<compile_context>
chip_gen: v7x
topology: tpu7x:2x2x1
jax: 0.10.0
libtpu: 0.0.40
codegen_flags: <defaults>
</compile_context>

<pallas_src>
import functools

import jax
import jax.numpy as jnp
from jax.experimental import pallas as pl
from jax.experimental.pallas import tpu as pltpu


# ----------------------------------------------------------------------------
# Fused Pallas GEMM kernel:  O = act(A @ B + shift)
#   A, B are bf16 (MXU-native); accumulation in f32; BatchNorm scale is
#   pre-folded into B's columns so the epilogue is shift-only.
#   K and N are single full-dim blocks; only M is tiled (1 or 2 blocks).
# ----------------------------------------------------------------------------

_PALLAS_MIN_M = 128          # below this the launch + glue exceed the work
_PALLAS_MIN_N = 64           # lane-sparse outputs (N=3/16/32) -> XLA
_PALLAS_MAX_N = 512
_PALLAS_MAX_K = 8192         # single full-K block stays tiny in VMEM
_PALLAS_MIN_WORK = 1 << 22   # minimum M*K*N MAC budget for a Pallas launch


def _apply_act(y, act):
    if act == "relu":
        return jnp.maximum(y, 0.0)
    if act == "leaky":
        return jnp.where(y >= 0.0, y, 0.1 * y)   # nn.LeakyReLU(0.1) per spec
    if act == "sigmoid":
        return jax.nn.sigmoid(y)
    return y                                      # "none": affine only


def _mm_kernel(a_ref, b_ref, sh_ref, o_ref, *, act):
    y = jnp.dot(a_ref[...], b_ref[...], preferred_element_type=jnp.float32)
    y = _apply_act(y + sh_ref[...], act)
    o_ref[...] = y.astype(o_ref.dtype)


@functools.lru_cache(maxsize=None)
def _tensorcores_per_chip():
    """v7x has 2 TensorCores per chip; v5e/v6e have 1.  Any detection failure
    falls back to single-block tiling, which is always legal/correct."""
    try:
        kind = jax.devices()[0].device_kind.lower()
    except Exception:
        return 1
    return 2 if "v7" in kind else 1


def _pick_tm(m):
    # v7x: exactly 2 "parallel" M blocks (one per TensorCore) on big layers.
    # v5e/v6e: the grid is a serial loop on one TC, so a single full-M block
    # avoids the ~0.35us per-step pipeline overhead.  tm always divides M
    # exactly (or equals it), so no padding / output slicing is ever needed.
    if _tensorcores_per_chip() >= 2 and m >= 2 * _PALLAS_MIN_M and m % 16 == 0:
        return m // 2
    return m


def matmul_bias_act(a, b, shift, act="none", out_dtype=jnp.bfloat16):
    """act(a @ b + shift).  a:[M,K], b:[K,N] pre-packed bf16, shift:[N] f32."""
    M, K = a.shape
    Kb, N = b.shape
    assert Kb == K, (Kb, K)
    a = a.astype(jnp.bfloat16)

    if (M < _PALLAS_MIN_M or N < _PALLAS_MIN_N or N > _PALLAS_MAX_N
            or K > _PALLAS_MAX_K or M * K * N < _PALLAS_MIN_WORK):
        # Tiny / lane-sparse / oversized-K GEMM: let XLA fuse it.
        y = jnp.dot(a, b, preferred_element_type=jnp.float32) + shift
        return _apply_act(y, act).astype(out_dtype)

    tm = _pick_tm(M)
    sh = shift.astype(jnp.float32).reshape(1, N)

    cost = pl.CostEstimate(
        flops=2 * M * K * N,
        transcendentals=M * N if act == "sigmoid" else 0,
        bytes_accessed=2 * (M * K + K * N + M * N) + 4 * N,
    )
    return pl.pallas_call(
        functools.partial(_mm_kernel, act=act),
        out_shape=jax.ShapeDtypeStruct((M, N), out_dtype),
        grid_spec=pltpu.PrefetchScalarGridSpec(
            num_scalar_prefetch=0,
            grid=(M // tm,),
            in_specs=[
                pl.BlockSpec((tm, K), lambda i: (i, 0)),
                pl.BlockSpec((K, N), lambda i: (0, 0)),   # weight: grid-invariant
                pl.BlockSpec((1, N), lambda i: (0, 0)),   # shift:  grid-invariant
            ],
            out_specs=pl.BlockSpec((tm, N), lambda i: (i, 0)),
        ),
        compiler_params=pltpu.CompilerParams(
            dimension_semantics=("parallel",),
            vmem_limit_bytes=32 * 1024 * 1024,
        ),
        cost_estimate=cost,
    )(a, b, sh)


# ----------------------------------------------------------------------------
# Conv / ConvTranspose / Upsample built on the fused GEMM
# ----------------------------------------------------------------------------
def _im2col(x, kh, kw, stride, pad):
    n, h, w, c = x.shape
    xp = jnp.pad(x, ((0, 0), (pad, pad), (pad, pad), (0, 0))) if pad else x
    oh = (h + 2 * pad - kh) // stride + 1
    ow = (w + 2 * pad - kw) // stride + 1
    cols = [xp[:, dy:dy + stride * oh:stride, dx:dx + stride * ow:stride, :]
            for dy in range(kh) for dx in range(kw)]
    patches = jnp.concatenate(cols, axis=-1)        # [n,oh,ow,kh*kw*c]
    return patches.reshape(n * oh * ow, kh * kw * c), (n, oh, ow)


def conv2d_packed(x, packed, kh, kw, stride, pad, act):
    a, (n, oh, ow) = _im2col(x, kh, kw, stride, pad)
    y = matmul_bias_act(a, packed["B"], packed["shift"], act)
    return y.reshape(n, oh, ow, -1)


def conv_transpose_s2_packed(x, packed, act):
    """ConvTranspose2d(kernel=4, stride=2, padding=1) as a SINGLE sub-pixel
    GEMM: shared 3x3 im2col over the 1-padded input, with the 4 output-phase
    weights concatenated along N ([9*Cin, 4*Cout]) -> lane-dense output,
    one launch per deconv layer."""
    n, h, w, _cin = x.shape
    xp = jnp.pad(x, ((0, 0), (1, 1), (1, 1), (0, 0)))
    a, (n, oh, ow) = _im2col(xp, 3, 3, 1, 0)          # oh == h, ow == w
    y = matmul_bias_act(a, packed["B"], packed["shift"], act)   # [n*h*w, 4*cout]
    cout = y.shape[-1] // 4
    y = y.reshape(n, h, w, 2, 2, cout)                # [..., ty, tx, c]
    # out[n, 2q+ty, 2r+tx, c] = y[n, q, r, ty, tx, c]
    y = jnp.transpose(y, (0, 1, 3, 2, 4, 5)).reshape(n, 2 * h, 2 * w, cout)
    return y


def _upsample_matrix(size):
    """1-D bilinear interpolation matrix, scale 2, align_corners=True
    (== nn.UpsamplingBilinear2d)."""
    out = 2 * size
    src = jnp.arange(out, dtype=jnp.float32) * (size - 1) / (out - 1)
    i0 = jnp.floor(src).astype(jnp.int32)
    i1 = jnp.minimum(i0 + 1, size - 1)
    f = src - i0.astype(jnp.float32)
    m = jnp.zeros((out, size), jnp.float32)
    m = m.at[jnp.arange(out), i0].add(1.0 - f)
    m = m.at[jnp.arange(out), i1].add(f)
    return m


def upsample2x_relu(x):
    """UpsamplingBilinear2d(scale_factor=2) + the ReLU the reference applies
    after it, as two tiny dense interpolation matmuls (no gathers)."""
    n, h, w, c = x.shape
    my = _upsample_matrix(h)
    mx = _upsample_matrix(w)
    y = jnp.einsum("oh,nhwc->nowc", my, x.astype(jnp.float32))
    y = jnp.einsum("pw,nowc->nopc", mx, y)
    return jnp.maximum(y, 0.0).astype(jnp.bfloat16)


# ----------------------------------------------------------------------------
# Model definition (width=16, latent=64, random_dim=None, crop=4)
# ----------------------------------------------------------------------------
# (cin, cout, k, stride, pad, bias, bn)
ENC_SPECS = [
    (3, 16, 3, 1, 1, True, True),
    (16, 32, 4, 2, 1, False, True),
    (32, 64, 4, 2, 3, False, True),      # padding = 1 + crop//2
    (64, 128, 4, 2, 1, False, True),
    (128, 256, 4, 2, 1, False, True),
    (256, 512, 3, 1, 0, False, True),
    (512, 64, 2, 1, 0, True, False),
]
# (type, cin, cout, k, stride, pad, bias, bn, upsample_after)
DEC_SPECS = [
    ("convT", 64, 512, 2, 1, 0, True, True, False),
    ("convT", 1024, 256, 3, 1, 0, False, True, False),
    ("convT", 512, 128, 4, 2, 1, False, True, False),
    ("convT", 256, 64, 4, 2, 1, False, True, False),
    ("conv", 128, 32, 3, 1, 0, False, True, True),
    ("convT", 64, 16, 3, 1, 1, False, True, True),
    ("convT", 32, 3, 3, 1, 1, False, False, False),
]
DISC_SPECS = [
    (3, 16, 4, 2, 1, True, True),
    (16, 32, 4, 2, 3, False, True),      # padding = 1 + crop//2
    (32, 64, 4, 2, 1, False, True),
    (64, 128, 4, 2, 1, False, True),
    (128, 256, 3, 1, 0, False, True),
    (256, 512, 2, 1, 0, False, False),
]


def _bn_params(c):
    return dict(gamma=jnp.ones((c,), jnp.float32),
                beta=jnp.zeros((c,), jnp.float32),
                mean=jnp.zeros((c,), jnp.float32),
                var=jnp.ones((c,), jnp.float32),
                eps=jnp.float32(1e-5))


def _conv_params(key, cout, cin, kh, kw, bias, bn, transposed=False):
    k1, k2 = jax.random.split(key)
    wshape = (cin, cout, kh, kw) if transposed else (cout, cin, kh, kw)
    return dict(
        w=jax.random.normal(k1, wshape, jnp.float32) * 0.05,
        b=(jax.random.normal(k2, (cout,), jnp.float32) * 0.05) if bias else None,
        bn=_bn_params(cout) if bn else None,
    )


def _linear_params(key, cout, cin, bias):
    k1, k2 = jax.random.split(key)
    return dict(
        w=jax.random.normal(k1, (cout, cin), jnp.float32) * 0.05,
        b=(jax.random.normal(k2, (cout,), jnp.float32) * 0.05) if bias else None,
    )


def init_params(key):
    keys = jax.random.split(key, 32)
    ki = iter(keys)
    enc = [_conv_params(next(ki), co, ci, k, k, b, bn)
           for (ci, co, k, s, p, b, bn) in ENC_SPECS]
    fc = _linear_params(next(ki), 64, 64, True)
    dec = [_conv_params(next(ki), co, ci, k, k, b, bn,
                        transposed=(typ == "convT"))
           for (typ, ci, co, k, s, p, b, bn, ups) in DEC_SPECS]
    disc = [_conv_params(next(ki), co, ci, k, k, b, bn)
            for (ci, co, k, s, p, b, bn) in DISC_SPECS]
    fc0 = _linear_params(next(ki), 512, 512, True)
    fc1 = _linear_params(next(ki), 1, 512, False)
    return dict(enc=enc, fc=fc, dec=dec, disc=disc, fc0=fc0, fc1=fc1)


# ----------------------------------------------------------------------------
# One-time weight packing (done OUTSIDE the jitted forward)
# ----------------------------------------------------------------------------
def _fold_bn(bias, bn, cout):
    """(scale, shift) folding eval-mode BatchNorm (+ conv bias)."""
    if bn is not None:
        scale = bn["gamma"] / jnp.sqrt(bn["var"] + bn["eps"])
        shift = bn["beta"] - bn["mean"] * scale
        if bias is not None:
            shift = shift + bias * scale
    else:
        scale = jnp.ones((cout,), jnp.float32)
        shift = bias if bias is not None else jnp.zeros((cout,), jnp.float32)
    return scale, shift


def _pack_matrix(w_conv, scale):
    """[Cout,Cin,KH,KW] -> bf16 [KH*KW*Cin, Cout] with BN scale folded in.
    No K padding: the GEMM uses full-K blocks (block dim == array dim), so
    the (8,128) rule holds and the activations need no per-forward pad."""
    cout, cin, kh, kw = w_conv.shape
    bmat = jnp.transpose(w_conv, (2, 3, 1, 0)).reshape(kh * kw * cin, cout)
    return (bmat * scale[None, :]).astype(jnp.bfloat16)


def prepare_params(params):
    def pack_conv(pr):
        cout = pr["w"].shape[0]
        scale, shift = _fold_bn(pr["b"], pr["bn"], cout)
        return dict(B=_pack_matrix(pr["w"], scale),
                    shift=shift.astype(jnp.float32))

    def pack_convT_s1(pr):
        # stride-1 ConvTranspose == stride-1 conv with flipped kernel and
        # swapped in/out channels (padding k-1-p applied at the call site).
        w = jnp.transpose(pr["w"][:, :, ::-1, ::-1], (1, 0, 2, 3))
        cout = w.shape[0]
        scale, shift = _fold_bn(pr["b"], pr["bn"], cout)
        return dict(B=_pack_matrix(w, scale), shift=shift.astype(jnp.float32))

    def pack_convT_s2k4p1_fused(pr):
        # Sub-pixel decomposition, all 4 phases fused along N.
        # Phase (ty,tx): out[2q+ty, 2r+tx] = sum_{j,i} xp[q+ty+j, r+tx+i]
        #                                     * W[:, :, 3-ty-2j, 3-tx-2i]
        # Shared 3x3 im2col block index = (ty+j)*3 + (tx+i); unused taps are
        # zero.  B: [9*Cin, 4*Cout], shift tiled per phase.
        w = pr["w"]                                   # [Cin, Cout, 4, 4]
        cin, cout = w.shape[0], w.shape[1]
        scale, shift = _fold_bn(pr["b"], pr["bn"], cout)
        bmat = jnp.zeros((9 * cin, 4 * cout), jnp.float32)
        for ty in range(2):
            for tx in range(2):
                ph = 2 * ty + tx
                for j in range(2):
                    for i in range(2):
                        blk = (ty + j) * 3 + (tx + i)
                        wt = w[:, :, 3 - ty - 2 * j, 3 - tx - 2 * i]
                        wt = wt * scale[None, :]       # [Cin, Cout]
                        bmat = bmat.at[blk * cin:(blk + 1) * cin,
                                       ph * cout:(ph + 1) * cout].set(wt)
        return dict(B=bmat.astype(jnp.bfloat16),
                    shift=jnp.concatenate([shift] * 4).astype(jnp.float32))

    def pack_linear(pr):
        cout = pr["w"].shape[0]
        shift = pr["b"] if pr["b"] is not None else jnp.zeros((cout,),
                                                              jnp.float32)
        return dict(B=pr["w"].T.astype(jnp.bfloat16),
                    shift=shift.astype(jnp.float32))

    enc = [pack_conv(p) for p in params["enc"]]
    dec = []
    for spec, p in zip(DEC_SPECS, params["dec"]):
        typ, _ci, _co, k, s, pad, _b, _bn, _ups = spec
        if typ == "convT" and s == 2:
            assert k == 4 and pad == 1
            dec.append(pack_convT_s2k4p1_fused(p))
        elif typ == "convT":
            dec.append(pack_convT_s1(p))
        else:
            dec.append(pack_conv(p))
    disc = [pack_conv(p) for p in params["disc"]]
    return dict(enc=enc, fc=pack_linear(params["fc"]), dec=dec, disc=disc,
                fc0=pack_linear(params["fc0"]), fc1=pack_linear(params["fc1"]))


# ----------------------------------------------------------------------------
# Forward passes
# ----------------------------------------------------------------------------
def transformator_forward(prep, x):
    fms = []
    for i, (_ci, _co, k, s, p, _b, _bn) in enumerate(ENC_SPECS):
        x = conv2d_packed(x, prep["enc"][i], k, k, s, p, "relu")
        if i < len(ENC_SPECS) - 1:
            fms.append(x)

    # fc: Flatten -> Dropout(eval=identity) -> Linear(64,64) -> Unflatten
    n = x.shape[0]
    flat = x.reshape(n, 64)
    flat = matmul_bias_act(flat, prep["fc"]["B"], prep["fc"]["shift"], "none")
    x = flat.reshape(n, 1, 1, 64)

    n_dec = len(DEC_SPECS)
    for i, (typ, _ci, _co, k, s, p, _b, _bn, ups) in enumerate(DEC_SPECS):
        pr = prep["dec"][i]
        last = i == n_dec - 1
        act = "sigmoid" if last else ("none" if ups else "relu")
        if typ == "convT" and s == 2:
            x = conv_transpose_s2_packed(x, pr, act)
        elif typ == "convT":
            x = conv2d_packed(x, pr, k, k, 1, k - 1 - p, act)
        else:
            x = conv2d_packed(x, pr, k, k, s, p, act)
        if ups:   # reference applies the ReLU AFTER UpsamplingBilinear2d
            x = upsample2x_relu(x)
        if not last:
            x = jnp.concatenate([x, fms[-i - 1]], axis=-1)
    return x      # (N, 56, 56, 3), sigmoid-activated


def discriminator_forward(prep, x):
    for i, (_ci, _co, k, s, p, _b, _bn) in enumerate(DISC_SPECS):
        x = conv2d_packed(x, prep["disc"][i], k, k, s, p, "leaky")
    n = x.shape[0]
    flat = x.reshape(n, 512)      # spatial is 1x1 -> matches torch Flatten
    # fc0: Dropout(eval=identity) -> Linear(512,512); fc1: Linear(512,1)
    flat = matmul_bias_act(flat, prep["fc0"]["B"], prep["fc0"]["shift"], "none")
    out = matmul_bias_act(flat, prep["fc1"]["B"], prep["fc1"]["shift"],
                          "sigmoid")
    return out    # (N, 1)


def pix_forward(prep, x):
    # Pix defines no forward(); implement the GAN composition disc(trans(x)).
    g = transformator_forward(prep, x.astype(jnp.bfloat16))
    d = discriminator_forward(prep, g)
    return g.astype(jnp.float32), d.astype(jnp.float32)


# ----------------------------------------------------------------------------
if __name__ == "__main__":
    key = jax.random.PRNGKey(0)
    pkey, xkey = jax.random.split(key)
    params = init_params(pkey)
    prep = prepare_params(params)     # one-time weight packing (BN folded, bf16)

    # Architecture (crop=4) requires 56x56 spatial input; batch=2, 3 channels.
    # NHWC here == PyTorch NCHW (2, 3, 56, 56).
    x = jax.random.normal(xkey, (2, 56, 56, 3), jnp.float32)

    fwd = jax.jit(pix_forward)
    g, d = fwd(prep, x)
    jax.block_until_ready((g, d))

    assert g.shape == (2, 56, 56, 3) and d.shape == (2, 1)
    assert bool(jnp.all((g >= 0) & (g <= 1))) and bool(jnp.all((d >= 0) & (d <= 1)))
    print("KERNEL_OK")
</pallas_src>

<mosaic_0001>
module attributes {stable_mosaic.version = 11 : i64} {
  func.func @_mm_kernel(%arg0: i32, %arg1: memref<512x512xbf16, #tpu.memory_space<vmem>>, %arg2: memref<512x64xbf16, #tpu.memory_space<vmem>>, %arg3: memref<1x64xf32, #tpu.memory_space<vmem>>, %arg4: memref<512x64xbf16, #tpu.memory_space<vmem>>) attributes {dimension_semantics = [#tpu.dimension_semantics<parallel>], iteration_bounds = array<i64: 1>, scalar_prefetch = 0 : i64, scratch_operands = 0 : i64, tpu.core_type = #tpu.core_type<tc>, window_params = [{transform_indices = @transform_0, window_bounds = array<i64: 512, 512>}, {pipeline_mode = #tpu.pipeline_mode<synchronous>, transform_indices = @transform_1, window_bounds = array<i64: 512, 64>}, {pipeline_mode = #tpu.pipeline_mode<synchronous>, transform_indices = @transform_2, window_bounds = array<i64: 1, 64>}, {transform_indices = @transform_3, window_bounds = array<i64: 512, 64>}]} {
    %c0 = arith.constant 0 : index
    %c0_0 = arith.constant 0 : index
    %0 = vector.load %arg1[%c0, %c0_0] : memref<512x512xbf16, #tpu.memory_space<vmem>>, vector<512x512xbf16>
    %c0_1 = arith.constant 0 : index
    %c0_2 = arith.constant 0 : index
    %1 = vector.load %arg2[%c0_1, %c0_2] : memref<512x64xbf16, #tpu.memory_space<vmem>>, vector<512x64xbf16>
    %cst = arith.constant dense<0.000000e+00> : vector<512x64xf32>
    %2 = tpu.matmul %0, %1, %cst {dimension_numbers = #tpu.dot_dimension_numbers<[1], [0], [0], [1], [0, 0, 1, 1], [], []>} : vector<512x512xbf16>, vector<512x64xbf16>, vector<512x64xf32> -> vector<512x64xf32>
    %c0_3 = arith.constant 0 : index
    %c0_4 = arith.constant 0 : index
    %3 = vector.load %arg3[%c0_3, %c0_4] : memref<1x64xf32, #tpu.memory_space<vmem>>, vector<1x64xf32>
    %4 = vector.broadcast %3 : vector<1x64xf32> to vector<512x64xf32>
    %5 = arith.addf %2, %4 : vector<512x64xf32>
    %cst_5 = arith.constant 0.000000e+00 : f32
    %6 = vector.broadcast %cst_5 : f32 to vector<512x64xf32>
    %7 = arith.maximumf %5, %6 : vector<512x64xf32>
    %8 = arith.truncf %7 : vector<512x64xf32> to vector<512x64xbf16>
    %c0_6 = arith.constant 0 : index
    %c0_7 = arith.constant 0 : index
    %9 = vector.load %arg4[%c0_6, %c0_7] : memref<512x64xbf16, #tpu.memory_space<vmem>>, vector<512x64xbf16>
    tpu.vector_store %arg4[%c0_6, %c0_7], %8 {strides = array<i32>} : memref<512x64xbf16, #tpu.memory_space<vmem>>, vector<512x64xbf16>,
    return
  }
  func.func @transform_0(%arg0: i32) -> (i32, i32) {
    %c0_i32 = arith.constant 0 : i32
    %c0_i32_0 = arith.constant 0 : i32
    return %arg0, %c0_i32 : i32, i32
  }
  func.func @transform_1(%arg0: i32) -> (i32, i32) {
    %c0_i32 = arith.constant 0 : i32
    %c0_i32_0 = arith.constant 0 : i32
    %c0_i32_1 = arith.constant 0 : i32
    return %c0_i32, %c0_i32_0 : i32, i32
  }
  func.func @transform_2(%arg0: i32) -> (i32, i32) {
    %c0_i32 = arith.constant 0 : i32
    %c0_i32_0 = arith.constant 0 : i32
    %c0_i32_1 = arith.constant 0 : i32
    return %c0_i32, %c0_i32_0 : i32, i32
  }
  func.func @transform_3(%arg0: i32) -> (i32, i32) {
    %c0_i32 = arith.constant 0 : i32
    %c0_i32_0 = arith.constant 0 : i32
    return %arg0, %c0_i32 : i32, i32
  }
}

module attributes {stable_mosaic.version = 11 : i64} {
  func.func @_mm_kernel(%arg0: i32, %arg1: memref<128x1024xbf16, #tpu.memory_space<vmem>>, %arg2: memref<1024x128xbf16, #tpu.memory_space<vmem>>, %arg3: memref<1x128xf32, #tpu.memory_space<vmem>>, %arg4: memref<128x128xbf16, #tpu.memory_space<vmem>>) attributes {dimension_semantics = [#tpu.dimension_semantics<parallel>], iteration_bounds = array<i64: 1>, scalar_prefetch = 0 : i64, scratch_operands = 0 : i64, tpu.core_type = #tpu.core_type<tc>, window_params = [{transform_indices = @transform_0, window_bounds = array<i64: 128, 1024>}, {pipeline_mode = #tpu.pipeline_mode<synchronous>, transform_indices = @transform_1, window_bounds = array<i64: 1024, 128>}, {pipeline_mode = #tpu.pipeline_mode<synchronous>, transform_indices = @transform_2, window_bounds = array<i64: 1, 128>}, {transform_indices = @transform_3, window_bounds = array<i64: 128, 128>}]} {
    %c0 = arith.constant 0 : index
    %c0_0 = arith.constant 0 : index
    %0 = vector.load %arg1[%c0, %c0_0] : memref<128x1024xbf16, #tpu.memory_space<vmem>>, vector<128x1024xbf16>
    %c0_1 = arith.constant 0 : index
    %c0_2 = arith.constant 0 : index
    %1 = vector.load %arg2[%c0_1, %c0_2] : memref<1024x128xbf16, #tpu.memory_space<vmem>>, vector<1024x128xbf16>
    %cst = arith.constant dense<0.000000e+00> : vector<128x128xf32>
    %2 = tpu.matmul %0, %1, %cst {dimension_numbers = #tpu.dot_dimension_numbers<[1], [0], [0], [1], [0, 0, 1, 1], [], []>} : vector<128x1024xbf16>, vector<1024x128xbf16>, vector<128x128xf32> -> vector<128x128xf32>
    %c0_3 = arith.constant 0 : index
    %c0_4 = arith.constant 0 : index
    %3 = vector.load %arg3[%c0_3, %c0_4] : memref<1x128xf32, #tpu.memory_space<vmem>>, vector<1x128xf32>
    %4 = vector.broadcast %3 : vector<1x128xf32> to vector<128x128xf32>
    %5 = arith.addf %2, %4 : vector<128x128xf32>
    %cst_5 = arith.constant 0.000000e+00 : f32
    %6 = vector.broadcast %cst_5 : f32 to vector<128x128xf32>
    %7 = arith.maximumf %5, %6 : vector<128x128xf32>
    %8 = arith.truncf %7 : vector<128x128xf32> to vector<128x128xbf16>
    %c0_6 = arith.constant 0 : index
    %c0_7 = arith.constant 0 : index
    %9 = vector.load %arg4[%c0_6, %c0_7] : memref<128x128xbf16, #tpu.memory_space<vmem>>, vector<128x128xbf16>
    tpu.vector_store %arg4[%c0_6, %c0_7], %8 {strides = array<i32>} : memref<128x128xbf16, #tpu.memory_space<vmem>>, vector<128x128xbf16>,
    return
  }
  func.func @transform_0(%arg0: i32) -> (i32, i32) {
    %c0_i32 = arith.constant 0 : i32
    %c0_i32_0 = arith.constant 0 : i32
    return %arg0, %c0_i32 : i32, i32
  }
  func.func @transform_1(%arg0: i32) -> (i32, i32) {
    %c0_i32 = arith.constant 0 : i32
    %c0_i32_0 = arith.constant 0 : i32
    %c0_i32_1 = arith.constant 0 : i32
    return %c0_i32, %c0_i32_0 : i32, i32
  }
  func.func @transform_2(%arg0: i32) -> (i32, i32) {
    %c0_i32 = arith.constant 0 : i32
    %c0_i32_0 = arith.constant 0 : i32
    %c0_i32_1 = arith.constant 0 : i32
    return %c0_i32, %c0_i32_0 : i32, i32
  }
  func.func @transform_3(%arg0: i32) -> (i32, i32) {
    %c0_i32 = arith.constant 0 : i32
    %c0_i32_0 = arith.constant 0 : i32
    return %arg0, %c0_i32 : i32, i32
  }
}

module attributes {stable_mosaic.version = 11 : i64} {
  func.func @_mm_kernel(%arg0: i32, %arg1: memref<128x2304xbf16, #tpu.memory_space<vmem>>, %arg2: memref<2304x256xbf16, #tpu.memory_space<vmem>>, %arg3: memref<1x256xf32, #tpu.memory_space<vmem>>, %arg4: memref<128x256xbf16, #tpu.memory_space<vmem>>) attributes {dimension_semantics = [#tpu.dimension_semantics<parallel>], iteration_bounds = array<i64: 1>, scalar_prefetch = 0 : i64, scratch_operands = 0 : i64, tpu.core_type = #tpu.core_type<tc>, window_params = [{transform_indices = @transform_0, window_bounds = array<i64: 128, 2304>}, {pipeline_mode = #tpu.pipeline_mode<synchronous>, transform_indices = @transform_1, window_bounds = array<i64: 2304, 256>}, {pipeline_mode = #tpu.pipeline_mode<synchronous>, transform_indices = @transform_2, window_bounds = array<i64: 1, 256>}, {transform_indices = @transform_3, window_bounds = array<i64: 128, 256>}]} {
    %c0 = arith.constant 0 : index
    %c0_0 = arith.constant 0 : index
    %0 = vector.load %arg1[%c0, %c0_0] : memref<128x2304xbf16, #tpu.memory_space<vmem>>, vector<128x2304xbf16>
    %c0_1 = arith.constant 0 : index
    %c0_2 = arith.constant 0 : index
    %1 = vector.load %arg2[%c0_1, %c0_2] : memref<2304x256xbf16, #tpu.memory_space<vmem>>, vector<2304x256xbf16>
    %cst = arith.constant dense<0.000000e+00> : vector<128x256xf32>
    %2 = tpu.matmul %0, %1, %cst {dimension_numbers = #tpu.dot_dimension_numbers<[1], [0], [0], [1], [0, 0, 1, 1], [], []>} : vector<128x2304xbf16>, vector<2304x256xbf16>, vector<128x256xf32> -> vector<128x256xf32>
    %c0_3 = arith.constant 0 : index
    %c0_4 = arith.constant 0 : index
    %3 = vector.load %arg3[%c0_3, %c0_4] : memref<1x256xf32, #tpu.memory_space<vmem>>, vector<1x256xf32>
    %4 = vector.broadcast %3 : vector<1x256xf32> to vector<128x256xf32>
    %5 = arith.addf %2, %4 : vector<128x256xf32>
    %cst_5 = arith.constant 0.000000e+00 : f32
    %6 = vector.broadcast %cst_5 : f32 to vector<128x256xf32>
    %7 = arith.maximumf %5, %6 : vector<128x256xf32>
    %8 = arith.truncf %7 : vector<128x256xf32> to vector<128x256xbf16>
    %c0_6 = arith.constant 0 : index
    %c0_7 = arith.constant 0 : index
    %9 = vector.load %arg4[%c0_6, %c0_7] : memref<128x256xbf16, #tpu.memory_space<vmem>>, vector<128x256xbf16>
    tpu.vector_store %arg4[%c0_6, %c0_7], %8 {strides = array<i32>} : memref<128x256xbf16, #tpu.memory_space<vmem>>, vector<128x256xbf16>,
    return
  }
  func.func @transform_0(%arg0: i32) -> (i32, i32) {
    %c0_i32 = arith.constant 0 : i32
    %c0_i32_0 = arith.constant 0 : i32
    return %arg0, %c0_i32 : i32, i32
  }
  func.func @transform_1(%arg0: i32) -> (i32, i32) {
    %c0_i32 = arith.constant 0 : i32
    %c0_i32_0 = arith.constant 0 : i32
    %c0_i32_1 = arith.constant 0 : i32
    return %c0_i32, %c0_i32_0 : i32, i32
  }
  func.func @transform_2(%arg0: i32) -> (i32, i32) {
    %c0_i32 = arith.constant 0 : i32
    %c0_i32_0 = arith.constant 0 : i32
    %c0_i32_1 = arith.constant 0 : i32
    return %c0_i32, %c0_i32_0 : i32, i32
  }
  func.func @transform_3(%arg0: i32) -> (i32, i32) {
    %c0_i32 = arith.constant 0 : i32
    %c0_i32_0 = arith.constant 0 : i32
    return %arg0, %c0_i32 : i32, i32
  }
}

module attributes {stable_mosaic.version = 11 : i64} {
  func.func @_mm_kernel(%arg0: i32, %arg1: memref<128x512xbf16, #tpu.memory_space<vmem>>, %arg2: memref<512x64xbf16, #tpu.memory_space<vmem>>, %arg3: memref<1x64xf32, #tpu.memory_space<vmem>>, %arg4: memref<128x64xbf16, #tpu.memory_space<vmem>>) attributes {dimension_semantics = [#tpu.dimension_semantics<parallel>], iteration_bounds = array<i64: 1>, scalar_prefetch = 0 : i64, scratch_operands = 0 : i64, tpu.core_type = #tpu.core_type<tc>, window_params = [{transform_indices = @transform_0, window_bounds = array<i64: 128, 512>}, {pipeline_mode = #tpu.pipeline_mode<synchronous>, transform_indices = @transform_1, window_bounds = array<i64: 512, 64>}, {pipeline_mode = #tpu.pipeline_mode<synchronous>, transform_indices = @transform_2, window_bounds = array<i64: 1, 64>}, {transform_indices = @transform_3, window_bounds = array<i64: 128, 64>}]} {
    %c0 = arith.constant 0 : index
    %c0_0 = arith.constant 0 : index
    %0 = vector.load %arg1[%c0, %c0_0] : memref<128x512xbf16, #tpu.memory_space<vmem>>, vector<128x512xbf16>
    %c0_1 = arith.constant 0 : index
    %c0_2 = arith.constant 0 : index
    %1 = vector.load %arg2[%c0_1, %c0_2] : memref<512x64xbf16, #tpu.memory_space<vmem>>, vector<512x64xbf16>
    %cst = arith.constant dense<0.000000e+00> : vector<128x64xf32>
    %2 = tpu.matmul %0, %1, %cst {dimension_numbers = #tpu.dot_dimension_numbers<[1], [0], [0], [1], [0, 0, 1, 1], [], []>} : vector<128x512xbf16>, vector<512x64xbf16>, vector<128x64xf32> -> vector<128x64xf32>
    %c0_3 = arith.constant 0 : index
    %c0_4 = arith.constant 0 : index
    %3 = vector.load %arg3[%c0_3, %c0_4] : memref<1x64xf32, #tpu.memory_space<vmem>>, vector<1x64xf32>
    %4 = vector.broadcast %3 : vector<1x64xf32> to vector<128x64xf32>
    %5 = arith.addf %2, %4 : vector<128x64xf32>
    %cst_5 = arith.constant 0.000000e+00 : f32
    %6 = vector.broadcast %cst_5 : f32 to vector<128x64xf32>
    %7 = arith.cmpf oge, %5, %6 : vector<128x64xf32>
    %cst_6 = arith.constant 1.000000e-01 : f32
    %8 = vector.broadcast %cst_6 : f32 to vector<128x64xf32>
    %9 = arith.mulf %8, %5 : vector<128x64xf32>
    %10 = arith.select %7, %5, %9 : vector<128x64xi1>, vector<128x64xf32>
    %11 = arith.truncf %10 : vector<128x64xf32> to vector<128x64xbf16>
    %c0_7 = arith.constant 0 : index
    %c0_8 = arith.constant 0 : index
    %12 = vector.load %arg4[%c0_7, %c0_8] : memref<128x64xbf16, #tpu.memory_space<vmem>>, vector<128x64xbf16>
    tpu.vector_store %arg4[%c0_7, %c0_8], %11 {strides = array<i32>} : memref<128x64xbf16, #tpu.memory_space<vmem>>, vector<128x64xbf16>,
    return
  }
  func.func @transform_0(%arg0: i32) -> (i32, i32) {
    %c0_i32 = arith.constant 0 : i32
    %c0_i32_0 = arith.constant 0 : i32
    return %arg0, %c0_i32 : i32, i32
  }
  func.func @transform_1(%arg0: i32) -> (i32, i32) {
    %c0_i32 = arith.constant 0 : i32
    %c0_i32_0 = arith.constant 0 : i32
    %c0_i32_1 = arith.constant 0 : i32
    return %c0_i32, %c0_i32_0 : i32, i32
  }
  func.func @transform_2(%arg0: i32) -> (i32, i32) {
    %c0_i32 = arith.constant 0 : i32
    %c0_i32_0 = arith.constant 0 : i32
    %c0_i32_1 = arith.constant 0 : i32
    return %c0_i32, %c0_i32_0 : i32, i32
  }
  func.func @transform_3(%arg0: i32) -> (i32, i32) {
    %c0_i32 = arith.constant 0 : i32
    %c0_i32_0 = arith.constant 0 : i32
    return %arg0, %c0_i32 : i32, i32
  }
}

</mosaic_0001>

<llo_original>
// kernel: pix_forward.4
$region0: #{pix_forward.4}
  #allocation0 [shape = 'u32[]', space=smem, size = 0x4, offset = 0x4, fixed_abs, tag = 'smem constant byte address 0x4 - core index']
  #allocation1 [shape = 'u32[144,128]{1,0:T(1,128)}', space=vmem, size = 0x12000, scoped, tag = 'internal scratch']
  %s0 = inlined_call_operand.vmem [shape: bf16[512,512], index: 0, kind: input, shape index: {}]
  %s1 = inlined_call_operand.vmem [shape: bf16[512,64], index: 1, kind: input, shape index: {}]
  %s2 = inlined_call_operand.vmem [shape: f32[1,64], index: 2, kind: input, shape index: {}]
  %s3 = inlined_call_operand.vmem [shape: bf16[512,64], index: 3, kind: output, shape index: {}]
  %s4 = sld [smem:[#allocation0]]
  $region22: #{pix_forward.4} parent=0
    _
  %s6 = ssub.s32 1, %s4
  %s7 = scalar_select 0, %s6, %s4
  // Predicated region
  $region2: #{pix_forward.4} parent=0 // pred_check
    _
  $region3: #{pix_forward.4} parent=0 // pred_check_branch
    %9 = sbr.rel (0) target = $region5
  $region4: #{pix_forward.4} parent=0 // pred_region
    _
  $region5: #{pix_forward.4} parent=0 // pred_fallthru
    _
  // Predicated region
  $region6: #{pix_forward.4} parent=0 // pred_check
    _
  $region7: #{pix_forward.4} parent=0 // pred_check_branch
    %11 = sbr.rel (0) target = $region9
  $region8: #{pix_forward.4} parent=0 // pred_region
    _
  $region9: #{pix_forward.4} parent=0 // pred_fallthru
    _
  // Predicated region
  $region10: #{pix_forward.4} parent=0 // pred_check
    _
  $region11: #{pix_forward.4} parent=0 // pred_check_branch
    %13 = sbr.rel (0) target = $region13
  $region12: #{pix_forward.4} parent=0 // pred_region
    _
  $region13: #{pix_forward.4} parent=0 // pred_fallthru
    _
  %v15 = vld [vmem:[%s0] sm:$0xff]
  %v16 = vld [vmem:[%s0 + $0x8] sm:$0xff]
  %v17 = vld [vmem:[%s0 + $0x10] sm:$0xff]
  %v18 = vld [vmem:[%s0 + $0x18] sm:$0xff]
  %v19 = vld [vmem:[%s0 + $0x20] sm:$0xff]
  %v20 = vld [vmem:[%s0 + $0x28] sm:$0xff]
  %v21 = vld [vmem:[%s0 + $0x30] sm:$0xff]
  %v22 = vld [vmem:[%s0 + $0x38] sm:$0xff]
  %v23 = vld [vmem:[%s0 + $0x40] sm:$0xff]
  %v24 = vld [vmem:[%s0 + $0x48] sm:$0xff]
  %v25 = vld [vmem:[%s0 + $0x50] sm:$0xff]
  %v26 = vld [vmem:[%s0 + $0x58] sm:$0xff]
  %v27 = vld [vmem:[%s0 + $0x60] sm:$0xff]
  %v28 = vld [vmem:[%s0 + $0x68] sm:$0xff]
  %v29 = vld [vmem:[%s0 + $0x70] sm:$0xff]
  %v30 = vld [vmem:[%s0 + $0x78] sm:$0xff]
  %v31 = vld [vmem:[%s0 + $0x80] sm:$0xff]
  %v32 = vld [vmem:[%s0 + $0x88] sm:$0xff]
  %v33 = vld [vmem:[%s0 + $0x90] sm:$0xff]
  %v34 = vld [vmem:[%s0 + $0x98] sm:$0xff]
  %v35 = vld [vmem:[%s0 + $0xa0] sm:$0xff]
  %v36 = vld [vmem:[%s0 + $0xa8] sm:$0xff]
  %v37 = vld [vmem:[%s0 + $0xb0] sm:$0xff]
  %v38 = vld [vmem:[%s0 + $0xb8] sm:$0xff]
  %v39 = vld [vmem:[%s0 + $0xc0] sm:$0xff]
  %v40 = vld [vmem:[%s0 + $0xc8] sm:$0xff]
  %v41 = vld [vmem:[%s0 + $0xd0] sm:$0xff]
  %v42 = vld [vmem:[%s0 + $0xd8] sm:$0xff]
  %v43 = vld [vmem:[%s0 + $0xe0] sm:$0xff]
  %v44 = vld [vmem:[%s0 + $0xe8] sm:$0xff]
  %v45 = vld [vmem:[%s0 + $0xf0] sm:$0xff]
  %v46 = vld [vmem:[%s0 + $0xf8] sm:$0xff]
  %v47 = vld [vmem:[%s0 + $0x100] sm:$0xff]
  %v48 = vld [vmem:[%s0 + $0x108] sm:$0xff]
  %v49 = vld [vmem:[%s0 + $0x110] sm:$0xff]
  %v50 = vld [vmem:[%s0 + $0x118] sm:$0xff]
  %v51 = vld [vmem:[%s0 + $0x120] sm:$0xff]
  %v52 = vld [vmem:[%s0 + $0x128] sm:$0xff]
  %v53 = vld [vmem:[%s0 + $0x130] sm:$0xff]
  %v54 = vld [vmem:[%s0 + $0x138] sm:$0xff]
  %v55 = vld [vmem:[%s0 + $0x140] sm:$0xff]
  %v56 = vld [vmem:[%s0 + $0x148] sm:$0xff]
  %v57 = vld [vmem:[%s0 + $0x150] sm:$0xff]
  %v58 = vld [vmem:[%s0 + $0x158] sm:$0xff]
  %v59 = vld [vmem:[%s0 + $0x160] sm:$0xff]
  %v60 = vld [vmem:[%s0 + $0x168] sm:$0xff]
  %v61 = vld [vmem:[%s0 + $0x170] sm:$0xff]
  %v62 = vld [vmem:[%s0 + $0x178] sm:$0xff]
  %v63 = vld [vmem:[%s0 + $0x180] sm:$0xff]
  %v64 = vld [vmem:[%s0 + $0x188] sm:$0xff]
  %v65 = vld [vmem:[%s0 + $0x190] sm:$0xff]
  %v66 = vld [vmem:[%s0 + $0x198] sm:$0xff]
  %v67 = vld [vmem:[%s0 + $0x1a0] sm:$0xff]
  %v68 = vld [vmem:[%s0 + $0x1a8] sm:$0xff]
  %v69 = vld [vmem:[%s0 + $0x1b0] sm:$0xff]
  %v70 = vld [vmem:[%s0 + $0x1b8] sm:$0xff]
  %v71 = vld [vmem:[%s0 + $0x1c0] sm:$0xff]
  %v72 = vld [vmem:[%s0 + $0x1c8] sm:$0xff]
  %v73 = vld [vmem:[%s0 + $0x1d0] sm:$0xff]
  %v74 = vld [vmem:[%s0 + $0x1d8] sm:$0xff]
  %v75 = vld [vmem:[%s0 + $0x1e0] sm:$0xff]
  %v76 = vld [vmem:[%s0 + $0x1e8] sm:$0xff]
  %v77 = vld [vmem:[%s0 + $0x1f0] sm:$0xff]
  %v78 = vld [vmem:[%s0 + $0x1f8] sm:$0xff]
  %v79 = vld [vmem:[%s0 + $0x200] sm:$0xff]
  %v80 = vld [vmem:[%s0 + $0x208] sm:$0xff]
  %v81 = vld [vmem:[%s0 + $0x210] sm:$0xff]
  %v82 = vld [vmem:[%s0 + $0x218] sm:$0xff]
  %v83 = vld [vmem:[%s0 + $0x220] sm:$0xff]
  %v84 = vld [vmem:[%s0 + $0x228] sm:$0xff]
  %v85 = vld [vmem:[%s0 + $0x230] sm:$0xff]
  %v86 = vld [vmem:[%s0 + $0x238] sm:$0xff]
  %v87 = vld [vmem:[%s0 + $0x240] sm:$0xff]
  %v88 = vld [vmem:[%s0 + $0x248] sm:$0xff]
  %v89 = vld [vmem:[%s0 + $0x250] sm:$0xff]
  %v90 = vld [vmem:[%s0 + $0x258] sm:$0xff]
  %v91 = vld [vmem:[%s0 + $0x260] sm:$0xff]
  %v92 = vld [vmem:[%s0 + $0x268] sm:$0xff]
  %v93 = vld [vmem:[%s0 + $0x270] sm:$0xff]
  %v94 = vld [vmem:[%s0 + $0x278] sm:$0xff]
  %v95 = vld [vmem:[%s0 + $0x280] sm:$0xff]
  %v96 = vld [vmem:[%s0 + $0x288] sm:$0xff]
  %v97 = vld [vmem:[%s0 + $0x290] sm:$0xff]
  %v98 = vld [vmem:[%s0 + $0x298] sm:$0xff]
  %v99 = vld [vmem:[%s0 + $0x2a0] sm:$0xff]
  %v100 = vld [vmem:[%s0 + $0x2a8] sm:$0xff]
  %v101 = vld [vmem:[%s0 + $0x2b0] sm:$0xff]
  %v102 = vld [vmem:[%s0 + $0x2b8] sm:$0xff]
  %v103 = vld [vmem:[%s0 + $0x2c0] sm:$0xff]
  %v104 = vld [vmem:[%s0 + $0x2c8] sm:$0xff]
  %v105 = vld [vmem:[%s0 + $0x2d0] sm:$0xff]
  %v106 = vld [vmem:[%s0 + $0x2d8] sm:$0xff]
  %v107 = vld [vmem:[%s0 + $0x2e0] sm:$0xff]
  %v108 = vld [vmem:[%s0 + $0x2e8] sm:$0xff]
  %v109 = vld [vmem:[%s0 + $0x2f0] sm:$0xff]
  %v110 = vld [vmem:[%s0 + $0x2f8] sm:$0xff]
  %v111 = vld [vmem:[%s0 + $0x300] sm:$0xff]
  %v112 = vld [vmem:[%s0 + $0x308] sm:$0xff]
  %v113 = vld [vmem:[%s0 + $0x310] sm:$0xff]
  %v114 = vld [vmem:[%s0 + $0x318] sm:$0xff]
  %v115 = vld [vmem:[%s0 + $0x320] sm:$0xff]
  %v116 = vld [vmem:[%s0 + $0x328] sm:$0xff]
  %v117 = vld [vmem:[%s0 + $0x330] sm:$0xff]
  %v118 = vld [vmem:[%s0 + $0x338] sm:$0xff]
  %v119 = vld [vmem:[%s0 + $0x340] sm:$0xff]
  %v120 = vld [vmem:[%s0 + $0x348] sm:$0xff]
  %v121 = vld [vmem:[%s0 + $0x350] sm:$0xff]
  %v122 = vld [vmem:[%s0 + $0x358] sm:$0xff]
  %v123 = vld [vmem:[%s0 + $0x360] sm:$0xff]
  %v124 = vld [vmem:[%s0 + $0x368] sm:$0xff]
  %v125 = vld [vmem:[%s0 + $0x370] sm:$0xff]
  %v126 = vld [vmem:[%s0 + $0x378] sm:$0xff]
  %v127 = vld [vmem:[%s0 + $0x380] sm:$0xff]
  %v128 = vld [vmem:[%s0 + $0x388] sm:$0xff]
  %v129 = vld [vmem:[%s0 + $0x390] sm:$0xff]
  %v130 = vld [vmem:[%s0 + $0x398] sm:$0xff]
  %v131 = vld [vmem:[%s0 + $0x3a0] sm:$0xff]
  %v132 = vld [vmem:[%s0 + $0x3a8] sm:$0xff]
  %v133 = vld [vmem:[%s0 + $0x3b0] sm:$0xff]
  %v134 = vld [vmem:[%s0 + $0x3b8] sm:$0xff]
  %v135 = vld [vmem:[%s0 + $0x3c0] sm:$0xff]
  %v136 = vld [vmem:[%s0 + $0x3c8] sm:$0xff]
  %v137 = vld [vmem:[%s0 + $0x3d0] sm:$0xff]
  %v138 = vld [vmem:[%s0 + $0x3d8] sm:$0xff]
  %v139 = vld [vmem:[%s0 + $0x3e0] sm:$0xff]
  %v140 = vld [vmem:[%s0 + $0x3e8] sm:$0xff]
  %v141 = vld [vmem:[%s0 + $0x3f0] sm:$0xff]
  %v142 = vld [vmem:[%s0 + $0x3f8] sm:$0xff]
  %v143 = vld [vmem:[%s1] sm:$0xf]
  %v144 = vld [vmem:[%s1 + $0x4] sm:$0xf]
  %v145 = vld [vmem:[%s1 + $0x8] sm:$0xf]
  %v146 = vld [vmem:[%s1 + $0xc] sm:$0xf]
  %v147 = vld [vmem:[%s1 + $0x10] sm:$0xf]
  %v148 = vld [vmem:[%s1 + $0x14] sm:$0xf]
  %v149 = vld [vmem:[%s1 + $0x18] sm:$0xf]
  %v150 = vld [vmem:[%s1 + $0x1c] sm:$0xf]
  %v151 = vld [vmem:[%s1 + $0x20] sm:$0xf]
  %v152 = vld [vmem:[%s1 + $0x24] sm:$0xf]
  %v153 = vld [vmem:[%s1 + $0x28] sm:$0xf]
  %v154 = vld [vmem:[%s1 + $0x2c] sm:$0xf]
  %v155 = vld [vmem:[%s1 + $0x30] sm:$0xf]
  %v156 = vld [vmem:[%s1 + $0x34] sm:$0xf]
  %v157 = vld [vmem:[%s1 + $0x38] sm:$0xf]
  %v158 = vld [vmem:[%s1 + $0x3c] sm:$0xf]
  %v159 = vld [vmem:[%s1 + $0x40] sm:$0xf]
  %v160 = vld [vmem:[%s1 + $0x44] sm:$0xf]
  %v161 = vld [vmem:[%s1 + $0x48] sm:$0xf]
  %v162 = vld [vmem:[%s1 + $0x4c] sm:$0xf]
  %v163 = vld [vmem:[%s1 + $0x50] sm:$0xf]
  %v164 = vld [vmem:[%s1 + $0x54] sm:$0xf]
  %v165 = vld [vmem:[%s1 + $0x58] sm:$0xf]
  %v166 = vld [vmem:[%s1 + $0x5c] sm:$0xf]
  %v167 = vld [vmem:[%s1 + $0x60] sm:$0xf]
  %v168 = vld [vmem:[%s1 + $0x64] sm:$0xf]
  %v169 = vld [vmem:[%s1 + $0x68] sm:$0xf]
  %v170 = vld [vmem:[%s1 + $0x6c] sm:$0xf]
  %v171 = vld [vmem:[%s1 + $0x70] sm:$0xf]
  %v172 = vld [vmem:[%s1 + $0x74] sm:$0xf]
  %v173 = vld [vmem:[%s1 + $0x78] sm:$0xf]
  %v174 = vld [vmem:[%s1 + $0x7c] sm:$0xf]
  %v175 = vld [vmem:[%s1 + $0x80] sm:$0xf]
  %v176 = vld [vmem:[%s1 + $0x84] sm:$0xf]
  %v177 = vld [vmem:[%s1 + $0x88] sm:$0xf]
  %v178 = vld [vmem:[%s1 + $0x8c] sm:$0xf]
  %v179 = vld [vmem:[%s1 + $0x90] sm:$0xf]
  %v180 = vld [vmem:[%s1 + $0x94] sm:$0xf]
  %v181 = vld [vmem:[%s1 + $0x98] sm:$0xf]
  %v182 = vld [vmem:[%s1 + $0x9c] sm:$0xf]
  %v183 = vld [vmem:[%s1 + $0xa0] sm:$0xf]
  %v184 = vld [vmem:[%s1 + $0xa4] sm:$0xf]
  %v185 = vld [vmem:[%s1 + $0xa8] sm:$0xf]
  %v186 = vld [vmem:[%s1 + $0xac] sm:$0xf]
  %v187 = vld [vmem:[%s1 + $0xb0] sm:$0xf]
  %v188 = vld [vmem:[%s1 + $0xb4] sm:$0xf]
  %v189 = vld [vmem:[%s1 + $0xb8] sm:$0xf]
  %v190 = vld [vmem:[%s1 + $0xbc] sm:$0xf]
  %v191 = vld [vmem:[%s1 + $0xc0] sm:$0xf]
  %v192 = vld [vmem:[%s1 + $0xc4] sm:$0xf]
  %v193 = vld [vmem:[%s1 + $0xc8] sm:$0xf]
  %v194 = vld [vmem:[%s1 + $0xcc] sm:$0xf]
  %v195 = vld [vmem:[%s1 + $0xd0] sm:$0xf]
  %v196 = vld [vmem:[%s1 + $0xd4] sm:$0xf]
  %v197 = vld [vmem:[%s1 + $0xd8] sm:$0xf]
  %v198 = vld [vmem:[%s1 + $0xdc] sm:$0xf]
  %v199 = vld [vmem:[%s1 + $0xe0] sm:$0xf]
  %v200 = vld [vmem:[%s1 + $0xe4] sm:$0xf]
  %v201 = vld [vmem:[%s1 + $0xe8] sm:$0xf]
  %v202 = vld [vmem:[%s1 + $0xec] sm:$0xf]
  %v203 = vld [vmem:[%s1 + $0xf0] sm:$0xf]
  %v204 = vld [vmem:[%s1 + $0xf4] sm:$0xf]
  %v205 = vld [vmem:[%s1 + $0xf8] sm:$0xf]
  %v206 = vld [vmem:[%s1 + $0xfc] sm:$0xf]
  %v207 = vld [vmem:[%s2] sm:$0x1]
  %v209 = vlaneseq
  %v210 = vshrl.u32 %v209, 7
  %v211 = vsub.s32 0, %v210
  %v212 = vrot.slane %v207, %v211
  %v342 = vunpack.c.l.b16 %v15
  %v343 = vunpack.c.h.b16 %v15
  %v344 = vunpack.c.l.b16 %v16
  %v345 = vunpack.c.h.b16 %v16
  %v346 = vunpack.c.l.b16 %v17
  %v347 = vunpack.c.h.b16 %v17
  %v348 = vunpack.c.l.b16 %v18
  %v349 = vunpack.c.h.b16 %v18
  %v350 = vunpack.c.l.b16 %v19
  %v351 = vunpack.c.h.b16 %v19
  %v352 = vunpack.c.l.b16 %v20
  %v353 = vunpack.c.h.b16 %v20
  %v354 = vunpack.c.l.b16 %v21
  %v355 = vunpack.c.h.b16 %v21
  %v356 = vunpack.c.l.b16 %v22
  %v357 = vunpack.c.h.b16 %v22
  %v358 = vunpack.c.l.b16 %v23
  %v359 = vunpack.c.h.b16 %v23
  %v360 = vunpack.c.l.b16 %v24
  %v361 = vunpack.c.h.b16 %v24
  %v362 = vunpack.c.l.b16 %v25
  %v363 = vunpack.c.h.b16 %v25
  %v364 = vunpack.c.l.b16 %v26
  %v365 = vunpack.c.h.b16 %v26
  %v366 = vunpack.c.l.b16 %v27
  %v367 = vunpack.c.h.b16 %v27
  %v368 = vunpack.c.l.b16 %v28
  %v369 = vunpack.c.h.b16 %v28
  %v370 = vunpack.c.l.b16 %v29
  %v371 = vunpack.c.h.b16 %v29
  %v372 = vunpack.c.l.b16 %v30
  %v373 = vunpack.c.h.b16 %v30
  %v374 = vunpack.c.l.b16 %v31
  %v375 = vunpack.c.h.b16 %v31
  %v376 = vunpack.c.l.b16 %v32
  %v377 = vunpack.c.h.b16 %v32
  %v378 = vunpack.c.l.b16 %v33
  %v379 = vunpack.c.h.b16 %v33
  %v380 = vunpack.c.l.b16 %v34
  %v381 = vunpack.c.h.b16 %v34
  %v382 = vunpack.c.l.b16 %v35
  %v383 = vunpack.c.h.b16 %v35
  %v384 = vunpack.c.l.b16 %v36
  %v385 = vunpack.c.h.b16 %v36
  %v386 = vunpack.c.l.b16 %v37
  %v387 = vunpack.c.h.b16 %v37
  %v388 = vunpack.c.l.b16 %v38
  %v389 = vunpack.c.h.b16 %v38
  %v390 = vunpack.c.l.b16 %v39
  %v391 = vunpack.c.h.b16 %v39
  %v392 = vunpack.c.l.b16 %v40
  %v393 = vunpack.c.h.b16 %v40
  %v394 = vunpack.c.l.b16 %v41
  %v395 = vunpack.c.h.b16 %v41
  %v396 = vunpack.c.l.b16 %v42
  %v397 = vunpack.c.h.b16 %v42
  %v398 = vunpack.c.l.b16 %v43
  %v399 = vunpack.c.h.b16 %v43
  %v400 = vunpack.c.l.b16 %v44
  %v401 = vunpack.c.h.b16 %v44
  %v402 = vunpack.c.l.b16 %v45
  %v403 = vunpack.c.h.b16 %v45
  %v404 = vunpack.c.l.b16 %v46
  %v405 = vunpack.c.h.b16 %v46
  %v406 = vunpack.c.l.b16 %v47
  %v407 = vunpack.c.h.b16 %v47
  %v408 = vunpack.c.l.b16 %v48
  %v409 = vunpack.c.h.b16 %v48
  %v410 = vunpack.c.l.b16 %v49
  %v411 = vunpack.c.h.b16 %v49
  %v412 = vunpack.c.l.b16 %v50
  %v413 = vunpack.c.h.b16 %v50
  %v414 = vunpack.c.l.b16 %v51
  %v415 = vunpack.c.h.b16 %v51
  %v416 = vunpack.c.l.b16 %v52
  %v417 = vunpack.c.h.b16 %v52
  %v418 = vunpack.c.l.b16 %v53
  %v419 = vunpack.c.h.b16 %v53
  %v420 = vunpack.c.l.b16 %v54
  %v421 = vunpack.c.h.b16 %v54
  %v422 = vunpack.c.l.b16 %v55
  %v423 = vunpack.c.h.b16 %v55
  %v424 = vunpack.c.l.b16 %v56
  %v425 = vunpack.c.h.b16 %v56
  %v426 = vunpack.c.l.b16 %v57
  %v427 = vunpack.c.h.b16 %v57
  %v428 = vunpack.c.l.b16 %v58
  %v429 = vunpack.c.h.b16 %v58
  %v430 = vunpack.c.l.b16 %v59
  %v431 = vunpack.c.h.b16 %v59
  %v432 = vunpack.c.l.b16 %v60
  %v433 = vunpack.c.h.b16 %v60
  %v434 = vunpack.c.l.b16 %v61
  %v435 = vunpack.c.h.b16 %v61
  %v436 = vunpack.c.l.b16 %v62
  %v437 = vunpack.c.h.b16 %v62
  %v438 = vunpack.c.l.b16 %v63
  %v439 = vunpack.c.h.b16 %v63
  %v440 = vunpack.c.l.b16 %v64
  %v441 = vunpack.c.h.b16 %v64
  %v442 = vunpack.c.l.b16 %v65
  %v443 = vunpack.c.h.b16 %v65
  %v444 = vunpack.c.l.b16 %v66
  %v445 = vunpack.c.h.b16 %v66
  %v446 = vunpack.c.l.b16 %v67
  %v447 = vunpack.c.h.b16 %v67
  %v448 = vunpack.c.l.b16 %v68
  %v449 = vunpack.c.h.b16 %v68
  %v450 = vunpack.c.l.b16 %v69
  %v451 = vunpack.c.h.b16 %v69
  %v452 = vunpack.c.l.b16 %v70
  %v453 = vunpack.c.h.b16 %v70
  %v454 = vunpack.c.l.b16 %v71
  %v455 = vunpack.c.h.b16 %v71
  %v456 = vunpack.c.l.b16 %v72
  %v457 = vunpack.c.h.b16 %v72
  %v458 = vunpack.c.l.b16 %v73
  %v459 = vunpack.c.h.b16 %v73
  %v460 = vunpack.c.l.b16 %v74
  %v461 = vunpack.c.h.b16 %v74
  %v462 = vunpack.c.l.b16 %v75
  %v463 = vunpack.c.h.b16 %v75
  %v464 = vunpack.c.l.b16 %v76
  %v465 = vunpack.c.h.b16 %v76
  %v466 = vunpack.c.l.b16 %v77
  %v467 = vunpack.c.h.b16 %v77
  %v468 = vunpack.c.l.b16 %v78
  %v469 = vunpack.c.h.b16 %v78
  %v470 = vunpack.c.l.b16 %v79
  %v471 = vunpack.c.h.b16 %v79
  %v472 = vunpack.c.l.b16 %v80
  %v473 = vunpack.c.h.b16 %v80
  %v474 = vunpack.c.l.b16 %v81
  %v475 = vunpack.c.h.b16 %v81
  %v476 = vunpack.c.l.b16 %v82
  %v477 = vunpack.c.h.b16 %v82
  %v478 = vunpack.c.l.b16 %v83
  %v479 = vunpack.c.h.b16 %v83
  %v480 = vunpack.c.l.b16 %v84
  %v481 = vunpack.c.h.b16 %v84
  %v482 = vunpack.c.l.b16 %v85
  %v483 = vunpack.c.h.b16 %v85
  %v484 = vunpack.c.l.b16 %v86
  %v485 = vunpack.c.h.b16 %v86
  %v486 = vunpack.c.l.b16 %v87
  %v487 = vunpack.c.h.b16 %v87
  %v488 = vunpack.c.l.b16 %v88
  %v489 = vunpack.c.h.b16 %v88
  %v490 = vunpack.c.l.b16 %v89
  %v491 = vunpack.c.h.b16 %v89
  %v492 = vunpack.c.l.b16 %v90
  %v493 = vunpack.c.h.b16 %v90
  %v494 = vunpack.c.l.b16 %v91
  %v495 = vunpack.c.h.b16 %v91
  %v496 = vunpack.c.l.b16 %v92
  %v497 = vunpack.c.h.b16 %v92
  %v498 = vunpack.c.l.b16 %v93
  %v499 = vunpack.c.h.b16 %v93
  %v500 = vunpack.c.l.b16 %v94
  %v501 = vunpack.c.h.b16 %v94
  %v502 = vunpack.c.l.b16 %v95
  %v503 = vunpack.c.h.b16 %v95
  %v504 = vunpack.c.l.b16 %v96
  %v505 = vunpack.c.h.b16 %v96
  %v506 = vunpack.c.l.b16 %v97
  %v507 = vunpack.c.h.b16 %v97
  %v508 = vunpack.c.l.b16 %v98
  %v509 = vunpack.c.h.b16 %v98
  %v510 = vunpack.c.l.b16 %v99
  %v511 = vunpack.c.h.b16 %v99
  %v512 = vunpack.c.l.b16 %v100
  %v513 = vunpack.c.h.b16 %v100
  %v514 = vunpack.c.l.b16 %v101
  %v515 = vunpack.c.h.b16 %v101
  %v516 = vunpack.c.l.b16 %v102
  %v517 = vunpack.c.h.b16 %v102
  %v518 = vunpack.c.l.b16 %v103
  %v519 = vunpack.c.h.b16 %v103
  %v520 = vunpack.c.l.b16 %v104
  %v521 = vunpack.c.h.b16 %v104
  %v522 = vunpack.c.l.b16 %v105
  %v523 = vunpack.c.h.b16 %v105
  %v524 = vunpack.c.l.b16 %v106
  %v525 = vunpack.c.h.b16 %v106
  %v526 = vunpack.c.l.b16 %v107
  %v527 = vunpack.c.h.b16 %v107
  %v528 = vunpack.c.l.b16 %v108
  %v529 = vunpack.c.h.b16 %v108
  %v530 = vunpack.c.l.b16 %v109
  %v531 = vunpack.c.h.b16 %v109
  %v532 = vunpack.c.l.b16 %v110
  %v533 = vunpack.c.h.b16 %v110
  %v534 = vunpack.c.l.b16 %v111
  %v535 = vunpack.c.h.b16 %v111
  %v536 = vunpack.c.l.b16 %v112
  %v537 = vunpack.c.h.b16 %v112
  %v538 = vunpack.c.l.b16 %v113
  %v539 = vunpack.c.h.b16 %v113
  %v540 = vunpack.c.l.b16 %v114
  %v541 = vunpack.c.h.b16 %v114
  %v542 = vunpack.c.l.b16 %v115
  %v543 = vunpack.c.h.b16 %v115
  %v544 = vunpack.c.l.b16 %v116
  %v545 = vunpack.c.h.b16 %v116
  %v546 = vunpack.c.l.b16 %v117
  %v547 = vunpack.c.h.b16 %v117
  %v548 = vunpack.c.l.b16 %v118
  %v549 = vunpack.c.h.b16 %v118
  %v550 = vunpack.c.l.b16 %v119
  %v551 = vunpack.c.h.b16 %v119
  %v552 = vunpack.c.l.b16 %v120
  %v553 = vunpack.c.h.b16 %v120
  %v554 = vunpack.c.l.b16 %v121
  %v555 = vunpack.c.h.b16 %v121
  %v556 = vunpack.c.l.b16 %v122
  %v557 = vunpack.c.h.b16 %v122
  %v558 = vunpack.c.l.b16 %v123
  %v559 = vunpack.c.h.b16 %v123
  %v560 = vunpack.c.l.b16 %v124
  %v561 = vunpack.c.h.b16 %v124
  %v562 = vunpack.c.l.b16 %v125
  %v563 = vunpack.c.h.b16 %v125
  %v564 = vunpack.c.l.b16 %v126
  %v565 = vunpack.c.h.b16 %v126
  %v566 = vunpack.c.l.b16 %v127
  %v567 = vunpack.c.h.b16 %v127
  %v568 = vunpack.c.l.b16 %v128
  %v569 = vunpack.c.h.b16 %v128
  %v570 = vunpack.c.l.b16 %v129
  %v571 = vunpack.c.h.b16 %v129
  %v572 = vunpack.c.l.b16 %v130
  %v573 = vunpack.c.h.b16 %v130
  %v574 = vunpack.c.l.b16 %v131
  %v575 = vunpack.c.h.b16 %v131
  %v576 = vunpack.c.l.b16 %v132
  %v577 = vunpack.c.h.b16 %v132
  %v578 = vunpack.c.l.b16 %v133
  %v579 = vunpack.c.h.b16 %v133
  %v580 = vunpack.c.l.b16 %v134
  %v581 = vunpack.c.h.b16 %v134
  %v582 = vunpack.c.l.b16 %v135
  %v583 = vunpack.c.h.b16 %v135
  %v584 = vunpack.c.l.b16 %v136
  %v585 = vunpack.c.h.b16 %v136
  %v586 = vunpack.c.l.b16 %v137
  %v587 = vunpack.c.h.b16 %v137
  %v588 = vunpack.c.l.b16 %v138
  %v589 = vunpack.c.h.b16 %v138
  %v590 = vunpack.c.l.b16 %v139
  %v591 = vunpack.c.h.b16 %v139
  %v592 = vunpack.c.l.b16 %v140
  %v593 = vunpack.c.h.b16 %v140
  %v594 = vunpack.c.l.b16 %v141
  %v595 = vunpack.c.h.b16 %v141
  %v596 = vunpack.c.l.b16 %v142
  %v597 = vunpack.c.h.b16 %v142
  %v598 = vpack.c.b16 %v346, %v342
  %v599 = vpack.c.b16 %v347, %v343
  %v600 = vpack.c.b16 %v348, %v344
  %v601 = vpack.c.b16 %v349, %v345
  %v602 = vpack.c.b16 %v354, %v350
  %v603 = vpack.c.b16 %v355, %v351
  %v604 = vpack.c.b16 %v356, %v352
  %v605 = vpack.c.b16 %v357, %v353
  %v606 = vpack.c.b16 %v362, %v358
  %v607 = vpack.c.b16 %v363, %v359
  %v608 = vpack.c.b16 %v364, %v360
  %v609 = vpack.c.b16 %v365, %v361
  %v610 = vpack.c.b16 %v370, %v366
  %v611 = vpack.c.b16 %v371, %v367
  %v612 = vpack.c.b16 %v372, %v368
  %v613 = vpack.c.b16 %v373, %v369
  %v614 = vpack.c.b16 %v378, %v374
  %v615 = vpack.c.b16 %v379, %v375
  %v616 = vpack.c.b16 %v380, %v376
  %v617 = vpack.c.b16 %v381, %v377
  %v618 = vpack.c.b16 %v386, %v382
  %v619 = vpack.c.b16 %v387, %v383
  %v620 = vpack.c.b16 %v388, %v384
  %v621 = vpack.c.b16 %v389, %v385
  %v622 = vpack.c.b16 %v394, %v390
  %v623 = vpack.c.b16 %v395, %v391
  %v624 = vpack.c.b16 %v396, %v392
  %v625 = vpack.c.b16 %v397, %v393
  %v626 = vpack.c.b16 %v402, %v398
  %v627 = vpack.c.b16 %v403, %v399
  %v628 = vpack.c.b16 %v404, %v400
  %v629 = vpack.c.b16 %v405, %v401
  %v630 = vpack.c.b16 %v410, %v406
  %v631 = vpack.c.b16 %v411, %v407
  %v632 = vpack.c.b16 %v412, %v408
  %v633 = vpack.c.b16 %v413, %v409
  %v634 = vpack.c.b16 %v418, %v414
  %v635 = vpack.c.b16 %v419, %v415
  %v636 = vpack.c.b16 %v420, %v416
  %v637 = vpack.c.b16 %v421, %v417
  %v638 = vpack.c.b16 %v426, %v422
  %v639 = vpack.c.b16 %v427, %v423
  %v640 = vpack.c.b16 %v428, %v424
  %v641 = vpack.c.b16 %v429, %v425
  %v642 = vpack.c.b16 %v434, %v430
  %v643 = vpack.c.b16 %v435, %v431
  %v644 = vpack.c.b16 %v436, %v432
  %v645 = vpack.c.b16 %v437, %v433
  %v646 = vpack.c.b16 %v442, %v438
  %v647 = vpack.c.b16 %v443, %v439
  %v648 = vpack.c.b16 %v444, %v440
  %v649 = vpack.c.b16 %v445, %v441
  %v650 = vpack.c.b16 %v450, %v446
  %v651 = vpack.c.b16 %v451, %v447
  %v652 = vpack.c.b16 %v452, %v448
  %v653 = vpack.c.b16 %v453, %v449
  %v654 = vpack.c.b16 %v458, %v454
  %v655 = vpack.c.b16 %v459, %v455
  %v656 = vpack.c.b16 %v460, %v456
  %v657 = vpack.c.b16 %v461, %v457
  %v658 = vpack.c.b16 %v466, %v462
  %v659 = vpack.c.b16 %v467, %v463
  %v660 = vpack.c.b16 %v468, %v464
  %v661 = vpack.c.b16 %v469, %v465
  %v662 = vpack.c.b16 %v474, %v470
  %v663 = vpack.c.b16 %v475, %v471
  %v664 = vpack.c.b16 %v476, %v472
  %v665 = vpack.c.b16 %v477, %v473
  %v666 = vpack.c.b16 %v482, %v478
  %v667 = vpack.c.b16 %v483, %v479
  %v668 = vpack.c.b16 %v484, %v480
  %v669 = vpack.c.b16 %v485, %v481
  %v670 = vpack.c.b16 %v490, %v486
  %v671 = vpack.c.b16 %v491, %v487
  %v672 = vpack.c.b16 %v492, %v488
  %v673 = vpack.c.b16 %v493, %v489
  %v674 = vpack.c.b16 %v498, %v494
  %v675 = vpack.c.b16 %v499, %v495
  %v676 = vpack.c.b16 %v500, %v496
  %v677 = vpack.c.b16 %v501, %v497
  %v678 = vpack.c.b16 %v506, %v502
  %v679 = vpack.c.b16 %v507, %v503
  %v680 = vpack.c.b16 %v508, %v504
  %v681 = vpack.c.b16 %v509, %v505
  %v682 = vpack.c.b16 %v514, %v510
  %v683 = vpack.c.b16 %v515, %v511
  %v684 = vpack.c.b16 %v516, %v512
  %v685 = vpack.c.b16 %v517, %v513
  %v686 = vpack.c.b16 %v522, %v518
  %v687 = vpack.c.b16 %v523, %v519
  %v688 = vpack.c.b16 %v524, %v520
  %v689 = vpack.c.b16 %v525, %v521
  %v690 = vpack.c.b16 %v530, %v526
  %v691 = vpack.c.b16 %v531, %v527
  %v692 = vpack.c.b16 %v532, %v528
  %v693 = vpack.c.b16 %v533, %v529
  %v694 = vpack.c.b16 %v538, %v534
  %v695 = vpack.c.b16 %v539, %v535
  %v696 = vpack.c.b16 %v540, %v536
  %v697 = vpack.c.b16 %v541, %v537
  %v698 = vpack.c.b16 %v546, %v542
  %v699 = vpack.c.b16 %v547, %v543
  %v700 = vpack.c.b16 %v548, %v544
  %v701 = vpack.c.b16 %v549, %v545
  %v702 = vpack.c.b16 %v554, %v550
  %v703 = vpack.c.b16 %v555, %v551
  %v704 = vpack.c.b16 %v556, %v552
  %v705 = vpack.c.b16 %v557, %v553
  %v706 = vpack.c.b16 %v562, %v558
  %v707 = vpack.c.b16 %v563, %v559
  %v708 = vpack.c.b16 %v564, %v560
  %v709 = vpack.c.b16 %v565, %v561
  %v710 = vpack.c.b16 %v570, %v566
  %v711 = vpack.c.b16 %v571, %v567
  %v712 = vpack.c.b16 %v572, %v568
  %v713 = vpack.c.b16 %v573, %v569
  %v714 = vpack.c.b16 %v578, %v574
  %v715 = vpack.c.b16 %v579, %v575
  %v716 = vpack.c.b16 %v580, %v576
  %v717 = vpack.c.b16 %v581, %v577
  %v718 = vpack.c.b16 %v586, %v582
  %v719 = vpack.c.b16 %v587, %v583
  %v720 = vpack.c.b16 %v588, %v584
  %v721 = vpack.c.b16 %v589, %v585
  %v722 = vpack.c.b16 %v594, %v590
  %v723 = vpack.c.b16 %v595, %v591
  %v724 = vpack.c.b16 %v596, %v592
  %v725 = vpack.c.b16 %v597, %v593
  %v918 = vunpack.c.l.b16 %v143
  %v919 = vunpack.c.l.b16 %v144
  %v920 = vunpack.c.l.b16 %v145
  %v921 = vunpack.c.l.b16 %v146
  %v922 = vunpack.c.l.b16 %v147
  %v923 = vunpack.c.l.b16 %v148
  %v924 = vunpack.c.l.b16 %v149
  %v925 = vunpack.c.l.b16 %v150
  %v926 = vunpack.c.l.b16 %v151
  %v927 = vunpack.c.l.b16 %v152
  %v928 = vunpack.c.l.b16 %v153
  %v929 = vunpack.c.l.b16 %v154
  %v930 = vunpack.c.l.b16 %v155
  %v931 = vunpack.c.l.b16 %v156
  %v932 = vunpack.c.l.b16 %v157
  %v933 = vunpack.c.l.b16 %v158
  %v934 = vunpack.c.l.b16 %v159
  %v935 = vunpack.c.l.b16 %v160
  %v936 = vunpack.c.l.b16 %v161
  %v937 = vunpack.c.l.b16 %v162
  %v938 = vunpack.c.l.b16 %v163
  %v939 = vunpack.c.l.b16 %v164
  %v940 = vunpack.c.l.b16 %v165
  %v941 = vunpack.c.l.b16 %v166
  %v942 = vunpack.c.l.b16 %v167
  %v943 = vunpack.c.l.b16 %v168
  %v944 = vunpack.c.l.b16 %v169
  %v945 = vunpack.c.l.b16 %v170
  %v946 = vunpack.c.l.b16 %v171
  %v947 = vunpack.c.l.b16 %v172
  %v948 = vunpack.c.l.b16 %v173
  %v949 = vunpack.c.l.b16 %v174
  %v950 = vunpack.c.l.b16 %v175
  %v951 = vunpack.c.l.b16 %v176
  %v952 = vunpack.c.l.b16 %v177
  %v953 = vunpack.c.l.b16 %v178
  %v954 = vunpack.c.l.b16 %v179
  %v955 = vunpack.c.l.b16 %v180
  %v956 = vunpack.c.l.b16 %v181
  %v957 = vunpack.c.l.b16 %v182
  %v958 = vunpack.c.l.b16 %v183
  %v959 = vunpack.c.l.b16 %v184
  %v960 = vunpack.c.l.b16 %v185
  %v961 = vunpack.c.l.b16 %v186
  %v962 = vunpack.c.l.b16 %v187
  %v963 = vunpack.c.l.b16 %v188
  %v964 = vunpack.c.l.b16 %v189
  %v965 = vunpack.c.l.b16 %v190
  %v966 = vunpack.c.l.b16 %v191
  %v967 = vunpack.c.l.b16 %v192
  %v968 = vunpack.c.l.b16 %v193
  %v969 = vunpack.c.l.b16 %v194
  %v970 = vunpack.c.l.b16 %v195
  %v971 = vunpack.c.l.b16 %v196
  %v972 = vunpack.c.l.b16 %v197
  %v973 = vunpack.c.l.b16 %v198
  %v974 = vunpack.c.l.b16 %v199
  %v975 = vunpack.c.l.b16 %v200
  %v976 = vunpack.c.l.b16 %v201
  %v977 = vunpack.c.l.b16 %v202
  %v978 = vunpack.c.l.b16 %v203
  %v979 = vunpack.c.l.b16 %v204
  %v980 = vunpack.c.l.b16 %v205
  %v981 = vunpack.c.l.b16 %v206
  %v982 = vpack.c.b16 %v919, %v918
  %v983 = vpack.c.b16 %v921, %v920
  %v984 = vpack.c.b16 %v923, %v922
  %v985 = vpack.c.b16 %v925, %v924
  %v986 = vpack.c.b16 %v927, %v926
  %v987 = vpack.c.b16 %v929, %v928
  %v988 = vpack.c.b16 %v931, %v930
  %v989 = vpack.c.b16 %v933, %v932
  %v990 = vpack.c.b16 %v935, %v934
  %v991 = vpack.c.b16 %v937, %v936
  %v992 = vpack.c.b16 %v939, %v938
  %v993 = vpack.c.b16 %v941, %v940
  %v994 = vpack.c.b16 %v943, %v942
  %v995 = vpack.c.b16 %v945, %v944
  %v996 = vpack.c.b16 %v947, %v946
  %v997 = vpack.c.b16 %v949, %v948
  %v998 = vpack.c.b16 %v951, %v950
  %v999 = vpack.c.b16 %v953, %v952
  %v1000 = vpack.c.b16 %v955, %v954
  %v1001 = vpack.c.b16 %v957, %v956
  %v1002 = vpack.c.b16 %v959, %v958
  %v1003 = vpack.c.b16 %v961, %v960
  %v1004 = vpack.c.b16 %v963, %v962
  %v1005 = vpack.c.b16 %v965, %v964
  %v1006 = vpack.c.b16 %v967, %v966
  %v1007 = vpack.c.b16 %v969, %v968
  %v1008 = vpack.c.b16 %v971, %v970
  %v1009 = vpack.c.b16 %v973, %v972
  %v1010 = vpack.c.b16 %v975, %v974
  %v1011 = vpack.c.b16 %v977, %v976
  %v1012 = vpack.c.b16 %v979, %v978
  %v1013 = vpack.c.b16 %v981, %v980
  %1046 = vmatprep.subr.bf16.mxu0 0
  %1047 = vmatpush1.bf16.msra.mxu0 %v982
  %1048 = vmatprep.subr.bf16.mxu0 0
  %1049 = vmatpush1.bf16.msra.mxu0 %v983
  %1050 = vmatprep.subr.bf16.mxu0 0
  %1051 = vmatpush1.bf16.msra.mxu0 %v984
  %1052 = vmatprep.subr.bf16.mxu0 0
  %1053 = vmatpush1.bf16.msra.mxu0 %v985
  %1054 = vmatprep.subr.bf16.mxu0 0
  %1055 = vmatpush1.bf16.msra.mxu0 %v986
  %1056 = vmatprep.subr.bf16.mxu0 0
  %1057 = vmatpush1.bf16.msra.mxu0 %v987
  %1058 = vmatprep.subr.bf16.mxu0 0
  %1059 = vmatpush1.bf16.msra.mxu0 %v988
  %1060 = vmatprep.subr.bf16.mxu0 0
  %1061 = vmatpush1.bf16.msra.mxu0 %v989
  %1062 = vmatprep.subr.bf16.mxu0 0
  %1063 = vmatpush1.bf16.msra.mxu0 %v990
  %1064 = vmatprep.subr.bf16.mxu0 0
  %1065 = vmatpush1.bf16.msra.mxu0 %v991
  %1066 = vmatprep.subr.bf16.mxu0 0
  %1067 = vmatpush1.bf16.msra.mxu0 %v992
  %1068 = vmatprep.subr.bf16.mxu0 0
  %1069 = vmatpush1.bf16.msra.mxu0 %v993
  %1070 = vmatprep.subr.bf16.mxu0 0
  %1071 = vmatpush1.bf16.msra.mxu0 %v994
  %1072 = vmatprep.subr.bf16.mxu0 0
  %1073 = vmatpush1.bf16.msra.mxu0 %v995
  %1074 = vmatprep.subr.bf16.mxu0 0
  %1075 = vmatpush1.bf16.msra.mxu0 %v996
  %1076 = vmatprep.subr.bf16.mxu0 0
  %1077 = vmatpush1.bf16.msra.mxu0 %v997
  %1078 = vmatprep.mubr.bf16.mxu0 %v599
  %1079 = vmatmul.mubr.bf16.gmra.mrb[0].mxu0 %v598
  %v1080 = vpop.f32.mrb[0].mxu0
  %v1081 = vadd.f32 %v212, %v1080
  %v1082 = vpop.f32.mrb[0].mxu0
  %v1083 = vpop.f32.mrb[0].mxu0
  %v1084 = vadd.f32 %v212, %v1083
  %v1085 = vpop.f32.mrb[0].mxu0
  %1086 = vmatprep.mubr.bf16.mxu0 %v603
  %1087 = vmatmul.mubr.bf16.gmra.mrb[0].mxu0 %v602
  %v1088 = vpop.f32.mrb[0].mxu0
  %v1089 = vadd.f32 %v212, %v1088
  %v1090 = vpop.f32.mrb[0].mxu0
  %v1091 = vpop.f32.mrb[0].mxu0
  %v1092 = vadd.f32 %v212, %v1091
  %v1093 = vpop.f32.mrb[0].mxu0
  %1094 = vmatprep.mubr.bf16.mxu0 %v607
  %1095 = vmatmul.mubr.bf16.gmra.mrb[0].mxu0 %v606
  %v1096 = vpop.f32.mrb[0].mxu0
  %v1097 = vadd.f32 %v212, %v1096
  %v1098 = vpop.f32.mrb[0].mxu0
  %v1099 = vpop.f32.mrb[0].mxu0
  %v1100 = vadd.f32 %v212, %v1099
  %v1101 = vpop.f32.mrb[0].mxu0
  %1102 = vmatprep.mubr.bf16.mxu0 %v611
  %1103 = vmatmul.mubr.bf16.gmra.mrb[0].mxu0 %v610
  %v1104 = vpop.f32.mrb[0].mxu0
  %v1105 = vadd.f32 %v212, %v1104
  %v1106 = vpop.f32.mrb[0].mxu0
  %v1107 = vpop.f32.mrb[0].mxu0
  %v1108 = vadd.f32 %v212, %v1107
  %v1109 = vpop.f32.mrb[0].mxu0
  %1110 = vmatprep.mubr.bf16.mxu0 %v615
  %1111 = vmatmul.mubr.bf16.gmra.mrb[0].mxu0 %v614
  %v1112 = vpop.f32.mrb[0].mxu0
  %v1113 = vadd.f32 %v212, %v1112
  %v1114 = vpop.f32.mrb[0].mxu0
  %v1115 = vpop.f32.mrb[0].mxu0
  %v1116 = vadd.f32 %v212, %v1115
  %v1117 = vpop.f32.mrb[0].mxu0
  %1118 = vmatprep.mubr.bf16.mxu0 %v619
  %1119 = vmatmul.mubr.bf16.gmra.mrb[0].mxu0 %v618
  %v1120 = vpop.f32.mrb[0].mxu0
  %v1121 = vadd.f32 %v212, %v1120
  %v1122 = vpop.f32.mrb[0].mxu0
  %v1123 = vpop.f32.mrb[0].mxu0
  %v1124 = vadd.f32 %v212, %v1123
  %v1125 = vpop.f32.mrb[0].mxu0
  %1126 = vmatprep.mubr.bf16.mxu0 %v623
  %1127 = vmatmul.mubr.bf16.gmra.mrb[0].mxu0 %v622
  %v1128 = vpop.f32.mrb[0].mxu0
  %v1129 = vadd.f32 %v212, %v1128
  %v1130 = vpop.f32.mrb[0].mxu0
  %v1131 = vpop.f32.mrb[0].mxu0
  %v1132 = vadd.f32 %v212, %v1131
  %v1133 = vpop.f32.mrb[0].mxu0
  %1134 = vmatprep.mubr.bf16.mxu0 %v627
  %1135 = vmatmul.mubr.bf16.gmra.mrb[0].mxu0 %v626
  %v1136 = vpop.f32.mrb[0].mxu0
  %v1137 = vadd.f32 %v212, %v1136
  %v1138 = vpop.f32.mrb[0].mxu0
  %v1139 = vpop.f32.mrb[0].mxu0
  %v1140 = vadd.f32 %v212, %v1139
  %v1141 = vpop.f32.mrb[0].mxu0
  %1142 = vmatprep.mubr.bf16.mxu0 %v631
  %1143 = vmatmul.mubr.bf16.gmra.mrb[0].mxu0 %v630
  %v1144 = vpop.f32.mrb[0].mxu0
  %v1145 = vadd.f32 %v212, %v1144
  %v1146 = vpop.f32.mrb[0].mxu0
  %v1147 = vpop.f32.mrb[0].mxu0
  %v1148 = vadd.f32 %v212, %v1147
  %v1149 = vpop.f32.mrb[0].mxu0
  %1150 = vmatprep.mubr.bf16.mxu0 %v635
  %1151 = vmatmul.mubr.bf16.gmra.mrb[0].mxu0 %v634
  %v1152 = vpop.f32.mrb[0].mxu0
  %v1153 = vadd.f32 %v212, %v1152
  %v1154 = vpop.f32.mrb[0].mxu0
  %v1155 = vpop.f32.mrb[0].mxu0
  %v1156 = vadd.f32 %v212, %v1155
  %v1157 = vpop.f32.mrb[0].mxu0
  %1158 = vmatprep.mubr.bf16.mxu0 %v639
  %1159 = vmatmul.mubr.bf16.gmra.mrb[0].mxu0 %v638
  %v1160 = vpop.f32.mrb[0].mxu0
  %v1161 = vadd.f32 %v212, %v1160
  %v1162 = vpop.f32.mrb[0].mxu0
  %v1163 = vpop.f32.mrb[0].mxu0
  %v1164 = vadd.f32 %v212, %v1163
  %v1165 = vpop.f32.mrb[0].mxu0
  %1166 = vmatprep.mubr.bf16.mxu0 %v643
  %1167 = vmatmul.mubr.bf16.gmra.mrb[0].mxu0 %v642
  %v1168 = vpop.f32.mrb[0].mxu0
  %v1169 = vadd.f32 %v212, %v1168
  %v1170 = vpop.f32.mrb[0].mxu0
  %v1171 = vpop.f32.mrb[0].mxu0
  %v1172 = vadd.f32 %v212, %v1171
  %v1173 = vpop.f32.mrb[0].mxu0
  %1174 = vmatprep.mubr.bf16.mxu0 %v647
  %1175 = vmatmul.mubr.bf16.gmra.mrb[0].mxu0 %v646
  %v1176 = vpop.f32.mrb[0].mxu0
  %v1177 = vadd.f32 %v212, %v1176
  %v1178 = vpop.f32.mrb[0].mxu0
  %v1179 = vpop.f32.mrb[0].mxu0
  %v1180 = vadd.f32 %v212, %v1179
  %v1181 = vpop.f32.mrb[0].mxu0
  %1182 = vmatprep.mubr.bf16.mxu0 %v651
  %1183 = vmatmul.mubr.bf16.gmra.mrb[0].mxu0 %v650
  %v1184 = vpop.f32.mrb[0].mxu0
  %v1185 = vadd.f32 %v212, %v1184
  %v1186 = vpop.f32.mrb[0].mxu0
  %v1187 = vpop.f32.mrb[0].mxu0
  %v1188 = vadd.f32 %v212, %v1187
  %v1189 = vpop.f32.mrb[0].mxu0
  %1190 = vmatprep.mubr.bf16.mxu0 %v655
  %1191 = vmatmul.mubr.bf16.gmra.mrb[0].mxu0 %v654
  %v1192 = vpop.f32.mrb[0].mxu0
  %v1193 = vadd.f32 %v212, %v1192
  %v1194 = vpop.f32.mrb[0].mxu0
  %v1195 = vpop.f32.mrb[0].mxu0
  %v1196 = vadd.f32 %v212, %v1195
  %v1197 = vpop.f32.mrb[0].mxu0
  %1198 = vmatprep.mubr.bf16.mxu0 %v659
  %1199 = vmatmul.mubr.bf16.gmra.mrb[0].mxu0 %v658
  %v1200 = vpop.f32.mrb[0].mxu0
  %v1201 = vadd.f32 %v212, %v1200
  %v1202 = vpop.f32.mrb[0].mxu0
  %v1203 = vpop.f32.mrb[0].mxu0
  %v1204 = vadd.f32 %v212, %v1203
  %v1205 = vpop.f32.mrb[0].mxu0
  %1206 = vmatprep.mubr.bf16.mxu0 %v663
  %1207 = vmatmul.mubr.bf16.gmra.mrb[0].mxu0 %v662
  %v1208 = vpop.f32.mrb[0].mxu0
  %v1209 = vadd.f32 %v212, %v1208
  %v1210 = vpop.f32.mrb[0].mxu0
  %v1211 = vpop.f32.mrb[0].mxu0
  %v1212 = vadd.f32 %v212, %v1211
  %v1213 = vpop.f32.mrb[0].mxu0
  %1214 = vmatprep.mubr.bf16.mxu0 %v667
  %1215 = vmatmul.mubr.bf16.gmra.mrb[0].mxu0 %v666
  %v1216 = vpop.f32.mrb[0].mxu0
  %v1217 = vadd.f32 %v212, %v1216
  %v1218 = vpop.f32.mrb[0].mxu0
  %v1219 = vpop.f32.mrb[0].mxu0
  %v1220 = vadd.f32 %v212, %v1219
  %v1221 = vpop.f32.mrb[0].mxu0
  %1222 = vmatprep.mubr.bf16.mxu0 %v671
  %1223 = vmatmul.mubr.bf16.gmra.mrb[0].mxu0 %v670
  %v1224 = vpop.f32.mrb[0].mxu0
  %v1225 = vadd.f32 %v212, %v1224
  %v1226 = vpop.f32.mrb[0].mxu0
  %v1227 = vpop.f32.mrb[0].mxu0
  %v1228 = vadd.f32 %v212, %v1227
  %v1229 = vpop.f32.mrb[0].mxu0
  %1230 = vmatprep.mubr.bf16.mxu0 %v675
  %1231 = vmatmul.mubr.bf16.gmra.mrb[0].mxu0 %v674
  %v1232 = vpop.f32.mrb[0].mxu0
  %v1233 = vadd.f32 %v212, %v1232
  %v1234 = vpop.f32.mrb[0].mxu0
  %v1235 = vpop.f32.mrb[0].mxu0
  %v1236 = vadd.f32 %v212, %v1235
  %v1237 = vpop.f32.mrb[0].mxu0
  %1238 = vmatprep.mubr.bf16.mxu0 %v679
  %1239 = vmatmul.mubr.bf16.gmra.mrb[0].mxu0 %v678
  %v1240 = vpop.f32.mrb[0].mxu0
  %v1241 = vadd.f32 %v212, %v1240
  %v1242 = vpop.f32.mrb[0].mxu0
  %v1243 = vpop.f32.mrb[0].mxu0
  %v1244 = vadd.f32 %v212, %v1243
  %v1245 = vpop.f32.mrb[0].mxu0
  %1246 = vmatprep.mubr.bf16.mxu0 %v683
  %1247 = vmatmul.mubr.bf16.gmra.mrb[0].mxu0 %v682
  %v1248 = vpop.f32.mrb[0].mxu0
  %v1249 = vadd.f32 %v212, %v1248
  %v1250 = vpop.f32.mrb[0].mxu0
  %v1251 = vpop.f32.mrb[0].mxu0
  %v1252 = vadd.f32 %v212, %v1251
  %v1253 = vpop.f32.mrb[0].mxu0
  %1254 = vmatprep.mubr.bf16.mxu0 %v687
  %1255 = vmatmul.mubr.bf16.gmra.mrb[0].mxu0 %v686
  %v1256 = vpop.f32.mrb[0].mxu0
  %v1257 = vadd.f32 %v212, %v1256
  %v1258 = vpop.f32.mrb[0].mxu0
  %v1259 = vpop.f32.mrb[0].mxu0
  %v1260 = vadd.f32 %v212, %v1259
  %v1261 = vpop.f32.mrb[0].mxu0
  %1262 = vmatprep.mubr.bf16.mxu0 %v691
  %1263 = vmatmul.mubr.bf16.gmra.mrb[0].mxu0 %v690
  %v1264 = vpop.f32.mrb[0].mxu0
  %v1265 = vadd.f32 %v212, %v1264
  %v1266 = vpop.f32.mrb[0].mxu0
  %v1267 = vpop.f32.mrb[0].mxu0
  %v1268 = vadd.f32 %v212, %v1267
  %v1269 = vpop.f32.mrb[0].mxu0
  %1270 = vmatprep.mubr.bf16.mxu0 %v695
  %1271 = vmatmul.mubr.bf16.gmra.mrb[0].mxu0 %v694
  %v1272 = vpop.f32.mrb[0].mxu0
  %v1273 = vadd.f32 %v212, %v1272
  %v1274 = vpop.f32.mrb[0].mxu0
  %v1275 = vpop.f32.mrb[0].mxu0
  %v1276 = vadd.f32 %v212, %v1275
  %v1277 = vpop.f32.mrb[0].mxu0
  %1278 = vmatprep.mubr.bf16.mxu0 %v699
  %1279 = vmatmul.mubr.bf16.gmra.mrb[0].mxu0 %v698
  %v1280 = vpop.f32.mrb[0].mxu0
  %v1281 = vadd.f32 %v212, %v1280
  %v1282 = vpop.f32.mrb[0].mxu0
  %v1283 = vpop.f32.mrb[0].mxu0
  %v1284 = vadd.f32 %v212, %v1283
  %v1285 = vpop.f32.mrb[0].mxu0
  %1286 = vmatprep.mubr.bf16.mxu0 %v703
  %1287 = vmatmul.mubr.bf16.gmra.mrb[0].mxu0 %v702
  %v1288 = vpop.f32.mrb[0].mxu0
  %v1289 = vadd.f32 %v212, %v1288
  %v1290 = vpop.f32.mrb[0].mxu0
  %v1291 = vpop.f32.mrb[0].mxu0
  %v1292 = vadd.f32 %v212, %v1291
  %v1293 = vpop.f32.mrb[0].mxu0
  %1294 = vmatprep.mubr.bf16.mxu0 %v707
  %1295 = vmatmul.mubr.bf16.gmra.mrb[0].mxu0 %v706
  %v1296 = vpop.f32.mrb[0].mxu0
  %v1297 = vadd.f32 %v212, %v1296
  %v1298 = vpop.f32.mrb[0].mxu0
  %v1299 = vpop.f32.mrb[0].mxu0
  %v1300 = vadd.f32 %v212, %v1299
  %v1301 = vpop.f32.mrb[0].mxu0
  %1302 = vmatprep.mubr.bf16.mxu0 %v711
  %1303 = vmatmul.mubr.bf16.gmra.mrb[0].mxu0 %v710
  %v1304 = vpop.f32.mrb[0].mxu0
  %v1305 = vadd.f32 %v212, %v1304
  %v1306 = vpop.f32.mrb[0].mxu0
  %v1307 = vpop.f32.mrb[0].mxu0
  %v1308 = vadd.f32 %v212, %v1307
  %v1309 = vpop.f32.mrb[0].mxu0
  %1310 = vmatprep.mubr.bf16.mxu0 %v715
  %1311 = vmatmul.mubr.bf16.gmra.mrb[0].mxu0 %v714
  %v1312 = vpop.f32.mrb[0].mxu0
  %v1313 = vadd.f32 %v212, %v1312
  %v1314 = vpop.f32.mrb[0].mxu0
  %v1315 = vpop.f32.mrb[0].mxu0
  %v1316 = vadd.f32 %v212, %v1315
  %v1317 = vpop.f32.mrb[0].mxu0
  %1318 = vmatprep.mubr.bf16.mxu0 %v719
  %1319 = vmatmul.mubr.bf16.gmra.mrb[0].mxu0 %v718
  %v1320 = vpop.f32.mrb[0].mxu0
  %v1321 = vadd.f32 %v212, %v1320
  %v1322 = vpop.f32.mrb[0].mxu0
  %v1323 = vpop.f32.mrb[0].mxu0
  %v1324 = vadd.f32 %v212, %v1323
  %v1325 = vpop.f32.mrb[0].mxu0
  %1326 = vmatprep.mubr.bf16.mxu0 %v723
  %1327 = vmatmul.mubr.bf16.gmra.mrb[0].mxu0 %v722
  %v1328 = vpop.f32.mrb[0].mxu0
  %v1329 = vadd.f32 %v212, %v1328
  %v1330 = vpop.f32.mrb[0].mxu0
  %v1331 = vpop.f32.mrb[0].mxu0
  %v1332 = vadd.f32 %v212, %v1331
  %v1333 = vpop.f32.mrb[0].mxu0
  %1334 = vdwg.mxu0
  %1335 = vmatprep.subr.bf16.mxu0 0
  %1336 = vmatpush1.bf16.msra.mxu0 %v998
  %1337 = vmatprep.subr.bf16.mxu0 0
  %1338 = vmatpush1.bf16.msra.mxu0 %v999
  %1339 = vmatprep.subr.bf16.mxu0 0
  %1340 = vmatpush1.bf16.msra.mxu0 %v1000
  %1341 = vmatprep.subr.bf16.mxu0 0
  %1342 = vmatpush1.bf16.msra.mxu0 %v1001
  %1343 = vmatprep.subr.bf16.mxu0 0
  %1344 = vmatpush1.bf16.msra.mxu0 %v1002
  %1345 = vmatprep.subr.bf16.mxu0 0
  %1346 = vmatpush1.bf16.msra.mxu0 %v1003
  %1347 = vmatprep.subr.bf16.mxu0 0
  %1348 = vmatpush1.bf16.msra.mxu0 %v1004
  %1349 = vmatprep.subr.bf16.mxu0 0
  %1350 = vmatpush1.bf16.msra.mxu0 %v1005
  %1351 = vmatprep.subr.bf16.mxu0 0
  %1352 = vmatpush1.bf16.msra.mxu0 %v1006
  %1353 = vmatprep.subr.bf16.mxu0 0
  %1354 = vmatpush1.bf16.msra.mxu0 %v1007
  %1355 = vmatprep.subr.bf16.mxu0 0
  %1356 = vmatpush1.bf16.msra.mxu0 %v1008
  %1357 = vmatprep.subr.bf16.mxu0 0
  %1358 = vmatpush1.bf16.msra.mxu0 %v1009
  %1359 = vmatprep.subr.bf16.mxu0 0
  %1360 = vmatpush1.bf16.msra.mxu0 %v1010
  %1361 = vmatprep.subr.bf16.mxu0 0
  %1362 = vmatpush1.bf16.msra.mxu0 %v1011
  %1363 = vmatprep.subr.bf16.mxu0 0
  %1364 = vmatpush1.bf16.msra.mxu0 %v1012
  %1365 = vmatprep.subr.bf16.mxu0 0
  %1366 = vmatpush1.bf16.msra.mxu0 %v1013
  %1367 = vmatprep.mubr.bf16.mxu0 %v601
  %1368 = vmatmul.mubr.bf16.gmra.mrb[0].mxu0 %v600
  %v1369 = vpop.f32.mrb[0].mxu0
  %v1370 = vadd.f32 %v1081, %v1369
  %v1371 = vpop.f32.mrb[0].mxu0
  %v1372 = vpop.f32.mrb[0].mxu0
  %v1373 = vadd.f32 %v1084, %v1372
  %v1374 = vpop.f32.mrb[0].mxu0
  %1375 = vmatprep.mubr.bf16.mxu0 %v605
  %1376 = vmatmul.mubr.bf16.gmra.mrb[0].mxu0 %v604
  %v1377 = vpop.f32.mrb[0].mxu0
  %v1378 = vadd.f32 %v1089, %v1377
  %v1379 = vpop.f32.mrb[0].mxu0
  %v1380 = vpop.f32.mrb[0].mxu0
  %v1381 = vadd.f32 %v1092, %v1380
  %v1382 = vpop.f32.mrb[0].mxu0
  %1383 = vmatprep.mubr.bf16.mxu0 %v609
  %1384 = vmatmul.mubr.bf16.gmra.mrb[0].mxu0 %v608
  %v1385 = vpop.f32.mrb[0].mxu0
  %v1386 = vadd.f32 %v1097, %v1385
  %v1387 = vpop.f32.mrb[0].mxu0
  %v1388 = vpop.f32.mrb[0].mxu0
  %v1389 = vadd.f32 %v1100, %v1388
  %v1390 = vpop.f32.mrb[0].mxu0
  %1391 = vmatprep.mubr.bf16.mxu0 %v613
  %1392 = vmatmul.mubr.bf16.gmra.mrb[0].mxu0 %v612
  %v1393 = vpop.f32.mrb[0].mxu0
  %v1394 = vadd.f32 %v1105, %v1393
  %v1395 = vpop.f32.mrb[0].mxu0
  %v1396 = vpop.f32.mrb[0].mxu0
  %v1397 = vadd.f32 %v1108, %v1396
  %v1398 = vpop.f32.mrb[0].mxu0
  %1399 = vmatprep.mubr.bf16.mxu0 %v617
  %1400 = vmatmul.mubr.bf16.gmra.mrb[0].mxu0 %v616
  %v1401 = vpop.f32.mrb[0].mxu0
  %v1402 = vadd.f32 %v1113, %v1401
  %v1403 = vpop.f32.mrb[0].mxu0
  %v1404 = vpop.f32.mrb[0].mxu0
  %v1405 = vadd.f32 %v1116, %v1404
  %v1406 = vpop.f32.mrb[0].mxu0
  %1407 = vmatprep.mubr.bf16.mxu0 %v621
  %1408 = vmatmul.mubr.bf16.gmra.mrb[0].mxu0 %v620
  %v1409 = vpop.f32.mrb[0].mxu0
  %v1410 = vadd.f32 %v1121, %v1409
  %v1411 = vpop.f32.mrb[0].mxu0
  %v1412 = vpop.f32.mrb[0].mxu0
  %v1413 = vadd.f32 %v1124, %v1412
  %v1414 = vpop.f32.mrb[0].mxu0
  %1415 = vmatprep.mubr.bf16.mxu0 %v625
  %1416 = vmatmul.mubr.bf16.gmra.mrb[0].mxu0 %v624
  %v1417 = vpop.f32.mrb[0].mxu0
  %v1418 = vadd.f32 %v1129, %v1417
  %v1419 = vpop.f32.mrb[0].mxu0
  %v1420 = vpop.f32.mrb[0].mxu0
  %v1421 = vadd.f32 %v1132, %v1420
  %v1422 = vpop.f32.mrb[0].mxu0
  %1423 = vmatprep.mubr.bf16.mxu0 %v629
  %1424 = vmatmul.mubr.bf16.gmra.mrb[0].mxu0 %v628
  %v1425 = vpop.f32.mrb[0].mxu0
  %v1426 = vadd.f32 %v1137, %v1425
  %v1427 = vpop.f32.mrb[0].mxu0
  %v1428 = vpop.f32.mrb[0].mxu0
  %v1429 = vadd.f32 %v1140, %v1428
  %v1430 = vpop.f32.mrb[0].mxu0
  %1431 = vmatprep.mubr.bf16.mxu0 %v633
  %1432 = vmatmul.mubr.bf16.gmra.mrb[0].mxu0 %v632
  %v1433 = vpop.f32.mrb[0].mxu0
  %v1434 = vadd.f32 %v1145, %v1433
  %v1435 = vpop.f32.mrb[0].mxu0
  %v1436 = vpop.f32.mrb[0].mxu0
  %v1437 = vadd.f32 %v1148, %v1436
  %v1438 = vpop.f32.mrb[0].mxu0
  %1439 = vmatprep.mubr.bf16.mxu0 %v637
  %1440 = vmatmul.mubr.bf16.gmra.mrb[0].mxu0 %v636
  %v1441 = vpop.f32.mrb[0].mxu0
  %v1442 = vadd.f32 %v1153, %v1441
  %v1443 = vpop.f32.mrb[0].mxu0
  %v1444 = vpop.f32.mrb[0].mxu0
  %v1445 = vadd.f32 %v1156, %v1444
  %v1446 = vpop.f32.mrb[0].mxu0
  %1447 = vmatprep.mubr.bf16.mxu0 %v641
  %1448 = vmatmul.mubr.bf16.gmra.mrb[0].mxu0 %v640
  %v1449 = vpop.f32.mrb[0].mxu0
  %v1450 = vadd.f32 %v1161, %v1449
  %v1451 = vpop.f32.mrb[0].mxu0
  %v1452 = vpop.f32.mrb[0].mxu0
  %v1453 = vadd.f32 %v1164, %v1452
  %v1454 = vpop.f32.mrb[0].mxu0
  %1455 = vmatprep.mubr.bf16.mxu0 %v645
  %1456 = vmatmul.mubr.bf16.gmra.mrb[0].mxu0 %v644
  %v1457 = vpop.f32.mrb[0].mxu0
  %v1458 = vadd.f32 %v1169, %v1457
  %v1459 = vpop.f32.mrb[0].mxu0
  %v1460 = vpop.f32.mrb[0].mxu0
  %v1461 = vadd.f32 %v1172, %v1460
  %v1462 = vpop.f32.mrb[0].mxu0
  %1463 = vmatprep.mubr.bf16.mxu0 %v649
  %1464 = vmatmul.mubr.bf16.gmra.mrb[0].mxu0 %v648
  %v1465 = vpop.f32.mrb[0].mxu0
  %v1466 = vadd.f32 %v1177, %v1465
  %v1467 = vpop.f32.mrb[0].mxu0
  %v1468 = vpop.f32.mrb[0].mxu0
  %v1469 = vadd.f32 %v1180, %v1468
  %v1470 = vpop.f32.mrb[0].mxu0
  %1471 = vmatprep.mubr.bf16.mxu0 %v653
  %1472 = vmatmul.mubr.bf16.gmra.mrb[0].mxu0 %v652
  %v1473 = vpop.f32.mrb[0].mxu0
  %v1474 = vadd.f32 %v1185, %v1473
  %v1475 = vpop.f32.mrb[0].mxu0
  %v1476 = vpop.f32.mrb[0].mxu0
  %v1477 = vadd.f32 %v1188, %v1476
  %v1478 = vpop.f32.mrb[0].mxu0
  %1479 = vmatprep.mubr.bf16.mxu0 %v657
  %1480 = vmatmul.mubr.bf16.gmra.mrb[0].mxu0 %v656
  %v1481 = vpop.f32.mrb[0].mxu0
  %v1482 = vadd.f32 %v1193, %v1481
  %v1483 = vpop.f32.mrb[0].mxu0
  %v1484 = vpop.f32.mrb[0].mxu0
  %v1485 = vadd.f32 %v1196, %v1484
  %v1486 = vpop.f32.mrb[0].mxu0
  %1487 = vmatprep.mubr.bf16.mxu0 %v661
  %1488 = vmatmul.mubr.bf16.gmra.mrb[0].mxu0 %v660
  %v1489 = vpop.f32.mrb[0].mxu0
  %v1490 = vadd.f32 %v1201, %v1489
  %v1491 = vpop.f32.mrb[0].mxu0
  %v1492 = vpop.f32.mrb[0].mxu0
  %v1493 = vadd.f32 %v1204, %v1492
  %v1494 = vpop.f32.mrb[0].mxu0
  %1495 = vmatprep.mubr.bf16.mxu0 %v665
  %1496 = vmatmul.mubr.bf16.gmra.mrb[0].mxu0 %v664
  %v1497 = vpop.f32.mrb[0].mxu0
  %v1498 = vadd.f32 %v1209, %v1497
  %v1499 = vpop.f32.mrb[0].mxu0
  %v1500 = vpop.f32.mrb[0].mxu0
  %v1501 = vadd.f32 %v1212, %v1500
  %v1502 = vpop.f32.mrb[0].mxu0
  %1503 = vmatprep.mubr.bf16.mxu0 %v669
  %1504 = vmatmul.mubr.bf16.gmra.mrb[0].mxu0 %v668
  %v1505 = vpop.f32.mrb[0].mxu0
  %v1506 = vadd.f32 %v1217, %v1505
  %v1507 = vpop.f32.mrb[0].mxu0
  %v1508 = vpop.f32.mrb[0].mxu0
  %v1509 = vadd.f32 %v1220, %v1508
  %v1510 = vpop.f32.mrb[0].mxu0
  %1511 = vmatprep.mubr.bf16.mxu0 %v673
  %1512 = vmatmul.mubr.bf16.gmra.mrb[0].mxu0 %v672
  %v1513 = vpop.f32.mrb[0].mxu0
  %v1514 = vadd.f32 %v1225, %v1513
  %v1515 = vpop.f32.mrb[0].mxu0
  %v1516 = vpop.f32.mrb[0].mxu0
  %v1517 = vadd.f32 %v1228, %v1516
  %v1518 = vpop.f32.mrb[0].mxu0
  %1519 = vmatprep.mubr.bf16.mxu0 %v677
  %1520 = vmatmul.mubr.bf16.gmra.mrb[0].mxu0 %v676
  %v1521 = vpop.f32.mrb[0].mxu0
  %v1522 = vadd.f32 %v1233, %v1521
  %v1523 = vpop.f32.mrb[0].mxu0
  %v1524 = vpop.f32.mrb[0].mxu0
  %v1525 = vadd.f32 %v1236, %v1524
  %v1526 = vpop.f32.mrb[0].mxu0
  %1527 = vmatprep.mubr.bf16.mxu0 %v681
  %1528 = vmatmul.mubr.bf16.gmra.mrb[0].mxu0 %v680
  %v1529 = vpop.f32.mrb[0].mxu0
  %v1530 = vadd.f32 %v1241, %v1529
  %v1531 = vpop.f32.mrb[0].mxu0
  %v1532 = vpop.f32.mrb[0].mxu0
  %v1533 = vadd.f32 %v1244, %v1532
  %v1534 = vpop.f32.mrb[0].mxu0
  %1535 = vmatprep.mubr.bf16.mxu0 %v685
  %1536 = vmatmul.mubr.bf16.gmra.mrb[0].mxu0 %v684
  %v1537 = vpop.f32.mrb[0].mxu0
  %v1538 = vadd.f32 %v1249, %v1537
  %v1539 = vpop.f32.mrb[0].mxu0
  %v1540 = vpop.f32.mrb[0].mxu0
  %v1541 = vadd.f32 %v1252, %v1540
  %v1542 = vpop.f32.mrb[0].mxu0
  %1543 = vmatprep.mubr.bf16.mxu0 %v689
  %1544 = vmatmul.mubr.bf16.gmra.mrb[0].mxu0 %v688
  %v1545 = vpop.f32.mrb[0].mxu0
  %v1546 = vadd.f32 %v1257, %v1545
  %v1547 = vpop.f32.mrb[0].mxu0
  %v1548 = vpop.f32.mrb[0].mxu0
  %v1549 = vadd.f32 %v1260, %v1548
  %v1550 = vpop.f32.mrb[0].mxu0
  %1551 = vmatprep.mubr.bf16.mxu0 %v693
  %1552 = vmatmul.mubr.bf16.gmra.mrb[0].mxu0 %v692
  %v1553 = vpop.f32.mrb[0].mxu0
  %v1554 = vadd.f32 %v1265, %v1553
  %v1555 = vpop.f32.mrb[0].mxu0
  %v1556 = vpop.f32.mrb[0].mxu0
  %v1557 = vadd.f32 %v1268, %v1556
  %v1558 = vpop.f32.mrb[0].mxu0
  %1559 = vmatprep.mubr.bf16.mxu0 %v697
  %1560 = vmatmul.mubr.bf16.gmra.mrb[0].mxu0 %v696
  %v1561 = vpop.f32.mrb[0].mxu0
  %v1562 = vadd.f32 %v1273, %v1561
  %v1563 = vpop.f32.mrb[0].mxu0
  %v1564 = vpop.f32.mrb[0].mxu0
  %v1565 = vadd.f32 %v1276, %v1564
  %v1566 = vpop.f32.mrb[0].mxu0
  %1567 = vmatprep.mubr.bf16.mxu0 %v701
  %1568 = vmatmul.mubr.bf16.gmra.mrb[0].mxu0 %v700
  %v1569 = vpop.f32.mrb[0].mxu0
  %v1570 = vadd.f32 %v1281, %v1569
  %v1571 = vpop.f32.mrb[0].mxu0
  %v1572 = vpop.f32.mrb[0].mxu0
  %v1573 = vadd.f32 %v1284, %v1572
  %v1574 = vpop.f32.mrb[0].mxu0
  %1575 = vmatprep.mubr.bf16.mxu0 %v705
  %1576 = vmatmul.mubr.bf16.gmra.mrb[0].mxu0 %v704
  %v1577 = vpop.f32.mrb[0].mxu0
  %v1578 = vadd.f32 %v1289, %v1577
  %v1579 = vpop.f32.mrb[0].mxu0
  %v1580 = vpop.f32.mrb[0].mxu0
  %v1581 = vadd.f32 %v1292, %v1580
  %v1582 = vpop.f32.mrb[0].mxu0
  %1583 = vmatprep.mubr.bf16.mxu0 %v709
  %1584 = vmatmul.mubr.bf16.gmra.mrb[0].mxu0 %v708
  %v1585 = vpop.f32.mrb[0].mxu0
  %v1586 = vadd.f32 %v1297, %v1585
  %v1587 = vpop.f32.mrb[0].mxu0
  %v1588 = vpop.f32.mrb[0].mxu0
  %v1589 = vadd.f32 %v1300, %v1588
  %v1590 = vpop.f32.mrb[0].mxu0
  %1591 = vmatprep.mubr.bf16.mxu0 %v713
  %1592 = vmatmul.mubr.bf16.gmra.mrb[0].mxu0 %v712
  %v1593 = vpop.f32.mrb[0].mxu0
  %v1594 = vadd.f32 %v1305, %v1593
  %v1595 = vpop.f32.mrb[0].mxu0
  %v1596 = vpop.f32.mrb[0].mxu0
  %v1597 = vadd.f32 %v1308, %v1596
  %v1598 = vpop.f32.mrb[0].mxu0
  %1599 = vmatprep.mubr.bf16.mxu0 %v717
  %1600 = vmatmul.mubr.bf16.gmra.mrb[0].mxu0 %v716
  %v1601 = vpop.f32.mrb[0].mxu0
  %v1602 = vadd.f32 %v1313, %v1601
  %v1603 = vpop.f32.mrb[0].mxu0
  %v1604 = vpop.f32.mrb[0].mxu0
  %v1605 = vadd.f32 %v1316, %v1604
  %v1606 = vpop.f32.mrb[0].mxu0
  %1607 = vmatprep.mubr.bf16.mxu0 %v721
  %1608 = vmatmul.mubr.bf16.gmra.mrb[0].mxu0 %v720
  %v1609 = vpop.f32.mrb[0].mxu0
  %v1610 = vadd.f32 %v1321, %v1609
  %v1611 = vpop.f32.mrb[0].mxu0
  %v1612 = vpop.f32.mrb[0].mxu0
  %v1613 = vadd.f32 %v1324, %v1612
  %v1614 = vpop.f32.mrb[0].mxu0
  %1615 = vmatprep.mubr.bf16.mxu0 %v725
  %1616 = vmatmul.mubr.bf16.gmra.mrb[0].mxu0 %v724
  %v1617 = vpop.f32.mrb[0].mxu0
  %v1618 = vadd.f32 %v1329, %v1617
  %v1619 = vpop.f32.mrb[0].mxu0
  %v1620 = vpop.f32.mrb[0].mxu0
  %v1621 = vadd.f32 %v1332, %v1620
  %v1622 = vpop.f32.mrb[0].mxu0
  %1623 = vdwg.mxu0
  %v1624 = vmax.f32 %v1370, 0.0
  %v1625 = vmax.f32 %v1373, 0.0
  %v1626 = vmax.f32 %v1378, 0.0
  %v1627 = vmax.f32 %v1381, 0.0
  %v1628 = vmax.f32 %v1386, 0.0
  %v1629 = vmax.f32 %v1389, 0.0
  %v1630 = vmax.f32 %v1394, 0.0
  %v1631 = vmax.f32 %v1397, 0.0
  %v1632 = vmax.f32 %v1402, 0.0
  %v1633 = vmax.f32 %v1405, 0.0
  %v1634 = vmax.f32 %v1410, 0.0
  %v1635 = vmax.f32 %v1413, 0.0
  %v1636 = vmax.f32 %v1418, 0.0
  %v1637 = vmax.f32 %v1421, 0.0
  %v1638 = vmax.f32 %v1426, 0.0
  %v1639 = vmax.f32 %v1429, 0.0
  %v1640 = vmax.f32 %v1434, 0.0
  %v1641 = vmax.f32 %v1437, 0.0
  %v1642 = vmax.f32 %v1442, 0.0
  %v1643 = vmax.f32 %v1445, 0.0
  %v1644 = vmax.f32 %v1450, 0.0
  %v1645 = vmax.f32 %v1453, 0.0
  %v1646 = vmax.f32 %v1458, 0.0
  %v1647 = vmax.f32 %v1461, 0.0
  %v1648 = vmax.f32 %v1466, 0.0
  %v1649 = vmax.f32 %v1469, 0.0
  %v1650 = vmax.f32 %v1474, 0.0
  %v1651 = vmax.f32 %v1477, 0.0
  %v1652 = vmax.f32 %v1482, 0.0
  %v1653 = vmax.f32 %v1485, 0.0
  %v1654 = vmax.f32 %v1490, 0.0
  %v1655 = vmax.f32 %v1493, 0.0
  %v1656 = vmax.f32 %v1498, 0.0
  %v1657 = vmax.f32 %v1501, 0.0
  %v1658 = vmax.f32 %v1506, 0.0
  %v1659 = vmax.f32 %v1509, 0.0
  %v1660 = vmax.f32 %v1514, 0.0
  %v1661 = vmax.f32 %v1517, 0.0
  %v1662 = vmax.f32 %v1522, 0.0
  %v1663 = vmax.f32 %v1525, 0.0
  %v1664 = vmax.f32 %v1530, 0.0
  %v1665 = vmax.f32 %v1533, 0.0
  %v1666 = vmax.f32 %v1538, 0.0
  %v1667 = vmax.f32 %v1541, 0.0
  %v1668 = vmax.f32 %v1546, 0.0
  %v1669 = vmax.f32 %v1549, 0.0
  %v1670 = vmax.f32 %v1554, 0.0
  %v1671 = vmax.f32 %v1557, 0.0
  %v1672 = vmax.f32 %v1562, 0.0
  %v1673 = vmax.f32 %v1565, 0.0
  %v1674 = vmax.f32 %v1570, 0.0
  %v1675 = vmax.f32 %v1573, 0.0
  %v1676 = vmax.f32 %v1578, 0.0
  %v1677 = vmax.f32 %v1581, 0.0
  %v1678 = vmax.f32 %v1586, 0.0
  %v1679 = vmax.f32 %v1589, 0.0
  %v1680 = vmax.f32 %v1594, 0.0
  %v1681 = vmax.f32 %v1597, 0.0
  %v1682 = vmax.f32 %v1602, 0.0
  %v1683 = vmax.f32 %v1605, 0.0
  %v1684 = vmax.f32 %v1610, 0.0
  %v1685 = vmax.f32 %v1613, 0.0
  %v1686 = vmax.f32 %v1618, 0.0
  %v1687 = vmax.f32 %v1621, 0.0
  %v1688 = vpack.c.bf16 %v1625, %v1624
  %v1689 = vpack.c.bf16 %v1627, %v1626
  %v1690 = vpack.c.bf16 %v1629, %v1628
  %v1691 = vpack.c.bf16 %v1631, %v1630
  %v1692 = vpack.c.bf16 %v1633, %v1632
  %v1693 = vpack.c.bf16 %v1635, %v1634
  %v1694 = vpack.c.bf16 %v1637, %v1636
  %v1695 = vpack.c.bf16 %v1639, %v1638
  %v1696 = vpack.c.bf16 %v1641, %v1640
  %v1697 = vpack.c.bf16 %v1643, %v1642
  %v1698 = vpack.c.bf16 %v1645, %v1644
  %v1699 = vpack.c.bf16 %v1647, %v1646
  %v1700 = vpack.c.bf16 %v1649, %v1648
  %v1701 = vpack.c.bf16 %v1651, %v1650
  %v1702 = vpack.c.bf16 %v1653, %v1652
  %v1703 = vpack.c.bf16 %v1655, %v1654
  %v1704 = vpack.c.bf16 %v1657, %v1656
  %v1705 = vpack.c.bf16 %v1659, %v1658
  %v1706 = vpack.c.bf16 %v1661, %v1660
  %v1707 = vpack.c.bf16 %v1663, %v1662
  %v1708 = vpack.c.bf16 %v1665, %v1664
  %v1709 = vpack.c.bf16 %v1667, %v1666
  %v1710 = vpack.c.bf16 %v1669, %v1668
  %v1711 = vpack.c.bf16 %v1671, %v1670
  %v1712 = vpack.c.bf16 %v1673, %v1672
  %v1713 = vpack.c.bf16 %v1675, %v1674
  %v1714 = vpack.c.bf16 %v1677, %v1676
  %v1715 = vpack.c.bf16 %v1679, %v1678
  %v1716 = vpack.c.bf16 %v1681, %v1680
  %v1717 = vpack.c.bf16 %v1683, %v1682
  %v1718 = vpack.c.bf16 %v1685, %v1684
  %v1719 = vpack.c.bf16 %v1687, %v1686
  %v1752 = vunpack.c.l.b16 %v1688
  %v1753 = vunpack.c.h.b16 %v1688
  %v1754 = vunpack.c.l.b16 %v1689
  %v1755 = vunpack.c.h.b16 %v1689
  %v1756 = vunpack.c.l.b16 %v1690
  %v1757 = vunpack.c.h.b16 %v1690
  %v1758 = vunpack.c.l.b16 %v1691
  %v1759 = vunpack.c.h.b16 %v1691
  %v1760 = vunpack.c.l.b16 %v1692
  %v1761 = vunpack.c.h.b16 %v1692
  %v1762 = vunpack.c.l.b16 %v1693
  %v1763 = vunpack.c.h.b16 %v1693
  %v1764 = vunpack.c.l.b16 %v1694
  %v1765 = vunpack.c.h.b16 %v1694
  %v1766 = vunpack.c.l.b16 %v1695
  %v1767 = vunpack.c.h.b16 %v1695
  %v1768 = vunpack.c.l.b16 %v1696
  %v1769 = vunpack.c.h.b16 %v1696
  %v1770 = vunpack.c.l.b16 %v1697
  %v1771 = vunpack.c.h.b16 %v1697
  %v1772 = vunpack.c.l.b16 %v1698
  %v1773 = vunpack.c.h.b16 %v1698
  %v1774 = vunpack.c.l.b16 %v1699
  %v1775 = vunpack.c.h.b16 %v1699
  %v1776 = vunpack.c.l.b16 %v1700
  %v1777 = vunpack.c.h.b16 %v1700
  %v1778 = vunpack.c.l.b16 %v1701
  %v1779 = vunpack.c.h.b16 %v1701
  %v1780 = vunpack.c.l.b16 %v1702
  %v1781 = vunpack.c.h.b16 %v1702
  %v1782 = vunpack.c.l.b16 %v1703
  %v1783 = vunpack.c.h.b16 %v1703
  %v1784 = vunpack.c.l.b16 %v1704
  %v1785 = vunpack.c.h.b16 %v1704
  %v1786 = vunpack.c.l.b16 %v1705
  %v1787 = vunpack.c.h.b16 %v1705
  %v1788 = vunpack.c.l.b16 %v1706
  %v1789 = vunpack.c.h.b16 %v1706
  %v1790 = vunpack.c.l.b16 %v1707
  %v1791 = vunpack.c.h.b16 %v1707
  %v1792 = vunpack.c.l.b16 %v1708
  %v1793 = vunpack.c.h.b16 %v1708
  %v1794 = vunpack.c.l.b16 %v1709
  %v1795 = vunpack.c.h.b16 %v1709
  %v1796 = vunpack.c.l.b16 %v1710
  %v1797 = vunpack.c.h.b16 %v1710
  %v1798 = vunpack.c.l.b16 %v1711
  %v1799 = vunpack.c.h.b16 %v1711
  %v1800 = vunpack.c.l.b16 %v1712
  %v1801 = vunpack.c.h.b16 %v1712
  %v1802 = vunpack.c.l.b16 %v1713
  %v1803 = vunpack.c.h.b16 %v1713
  %v1804 = vunpack.c.l.b16 %v1714
  %v1805 = vunpack.c.h.b16 %v1714
  %v1806 = vunpack.c.l.b16 %v1715
  %v1807 = vunpack.c.h.b16 %v1715
  %v1808 = vunpack.c.l.b16 %v1716
  %v1809 = vunpack.c.h.b16 %v1716
  %v1810 = vunpack.c.l.b16 %v1717
  %v1811 = vunpack.c.h.b16 %v1717
  %v1812 = vunpack.c.l.b16 %v1718
  %v1813 = vunpack.c.h.b16 %v1718
  %v1814 = vunpack.c.l.b16 %v1719
  %v1815 = vunpack.c.h.b16 %v1719
  %v1816 = vpack.c.b16 %v1752, %v1752
  %v1817 = vpack.c.b16 %v1753, %v1753
  %v1818 = vpack.c.b16 %v1754, %v1754
  %v1819 = vpack.c.b16 %v1755, %v1755
  %v1820 = vpack.c.b16 %v1756, %v1756
  %v1821 = vpack.c.b16 %v1757, %v1757
  %v1822 = vpack.c.b16 %v1758, %v1758
  %v1823 = vpack.c.b16 %v1759, %v1759
  %v1824 = vpack.c.b16 %v1760, %v1760
  %v1825 = vpack.c.b16 %v1761, %v1761
  %v1826 = vpack.c.b16 %v1762, %v1762
  %v1827 = vpack.c.b16 %v1763, %v1763
  %v1828 = vpack.c.b16 %v1764, %v1764
  %v1829 = vpack.c.b16 %v1765, %v1765
  %v1830 = vpack.c.b16 %v1766, %v1766
  %v1831 = vpack.c.b16 %v1767, %v1767
  %v1832 = vpack.c.b16 %v1768, %v1768
  %v1833 = vpack.c.b16 %v1769, %v1769
  %v1834 = vpack.c.b16 %v1770, %v1770
  %v1835 = vpack.c.b16 %v1771, %v1771
  %v1836 = vpack.c.b16 %v1772, %v1772
  %v1837 = vpack.c.b16 %v1773, %v1773
  %v1838 = vpack.c.b16 %v1774, %v1774
  %v1839 = vpack.c.b16 %v1775, %v1775
  %v1840 = vpack.c.b16 %v1776, %v1776
  %v1841 = vpack.c.b16 %v1777, %v1777
  %v1842 = vpack.c.b16 %v1778, %v1778
  %v1843 = vpack.c.b16 %v1779, %v1779
  %v1844 = vpack.c.b16 %v1780, %v1780
  %v1845 = vpack.c.b16 %v1781, %v1781
  %v1846 = vpack.c.b16 %v1782, %v1782
  %v1847 = vpack.c.b16 %v1783, %v1783
  %v1848 = vpack.c.b16 %v1784, %v1784
  %v1849 = vpack.c.b16 %v1785, %v1785
  %v1850 = vpack.c.b16 %v1786, %v1786
  %v1851 = vpack.c.b16 %v1787, %v1787
  %v1852 = vpack.c.b16 %v1788, %v1788
  %v1853 = vpack.c.b16 %v1789, %v1789
  %v1854 = vpack.c.b16 %v1790, %v1790
  %v1855 = vpack.c.b16 %v1791, %v1791
  %v1856 = vpack.c.b16 %v1792, %v1792
  %v1857 = vpack.c.b16 %v1793, %v1793
  %v1858 = vpack.c.b16 %v1794, %v1794
  %v1859 = vpack.c.b16 %v1795, %v1795
  %v1860 = vpack.c.b16 %v1796, %v1796
  %v1861 = vpack.c.b16 %v1797, %v1797
  %v1862 = vpack.c.b16 %v1798, %v1798
  %v1863 = vpack.c.b16 %v1799, %v1799
  %v1864 = vpack.c.b16 %v1800, %v1800
  %v1865 = vpack.c.b16 %v1801, %v1801
  %v1866 = vpack.c.b16 %v1802, %v1802
  %v1867 = vpack.c.b16 %v1803, %v1803
  %v1868 = vpack.c.b16 %v1804, %v1804
  %v1869 = vpack.c.b16 %v1805, %v1805
  %v1870 = vpack.c.b16 %v1806, %v1806
  %v1871 = vpack.c.b16 %v1807, %v1807
  %v1872 = vpack.c.b16 %v1808, %v1808
  %v1873 = vpack.c.b16 %v1809, %v1809
  %v1874 = vpack.c.b16 %v1810, %v1810
  %v1875 = vpack.c.b16 %v1811, %v1811
  %v1876 = vpack.c.b16 %v1812, %v1812
  %v1877 = vpack.c.b16 %v1813, %v1813
  %v1878 = vpack.c.b16 %v1814, %v1814
  %v1879 = vpack.c.b16 %v1815, %v1815
  %vm1944 = vcmask 519168
  %1945 = vst.msk [vmem:[%s3] sm:$0xf] %vm1944, %v1816
  %1946 = vst.msk [vmem:[%s3 + $0x4] sm:$0xf] %vm1944, %v1817
  %1947 = vst.msk [vmem:[%s3 + $0x8] sm:$0xf] %vm1944, %v1818
  %1948 = vst.msk [vmem:[%s3 + $0xc] sm:$0xf] %vm1944, %v1819
  %1949 = vst.msk [vmem:[%s3 + $0x10] sm:$0xf] %vm1944, %v1820
  %1950 = vst.msk [vmem:[%s3 + $0x14] sm:$0xf] %vm1944, %v1821
  %1951 = vst.msk [vmem:[%s3 + $0x18] sm:$0xf] %vm1944, %v1822
  %1952 = vst.msk [vmem:[%s3 + $0x1c] sm:$0xf] %vm1944, %v1823
  %1953 = vst.msk [vmem:[%s3 + $0x20] sm:$0xf] %vm1944, %v1824
  %1954 = vst.msk [vmem:[%s3 + $0x24] sm:$0xf] %vm1944, %v1825
  %1955 = vst.msk [vmem:[%s3 + $0x28] sm:$0xf] %vm1944, %v1826
  %1956 = vst.msk [vmem:[%s3 + $0x2c] sm:$0xf] %vm1944, %v1827
  %1957 = vst.msk [vmem:[%s3 + $0x30] sm:$0xf] %vm1944, %v1828
  %1958 = vst.msk [vmem:[%s3 + $0x34] sm:$0xf] %vm1944, %v1829
  %1959 = vst.msk [vmem:[%s3 + $0x38] sm:$0xf] %vm1944, %v1830
  %1960 = vst.msk [vmem:[%s3 + $0x3c] sm:$0xf] %vm1944, %v1831
  %1961 = vst.msk [vmem:[%s3 + $0x40] sm:$0xf] %vm1944, %v1832
  %1962 = vst.msk [vmem:[%s3 + $0x44] sm:$0xf] %vm1944, %v1833
  %1963 = vst.msk [vmem:[%s3 + $0x48] sm:$0xf] %vm1944, %v1834
  %1964 = vst.msk [vmem:[%s3 + $0x4c] sm:$0xf] %vm1944, %v1835
  %1965 = vst.msk [vmem:[%s3 + $0x50] sm:$0xf] %vm1944, %v1836
  %1966 = vst.msk [vmem:[%s3 + $0x54] sm:$0xf] %vm1944, %v1837
  %1967 = vst.msk [vmem:[%s3 + $0x58] sm:$0xf] %vm1944, %v1838
  %1968 = vst.msk [vmem:[%s3 + $0x5c] sm:$0xf] %vm1944, %v1839
  %1969 = vst.msk [vmem:[%s3 + $0x60] sm:$0xf] %vm1944, %v1840
  %1970 = vst.msk [vmem:[%s3 + $0x64] sm:$0xf] %vm1944, %v1841
  %1971 = vst.msk [vmem:[%s3 + $0x68] sm:$0xf] %vm1944, %v1842
  %1972 = vst.msk [vmem:[%s3 + $0x6c] sm:$0xf] %vm1944, %v1843
  %1973 = vst.msk [vmem:[%s3 + $0x70] sm:$0xf] %vm1944, %v1844
  %1974 = vst.msk [vmem:[%s3 + $0x74] sm:$0xf] %vm1944, %v1845
  %1975 = vst.msk [vmem:[%s3 + $0x78] sm:$0xf] %vm1944, %v1846
  %1976 = vst.msk [vmem:[%s3 + $0x7c] sm:$0xf] %vm1944, %v1847
  %1977 = vst.msk [vmem:[%s3 + $0x80] sm:$0xf] %vm1944, %v1848
  %1978 = vst.msk [vmem:[%s3 + $0x84] sm:$0xf] %vm1944, %v1849
  %1979 = vst.msk [vmem:[%s3 + $0x88] sm:$0xf] %vm1944, %v1850
  %1980 = vst.msk [vmem:[%s3 + $0x8c] sm:$0xf] %vm1944, %v1851
  %1981 = vst.msk [vmem:[%s3 + $0x90] sm:$0xf] %vm1944, %v1852
  %1982 = vst.msk [vmem:[%s3 + $0x94] sm:$0xf] %vm1944, %v1853
  %1983 = vst.msk [vmem:[%s3 + $0x98] sm:$0xf] %vm1944, %v1854
  %1984 = vst.msk [vmem:[%s3 + $0x9c] sm:$0xf] %vm1944, %v1855
  %1985 = vst.msk [vmem:[%s3 + $0xa0] sm:$0xf] %vm1944, %v1856
  %1986 = vst.msk [vmem:[%s3 + $0xa4] sm:$0xf] %vm1944, %v1857
  %1987 = vst.msk [vmem:[%s3 + $0xa8] sm:$0xf] %vm1944, %v1858
  %1988 = vst.msk [vmem:[%s3 + $0xac] sm:$0xf] %vm1944, %v1859
  %1989 = vst.msk [vmem:[%s3 + $0xb0] sm:$0xf] %vm1944, %v1860
  %1990 = vst.msk [vmem:[%s3 + $0xb4] sm:$0xf] %vm1944, %v1861
  %1991 = vst.msk [vmem:[%s3 + $0xb8] sm:$0xf] %vm1944, %v1862
  %1992 = vst.msk [vmem:[%s3 + $0xbc] sm:$0xf] %vm1944, %v1863
  %1993 = vst.msk [vmem:[%s3 + $0xc0] sm:$0xf] %vm1944, %v1864
  %1994 = vst.msk [vmem:[%s3 + $0xc4] sm:$0xf] %vm1944, %v1865
  %1995 = vst.msk [vmem:[%s3 + $0xc8] sm:$0xf] %vm1944, %v1866
  %1996 = vst.msk [vmem:[%s3 + $0xcc] sm:$0xf] %vm1944, %v1867
  %1997 = vst.msk [vmem:[%s3 + $0xd0] sm:$0xf] %vm1944, %v1868
  %1998 = vst.msk [vmem:[%s3 + $0xd4] sm:$0xf] %vm1944, %v1869
  %1999 = vst.msk [vmem:[%s3 + $0xd8] sm:$0xf] %vm1944, %v1870
  %2000 = vst.msk [vmem:[%s3 + $0xdc] sm:$0xf] %vm1944, %v1871
  %2001 = vst.msk [vmem:[%s3 + $0xe0] sm:$0xf] %vm1944, %v1872
  %2002 = vst.msk [vmem:[%s3 + $0xe4] sm:$0xf] %vm1944, %v1873
  %2003 = vst.msk [vmem:[%s3 + $0xe8] sm:$0xf] %vm1944, %v1874
  %2004 = vst.msk [vmem:[%s3 + $0xec] sm:$0xf] %vm1944, %v1875
  %2005 = vst.msk [vmem:[%s3 + $0xf0] sm:$0xf] %vm1944, %v1876
  %2006 = vst.msk [vmem:[%s3 + $0xf4] sm:$0xf] %vm1944, %v1877
  %2007 = vst.msk [vmem:[%s3 + $0xf8] sm:$0xf] %vm1944, %v1878
  %2008 = vst.msk [vmem:[%s3 + $0xfc] sm:$0xf] %vm1944, %v1879
  // Predicated region
  $region14: #{pix_forward.4} parent=0 // pred_check
    _
  $region15: #{pix_forward.4} parent=0 // pred_check_branch
    %2010 = sbr.rel (0) target = $region17
  $region16: #{pix_forward.4} parent=0 // pred_region
    _
  $region17: #{pix_forward.4} parent=0 // pred_fallthru
    _
  // Predicated region
  $region18: #{pix_forward.4} parent=0 // pred_check
    _
  $region19: #{pix_forward.4} parent=0 // pred_check_branch
    %2012 = sbr.rel (0) target = $region21
  $region20: #{pix_forward.4} parent=0 // pred_region
    _
  $region21: #{pix_forward.4} parent=0 // pred_fallthru
    _

// kernel: pix_forward.5
$region0: #{pix_forward.5}
  #allocation0 [shape = 'u32[]', space=smem, size = 0x4, offset = 0x4, fixed_abs, tag = 'smem constant byte address 0x4 - core index']
  #allocation1 [shape = 'u32[144,128]{1,0:T(1,128)}', space=vmem, size = 0x12000, scoped, tag = 'internal scratch']
  %s0 = inlined_call_operand.vmem [shape: bf16[128,1024], index: 0, kind: input, shape index: {}]
  %s1 = inlined_call_operand.vmem [shape: bf16[1024,128], index: 1, kind: input, shape index: {}]
  %s2 = inlined_call_operand.vmem [shape: f32[1,128], index: 2, kind: input, shape index: {}]
  %s3 = inlined_call_operand.vmem [shape: bf16[128,128], index: 3, kind: output, shape index: {}]
  %s4 = sld [smem:[#allocation0]]
  $region22: #{pix_forward.5} parent=0
    _
  %s6 = ssub.s32 1, %s4
  %s7 = scalar_select 0, %s6, %s4
  // Predicated region
  $region2: #{pix_forward.5} parent=0 // pred_check
    _
  $region3: #{pix_forward.5} parent=0 // pred_check_branch
    %9 = sbr.rel (0) target = $region5
  $region4: #{pix_forward.5} parent=0 // pred_region
    _
  $region5: #{pix_forward.5} parent=0 // pred_fallthru
    _
  // Predicated region
  $region6: #{pix_forward.5} parent=0 // pred_check
    _
  $region7: #{pix_forward.5} parent=0 // pred_check_branch
    %11 = sbr.rel (0) target = $region9
  $region8: #{pix_forward.5} parent=0 // pred_region
    _
  $region9: #{pix_forward.5} parent=0 // pred_fallthru
    _
  // Predicated region
  $region10: #{pix_forward.5} parent=0 // pred_check
    _
  $region11: #{pix_forward.5} parent=0 // pred_check_branch
    %13 = sbr.rel (0) target = $region13
  $region12: #{pix_forward.5} parent=0 // pred_region
    _
  $region13: #{pix_forward.5} parent=0 // pred_fallthru
    _
  %v15 = vld [vmem:[%s0] sm:$0xff]
  %v16 = vld [vmem:[%s0 + $0x8] sm:$0xff]
  %v17 = vld [vmem:[%s0 + $0x10] sm:$0xff]
  %v18 = vld [vmem:[%s0 + $0x18] sm:$0xff]
  %v19 = vld [vmem:[%s0 + $0x20] sm:$0xff]
  %v20 = vld [vmem:[%s0 + $0x28] sm:$0xff]
  %v21 = vld [vmem:[%s0 + $0x30] sm:$0xff]
  %v22 = vld [vmem:[%s0 + $0x38] sm:$0xff]
  %v23 = vld [vmem:[%s0 + $0x40] sm:$0xff]
  %v24 = vld [vmem:[%s0 + $0x48] sm:$0xff]
  %v25 = vld [vmem:[%s0 + $0x50] sm:$0xff]
  %v26 = vld [vmem:[%s0 + $0x58] sm:$0xff]
  %v27 = vld [vmem:[%s0 + $0x60] sm:$0xff]
  %v28 = vld [vmem:[%s0 + $0x68] sm:$0xff]
  %v29 = vld [vmem:[%s0 + $0x70] sm:$0xff]
  %v30 = vld [vmem:[%s0 + $0x78] sm:$0xff]
  %v31 = vld [vmem:[%s0 + $0x80] sm:$0xff]
  %v32 = vld [vmem:[%s0 + $0x88] sm:$0xff]
  %v33 = vld [vmem:[%s0 + $0x90] sm:$0xff]
  %v34 = vld [vmem:[%s0 + $0x98] sm:$0xff]
  %v35 = vld [vmem:[%s0 + $0xa0] sm:$0xff]
  %v36 = vld [vmem:[%s0 + $0xa8] sm:$0xff]
  %v37 = vld [vmem:[%s0 + $0xb0] sm:$0xff]
  %v38 = vld [vmem:[%s0 + $0xb8] sm:$0xff]
  %v39 = vld [vmem:[%s0 + $0xc0] sm:$0xff]
  %v40 = vld [vmem:[%s0 + $0xc8] sm:$0xff]
  %v41 = vld [vmem:[%s0 + $0xd0] sm:$0xff]
  %v42 = vld [vmem:[%s0 + $0xd8] sm:$0xff]
  %v43 = vld [vmem:[%s0 + $0xe0] sm:$0xff]
  %v44 = vld [vmem:[%s0 + $0xe8] sm:$0xff]
  %v45 = vld [vmem:[%s0 + $0xf0] sm:$0xff]
  %v46 = vld [vmem:[%s0 + $0xf8] sm:$0xff]
  %v47 = vld [vmem:[%s0 + $0x100] sm:$0xff]
  %v48 = vld [vmem:[%s0 + $0x108] sm:$0xff]
  %v49 = vld [vmem:[%s0 + $0x110] sm:$0xff]
  %v50 = vld [vmem:[%s0 + $0x118] sm:$0xff]
  %v51 = vld [vmem:[%s0 + $0x120] sm:$0xff]
  %v52 = vld [vmem:[%s0 + $0x128] sm:$0xff]
  %v53 = vld [vmem:[%s0 + $0x130] sm:$0xff]
  %v54 = vld [vmem:[%s0 + $0x138] sm:$0xff]
  %v55 = vld [vmem:[%s0 + $0x140] sm:$0xff]
  %v56 = vld [vmem:[%s0 + $0x148] sm:$0xff]
  %v57 = vld [vmem:[%s0 + $0x150] sm:$0xff]
  %v58 = vld [vmem:[%s0 + $0x158] sm:$0xff]
  %v59 = vld [vmem:[%s0 + $0x160] sm:$0xff]
  %v60 = vld [vmem:[%s0 + $0x168] sm:$0xff]
  %v61 = vld [vmem:[%s0 + $0x170] sm:$0xff]
  %v62 = vld [vmem:[%s0 + $0x178] sm:$0xff]
  %v63 = vld [vmem:[%s0 + $0x180] sm:$0xff]
  %v64 = vld [vmem:[%s0 + $0x188] sm:$0xff]
  %v65 = vld [vmem:[%s0 + $0x190] sm:$0xff]
  %v66 = vld [vmem:[%s0 + $0x198] sm:$0xff]
  %v67 = vld [vmem:[%s0 + $0x1a0] sm:$0xff]
  %v68 = vld [vmem:[%s0 + $0x1a8] sm:$0xff]
  %v69 = vld [vmem:[%s0 + $0x1b0] sm:$0xff]
  %v70 = vld [vmem:[%s0 + $0x1b8] sm:$0xff]
  %v71 = vld [vmem:[%s0 + $0x1c0] sm:$0xff]
  %v72 = vld [vmem:[%s0 + $0x1c8] sm:$0xff]
  %v73 = vld [vmem:[%s0 + $0x1d0] sm:$0xff]
  %v74 = vld [vmem:[%s0 + $0x1d8] sm:$0xff]
  %v75 = vld [vmem:[%s0 + $0x1e0] sm:$0xff]
  %v76 = vld [vmem:[%s0 + $0x1e8] sm:$0xff]
  %v77 = vld [vmem:[%s0 + $0x1f0] sm:$0xff]
  %v78 = vld [vmem:[%s0 + $0x1f8] sm:$0xff]
  %v79 = vld [vmem:[%s1] sm:$0xf]
  %v80 = vld [vmem:[%s1 + $0x4] sm:$0xf]
  %v81 = vld [vmem:[%s1 + $0x8] sm:$0xf]
  %v82 = vld [vmem:[%s1 + $0xc] sm:$0xf]
  %v83 = vld [vmem:[%s1 + $0x10] sm:$0xf]
  %v84 = vld [vmem:[%s1 + $0x14] sm:$0xf]
  %v85 = vld [vmem:[%s1 + $0x18] sm:$0xf]
  %v86 = vld [vmem:[%s1 + $0x1c] sm:$0xf]
  %v87 = vld [vmem:[%s1 + $0x20] sm:$0xf]
  %v88 = vld [vmem:[%s1 + $0x24] sm:$0xf]
  %v89 = vld [vmem:[%s1 + $0x28] sm:$0xf]
  %v90 = vld [vmem:[%s1 + $0x2c] sm:$0xf]
  %v91 = vld [vmem:[%s1 + $0x30] sm:$0xf]
  %v92 = vld [vmem:[%s1 + $0x34] sm:$0xf]
  %v93 = vld [vmem:[%s1 + $0x38] sm:$0xf]
  %v94 = vld [vmem:[%s1 + $0x3c] sm:$0xf]
  %v95 = vld [vmem:[%s1 + $0x40] sm:$0xf]
  %v96 = vld [vmem:[%s1 + $0x44] sm:$0xf]
  %v97 = vld [vmem:[%s1 + $0x48] sm:$0xf]
  %v98 = vld [vmem:[%s1 + $0x4c] sm:$0xf]
  %v99 = vld [vmem:[%s1 + $0x50] sm:$0xf]
  %v100 = vld [vmem:[%s1 + $0x54] sm:$0xf]
  %v101 = vld [vmem:[%s1 + $0x58] sm:$0xf]
  %v102 = vld [vmem:[%s1 + $0x5c] sm:$0xf]
  %v103 = vld [vmem:[%s1 + $0x60] sm:$0xf]
  %v104 = vld [vmem:[%s1 + $0x64] sm:$0xf]
  %v105 = vld [vmem:[%s1 + $0x68] sm:$0xf]
  %v106 = vld [vmem:[%s1 + $0x6c] sm:$0xf]
  %v107 = vld [vmem:[%s1 + $0x70] sm:$0xf]
  %v108 = vld [vmem:[%s1 + $0x74] sm:$0xf]
  %v109 = vld [vmem:[%s1 + $0x78] sm:$0xf]
  %v110 = vld [vmem:[%s1 + $0x7c] sm:$0xf]
  %v111 = vld [vmem:[%s1 + $0x80] sm:$0xf]
  %v112 = vld [vmem:[%s1 + $0x84] sm:$0xf]
  %v113 = vld [vmem:[%s1 + $0x88] sm:$0xf]
  %v114 = vld [vmem:[%s1 + $0x8c] sm:$0xf]
  %v115 = vld [vmem:[%s1 + $0x90] sm:$0xf]
  %v116 = vld [vmem:[%s1 + $0x94] sm:$0xf]
  %v117 = vld [vmem:[%s1 + $0x98] sm:$0xf]
  %v118 = vld [vmem:[%s1 + $0x9c] sm:$0xf]
  %v119 = vld [vmem:[%s1 + $0xa0] sm:$0xf]
  %v120 = vld [vmem:[%s1 + $0xa4] sm:$0xf]
  %v121 = vld [vmem:[%s1 + $0xa8] sm:$0xf]
  %v122 = vld [vmem:[%s1 + $0xac] sm:$0xf]
  %v123 = vld [vmem:[%s1 + $0xb0] sm:$0xf]
  %v124 = vld [vmem:[%s1 + $0xb4] sm:$0xf]
  %v125 = vld [vmem:[%s1 + $0xb8] sm:$0xf]
  %v126 = vld [vmem:[%s1 + $0xbc] sm:$0xf]
  %v127 = vld [vmem:[%s1 + $0xc0] sm:$0xf]
  %v128 = vld [vmem:[%s1 + $0xc4] sm:$0xf]
  %v129 = vld [vmem:[%s1 + $0xc8] sm:$0xf]
  %v130 = vld [vmem:[%s1 + $0xcc] sm:$0xf]
  %v131 = vld [vmem:[%s1 + $0xd0] sm:$0xf]
  %v132 = vld [vmem:[%s1 + $0xd4] sm:$0xf]
  %v133 = vld [vmem:[%s1 + $0xd8] sm:$0xf]
  %v134 = vld [vmem:[%s1 + $0xdc] sm:$0xf]
  %v135 = vld [vmem:[%s1 + $0xe0] sm:$0xf]
  %v136 = vld [vmem:[%s1 + $0xe4] sm:$0xf]
  %v137 = vld [vmem:[%s1 + $0xe8] sm:$0xf]
  %v138 = vld [vmem:[%s1 + $0xec] sm:$0xf]
  %v139 = vld [vmem:[%s1 + $0xf0] sm:$0xf]
  %v140 = vld [vmem:[%s1 + $0xf4] sm:$0xf]
  %v141 = vld [vmem:[%s1 + $0xf8] sm:$0xf]
  %v142 = vld [vmem:[%s1 + $0xfc] sm:$0xf]
  %v143 = vld [vmem:[%s1 + $0x100] sm:$0xf]
  %v144 = vld [vmem:[%s1 + $0x104] sm:$0xf]
  %v145 = vld [vmem:[%s1 + $0x108] sm:$0xf]
  %v146 = vld [vmem:[%s1 + $0x10c] sm:$0xf]
  %v147 = vld [vmem:[%s1 + $0x110] sm:$0xf]
  %v148 = vld [vmem:[%s1 + $0x114] sm:$0xf]
  %v149 = vld [vmem:[%s1 + $0x118] sm:$0xf]
  %v150 = vld [vmem:[%s1 + $0x11c] sm:$0xf]
  %v151 = vld [vmem:[%s1 + $0x120] sm:$0xf]
  %v152 = vld [vmem:[%s1 + $0x124] sm:$0xf]
  %v153 = vld [vmem:[%s1 + $0x128] sm:$0xf]
  %v154 = vld [vmem:[%s1 + $0x12c] sm:$0xf]
  %v155 = vld [vmem:[%s1 + $0x130] sm:$0xf]
  %v156 = vld [vmem:[%s1 + $0x134] sm:$0xf]
  %v157 = vld [vmem:[%s1 + $0x138] sm:$0xf]
  %v158 = vld [vmem:[%s1 + $0x13c] sm:$0xf]
  %v159 = vld [vmem:[%s1 + $0x140] sm:$0xf]
  %v160 = vld [vmem:[%s1 + $0x144] sm:$0xf]
  %v161 = vld [vmem:[%s1 + $0x148] sm:$0xf]
  %v162 = vld [vmem:[%s1 + $0x14c] sm:$0xf]
  %v163 = vld [vmem:[%s1 + $0x150] sm:$0xf]
  %v164 = vld [vmem:[%s1 + $0x154] sm:$0xf]
  %v165 = vld [vmem:[%s1 + $0x158] sm:$0xf]
  %v166 = vld [vmem:[%s1 + $0x15c] sm:$0xf]
  %v167 = vld [vmem:[%s1 + $0x160] sm:$0xf]
  %v168 = vld [vmem:[%s1 + $0x164] sm:$0xf]
  %v169 = vld [vmem:[%s1 + $0x168] sm:$0xf]
  %v170 = vld [vmem:[%s1 + $0x16c] sm:$0xf]
  %v171 = vld [vmem:[%s1 + $0x170] sm:$0xf]
  %v172 = vld [vmem:[%s1 + $0x174] sm:$0xf]
  %v173 = vld [vmem:[%s1 + $0x178] sm:$0xf]
  %v174 = vld [vmem:[%s1 + $0x17c] sm:$0xf]
  %v175 = vld [vmem:[%s1 + $0x180] sm:$0xf]
  %v176 = vld [vmem:[%s1 + $0x184] sm:$0xf]
  %v177 = vld [vmem:[%s1 + $0x188] sm:$0xf]
  %v178 = vld [vmem:[%s1 + $0x18c] sm:$0xf]
  %v179 = vld [vmem:[%s1 + $0x190] sm:$0xf]
  %v180 = vld [vmem:[%s1 + $0x194] sm:$0xf]
  %v181 = vld [vmem:[%s1 + $0x198] sm:$0xf]
  %v182 = vld [vmem:[%s1 + $0x19c] sm:$0xf]
  %v183 = vld [vmem:[%s1 + $0x1a0] sm:$0xf]
  %v184 = vld [vmem:[%s1 + $0x1a4] sm:$0xf]
  %v185 = vld [vmem:[%s1 + $0x1a8] sm:$0xf]
  %v186 = vld [vmem:[%s1 + $0x1ac] sm:$0xf]
  %v187 = vld [vmem:[%s1 + $0x1b0] sm:$0xf]
  %v188 = vld [vmem:[%s1 + $0x1b4] sm:$0xf]
  %v189 = vld [vmem:[%s1 + $0x1b8] sm:$0xf]
  %v190 = vld [vmem:[%s1 + $0x1bc] sm:$0xf]
  %v191 = vld [vmem:[%s1 + $0x1c0] sm:$0xf]
  %v192 = vld [vmem:[%s1 + $0x1c4] sm:$0xf]
  %v193 = vld [vmem:[%s1 + $0x1c8] sm:$0xf]
  %v194 = vld [vmem:[%s1 + $0x1cc] sm:$0xf]
  %v195 = vld [vmem:[%s1 + $0x1d0] sm:$0xf]
  %v196 = vld [vmem:[%s1 + $0x1d4] sm:$0xf]
  %v197 = vld [vmem:[%s1 + $0x1d8] sm:$0xf]
  %v198 = vld [vmem:[%s1 + $0x1dc] sm:$0xf]
  %v199 = vld [vmem:[%s1 + $0x1e0] sm:$0xf]
  %v200 = vld [vmem:[%s1 + $0x1e4] sm:$0xf]
  %v201 = vld [vmem:[%s1 + $0x1e8] sm:$0xf]
  %v202 = vld [vmem:[%s1 + $0x1ec] sm:$0xf]
  %v203 = vld [vmem:[%s1 + $0x1f0] sm:$0xf]
  %v204 = vld [vmem:[%s1 + $0x1f4] sm:$0xf]
  %v205 = vld [vmem:[%s1 + $0x1f8] sm:$0xf]
  %v206 = vld [vmem:[%s1 + $0x1fc] sm:$0xf]
  %v207 = vld [vmem:[%s2] sm:$0x1]
  %v209 = vlaneseq
  %v210 = vshrl.u32 %v209, 7
  %v211 = vsub.s32 0, %v210
  %v212 = vrot.slane %v207, %v211
  %v278 = vunpack.c.l.b16 %v15
  %v279 = vunpack.c.h.b16 %v15
  %v280 = vunpack.c.l.b16 %v16
  %v281 = vunpack.c.h.b16 %v16
  %v282 = vunpack.c.l.b16 %v17
  %v283 = vunpack.c.h.b16 %v17
  %v284 = vunpack.c.l.b16 %v18
  %v285 = vunpack.c.h.b16 %v18
  %v286 = vunpack.c.l.b16 %v19
  %v287 = vunpack.c.h.b16 %v19
  %v288 = vunpack.c.l.b16 %v20
  %v289 = vunpack.c.h.b16 %v20
  %v290 = vunpack.c.l.b16 %v21
  %v291 = vunpack.c.h.b16 %v21
  %v292 = vunpack.c.l.b16 %v22
  %v293 = vunpack.c.h.b16 %v22
  %v294 = vunpack.c.l.b16 %v23
  %v295 = vunpack.c.h.b16 %v23
  %v296 = vunpack.c.l.b16 %v24
  %v297 = vunpack.c.h.b16 %v24
  %v298 = vunpack.c.l.b16 %v25
  %v299 = vunpack.c.h.b16 %v25
  %v300 = vunpack.c.l.b16 %v26
  %v301 = vunpack.c.h.b16 %v26
  %v302 = vunpack.c.l.b16 %v27
  %v303 = vunpack.c.h.b16 %v27
  %v304 = vunpack.c.l.b16 %v28
  %v305 = vunpack.c.h.b16 %v28
  %v306 = vunpack.c.l.b16 %v29
  %v307 = vunpack.c.h.b16 %v29
  %v308 = vunpack.c.l.b16 %v30
  %v309 = vunpack.c.h.b16 %v30
  %v310 = vunpack.c.l.b16 %v31
  %v311 = vunpack.c.h.b16 %v31
  %v312 = vunpack.c.l.b16 %v32
  %v313 = vunpack.c.h.b16 %v32
  %v314 = vunpack.c.l.b16 %v33
  %v315 = vunpack.c.h.b16 %v33
  %v316 = vunpack.c.l.b16 %v34
  %v317 = vunpack.c.h.b16 %v34
  %v318 = vunpack.c.l.b16 %v35
  %v319 = vunpack.c.h.b16 %v35
  %v320 = vunpack.c.l.b16 %v36
  %v321 = vunpack.c.h.b16 %v36
  %v322 = vunpack.c.l.b16 %v37
  %v323 = vunpack.c.h.b16 %v37
  %v324 = vunpack.c.l.b16 %v38
  %v325 = vunpack.c.h.b16 %v38
  %v326 = vunpack.c.l.b16 %v39
  %v327 = vunpack.c.h.b16 %v39
  %v328 = vunpack.c.l.b16 %v40
  %v329 = vunpack.c.h.b16 %v40
  %v330 = vunpack.c.l.b16 %v41
  %v331 = vunpack.c.h.b16 %v41
  %v332 = vunpack.c.l.b16 %v42
  %v333 = vunpack.c.h.b16 %v42
  %v334 = vunpack.c.l.b16 %v43
  %v335 = vunpack.c.h.b16 %v43
  %v336 = vunpack.c.l.b16 %v44
  %v337 = vunpack.c.h.b16 %v44
  %v338 = vunpack.c.l.b16 %v45
  %v339 = vunpack.c.h.b16 %v45
  %v340 = vunpack.c.l.b16 %v46
  %v341 = vunpack.c.h.b16 %v46
  %v342 = vunpack.c.l.b16 %v47
  %v343 = vunpack.c.h.b16 %v47
  %v344 = vunpack.c.l.b16 %v48
  %v345 = vunpack.c.h.b16 %v48
  %v346 = vunpack.c.l.b16 %v49
  %v347 = vunpack.c.h.b16 %v49
  %v348 = vunpack.c.l.b16 %v50
  %v349 = vunpack.c.h.b16 %v50
  %v350 = vunpack.c.l.b16 %v51
  %v351 = vunpack.c.h.b16 %v51
  %v352 = vunpack.c.l.b16 %v52
  %v353 = vunpack.c.h.b16 %v52
  %v354 = vunpack.c.l.b16 %v53
  %v355 = vunpack.c.h.b16 %v53
  %v356 = vunpack.c.l.b16 %v54
  %v357 = vunpack.c.h.b16 %v54
  %v358 = vunpack.c.l.b16 %v55
  %v359 = vunpack.c.h.b16 %v55
  %v360 = vunpack.c.l.b16 %v56
  %v361 = vunpack.c.h.b16 %v56
  %v362 = vunpack.c.l.b16 %v57
  %v363 = vunpack.c.h.b16 %v57
  %v364 = vunpack.c.l.b16 %v58
  %v365 = vunpack.c.h.b16 %v58
  %v366 = vunpack.c.l.b16 %v59
  %v367 = vunpack.c.h.b16 %v59
  %v368 = vunpack.c.l.b16 %v60
  %v369 = vunpack.c.h.b16 %v60
  %v370 = vunpack.c.l.b16 %v61
  %v371 = vunpack.c.h.b16 %v61
  %v372 = vunpack.c.l.b16 %v62
  %v373 = vunpack.c.h.b16 %v62
  %v374 = vunpack.c.l.b16 %v63
  %v375 = vunpack.c.h.b16 %v63
  %v376 = vunpack.c.l.b16 %v64
  %v377 = vunpack.c.h.b16 %v64
  %v378 = vunpack.c.l.b16 %v65
  %v379 = vunpack.c.h.b16 %v65
  %v380 = vunpack.c.l.b16 %v66
  %v381 = vunpack.c.h.b16 %v66
  %v382 = vunpack.c.l.b16 %v67
  %v383 = vunpack.c.h.b16 %v67
  %v384 = vunpack.c.l.b16 %v68
  %v385 = vunpack.c.h.b16 %v68
  %v386 = vunpack.c.l.b16 %v69
  %v387 = vunpack.c.h.b16 %v69
  %v388 = vunpack.c.l.b16 %v70
  %v389 = vunpack.c.h.b16 %v70
  %v390 = vunpack.c.l.b16 %v71
  %v391 = vunpack.c.h.b16 %v71
  %v392 = vunpack.c.l.b16 %v72
  %v393 = vunpack.c.h.b16 %v72
  %v394 = vunpack.c.l.b16 %v73
  %v395 = vunpack.c.h.b16 %v73
  %v396 = vunpack.c.l.b16 %v74
  %v397 = vunpack.c.h.b16 %v74
  %v398 = vunpack.c.l.b16 %v75
  %v399 = vunpack.c.h.b16 %v75
  %v400 = vunpack.c.l.b16 %v76
  %v401 = vunpack.c.h.b16 %v76
  %v402 = vunpack.c.l.b16 %v77
  %v403 = vunpack.c.h.b16 %v77
  %v404 = vunpack.c.l.b16 %v78
  %v405 = vunpack.c.h.b16 %v78
  %v406 = vpack.c.b16 %v286, %v278
  %v407 = vpack.c.b16 %v287, %v279
  %v408 = vpack.c.b16 %v288, %v280
  %v409 = vpack.c.b16 %v289, %v281
  %v410 = vpack.c.b16 %v290, %v282
  %v411 = vpack.c.b16 %v291, %v283
  %v412 = vpack.c.b16 %v292, %v284
  %v413 = vpack.c.b16 %v293, %v285
  %v414 = vpack.c.b16 %v302, %v294
  %v415 = vpack.c.b16 %v303, %v295
  %v416 = vpack.c.b16 %v304, %v296
  %v417 = vpack.c.b16 %v305, %v297
  %v418 = vpack.c.b16 %v306, %v298
  %v419 = vpack.c.b16 %v307, %v299
  %v420 = vpack.c.b16 %v308, %v300
  %v421 = vpack.c.b16 %v309, %v301
  %v422 = vpack.c.b16 %v318, %v310
  %v423 = vpack.c.b16 %v319, %v311
  %v424 = vpack.c.b16 %v320, %v312
  %v425 = vpack.c.b16 %v321, %v313
  %v426 = vpack.c.b16 %v322, %v314
  %v427 = vpack.c.b16 %v323, %v315
  %v428 = vpack.c.b16 %v324, %v316
  %v429 = vpack.c.b16 %v325, %v317
  %v430 = vpack.c.b16 %v334, %v326
  %v431 = vpack.c.b16 %v335, %v327
  %v432 = vpack.c.b16 %v336, %v328
  %v433 = vpack.c.b16 %v337, %v329
  %v434 = vpack.c.b16 %v338, %v330
  %v435 = vpack.c.b16 %v339, %v331
  %v436 = vpack.c.b16 %v340, %v332
  %v437 = vpack.c.b16 %v341, %v333
  %v438 = vpack.c.b16 %v350, %v342
  %v439 = vpack.c.b16 %v351, %v343
  %v440 = vpack.c.b16 %v352, %v344
  %v441 = vpack.c.b16 %v353, %v345
  %v442 = vpack.c.b16 %v354, %v346
  %v443 = vpack.c.b16 %v355, %v347
  %v444 = vpack.c.b16 %v356, %v348
  %v445 = vpack.c.b16 %v357, %v349
  %v446 = vpack.c.b16 %v366, %v358
  %v447 = vpack.c.b16 %v367, %v359
  %v448 = vpack.c.b16 %v368, %v360
  %v449 = vpack.c.b16 %v369, %v361
  %v450 = vpack.c.b16 %v370, %v362
  %v451 = vpack.c.b16 %v371, %v363
  %v452 = vpack.c.b16 %v372, %v364
  %v453 = vpack.c.b16 %v373, %v365
  %v454 = vpack.c.b16 %v382, %v374
  %v455 = vpack.c.b16 %v383, %v375
  %v456 = vpack.c.b16 %v384, %v376
  %v457 = vpack.c.b16 %v385, %v377
  %v458 = vpack.c.b16 %v386, %v378
  %v459 = vpack.c.b16 %v387, %v379
  %v460 = vpack.c.b16 %v388, %v380
  %v461 = vpack.c.b16 %v389, %v381
  %v462 = vpack.c.b16 %v398, %v390
  %v463 = vpack.c.b16 %v399, %v391
  %v464 = vpack.c.b16 %v400, %v392
  %v465 = vpack.c.b16 %v401, %v393
  %v466 = vpack.c.b16 %v402, %v394
  %v467 = vpack.c.b16 %v403, %v395
  %v468 = vpack.c.b16 %v404, %v396
  %v469 = vpack.c.b16 %v405, %v397
  %v662 = vunpack.c.l.b16 %v79
  %v663 = vunpack.c.l.b16 %v80
  %v664 = vunpack.c.l.b16 %v81
  %v665 = vunpack.c.l.b16 %v82
  %v666 = vunpack.c.l.b16 %v83
  %v667 = vunpack.c.l.b16 %v84
  %v668 = vunpack.c.l.b16 %v85
  %v669 = vunpack.c.l.b16 %v86
  %v670 = vunpack.c.l.b16 %v87
  %v671 = vunpack.c.l.b16 %v88
  %v672 = vunpack.c.l.b16 %v89
  %v673 = vunpack.c.l.b16 %v90
  %v674 = vunpack.c.l.b16 %v91
  %v675 = vunpack.c.l.b16 %v92
  %v676 = vunpack.c.l.b16 %v93
  %v677 = vunpack.c.l.b16 %v94
  %v678 = vunpack.c.l.b16 %v95
  %v679 = vunpack.c.l.b16 %v96
  %v680 = vunpack.c.l.b16 %v97
  %v681 = vunpack.c.l.b16 %v98
  %v682 = vunpack.c.l.b16 %v99
  %v683 = vunpack.c.l.b16 %v100
  %v684 = vunpack.c.l.b16 %v101
  %v685 = vunpack.c.l.b16 %v102
  %v686 = vunpack.c.l.b16 %v103
  %v687 = vunpack.c.l.b16 %v104
  %v688 = vunpack.c.l.b16 %v105
  %v689 = vunpack.c.l.b16 %v106
  %v690 = vunpack.c.l.b16 %v107
  %v691 = vunpack.c.l.b16 %v108
  %v692 = vunpack.c.l.b16 %v109
  %v693 = vunpack.c.l.b16 %v110
  %v694 = vunpack.c.l.b16 %v111
  %v695 = vunpack.c.l.b16 %v112
  %v696 = vunpack.c.l.b16 %v113
  %v697 = vunpack.c.l.b16 %v114
  %v698 = vunpack.c.l.b16 %v115
  %v699 = vunpack.c.l.b16 %v116
  %v700 = vunpack.c.l.b16 %v117
  %v701 = vunpack.c.l.b16 %v118
  %v702 = vunpack.c.l.b16 %v119
  %v703 = vunpack.c.l.b16 %v120
  %v704 = vunpack.c.l.b16 %v121
  %v705 = vunpack.c.l.b16 %v122
  %v706 = vunpack.c.l.b16 %v123
  %v707 = vunpack.c.l.b16 %v124
  %v708 = vunpack.c.l.b16 %v125
  %v709 = vunpack.c.l.b16 %v126
  %v710 = vunpack.c.l.b16 %v127
  %v711 = vunpack.c.l.b16 %v128
  %v712 = vunpack.c.l.b16 %v129
  %v713 = vunpack.c.l.b16 %v130
  %v714 = vunpack.c.l.b16 %v131
  %v715 = vunpack.c.l.b16 %v132
  %v716 = vunpack.c.l.b16 %v133
  %v717 = vunpack.c.l.b16 %v134
  %v718 = vunpack.c.l.b16 %v135
  %v719 = vunpack.c.l.b16 %v136
  %v720 = vunpack.c.l.b16 %v137
  %v721 = vunpack.c.l.b16 %v138
  %v722 = vunpack.c.l.b16 %v139
  %v723 = vunpack.c.l.b16 %v140
  %v724 = vunpack.c.l.b16 %v141
  %v725 = vunpack.c.l.b16 %v142
  %v726 = vunpack.c.l.b16 %v143
  %v727 = vunpack.c.l.b16 %v144
  %v728 = vunpack.c.l.b16 %v145
  %v729 = vunpack.c.l.b16 %v146
  %v730 = vunpack.c.l.b16 %v147
  %v731 = vunpack.c.l.b16 %v148
  %v732 = vunpack.c.l.b16 %v149
  %v733 = vunpack.c.l.b16 %v150
  %v734 = vunpack.c.l.b16 %v151
  %v735 = vunpack.c.l.b16 %v152
  %v736 = vunpack.c.l.b16 %v153
  %v737 = vunpack.c.l.b16 %v154
  %v738 = vunpack.c.l.b16 %v155
  %v739 = vunpack.c.l.b16 %v156
  %v740 = vunpack.c.l.b16 %v157
  %v741 = vunpack.c.l.b16 %v158
  %v742 = vunpack.c.l.b16 %v159
  %v743 = vunpack.c.l.b16 %v160
  %v744 = vunpack.c.l.b16 %v161
  %v745 = vunpack.c.l.b16 %v162
  %v746 = vunpack.c.l.b16 %v163
  %v747 = vunpack.c.l.b16 %v164
  %v748 = vunpack.c.l.b16 %v165
  %v749 = vunpack.c.l.b16 %v166
  %v750 = vunpack.c.l.b16 %v167
  %v751 = vunpack.c.l.b16 %v168
  %v752 = vunpack.c.l.b16 %v169
  %v753 = vunpack.c.l.b16 %v170
  %v754 = vunpack.c.l.b16 %v171
  %v755 = vunpack.c.l.b16 %v172
  %v756 = vunpack.c.l.b16 %v173
  %v757 = vunpack.c.l.b16 %v174
  %v758 = vunpack.c.l.b16 %v175
  %v759 = vunpack.c.l.b16 %v176
  %v760 = vunpack.c.l.b16 %v177
  %v761 = vunpack.c.l.b16 %v178
  %v762 = vunpack.c.l.b16 %v179
  %v763 = vunpack.c.l.b16 %v180
  %v764 = vunpack.c.l.b16 %v181
  %v765 = vunpack.c.l.b16 %v182
  %v766 = vunpack.c.l.b16 %v183
  %v767 = vunpack.c.l.b16 %v184
  %v768 = vunpack.c.l.b16 %v185
  %v769 = vunpack.c.l.b16 %v186
  %v770 = vunpack.c.l.b16 %v187
  %v771 = vunpack.c.l.b16 %v188
  %v772 = vunpack.c.l.b16 %v189
  %v773 = vunpack.c.l.b16 %v190
  %v774 = vunpack.c.l.b16 %v191
  %v775 = vunpack.c.l.b16 %v192
  %v776 = vunpack.c.l.b16 %v193
  %v777 = vunpack.c.l.b16 %v194
  %v778 = vunpack.c.l.b16 %v195
  %v779 = vunpack.c.l.b16 %v196
  %v780 = vunpack.c.l.b16 %v197
  %v781 = vunpack.c.l.b16 %v198
  %v782 = vunpack.c.l.b16 %v199
  %v783 = vunpack.c.l.b16 %v200
  %v784 = vunpack.c.l.b16 %v201
  %v785 = vunpack.c.l.b16 %v202
  %v786 = vunpack.c.l.b16 %v203
  %v787 = vunpack.c.l.b16 %v204
  %v788 = vunpack.c.l.b16 %v205
  %v789 = vunpack.c.l.b16 %v206
  %v790 = vpack.c.b16 %v663, %v662
  %v791 = vpack.c.b16 %v665, %v664
  %v792 = vpack.c.b16 %v667, %v666
  %v793 = vpack.c.b16 %v669, %v668
  %v794 = vpack.c.b16 %v671, %v670
  %v795 = vpack.c.b16 %v673, %v672
  %v796 = vpack.c.b16 %v675, %v674
  %v797 = vpack.c.b16 %v677, %v676
  %v798 = vpack.c.b16 %v679, %v678
  %v799 = vpack.c.b16 %v681, %v680
  %v800 = vpack.c.b16 %v683, %v682
  %v801 = vpack.c.b16 %v685, %v684
  %v802 = vpack.c.b16 %v687, %v686
  %v803 = vpack.c.b16 %v689, %v688
  %v804 = vpack.c.b16 %v691, %v690
  %v805 = vpack.c.b16 %v693, %v692
  %v806 = vpack.c.b16 %v695, %v694
  %v807 = vpack.c.b16 %v697, %v696
  %v808 = vpack.c.b16 %v699, %v698
  %v809 = vpack.c.b16 %v701, %v700
  %v810 = vpack.c.b16 %v703, %v702
  %v811 = vpack.c.b16 %v705, %v704
  %v812 = vpack.c.b16 %v707, %v706
  %v813 = vpack.c.b16 %v709, %v708
  %v814 = vpack.c.b16 %v711, %v710
  %v815 = vpack.c.b16 %v713, %v712
  %v816 = vpack.c.b16 %v715, %v714
  %v817 = vpack.c.b16 %v717, %v716
  %v818 = vpack.c.b16 %v719, %v718
  %v819 = vpack.c.b16 %v721, %v720
  %v820 = vpack.c.b16 %v723, %v722
  %v821 = vpack.c.b16 %v725, %v724
  %v822 = vpack.c.b16 %v727, %v726
  %v823 = vpack.c.b16 %v729, %v728
  %v824 = vpack.c.b16 %v731, %v730
  %v825 = vpack.c.b16 %v733, %v732
  %v826 = vpack.c.b16 %v735, %v734
  %v827 = vpack.c.b16 %v737, %v736
  %v828 = vpack.c.b16 %v739, %v738
  %v829 = vpack.c.b16 %v741, %v740
  %v830 = vpack.c.b16 %v743, %v742
  %v831 = vpack.c.b16 %v745, %v744
  %v832 = vpack.c.b16 %v747, %v746
  %v833 = vpack.c.b16 %v749, %v748
  %v834 = vpack.c.b16 %v751, %v750
  %v835 = vpack.c.b16 %v753, %v752
  %v836 = vpack.c.b16 %v755, %v754
  %v837 = vpack.c.b16 %v757, %v756
  %v838 = vpack.c.b16 %v759, %v758
  %v839 = vpack.c.b16 %v761, %v760
  %v840 = vpack.c.b16 %v763, %v762
  %v841 = vpack.c.b16 %v765, %v764
  %v842 = vpack.c.b16 %v767, %v766
  %v843 = vpack.c.b16 %v769, %v768
  %v844 = vpack.c.b16 %v771, %v770
  %v845 = vpack.c.b16 %v773, %v772
  %v846 = vpack.c.b16 %v775, %v774
  %v847 = vpack.c.b16 %v777, %v776
  %v848 = vpack.c.b16 %v779, %v778
  %v849 = vpack.c.b16 %v781, %v780
  %v850 = vpack.c.b16 %v783, %v782
  %v851 = vpack.c.b16 %v785, %v784
  %v852 = vpack.c.b16 %v787, %v786
  %v853 = vpack.c.b16 %v789, %v788
  %918 = vmatprep.subr.bf16.mxu0 0
  %919 = vmatpush1.bf16.msra.mxu0 %v790
  %920 = vmatprep.subr.bf16.mxu0 0
  %921 = vmatpush1.bf16.msra.mxu0 %v791
  %922 = vmatprep.subr.bf16.mxu0 0
  %923 = vmatpush1.bf16.msra.mxu0 %v792
  %924 = vmatprep.subr.bf16.mxu0 0
  %925 = vmatpush1.bf16.msra.mxu0 %v793
  %926 = vmatprep.subr.bf16.mxu0 0
  %927 = vmatpush1.bf16.msra.mxu0 %v794
  %928 = vmatprep.subr.bf16.mxu0 0
  %929 = vmatpush1.bf16.msra.mxu0 %v795
  %930 = vmatprep.subr.bf16.mxu0 0
  %931 = vmatpush1.bf16.msra.mxu0 %v796
  %932 = vmatprep.subr.bf16.mxu0 0
  %933 = vmatpush1.bf16.msra.mxu0 %v797
  %934 = vmatprep.subr.bf16.mxu0 0
  %935 = vmatpush1.bf16.msra.mxu0 %v798
  %936 = vmatprep.subr.bf16.mxu0 0
  %937 = vmatpush1.bf16.msra.mxu0 %v799
  %938 = vmatprep.subr.bf16.mxu0 0
  %939 = vmatpush1.bf16.msra.mxu0 %v800
  %940 = vmatprep.subr.bf16.mxu0 0
  %941 = vmatpush1.bf16.msra.mxu0 %v801
  %942 = vmatprep.subr.bf16.mxu0 0
  %943 = vmatpush1.bf16.msra.mxu0 %v802
  %944 = vmatprep.subr.bf16.mxu0 0
  %945 = vmatpush1.bf16.msra.mxu0 %v803
  %946 = vmatprep.subr.bf16.mxu0 0
  %947 = vmatpush1.bf16.msra.mxu0 %v804
  %948 = vmatprep.subr.bf16.mxu0 0
  %949 = vmatpush1.bf16.msra.mxu0 %v805
  %950 = vmatprep.mubr.bf16.mxu0 %v407
  %951 = vmatmul.mubr.bf16.gmra.mrb[0].mxu0 %v406
  %v952 = vpop.f32.mrb[0].mxu0
  %v953 = vadd.f32 %v212, %v952
  %v954 = vpop.f32.mrb[0].mxu0
  %v955 = vpop.f32.mrb[0].mxu0
  %v956 = vadd.f32 %v212, %v955
  %v957 = vpop.f32.mrb[0].mxu0
  %958 = vmatprep.mubr.bf16.mxu0 %v415
  %959 = vmatmul.mubr.bf16.gmra.mrb[0].mxu0 %v414
  %v960 = vpop.f32.mrb[0].mxu0
  %v961 = vadd.f32 %v212, %v960
  %v962 = vpop.f32.mrb[0].mxu0
  %v963 = vpop.f32.mrb[0].mxu0
  %v964 = vadd.f32 %v212, %v963
  %v965 = vpop.f32.mrb[0].mxu0
  %966 = vmatprep.mubr.bf16.mxu0 %v423
  %967 = vmatmul.mubr.bf16.gmra.mrb[0].mxu0 %v422
  %v968 = vpop.f32.mrb[0].mxu0
  %v969 = vadd.f32 %v212, %v968
  %v970 = vpop.f32.mrb[0].mxu0
  %v971 = vpop.f32.mrb[0].mxu0
  %v972 = vadd.f32 %v212, %v971
  %v973 = vpop.f32.mrb[0].mxu0
  %974 = vmatprep.mubr.bf16.mxu0 %v431
  %975 = vmatmul.mubr.bf16.gmra.mrb[0].mxu0 %v430
  %v976 = vpop.f32.mrb[0].mxu0
  %v977 = vadd.f32 %v212, %v976
  %v978 = vpop.f32.mrb[0].mxu0
  %v979 = vpop.f32.mrb[0].mxu0
  %v980 = vadd.f32 %v212, %v979
  %v981 = vpop.f32.mrb[0].mxu0
  %982 = vmatprep.mubr.bf16.mxu0 %v439
  %983 = vmatmul.mubr.bf16.gmra.mrb[0].mxu0 %v438
  %v984 = vpop.f32.mrb[0].mxu0
  %v985 = vadd.f32 %v212, %v984
  %v986 = vpop.f32.mrb[0].mxu0
  %v987 = vpop.f32.mrb[0].mxu0
  %v988 = vadd.f32 %v212, %v987
  %v989 = vpop.f32.mrb[0].mxu0
  %990 = vmatprep.mubr.bf16.mxu0 %v447
  %991 = vmatmul.mubr.bf16.gmra.mrb[0].mxu0 %v446
  %v992 = vpop.f32.mrb[0].mxu0
  %v993 = vadd.f32 %v212, %v992
  %v994 = vpop.f32.mrb[0].mxu0
  %v995 = vpop.f32.mrb[0].mxu0
  %v996 = vadd.f32 %v212, %v995
  %v997 = vpop.f32.mrb[0].mxu0
  %998 = vmatprep.mubr.bf16.mxu0 %v455
  %999 = vmatmul.mubr.bf16.gmra.mrb[0].mxu0 %v454
  %v1000 = vpop.f32.mrb[0].mxu0
  %v1001 = vadd.f32 %v212, %v1000
  %v1002 = vpop.f32.mrb[0].mxu0
  %v1003 = vpop.f32.mrb[0].mxu0
  %v1004 = vadd.f32 %v212, %v1003
  %v1005 = vpop.f32.mrb[0].mxu0
  %1006 = vmatprep.mubr.bf16.mxu0 %v463
  %1007 = vmatmul.mubr.bf16.gmra.mrb[0].mxu0 %v462
  %v1008 = vpop.f32.mrb[0].mxu0
  %v1009 = vadd.f32 %v212, %v1008
  %v1010 = vpop.f32.mrb[0].mxu0
  %v1011 = vpop.f32.mrb[0].mxu0
  %v1012 = vadd.f32 %v212, %v1011
  %v1013 = vpop.f32.mrb[0].mxu0
  %1014 = vdwg.mxu0
  %1015 = vmatprep.subr.bf16.mxu0 0
  %1016 = vmatpush1.bf16.msra.mxu0 %v806
  %1017 = vmatprep.subr.bf16.mxu0 0
  %1018 = vmatpush1.bf16.msra.mxu0 %v807
  %1019 = vmatprep.subr.bf16.mxu0 0
  %1020 = vmatpush1.bf16.msra.mxu0 %v808
  %1021 = vmatprep.subr.bf16.mxu0 0
  %1022 = vmatpush1.bf16.msra.mxu0 %v809
  %1023 = vmatprep.subr.bf16.mxu0 0
  %1024 = vmatpush1.bf16.msra.mxu0 %v810
  %1025 = vmatprep.subr.bf16.mxu0 0
  %1026 = vmatpush1.bf16.msra.mxu0 %v811
  %1027 = vmatprep.subr.bf16.mxu0 0
  %1028 = vmatpush1.bf16.msra.mxu0 %v812
  %1029 = vmatprep.subr.bf16.mxu0 0
  %1030 = vmatpush1.bf16.msra.mxu0 %v813
  %1031 = vmatprep.subr.bf16.mxu0 0
  %1032 = vmatpush1.bf16.msra.mxu0 %v814
  %1033 = vmatprep.subr.bf16.mxu0 0
  %1034 = vmatpush1.bf16.msra.mxu0 %v815
  %1035 = vmatprep.subr.bf16.mxu0 0
  %1036 = vmatpush1.bf16.msra.mxu0 %v816
  %1037 = vmatprep.subr.bf16.mxu0 0
  %1038 = vmatpush1.bf16.msra.mxu0 %v817
  %1039 = vmatprep.subr.bf16.mxu0 0
  %1040 = vmatpush1.bf16.msra.mxu0 %v818
  %1041 = vmatprep.subr.bf16.mxu0 0
  %1042 = vmatpush1.bf16.msra.mxu0 %v819
  %1043 = vmatprep.subr.bf16.mxu0 0
  %1044 = vmatpush1.bf16.msra.mxu0 %v820
  %1045 = vmatprep.subr.bf16.mxu0 0
  %1046 = vmatpush1.bf16.msra.mxu0 %v821
  %1047 = vmatprep.mubr.bf16.mxu0 %v409
  %1048 = vmatmul.mubr.bf16.gmra.mrb[0].mxu0 %v408
  %v1049 = vpop.f32.mrb[0].mxu0
  %v1050 = vadd.f32 %v953, %v1049
  %v1051 = vpop.f32.mrb[0].mxu0
  %v1052 = vpop.f32.mrb[0].mxu0
  %v1053 = vadd.f32 %v956, %v1052
  %v1054 = vpop.f32.mrb[0].mxu0
  %1055 = vmatprep.mubr.bf16.mxu0 %v417
  %1056 = vmatmul.mubr.bf16.gmra.mrb[0].mxu0 %v416
  %v1057 = vpop.f32.mrb[0].mxu0
  %v1058 = vadd.f32 %v961, %v1057
  %v1059 = vpop.f32.mrb[0].mxu0
  %v1060 = vpop.f32.mrb[0].mxu0
  %v1061 = vadd.f32 %v964, %v1060
  %v1062 = vpop.f32.mrb[0].mxu0
  %1063 = vmatprep.mubr.bf16.mxu0 %v425
  %1064 = vmatmul.mubr.bf16.gmra.mrb[0].mxu0 %v424
  %v1065 = vpop.f32.mrb[0].mxu0
  %v1066 = vadd.f32 %v969, %v1065
  %v1067 = vpop.f32.mrb[0].mxu0
  %v1068 = vpop.f32.mrb[0].mxu0
  %v1069 = vadd.f32 %v972, %v1068
  %v1070 = vpop.f32.mrb[0].mxu0
  %1071 = vmatprep.mubr.bf16.mxu0 %v433
  %1072 = vmatmul.mubr.bf16.gmra.mrb[0].mxu0 %v432
  %v1073 = vpop.f32.mrb[0].mxu0
  %v1074 = vadd.f32 %v977, %v1073
  %v1075 = vpop.f32.mrb[0].mxu0
  %v1076 = vpop.f32.mrb[0].mxu0
  %v1077 = vadd.f32 %v980, %v1076
  %v1078 = vpop.f32.mrb[0].mxu0
  %1079 = vmatprep.mubr.bf16.mxu0 %v441
  %1080 = vmatmul.mubr.bf16.gmra.mrb[0].mxu0 %v440
  %v1081 = vpop.f32.mrb[0].mxu0
  %v1082 = vadd.f32 %v985, %v1081
  %v1083 = vpop.f32.mrb[0].mxu0
  %v1084 = vpop.f32.mrb[0].mxu0
  %v1085 = vadd.f32 %v988, %v1084
  %v1086 = vpop.f32.mrb[0].mxu0
  %1087 = vmatprep.mubr.bf16.mxu0 %v449
  %1088 = vmatmul.mubr.bf16.gmra.mrb[0].mxu0 %v448
  %v1089 = vpop.f32.mrb[0].mxu0
  %v1090 = vadd.f32 %v993, %v1089
  %v1091 = vpop.f32.mrb[0].mxu0
  %v1092 = vpop.f32.mrb[0].mxu0
  %v1093 = vadd.f32 %v996, %v1092
  %v1094 = vpop.f32.mrb[0].mxu0
  %1095 = vmatprep.mubr.bf16.mxu0 %v457
  %1096 = vmatmul.mubr.bf16.gmra.mrb[0].mxu0 %v456
  %v1097 = vpop.f32.mrb[0].mxu0
  %v1098 = vadd.f32 %v1001, %v1097
  %v1099 = vpop.f32.mrb[0].mxu0
  %v1100 = vpop.f32.mrb[0].mxu0
  %v1101 = vadd.f32 %v1004, %v1100
  %v1102 = vpop.f32.mrb[0].mxu0
  %1103 = vmatprep.mubr.bf16.mxu0 %v465
  %1104 = vmatmul.mubr.bf16.gmra.mrb[0].mxu0 %v464
  %v1105 = vpop.f32.mrb[0].mxu0
  %v1106 = vadd.f32 %v1009, %v1105
  %v1107 = vpop.f32.mrb[0].mxu0
  %v1108 = vpop.f32.mrb[0].mxu0
  %v1109 = vadd.f32 %v1012, %v1108
  %v1110 = vpop.f32.mrb[0].mxu0
  %1111 = vdwg.mxu0
  %1112 = vmatprep.subr.bf16.mxu0 0
  %1113 = vmatpush1.bf16.msra.mxu0 %v822
  %1114 = vmatprep.subr.bf16.mxu0 0
  %1115 = vmatpush1.bf16.msra.mxu0 %v823
  %1116 = vmatprep.subr.bf16.mxu0 0
  %1117 = vmatpush1.bf16.msra.mxu0 %v824
  %1118 = vmatprep.subr.bf16.mxu0 0
  %1119 = vmatpush1.bf16.msra.mxu0 %v825
  %1120 = vmatprep.subr.bf16.mxu0 0
  %1121 = vmatpush1.bf16.msra.mxu0 %v826
  %1122 = vmatprep.subr.bf16.mxu0 0
  %1123 = vmatpush1.bf16.msra.mxu0 %v827
  %1124 = vmatprep.subr.bf16.mxu0 0
  %1125 = vmatpush1.bf16.msra.mxu0 %v828
  %1126 = vmatprep.subr.bf16.mxu0 0
  %1127 = vmatpush1.bf16.msra.mxu0 %v829
  %1128 = vmatprep.subr.bf16.mxu0 0
  %1129 = vmatpush1.bf16.msra.mxu0 %v830
  %1130 = vmatprep.subr.bf16.mxu0 0
  %1131 = vmatpush1.bf16.msra.mxu0 %v831
  %1132 = vmatprep.subr.bf16.mxu0 0
  %1133 = vmatpush1.bf16.msra.mxu0 %v832
  %1134 = vmatprep.subr.bf16.mxu0 0
  %1135 = vmatpush1.bf16.msra.mxu0 %v833
  %1136 = vmatprep.subr.bf16.mxu0 0
  %1137 = vmatpush1.bf16.msra.mxu0 %v834
  %1138 = vmatprep.subr.bf16.mxu0 0
  %1139 = vmatpush1.bf16.msra.mxu0 %v835
  %1140 = vmatprep.subr.bf16.mxu0 0
  %1141 = vmatpush1.bf16.msra.mxu0 %v836
  %1142 = vmatprep.subr.bf16.mxu0 0
  %1143 = vmatpush1.bf16.msra.mxu0 %v837
  %1144 = vmatprep.mubr.bf16.mxu0 %v411
  %1145 = vmatmul.mubr.bf16.gmra.mrb[0].mxu0 %v410
  %v1146 = vpop.f32.mrb[0].mxu0
  %v1147 = vadd.f32 %v1050, %v1146
  %v1148 = vpop.f32.mrb[0].mxu0
  %v1149 = vpop.f32.mrb[0].mxu0
  %v1150 = vadd.f32 %v1053, %v1149
  %v1151 = vpop.f32.mrb[0].mxu0
  %1152 = vmatprep.mubr.bf16.mxu0 %v419
  %1153 = vmatmul.mubr.bf16.gmra.mrb[0].mxu0 %v418
  %v1154 = vpop.f32.mrb[0].mxu0
  %v1155 = vadd.f32 %v1058, %v1154
  %v1156 = vpop.f32.mrb[0].mxu0
  %v1157 = vpop.f32.mrb[0].mxu0
  %v1158 = vadd.f32 %v1061, %v1157
  %v1159 = vpop.f32.mrb[0].mxu0
  %1160 = vmatprep.mubr.bf16.mxu0 %v427
  %1161 = vmatmul.mubr.bf16.gmra.mrb[0].mxu0 %v426
  %v1162 = vpop.f32.mrb[0].mxu0
  %v1163 = vadd.f32 %v1066, %v1162
  %v1164 = vpop.f32.mrb[0].mxu0
  %v1165 = vpop.f32.mrb[0].mxu0
  %v1166 = vadd.f32 %v1069, %v1165
  %v1167 = vpop.f32.mrb[0].mxu0
  %1168 = vmatprep.mubr.bf16.mxu0 %v435
  %1169 = vmatmul.mubr.bf16.gmra.mrb[0].mxu0 %v434
  %v1170 = vpop.f32.mrb[0].mxu0
  %v1171 = vadd.f32 %v1074, %v1170
  %v1172 = vpop.f32.mrb[0].mxu0
  %v1173 = vpop.f32.mrb[0].mxu0
  %v1174 = vadd.f32 %v1077, %v1173
  %v1175 = vpop.f32.mrb[0].mxu0
  %1176 = vmatprep.mubr.bf16.mxu0 %v443
  %1177 = vmatmul.mubr.bf16.gmra.mrb[0].mxu0 %v442
  %v1178 = vpop.f32.mrb[0].mxu0
  %v1179 = vadd.f32 %v1082, %v1178
  %v1180 = vpop.f32.mrb[0].mxu0
  %v1181 = vpop.f32.mrb[0].mxu0
  %v1182 = vadd.f32 %v1085, %v1181
  %v1183 = vpop.f32.mrb[0].mxu0
  %1184 = vmatprep.mubr.bf16.mxu0 %v451
  %1185 = vmatmul.mubr.bf16.gmra.mrb[0].mxu0 %v450
  %v1186 = vpop.f32.mrb[0].mxu0
  %v1187 = vadd.f32 %v1090, %v1186
  %v1188 = vpop.f32.mrb[0].mxu0
  %v1189 = vpop.f32.mrb[0].mxu0
  %v1190 = vadd.f32 %v1093, %v1189
  %v1191 = vpop.f32.mrb[0].mxu0
  %1192 = vmatprep.mubr.bf16.mxu0 %v459
  %1193 = vmatmul.mubr.bf16.gmra.mrb[0].mxu0 %v458
  %v1194 = vpop.f32.mrb[0].mxu0
  %v1195 = vadd.f32 %v1098, %v1194
  %v1196 = vpop.f32.mrb[0].mxu0
  %v1197 = vpop.f32.mrb[0].mxu0
  %v1198 = vadd.f32 %v1101, %v1197
  %v1199 = vpop.f32.mrb[0].mxu0
  %1200 = vmatprep.mubr.bf16.mxu0 %v467
  %1201 = vmatmul.mubr.bf16.gmra.mrb[0].mxu0 %v466
  %v1202 = vpop.f32.mrb[0].mxu0
  %v1203 = vadd.f32 %v1106, %v1202
  %v1204 = vpop.f32.mrb[0].mxu0
  %v1205 = vpop.f32.mrb[0].mxu0
  %v1206 = vadd.f32 %v1109, %v1205
  %v1207 = vpop.f32.mrb[0].mxu0
  %1208 = vdwg.mxu0
  %1209 = vmatprep.subr.bf16.mxu0 0
  %1210 = vmatpush1.bf16.msra.mxu0 %v838
  %1211 = vmatprep.subr.bf16.mxu0 0
  %1212 = vmatpush1.bf16.msra.mxu0 %v839
  %1213 = vmatprep.subr.bf16.mxu0 0
  %1214 = vmatpush1.bf16.msra.mxu0 %v840
  %1215 = vmatprep.subr.bf16.mxu0 0
  %1216 = vmatpush1.bf16.msra.mxu0 %v841
  %1217 = vmatprep.subr.bf16.mxu0 0
  %1218 = vmatpush1.bf16.msra.mxu0 %v842
  %1219 = vmatprep.subr.bf16.mxu0 0
  %1220 = vmatpush1.bf16.msra.mxu0 %v843
  %1221 = vmatprep.subr.bf16.mxu0 0
  %1222 = vmatpush1.bf16.msra.mxu0 %v844
  %1223 = vmatprep.subr.bf16.mxu0 0
  %1224 = vmatpush1.bf16.msra.mxu0 %v845
  %1225 = vmatprep.subr.bf16.mxu0 0
  %1226 = vmatpush1.bf16.msra.mxu0 %v846
  %1227 = vmatprep.subr.bf16.mxu0 0
  %1228 = vmatpush1.bf16.msra.mxu0 %v847
  %1229 = vmatprep.subr.bf16.mxu0 0
  %1230 = vmatpush1.bf16.msra.mxu0 %v848
  %1231 = vmatprep.subr.bf16.mxu0 0
  %1232 = vmatpush1.bf16.msra.mxu0 %v849
  %1233 = vmatprep.subr.bf16.mxu0 0
  %1234 = vmatpush1.bf16.msra.mxu0 %v850
  %1235 = vmatprep.subr.bf16.mxu0 0
  %1236 = vmatpush1.bf16.msra.mxu0 %v851
  %1237 = vmatprep.subr.bf16.mxu0 0
  %1238 = vmatpush1.bf16.msra.mxu0 %v852
  %1239 = vmatprep.subr.bf16.mxu0 0
  %1240 = vmatpush1.bf16.msra.mxu0 %v853
  %1241 = vmatprep.mubr.bf16.mxu0 %v413
  %1242 = vmatmul.mubr.bf16.gmra.mrb[0].mxu0 %v412
  %v1243 = vpop.f32.mrb[0].mxu0
  %v1244 = vadd.f32 %v1147, %v1243
  %v1245 = vpop.f32.mrb[0].mxu0
  %v1246 = vpop.f32.mrb[0].mxu0
  %v1247 = vadd.f32 %v1150, %v1246
  %v1248 = vpop.f32.mrb[0].mxu0
  %1249 = vmatprep.mubr.bf16.mxu0 %v421
  %1250 = vmatmul.mubr.bf16.gmra.mrb[0].mxu0 %v420
  %v1251 = vpop.f32.mrb[0].mxu0
  %v1252 = vadd.f32 %v1155, %v1251
  %v1253 = vpop.f32.mrb[0].mxu0
  %v1254 = vpop.f32.mrb[0].mxu0
  %v1255 = vadd.f32 %v1158, %v1254
  %v1256 = vpop.f32.mrb[0].mxu0
  %1257 = vmatprep.mubr.bf16.mxu0 %v429
  %1258 = vmatmul.mubr.bf16.gmra.mrb[0].mxu0 %v428
  %v1259 = vpop.f32.mrb[0].mxu0
  %v1260 = vadd.f32 %v1163, %v1259
  %v1261 = vpop.f32.mrb[0].mxu0
  %v1262 = vpop.f32.mrb[0].mxu0
  %v1263 = vadd.f32 %v1166, %v1262
  %v1264 = vpop.f32.mrb[0].mxu0
  %1265 = vmatprep.mubr.bf16.mxu0 %v437
  %1266 = vmatmul.mubr.bf16.gmra.mrb[0].mxu0 %v436
  %v1267 = vpop.f32.mrb[0].mxu0
  %v1268 = vadd.f32 %v1171, %v1267
  %v1269 = vpop.f32.mrb[0].mxu0
  %v1270 = vpop.f32.mrb[0].mxu0
  %v1271 = vadd.f32 %v1174, %v1270
  %v1272 = vpop.f32.mrb[0].mxu0
  %1273 = vmatprep.mubr.bf16.mxu0 %v445
  %1274 = vmatmul.mubr.bf16.gmra.mrb[0].mxu0 %v444
  %v1275 = vpop.f32.mrb[0].mxu0
  %v1276 = vadd.f32 %v1179, %v1275
  %v1277 = vpop.f32.mrb[0].mxu0
  %v1278 = vpop.f32.mrb[0].mxu0
  %v1279 = vadd.f32 %v1182, %v1278
  %v1280 = vpop.f32.mrb[0].mxu0
  %1281 = vmatprep.mubr.bf16.mxu0 %v453
  %1282 = vmatmul.mubr.bf16.gmra.mrb[0].mxu0 %v452
  %v1283 = vpop.f32.mrb[0].mxu0
  %v1284 = vadd.f32 %v1187, %v1283
  %v1285 = vpop.f32.mrb[0].mxu0
  %v1286 = vpop.f32.mrb[0].mxu0
  %v1287 = vadd.f32 %v1190, %v1286
  %v1288 = vpop.f32.mrb[0].mxu0
  %1289 = vmatprep.mubr.bf16.mxu0 %v461
  %1290 = vmatmul.mubr.bf16.gmra.mrb[0].mxu0 %v460
  %v1291 = vpop.f32.mrb[0].mxu0
  %v1292 = vadd.f32 %v1195, %v1291
  %v1293 = vpop.f32.mrb[0].mxu0
  %v1294 = vpop.f32.mrb[0].mxu0
  %v1295 = vadd.f32 %v1198, %v1294
  %v1296 = vpop.f32.mrb[0].mxu0
  %1297 = vmatprep.mubr.bf16.mxu0 %v469
  %1298 = vmatmul.mubr.bf16.gmra.mrb[0].mxu0 %v468
  %v1299 = vpop.f32.mrb[0].mxu0
  %v1300 = vadd.f32 %v1203, %v1299
  %v1301 = vpop.f32.mrb[0].mxu0
  %v1302 = vpop.f32.mrb[0].mxu0
  %v1303 = vadd.f32 %v1206, %v1302
  %v1304 = vpop.f32.mrb[0].mxu0
  %1305 = vdwg.mxu0
  %v1306 = vmax.f32 %v1244, 0.0
  %v1307 = vmax.f32 %v1247, 0.0
  %v1308 = vmax.f32 %v1252, 0.0
  %v1309 = vmax.f32 %v1255, 0.0
  %v1310 = vmax.f32 %v1260, 0.0
  %v1311 = vmax.f32 %v1263, 0.0
  %v1312 = vmax.f32 %v1268, 0.0
  %v1313 = vmax.f32 %v1271, 0.0
  %v1314 = vmax.f32 %v1276, 0.0
  %v1315 = vmax.f32 %v1279, 0.0
  %v1316 = vmax.f32 %v1284, 0.0
  %v1317 = vmax.f32 %v1287, 0.0
  %v1318 = vmax.f32 %v1292, 0.0
  %v1319 = vmax.f32 %v1295, 0.0
  %v1320 = vmax.f32 %v1300, 0.0
  %v1321 = vmax.f32 %v1303, 0.0
  %v1322 = vpack.c.bf16 %v1307, %v1306
  %v1323 = vpack.c.bf16 %v1309, %v1308
  %v1324 = vpack.c.bf16 %v1311, %v1310
  %v1325 = vpack.c.bf16 %v1313, %v1312
  %v1326 = vpack.c.bf16 %v1315, %v1314
  %v1327 = vpack.c.bf16 %v1317, %v1316
  %v1328 = vpack.c.bf16 %v1319, %v1318
  %v1329 = vpack.c.bf16 %v1321, %v1320
  %v1338 = vunpack.c.l.b16 %v1322
  %v1339 = vunpack.c.h.b16 %v1322
  %v1340 = vunpack.c.l.b16 %v1323
  %v1341 = vunpack.c.h.b16 %v1323
  %v1342 = vunpack.c.l.b16 %v1324
  %v1343 = vunpack.c.h.b16 %v1324
  %v1344 = vunpack.c.l.b16 %v1325
  %v1345 = vunpack.c.h.b16 %v1325
  %v1346 = vunpack.c.l.b16 %v1326
  %v1347 = vunpack.c.h.b16 %v1326
  %v1348 = vunpack.c.l.b16 %v1327
  %v1349 = vunpack.c.h.b16 %v1327
  %v1350 = vunpack.c.l.b16 %v1328
  %v1351 = vunpack.c.h.b16 %v1328
  %v1352 = vunpack.c.l.b16 %v1329
  %v1353 = vunpack.c.h.b16 %v1329
  %v1354 = vpack.c.b16 %v1338, %v1338
  %v1355 = vpack.c.b16 %v1339, %v1339
  %v1356 = vpack.c.b16 %v1340, %v1340
  %v1357 = vpack.c.b16 %v1341, %v1341
  %v1358 = vpack.c.b16 %v1342, %v1342
  %v1359 = vpack.c.b16 %v1343, %v1343
  %v1360 = vpack.c.b16 %v1344, %v1344
  %v1361 = vpack.c.b16 %v1345, %v1345
  %v1362 = vpack.c.b16 %v1346, %v1346
  %v1363 = vpack.c.b16 %v1347, %v1347
  %v1364 = vpack.c.b16 %v1348, %v1348
  %v1365 = vpack.c.b16 %v1349, %v1349
  %v1366 = vpack.c.b16 %v1350, %v1350
  %v1367 = vpack.c.b16 %v1351, %v1351
  %v1368 = vpack.c.b16 %v1352, %v1352
  %v1369 = vpack.c.b16 %v1353, %v1353
  %1386 = vst [vmem:[%s3] sm:$0xf] %v1354
  %1387 = vst [vmem:[%s3 + $0x4] sm:$0xf] %v1355
  %1388 = vst [vmem:[%s3 + $0x8] sm:$0xf] %v1356
  %1389 = vst [vmem:[%s3 + $0xc] sm:$0xf] %v1357
  %1390 = vst [vmem:[%s3 + $0x10] sm:$0xf] %v1358
  %1391 = vst [vmem:[%s3 + $0x14] sm:$0xf] %v1359
  %1392 = vst [vmem:[%s3 + $0x18] sm:$0xf] %v1360
  %1393 = vst [vmem:[%s3 + $0x1c] sm:$0xf] %v1361
  %1394 = vst [vmem:[%s3 + $0x20] sm:$0xf] %v1362
  %1395 = vst [vmem:[%s3 + $0x24] sm:$0xf] %v1363
  %1396 = vst [vmem:[%s3 + $0x28] sm:$0xf] %v1364
  %1397 = vst [vmem:[%s3 + $0x2c] sm:$0xf] %v1365
  %1398 = vst [vmem:[%s3 + $0x30] sm:$0xf] %v1366
  %1399 = vst [vmem:[%s3 + $0x34] sm:$0xf] %v1367
  %1400 = vst [vmem:[%s3 + $0x38] sm:$0xf] %v1368
  %1401 = vst [vmem:[%s3 + $0x3c] sm:$0xf] %v1369
  // Predicated region
  $region14: #{pix_forward.5} parent=0 // pred_check
    _
  $region15: #{pix_forward.5} parent=0 // pred_check_branch
    %1403 = sbr.rel (0) target = $region17
  $region16: #{pix_forward.5} parent=0 // pred_region
    _
  $region17: #{pix_forward.5} parent=0 // pred_fallthru
    _
  // Predicated region
  $region18: #{pix_forward.5} parent=0 // pred_check
    _
  $region19: #{pix_forward.5} parent=0 // pred_check_branch
    %1405 = sbr.rel (0) target = $region21
  $region20: #{pix_forward.5} parent=0 // pred_region
    _
  $region21: #{pix_forward.5} parent=0 // pred_fallthru
    _

// kernel: pix_forward.6
$region0: #{pix_forward.6}
  #allocation0 [shape = 'u32[]', space=smem, size = 0x4, offset = 0x4, fixed_abs, tag = 'smem constant byte address 0x4 - core index']
  #allocation1 [shape = 'u32[144,128]{1,0:T(1,128)}', space=vmem, size = 0x12000, scoped, tag = 'internal scratch']
  %s0 = inlined_call_operand.vmem [shape: bf16[128,2304], index: 0, kind: input, shape index: {}]
  %s1 = inlined_call_operand.vmem [shape: bf16[2304,256], index: 1, kind: input, shape index: {}]
  %s2 = inlined_call_operand.vmem [shape: f32[1,256], index: 2, kind: input, shape index: {}]
  %s3 = inlined_call_operand.vmem [shape: bf16[128,256], index: 3, kind: output, shape index: {}]
  %s4 = sld [smem:[#allocation0]]
  $region22: #{pix_forward.6} parent=0
    _
  %s6 = ssub.s32 1, %s4
  %s7 = scalar_select 0, %s6, %s4
  // Predicated region
  $region2: #{pix_forward.6} parent=0 // pred_check
    _
  $region3: #{pix_forward.6} parent=0 // pred_check_branch
    %9 = sbr.rel (0) target = $region5
  $region4: #{pix_forward.6} parent=0 // pred_region
    _
  $region5: #{pix_forward.6} parent=0 // pred_fallthru
    _
  // Predicated region
  $region6: #{pix_forward.6} parent=0 // pred_check
    _
  $region7: #{pix_forward.6} parent=0 // pred_check_branch
    %11 = sbr.rel (0) target = $region9
  $region8: #{pix_forward.6} parent=0 // pred_region
    _
  $region9: #{pix_forward.6} parent=0 // pred_fallthru
    _
  // Predicated region
  $region10: #{pix_forward.6} parent=0 // pred_check
    _
  $region11: #{pix_forward.6} parent=0 // pred_check_branch
    %13 = sbr.rel (0) target = $region13
  $region12: #{pix_forward.6} parent=0 // pred_region
    _
  $region13: #{pix_forward.6} parent=0 // pred_fallthru
    _
  %v14 = vld [vmem:[%s0] sm:$0xff]
  %v15 = vld [vmem:[%s0 + $0x8] sm:$0xff]
  %v16 = vld [vmem:[%s0 + $0x10] sm:$0xff]
  %v17 = vld [vmem:[%s0 + $0x18] sm:$0xff]
  %v18 = vld [vmem:[%s0 + $0x20] sm:$0xff]
  %v19 = vld [vmem:[%s0 + $0x28] sm:$0xff]
  %v20 = vld [vmem:[%s0 + $0x30] sm:$0xff]
  %v21 = vld [vmem:[%s0 + $0x38] sm:$0xff]
  %v22 = vld [vmem:[%s0 + $0x40] sm:$0xff]
  %v23 = vld [vmem:[%s0 + $0x48] sm:$0xff]
  %v24 = vld [vmem:[%s0 + $0x50] sm:$0xff]
  %v25 = vld [vmem:[%s0 + $0x58] sm:$0xff]
  %v26 = vld [vmem:[%s0 + $0x60] sm:$0xff]
  %v27 = vld [vmem:[%s0 + $0x68] sm:$0xff]
  %v28 = vld [vmem:[%s0 + $0x70] sm:$0xff]
  %v29 = vld [vmem:[%s0 + $0x78] sm:$0xff]
  %v30 = vld [vmem:[%s0 + $0x80] sm:$0xff]
  %v31 = vld [vmem:[%s0 + $0x88] sm:$0xff]
  %v32 = vld [vmem:[%s0 + $0x90] sm:$0xff]
  %v33 = vld [vmem:[%s0 + $0x98] sm:$0xff]
  %v34 = vld [vmem:[%s0 + $0xa0] sm:$0xff]
  %v35 = vld [vmem:[%s0 + $0xa8] sm:$0xff]
  %v36 = vld [vmem:[%s0 + $0xb0] sm:$0xff]
  %v37 = vld [vmem:[%s0 + $0xb8] sm:$0xff]
  %v38 = vld [vmem:[%s0 + $0xc0] sm:$0xff]
  %v39 = vld [vmem:[%s0 + $0xc8] sm:$0xff]
  %v40 = vld [vmem:[%s0 + $0xd0] sm:$0xff]
  %v41 = vld [vmem:[%s0 + $0xd8] sm:$0xff]
  %v42 = vld [vmem:[%s0 + $0xe0] sm:$0xff]
  %v43 = vld [vmem:[%s0 + $0xe8] sm:$0xff]
  %v44 = vld [vmem:[%s0 + $0xf0] sm:$0xff]
  %v45 = vld [vmem:[%s0 + $0xf8] sm:$0xff]
  %v46 = vld [vmem:[%s0 + $0x100] sm:$0xff]
  %v47 = vld [vmem:[%s0 + $0x108] sm:$0xff]
  %v48 = vld [vmem:[%s0 + $0x110] sm:$0xff]
  %v49 = vld [vmem:[%s0 + $0x118] sm:$0xff]
  %v50 = vld [vmem:[%s0 + $0x120] sm:$0xff]
  %v51 = vld [vmem:[%s0 + $0x128] sm:$0xff]
  %v52 = vld [vmem:[%s0 + $0x130] sm:$0xff]
  %v53 = vld [vmem:[%s0 + $0x138] sm:$0xff]
  %v54 = vld [vmem:[%s0 + $0x140] sm:$0xff]
  %v55 = vld [vmem:[%s0 + $0x148] sm:$0xff]
  %v56 = vld [vmem:[%s0 + $0x150] sm:$0xff]
  %v57 = vld [vmem:[%s0 + $0x158] sm:$0xff]
  %v58 = vld [vmem:[%s0 + $0x160] sm:$0xff]
  %v59 = vld [vmem:[%s0 + $0x168] sm:$0xff]
  %v60 = vld [vmem:[%s0 + $0x170] sm:$0xff]
  %v61 = vld [vmem:[%s0 + $0x178] sm:$0xff]
  %v62 = vld [vmem:[%s0 + $0x180] sm:$0xff]
  %v63 = vld [vmem:[%s0 + $0x188] sm:$0xff]
  %v64 = vld [vmem:[%s0 + $0x190] sm:$0xff]
  %v65 = vld [vmem:[%s0 + $0x198] sm:$0xff]
  %v66 = vld [vmem:[%s0 + $0x1a0] sm:$0xff]
  %v67 = vld [vmem:[%s0 + $0x1a8] sm:$0xff]
  %v68 = vld [vmem:[%s0 + $0x1b0] sm:$0xff]
  %v69 = vld [vmem:[%s0 + $0x1b8] sm:$0xff]
  %v70 = vld [vmem:[%s0 + $0x1c0] sm:$0xff]
  %v71 = vld [vmem:[%s0 + $0x1c8] sm:$0xff]
  %v72 = vld [vmem:[%s0 + $0x1d0] sm:$0xff]
  %v73 = vld [vmem:[%s0 + $0x1d8] sm:$0xff]
  %v74 = vld [vmem:[%s0 + $0x1e0] sm:$0xff]
  %v75 = vld [vmem:[%s0 + $0x1e8] sm:$0xff]
  %v76 = vld [vmem:[%s0 + $0x1f0] sm:$0xff]
  %v77 = vld [vmem:[%s0 + $0x1f8] sm:$0xff]
  %v78 = vld [vmem:[%s0 + $0x200] sm:$0xff]
  %v79 = vld [vmem:[%s0 + $0x208] sm:$0xff]
  %v80 = vld [vmem:[%s0 + $0x210] sm:$0xff]
  %v81 = vld [vmem:[%s0 + $0x218] sm:$0xff]
  %v82 = vld [vmem:[%s0 + $0x220] sm:$0xff]
  %v83 = vld [vmem:[%s0 + $0x228] sm:$0xff]
  %v84 = vld [vmem:[%s0 + $0x230] sm:$0xff]
  %v85 = vld [vmem:[%s0 + $0x238] sm:$0xff]
  %v86 = vld [vmem:[%s0 + $0x240] sm:$0xff]
  %v87 = vld [vmem:[%s0 + $0x248] sm:$0xff]
  %v88 = vld [vmem:[%s0 + $0x250] sm:$0xff]
  %v89 = vld [vmem:[%s0 + $0x258] sm:$0xff]
  %v90 = vld [vmem:[%s0 + $0x260] sm:$0xff]
  %v91 = vld [vmem:[%s0 + $0x268] sm:$0xff]
  %v92 = vld [vmem:[%s0 + $0x270] sm:$0xff]
  %v93 = vld [vmem:[%s0 + $0x278] sm:$0xff]
  %v94 = vld [vmem:[%s0 + $0x280] sm:$0xff]
  %v95 = vld [vmem:[%s0 + $0x288] sm:$0xff]
  %v96 = vld [vmem:[%s0 + $0x290] sm:$0xff]
  %v97 = vld [vmem:[%s0 + $0x298] sm:$0xff]
  %v98 = vld [vmem:[%s0 + $0x2a0] sm:$0xff]
  %v99 = vld [vmem:[%s0 + $0x2a8] sm:$0xff]
  %v100 = vld [vmem:[%s0 + $0x2b0] sm:$0xff]
  %v101 = vld [vmem:[%s0 + $0x2b8] sm:$0xff]
  %v102 = vld [vmem:[%s0 + $0x2c0] sm:$0xff]
  %v103 = vld [vmem:[%s0 + $0x2c8] sm:$0xff]
  %v104 = vld [vmem:[%s0 + $0x2d0] sm:$0xff]
  %v105 = vld [vmem:[%s0 + $0x2d8] sm:$0xff]
  %v106 = vld [vmem:[%s0 + $0x2e0] sm:$0xff]
  %v107 = vld [vmem:[%s0 + $0x2e8] sm:$0xff]
  %v108 = vld [vmem:[%s0 + $0x2f0] sm:$0xff]
  %v109 = vld [vmem:[%s0 + $0x2f8] sm:$0xff]
  %v110 = vld [vmem:[%s0 + $0x300] sm:$0xff]
  %v111 = vld [vmem:[%s0 + $0x308] sm:$0xff]
  %v112 = vld [vmem:[%s0 + $0x310] sm:$0xff]
  %v113 = vld [vmem:[%s0 + $0x318] sm:$0xff]
  %v114 = vld [vmem:[%s0 + $0x320] sm:$0xff]
  %v115 = vld [vmem:[%s0 + $0x328] sm:$0xff]
  %v116 = vld [vmem:[%s0 + $0x330] sm:$0xff]
  %v117 = vld [vmem:[%s0 + $0x338] sm:$0xff]
  %v118 = vld [vmem:[%s0 + $0x340] sm:$0xff]
  %v119 = vld [vmem:[%s0 + $0x348] sm:$0xff]
  %v120 = vld [vmem:[%s0 + $0x350] sm:$0xff]
  %v121 = vld [vmem:[%s0 + $0x358] sm:$0xff]
  %v122 = vld [vmem:[%s0 + $0x360] sm:$0xff]
  %v123 = vld [vmem:[%s0 + $0x368] sm:$0xff]
  %v124 = vld [vmem:[%s0 + $0x370] sm:$0xff]
  %v125 = vld [vmem:[%s0 + $0x378] sm:$0xff]
  %v126 = vld [vmem:[%s0 + $0x380] sm:$0xff]
  %v127 = vld [vmem:[%s0 + $0x388] sm:$0xff]
  %v128 = vld [vmem:[%s0 + $0x390] sm:$0xff]
  %v129 = vld [vmem:[%s0 + $0x398] sm:$0xff]
  %v130 = vld [vmem:[%s0 + $0x3a0] sm:$0xff]
  %v131 = vld [vmem:[%s0 + $0x3a8] sm:$0xff]
  %v132 = vld [vmem:[%s0 + $0x3b0] sm:$0xff]
  %v133 = vld [vmem:[%s0 + $0x3b8] sm:$0xff]
  %v134 = vld [vmem:[%s0 + $0x3c0] sm:$0xff]
  %v135 = vld [vmem:[%s0 + $0x3c8] sm:$0xff]
  %v136 = vld [vmem:[%s0 + $0x3d0] sm:$0xff]
  %v137 = vld [vmem:[%s0 + $0x3d8] sm:$0xff]
  %v138 = vld [vmem:[%s0 + $0x3e0] sm:$0xff]
  %v139 = vld [vmem:[%s0 + $0x3e8] sm:$0xff]
  %v140 = vld [vmem:[%s0 + $0x3f0] sm:$0xff]
  %v141 = vld [vmem:[%s0 + $0x3f8] sm:$0xff]
  %v142 = vld [vmem:[%s0 + $0x400] sm:$0xff]
  %v143 = vld [vmem:[%s0 + $0x408] sm:$0xff]
  %v144 = vld [vmem:[%s0 + $0x410] sm:$0xff]
  %v145 = vld [vmem:[%s0 + $0x418] sm:$0xff]
  %v146 = vld [vmem:[%s0 + $0x420] sm:$0xff]
  %v147 = vld [vmem:[%s0 + $0x428] sm:$0xff]
  %v148 = vld [vmem:[%s0 + $0x430] sm:$0xff]
  %v149 = vld [vmem:[%s0 + $0x438] sm:$0xff]
  %v150 = vld [vmem:[%s0 + $0x440] sm:$0xff]
  %v151 = vld [vmem:[%s0 + $0x448] sm:$0xff]
  %v152 = vld [vmem:[%s0 + $0x450] sm:$0xff]
  %v153 = vld [vmem:[%s0 + $0x458] sm:$0xff]
  %v154 = vld [vmem:[%s0 + $0x460] sm:$0xff]
  %v155 = vld [vmem:[%s0 + $0x468] sm:$0xff]
  %v156 = vld [vmem:[%s0 + $0x470] sm:$0xff]
  %v157 = vld [vmem:[%s0 + $0x478] sm:$0xff]
  %v158 = vld [vmem:[%s1] sm:$0xff]
  %v159 = vld [vmem:[%s1 + $0x8] sm:$0xff]
  %v160 = vld [vmem:[%s1 + $0x10] sm:$0xff]
  %v161 = vld [vmem:[%s1 + $0x18] sm:$0xff]
  %v162 = vld [vmem:[%s1 + $0x20] sm:$0xff]
  %v163 = vld [vmem:[%s1 + $0x28] sm:$0xff]
  %v164 = vld [vmem:[%s1 + $0x30] sm:$0xff]
  %v165 = vld [vmem:[%s1 + $0x38] sm:$0xff]
  %v166 = vld [vmem:[%s1 + $0x40] sm:$0xff]
  %v167 = vld [vmem:[%s1 + $0x48] sm:$0xff]
  %v168 = vld [vmem:[%s1 + $0x50] sm:$0xff]
  %v169 = vld [vmem:[%s1 + $0x58] sm:$0xff]
  %v170 = vld [vmem:[%s1 + $0x60] sm:$0xff]
  %v171 = vld [vmem:[%s1 + $0x68] sm:$0xff]
  %v172 = vld [vmem:[%s1 + $0x70] sm:$0xff]
  %v173 = vld [vmem:[%s1 + $0x78] sm:$0xff]
  %v174 = vld [vmem:[%s1 + $0x80] sm:$0xff]
  %v175 = vld [vmem:[%s1 + $0x88] sm:$0xff]
  %v176 = vld [vmem:[%s1 + $0x90] sm:$0xff]
  %v177 = vld [vmem:[%s1 + $0x98] sm:$0xff]
  %v178 = vld [vmem:[%s1 + $0xa0] sm:$0xff]
  %v179 = vld [vmem:[%s1 + $0xa8] sm:$0xff]
  %v180 = vld [vmem:[%s1 + $0xb0] sm:$0xff]
  %v181 = vld [vmem:[%s1 + $0xb8] sm:$0xff]
  %v182 = vld [vmem:[%s1 + $0xc0] sm:$0xff]
  %v183 = vld [vmem:[%s1 + $0xc8] sm:$0xff]
  %v184 = vld [vmem:[%s1 + $0xd0] sm:$0xff]
  %v185 = vld [vmem:[%s1 + $0xd8] sm:$0xff]
  %v186 = vld [vmem:[%s1 + $0xe0] sm:$0xff]
  %v187 = vld [vmem:[%s1 + $0xe8] sm:$0xff]
  %v188 = vld [vmem:[%s1 + $0xf0] sm:$0xff]
  %v189 = vld [vmem:[%s1 + $0xf8] sm:$0xff]
  %v190 = vld [vmem:[%s1 + $0x100] sm:$0xff]
  %v191 = vld [vmem:[%s1 + $0x108] sm:$0xff]
  %v192 = vld [vmem:[%s1 + $0x110] sm:$0xff]
  %v193 = vld [vmem:[%s1 + $0x118] sm:$0xff]
  %v194 = vld [vmem:[%s1 + $0x120] sm:$0xff]
  %v195 = vld [vmem:[%s1 + $0x128] sm:$0xff]
  %v196 = vld [vmem:[%s1 + $0x130] sm:$0xff]
  %v197 = vld [vmem:[%s1 + $0x138] sm:$0xff]
  %v198 = vld [vmem:[%s1 + $0x140] sm:$0xff]
  %v199 = vld [vmem:[%s1 + $0x148] sm:$0xff]
  %v200 = vld [vmem:[%s1 + $0x150] sm:$0xff]
  %v201 = vld [vmem:[%s1 + $0x158] sm:$0xff]
  %v202 = vld [vmem:[%s1 + $0x160] sm:$0xff]
  %v203 = vld [vmem:[%s1 + $0x168] sm:$0xff]
  %v204 = vld [vmem:[%s1 + $0x170] sm:$0xff]
  %v205 = vld [vmem:[%s1 + $0x178] sm:$0xff]
  %v206 = vld [vmem:[%s1 + $0x180] sm:$0xff]
  %v207 = vld [vmem:[%s1 + $0x188] sm:$0xff]
  %v208 = vld [vmem:[%s1 + $0x190] sm:$0xff]
  %v209 = vld [vmem:[%s1 + $0x198] sm:$0xff]
  %v210 = vld [vmem:[%s1 + $0x1a0] sm:$0xff]
  %v211 = vld [vmem:[%s1 + $0x1a8] sm:$0xff]
  %v212 = vld [vmem:[%s1 + $0x1b0] sm:$0xff]
  %v213 = vld [vmem:[%s1 + $0x1b8] sm:$0xff]
  %v214 = vld [vmem:[%s1 + $0x1c0] sm:$0xff]
  %v215 = vld [vmem:[%s1 + $0x1c8] sm:$0xff]
  %v216 = vld [vmem:[%s1 + $0x1d0] sm:$0xff]
  %v217 = vld [vmem:[%s1 + $0x1d8] sm:$0xff]
  %v218 = vld [vmem:[%s1 + $0x1e0] sm:$0xff]
  %v219 = vld [vmem:[%s1 + $0x1e8] sm:$0xff]
  %v220 = vld [vmem:[%s1 + $0x1f0] sm:$0xff]
  %v221 = vld [vmem:[%s1 + $0x1f8] sm:$0xff]
  %v222 = vld [vmem:[%s1 + $0x200] sm:$0xff]
  %v223 = vld [vmem:[%s1 + $0x208] sm:$0xff]
  %v224 = vld [vmem:[%s1 + $0x210] sm:$0xff]
  %v225 = vld [vmem:[%s1 + $0x218] sm:$0xff]
  %v226 = vld [vmem:[%s1 + $0x220] sm:$0xff]
  %v227 = vld [vmem:[%s1 + $0x228] sm:$0xff]
  %v228 = vld [vmem:[%s1 + $0x230] sm:$0xff]
  %v229 = vld [vmem:[%s1 + $0x238] sm:$0xff]
  %v230 = vld [vmem:[%s1 + $0x240] sm:$0xff]
  %v231 = vld [vmem:[%s1 + $0x248] sm:$0xff]
  %v232 = vld [vmem:[%s1 + $0x250] sm:$0xff]
  %v233 = vld [vmem:[%s1 + $0x258] sm:$0xff]
  %v234 = vld [vmem:[%s1 + $0x260] sm:$0xff]
  %v235 = vld [vmem:[%s1 + $0x268] sm:$0xff]
  %v236 = vld [vmem:[%s1 + $0x270] sm:$0xff]
  %v237 = vld [vmem:[%s1 + $0x278] sm:$0xff]
  %v238 = vld [vmem:[%s1 + $0x280] sm:$0xff]
  %v239 = vld [vmem:[%s1 + $0x288] sm:$0xff]
  %v240 = vld [vmem:[%s1 + $0x290] sm:$0xff]
  %v241 = vld [vmem:[%s1 + $0x298] sm:$0xff]
  %v242 = vld [vmem:[%s1 + $0x2a0] sm:$0xff]
  %v243 = vld [vmem:[%s1 + $0x2a8] sm:$0xff]
  %v244 = vld [vmem:[%s1 + $0x2b0] sm:$0xff]
  %v245 = vld [vmem:[%s1 + $0x2b8] sm:$0xff]
  %v246 = vld [vmem:[%s1 + $0x2c0] sm:$0xff]
  %v247 = vld [vmem:[%s1 + $0x2c8] sm:$0xff]
  %v248 = vld [vmem:[%s1 + $0x2d0] sm:$0xff]
  %v249 = vld [vmem:[%s1 + $0x2d8] sm:$0xff]
  %v250 = vld [vmem:[%s1 + $0x2e0] sm:$0xff]
  %v251 = vld [vmem:[%s1 + $0x2e8] sm:$0xff]
  %v252 = vld [vmem:[%s1 + $0x2f0] sm:$0xff]
  %v253 = vld [vmem:[%s1 + $0x2f8] sm:$0xff]
  %v254 = vld [vmem:[%s1 + $0x300] sm:$0xff]
  %v255 = vld [vmem:[%s1 + $0x308] sm:$0xff]
  %v256 = vld [vmem:[%s1 + $0x310] sm:$0xff]
  %v257 = vld [vmem:[%s1 + $0x318] sm:$0xff]
  %v258 = vld [vmem:[%s1 + $0x320] sm:$0xff]
  %v259 = vld [vmem:[%s1 + $0x328] sm:$0xff]
  %v260 = vld [vmem:[%s1 + $0x330] sm:$0xff]
  %v261 = vld [vmem:[%s1 + $0x338] sm:$0xff]
  %v262 = vld [vmem:[%s1 + $0x340] sm:$0xff]
  %v263 = vld [vmem:[%s1 + $0x348] sm:$0xff]
  %v264 = vld [vmem:[%s1 + $0x350] sm:$0xff]
  %v265 = vld [vmem:[%s1 + $0x358] sm:$0xff]
  %v266 = vld [vmem:[%s1 + $0x360] sm:$0xff]
  %v267 = vld [vmem:[%s1 + $0x368] sm:$0xff]
  %v268 = vld [vmem:[%s1 + $0x370] sm:$0xff]
  %v269 = vld [vmem:[%s1 + $0x378] sm:$0xff]
  %v270 = vld [vmem:[%s1 + $0x380] sm:$0xff]
  %v271 = vld [vmem:[%s1 + $0x388] sm:$0xff]
  %v272 = vld [vmem:[%s1 + $0x390] sm:$0xff]
  %v273 = vld [vmem:[%s1 + $0x398] sm:$0xff]
  %v274 = vld [vmem:[%s1 + $0x3a0] sm:$0xff]
  %v275 = vld [vmem:[%s1 + $0x3a8] sm:$0xff]
  %v276 = vld [vmem:[%s1 + $0x3b0] sm:$0xff]
  %v277 = vld [vmem:[%s1 + $0x3b8] sm:$0xff]
  %v278 = vld [vmem:[%s1 + $0x3c0] sm:$0xff]
  %v279 = vld [vmem:[%s1 + $0x3c8] sm:$0xff]
  %v280 = vld [vmem:[%s1 + $0x3d0] sm:$0xff]
  %v281 = vld [vmem:[%s1 + $0x3d8] sm:$0xff]
  %v282 = vld [vmem:[%s1 + $0x3e0] sm:$0xff]
  %v283 = vld [vmem:[%s1 + $0x3e8] sm:$0xff]
  %v284 = vld [vmem:[%s1 + $0x3f0] sm:$0xff]
  %v285 = vld [vmem:[%s1 + $0x3f8] sm:$0xff]
  %v286 = vld [vmem:[%s1 + $0x400] sm:$0xff]
  %v287 = vld [vmem:[%s1 + $0x408] sm:$0xff]
  %v288 = vld [vmem:[%s1 + $0x410] sm:$0xff]
  %v289 = vld [vmem:[%s1 + $0x418] sm:$0xff]
  %v290 = vld [vmem:[%s1 + $0x420] sm:$0xff]
  %v291 = vld [vmem:[%s1 + $0x428] sm:$0xff]
  %v292 = vld [vmem:[%s1 + $0x430] sm:$0xff]
  %v293 = vld [vmem:[%s1 + $0x438] sm:$0xff]
  %v294 = vld [vmem:[%s1 + $0x440] sm:$0xff]
  %v295 = vld [vmem:[%s1 + $0x448] sm:$0xff]
  %v296 = vld [vmem:[%s1 + $0x450] sm:$0xff]
  %v297 = vld [vmem:[%s1 + $0x458] sm:$0xff]
  %v298 = vld [vmem:[%s1 + $0x460] sm:$0xff]
  %v299 = vld [vmem:[%s1 + $0x468] sm:$0xff]
  %v300 = vld [vmem:[%s1 + $0x470] sm:$0xff]
  %v301 = vld [vmem:[%s1 + $0x478] sm:$0xff]
  %v302 = vld [vmem:[%s1 + $0x480] sm:$0xff]
  %v303 = vld [vmem:[%s1 + $0x488] sm:$0xff]
  %v304 = vld [vmem:[%s1 + $0x490] sm:$0xff]
  %v305 = vld [vmem:[%s1 + $0x498] sm:$0xff]
  %v306 = vld [vmem:[%s1 + $0x4a0] sm:$0xff]
  %v307 = vld [vmem:[%s1 + $0x4a8] sm:$0xff]
  %v308 = vld [vmem:[%s1 + $0x4b0] sm:$0xff]
  %v309 = vld [vmem:[%s1 + $0x4b8] sm:$0xff]
  %v310 = vld [vmem:[%s1 + $0x4c0] sm:$0xff]
  %v311 = vld [vmem:[%s1 + $0x4c8] sm:$0xff]
  %v312 = vld [vmem:[%s1 + $0x4d0] sm:$0xff]
  %v313 = vld [vmem:[%s1 + $0x4d8] sm:$0xff]
  %v314 = vld [vmem:[%s1 + $0x4e0] sm:$0xff]
  %v315 = vld [vmem:[%s1 + $0x4e8] sm:$0xff]
  %v316 = vld [vmem:[%s1 + $0x4f0] sm:$0xff]
  %v317 = vld [vmem:[%s1 + $0x4f8] sm:$0xff]
  %v318 = vld [vmem:[%s1 + $0x500] sm:$0xff]
  %v319 = vld [vmem:[%s1 + $0x508] sm:$0xff]
  %v320 = vld [vmem:[%s1 + $0x510] sm:$0xff]
  %v321 = vld [vmem:[%s1 + $0x518] sm:$0xff]
  %v322 = vld [vmem:[%s1 + $0x520] sm:$0xff]
  %v323 = vld [vmem:[%s1 + $0x528] sm:$0xff]
  %v324 = vld [vmem:[%s1 + $0x530] sm:$0xff]
  %v325 = vld [vmem:[%s1 + $0x538] sm:$0xff]
  %v326 = vld [vmem:[%s1 + $0x540] sm:$0xff]
  %v327 = vld [vmem:[%s1 + $0x548] sm:$0xff]
  %v328 = vld [vmem:[%s1 + $0x550] sm:$0xff]
  %v329 = vld [vmem:[%s1 + $0x558] sm:$0xff]
  %v330 = vld [vmem:[%s1 + $0x560] sm:$0xff]
  %v331 = vld [vmem:[%s1 + $0x568] sm:$0xff]
  %v332 = vld [vmem:[%s1 + $0x570] sm:$0xff]
  %v333 = vld [vmem:[%s1 + $0x578] sm:$0xff]
  %v334 = vld [vmem:[%s1 + $0x580] sm:$0xff]
  %v335 = vld [vmem:[%s1 + $0x588] sm:$0xff]
  %v336 = vld [vmem:[%s1 + $0x590] sm:$0xff]
  %v337 = vld [vmem:[%s1 + $0x598] sm:$0xff]
  %v338 = vld [vmem:[%s1 + $0x5a0] sm:$0xff]
  %v339 = vld [vmem:[%s1 + $0x5a8] sm:$0xff]
  %v340 = vld [vmem:[%s1 + $0x5b0] sm:$0xff]
  %v341 = vld [vmem:[%s1 + $0x5b8] sm:$0xff]
  %v342 = vld [vmem:[%s1 + $0x5c0] sm:$0xff]
  %v343 = vld [vmem:[%s1 + $0x5c8] sm:$0xff]
  %v344 = vld [vmem:[%s1 + $0x5d0] sm:$0xff]
  %v345 = vld [vmem:[%s1 + $0x5d8] sm:$0xff]
  %v346 = vld [vmem:[%s1 + $0x5e0] sm:$0xff]
  %v347 = vld [vmem:[%s1 + $0x5e8] sm:$0xff]
  %v348 = vld [vmem:[%s1 + $0x5f0] sm:$0xff]
  %v349 = vld [vmem:[%s1 + $0x5f8] sm:$0xff]
  %v350 = vld [vmem:[%s1 + $0x600] sm:$0xff]
  %v351 = vld [vmem:[%s1 + $0x608] sm:$0xff]
  %v352 = vld [vmem:[%s1 + $0x610] sm:$0xff]
  %v353 = vld [vmem:[%s1 + $0x618] sm:$0xff]
  %v354 = vld [vmem:[%s1 + $0x620] sm:$0xff]
  %v355 = vld [vmem:[%s1 + $0x628] sm:$0xff]
  %v356 = vld [vmem:[%s1 + $0x630] sm:$0xff]
  %v357 = vld [vmem:[%s1 + $0x638] sm:$0xff]
  %v358 = vld [vmem:[%s1 + $0x640] sm:$0xff]
  %v359 = vld [vmem:[%s1 + $0x648] sm:$0xff]
  %v360 = vld [vmem:[%s1 + $0x650] sm:$0xff]
  %v361 = vld [vmem:[%s1 + $0x658] sm:$0xff]
  %v362 = vld [vmem:[%s1 + $0x660] sm:$0xff]
  %v363 = vld [vmem:[%s1 + $0x668] sm:$0xff]
  %v364 = vld [vmem:[%s1 + $0x670] sm:$0xff]
  %v365 = vld [vmem:[%s1 + $0x678] sm:$0xff]
  %v366 = vld [vmem:[%s1 + $0x680] sm:$0xff]
  %v367 = vld [vmem:[%s1 + $0x688] sm:$0xff]
  %v368 = vld [vmem:[%s1 + $0x690] sm:$0xff]
  %v369 = vld [vmem:[%s1 + $0x698] sm:$0xff]
  %v370 = vld [vmem:[%s1 + $0x6a0] sm:$0xff]
  %v371 = vld [vmem:[%s1 + $0x6a8] sm:$0xff]
  %v372 = vld [vmem:[%s1 + $0x6b0] sm:$0xff]
  %v373 = vld [vmem:[%s1 + $0x6b8] sm:$0xff]
  %v374 = vld [vmem:[%s1 + $0x6c0] sm:$0xff]
  %v375 = vld [vmem:[%s1 + $0x6c8] sm:$0xff]
  %v376 = vld [vmem:[%s1 + $0x6d0] sm:$0xff]
  %v377 = vld [vmem:[%s1 + $0x6d8] sm:$0xff]
  %v378 = vld [vmem:[%s1 + $0x6e0] sm:$0xff]
  %v379 = vld [vmem:[%s1 + $0x6e8] sm:$0xff]
  %v380 = vld [vmem:[%s1 + $0x6f0] sm:$0xff]
  %v381 = vld [vmem:[%s1 + $0x6f8] sm:$0xff]
  %v382 = vld [vmem:[%s1 + $0x700] sm:$0xff]
  %v383 = vld [vmem:[%s1 + $0x708] sm:$0xff]
  %v384 = vld [vmem:[%s1 + $0x710] sm:$0xff]
  %v385 = vld [vmem:[%s1 + $0x718] sm:$0xff]
  %v386 = vld [vmem:[%s1 + $0x720] sm:$0xff]
  %v387 = vld [vmem:[%s1 + $0x728] sm:$0xff]
  %v388 = vld [vmem:[%s1 + $0x730] sm:$0xff]
  %v389 = vld [vmem:[%s1 + $0x738] sm:$0xff]
  %v390 = vld [vmem:[%s1 + $0x740] sm:$0xff]
  %v391 = vld [vmem:[%s1 + $0x748] sm:$0xff]
  %v392 = vld [vmem:[%s1 + $0x750] sm:$0xff]
  %v393 = vld [vmem:[%s1 + $0x758] sm:$0xff]
  %v394 = vld [vmem:[%s1 + $0x760] sm:$0xff]
  %v395 = vld [vmem:[%s1 + $0x768] sm:$0xff]
  %v396 = vld [vmem:[%s1 + $0x770] sm:$0xff]
  %v397 = vld [vmem:[%s1 + $0x778] sm:$0xff]
  %v398 = vld [vmem:[%s1 + $0x780] sm:$0xff]
  %v399 = vld [vmem:[%s1 + $0x788] sm:$0xff]
  %v400 = vld [vmem:[%s1 + $0x790] sm:$0xff]
  %v401 = vld [vmem:[%s1 + $0x798] sm:$0xff]
  %v402 = vld [vmem:[%s1 + $0x7a0] sm:$0xff]
  %v403 = vld [vmem:[%s1 + $0x7a8] sm:$0xff]
  %v404 = vld [vmem:[%s1 + $0x7b0] sm:$0xff]
  %v405 = vld [vmem:[%s1 + $0x7b8] sm:$0xff]
  %v406 = vld [vmem:[%s1 + $0x7c0] sm:$0xff]
  %v407 = vld [vmem:[%s1 + $0x7c8] sm:$0xff]
  %v408 = vld [vmem:[%s1 + $0x7d0] sm:$0xff]
  %v409 = vld [vmem:[%s1 + $0x7d8] sm:$0xff]
  %v410 = vld [vmem:[%s1 + $0x7e0] sm:$0xff]
  %v411 = vld [vmem:[%s1 + $0x7e8] sm:$0xff]
  %v412 = vld [vmem:[%s1 + $0x7f0] sm:$0xff]
  %v413 = vld [vmem:[%s1 + $0x7f8] sm:$0xff]
  %v414 = vld [vmem:[%s1 + $0x800] sm:$0xff]
  %v415 = vld [vmem:[%s1 + $0x808] sm:$0xff]
  %v416 = vld [vmem:[%s1 + $0x810] sm:$0xff]
  %v417 = vld [vmem:[%s1 + $0x818] sm:$0xff]
  %v418 = vld [vmem:[%s1 + $0x820] sm:$0xff]
  %v419 = vld [vmem:[%s1 + $0x828] sm:$0xff]
  %v420 = vld [vmem:[%s1 + $0x830] sm:$0xff]
  %v421 = vld [vmem:[%s1 + $0x838] sm:$0xff]
  %v422 = vld [vmem:[%s1 + $0x840] sm:$0xff]
  %v423 = vld [vmem:[%s1 + $0x848] sm:$0xff]
  %v424 = vld [vmem:[%s1 + $0x850] sm:$0xff]
  %v425 = vld [vmem:[%s1 + $0x858] sm:$0xff]
  %v426 = vld [vmem:[%s1 + $0x860] sm:$0xff]
  %v427 = vld [vmem:[%s1 + $0x868] sm:$0xff]
  %v428 = vld [vmem:[%s1 + $0x870] sm:$0xff]
  %v429 = vld [vmem:[%s1 + $0x878] sm:$0xff]
  %v430 = vld [vmem:[%s1 + $0x880] sm:$0xff]
  %v431 = vld [vmem:[%s1 + $0x888] sm:$0xff]
  %v432 = vld [vmem:[%s1 + $0x890] sm:$0xff]
  %v433 = vld [vmem:[%s1 + $0x898] sm:$0xff]
  %v434 = vld [vmem:[%s1 + $0x8a0] sm:$0xff]
  %v435 = vld [vmem:[%s1 + $0x8a8] sm:$0xff]
  %v436 = vld [vmem:[%s1 + $0x8b0] sm:$0xff]
  %v437 = vld [vmem:[%s1 + $0x8b8] sm:$0xff]
  %v438 = vld [vmem:[%s1 + $0x8c0] sm:$0xff]
  %v439 = vld [vmem:[%s1 + $0x8c8] sm:$0xff]
  %v440 = vld [vmem:[%s1 + $0x8d0] sm:$0xff]
  %v441 = vld [vmem:[%s1 + $0x8d8] sm:$0xff]
  %v442 = vld [vmem:[%s1 + $0x8e0] sm:$0xff]
  %v443 = vld [vmem:[%s1 + $0x8e8] sm:$0xff]
  %v444 = vld [vmem:[%s1 + $0x8f0] sm:$0xff]
  %v445 = vld [vmem:[%s1 + $0x8f8] sm:$0xff]
  %v446 = vld [vmem:[%s2] sm:$0x3]
  %v448 = vlaneseq
  %v449 = vshrl.u32 %v448, 7
  %v450 = vsub.s32 0, %v449
  %v451 = vrot.slane %v446, %v450
  %v452 = vlaneseq
  %v453 = vshrl.u32 %v452, 7
  %v454 = vsub.s32 1, %v453
  %v455 = vrot.slane %v446, %v454
  %v602 = vunpack.c.l.b16 %v14
  %v603 = vunpack.c.h.b16 %v14
  %v604 = vunpack.c.l.b16 %v15
  %v605 = vunpack.c.h.b16 %v15
  %v606 = vunpack.c.l.b16 %v16
  %v607 = vunpack.c.h.b16 %v16
  %v608 = vunpack.c.l.b16 %v17
  %v609 = vunpack.c.h.b16 %v17
  %v610 = vunpack.c.l.b16 %v18
  %v611 = vunpack.c.h.b16 %v18
  %v612 = vunpack.c.l.b16 %v19
  %v613 = vunpack.c.h.b16 %v19
  %v614 = vunpack.c.l.b16 %v20
  %v615 = vunpack.c.h.b16 %v20
  %v616 = vunpack.c.l.b16 %v21
  %v617 = vunpack.c.h.b16 %v21
  %v618 = vunpack.c.l.b16 %v22
  %v619 = vunpack.c.h.b16 %v22
  %v620 = vunpack.c.l.b16 %v23
  %v621 = vunpack.c.h.b16 %v23
  %v622 = vunpack.c.l.b16 %v24
  %v623 = vunpack.c.h.b16 %v24
  %v624 = vunpack.c.l.b16 %v25
  %v625 = vunpack.c.h.b16 %v25
  %v626 = vunpack.c.l.b16 %v26
  %v627 = vunpack.c.h.b16 %v26
  %v628 = vunpack.c.l.b16 %v27
  %v629 = vunpack.c.h.b16 %v27
  %v630 = vunpack.c.l.b16 %v28
  %v631 = vunpack.c.h.b16 %v28
  %v632 = vunpack.c.l.b16 %v29
  %v633 = vunpack.c.h.b16 %v29
  %v634 = vunpack.c.l.b16 %v30
  %v635 = vunpack.c.h.b16 %v30
  %v636 = vunpack.c.l.b16 %v31
  %v637 = vunpack.c.h.b16 %v31
  %v638 = vunpack.c.l.b16 %v32
  %v639 = vunpack.c.h.b16 %v32
  %v640 = vunpack.c.l.b16 %v33
  %v641 = vunpack.c.h.b16 %v33
  %v642 = vunpack.c.l.b16 %v34
  %v643 = vunpack.c.h.b16 %v34
  %v644 = vunpack.c.l.b16 %v35
  %v645 = vunpack.c.h.b16 %v35
  %v646 = vunpack.c.l.b16 %v36
  %v647 = vunpack.c.h.b16 %v36
  %v648 = vunpack.c.l.b16 %v37
  %v649 = vunpack.c.h.b16 %v37
  %v650 = vunpack.c.l.b16 %v38
  %v651 = vunpack.c.h.b16 %v38
  %v652 = vunpack.c.l.b16 %v39
  %v653 = vunpack.c.h.b16 %v39
  %v654 = vunpack.c.l.b16 %v40
  %v655 = vunpack.c.h.b16 %v40
  %v656 = vunpack.c.l.b16 %v41
  %v657 = vunpack.c.h.b16 %v41
  %v658 = vunpack.c.l.b16 %v42
  %v659 = vunpack.c.h.b16 %v42
  %v660 = vunpack.c.l.b16 %v43
  %v661 = vunpack.c.h.b16 %v43
  %v662 = vunpack.c.l.b16 %v44
  %v663 = vunpack.c.h.b16 %v44
  %v664 = vunpack.c.l.b16 %v45
  %v665 = vunpack.c.h.b16 %v45
  %v666 = vunpack.c.l.b16 %v46
  %v667 = vunpack.c.h.b16 %v46
  %v668 = vunpack.c.l.b16 %v47
  %v669 = vunpack.c.h.b16 %v47
  %v670 = vunpack.c.l.b16 %v48
  %v671 = vunpack.c.h.b16 %v48
  %v672 = vunpack.c.l.b16 %v49
  %v673 = vunpack.c.h.b16 %v49
  %v674 = vunpack.c.l.b16 %v50
  %v675 = vunpack.c.h.b16 %v50
  %v676 = vunpack.c.l.b16 %v51
  %v677 = vunpack.c.h.b16 %v51
  %v678 = vunpack.c.l.b16 %v52
  %v679 = vunpack.c.h.b16 %v52
  %v680 = vunpack.c.l.b16 %v53
  %v681 = vunpack.c.h.b16 %v53
  %v682 = vunpack.c.l.b16 %v54
  %v683 = vunpack.c.h.b16 %v54
  %v684 = vunpack.c.l.b16 %v55
  %v685 = vunpack.c.h.b16 %v55
  %v686 = vunpack.c.l.b16 %v56
  %v687 = vunpack.c.h.b16 %v56
  %v688 = vunpack.c.l.b16 %v57
  %v689 = vunpack.c.h.b16 %v57
  %v690 = vunpack.c.l.b16 %v58
  %v691 = vunpack.c.h.b16 %v58
  %v692 = vunpack.c.l.b16 %v59
  %v693 = vunpack.c.h.b16 %v59
  %v694 = vunpack.c.l.b16 %v60
  %v695 = vunpack.c.h.b16 %v60
  %v696 = vunpack.c.l.b16 %v61
  %v697 = vunpack.c.h.b16 %v61
  %v698 = vunpack.c.l.b16 %v62
  %v699 = vunpack.c.h.b16 %v62
  %v700 = vunpack.c.l.b16 %v63
  %v701 = vunpack.c.h.b16 %v63
  %v702 = vunpack.c.l.b16 %v64
  %v703 = vunpack.c.h.b16 %v64
  %v704 = vunpack.c.l.b16 %v65
  %v705 = vunpack.c.h.b16 %v65
  %v706 = vunpack.c.l.b16 %v66
  %v707 = vunpack.c.h.b16 %v66
  %v708 = vunpack.c.l.b16 %v67
  %v709 = vunpack.c.h.b16 %v67
  %v710 = vunpack.c.l.b16 %v68
  %v711 = vunpack.c.h.b16 %v68
  %v712 = vunpack.c.l.b16 %v69
  %v713 = vunpack.c.h.b16 %v69
  %v714 = vunpack.c.l.b16 %v70
  %v715 = vunpack.c.h.b16 %v70
  %v716 = vunpack.c.l.b16 %v71
  %v717 = vunpack.c.h.b16 %v71
  %v718 = vunpack.c.l.b16 %v72
  %v719 = vunpack.c.h.b16 %v72
  %v720 = vunpack.c.l.b16 %v73
  %v721 = vunpack.c.h.b16 %v73
  %v722 = vunpack.c.l.b16 %v74
  %v723 = vunpack.c.h.b16 %v74
  %v724 = vunpack.c.l.b16 %v75
  %v725 = vunpack.c.h.b16 %v75
  %v726 = vunpack.c.l.b16 %v76
  %v727 = vunpack.c.h.b16 %v76
  %v728 = vunpack.c.l.b16 %v77
  %v729 = vunpack.c.h.b16 %v77
  %v730 = vunpack.c.l.b16 %v78
  %v731 = vunpack.c.h.b16 %v78
  %v732 = vunpack.c.l.b16 %v79
  %v733 = vunpack.c.h.b16 %v79
  %v734 = vunpack.c.l.b16 %v80
  %v735 = vunpack.c.h.b16 %v80
  %v736 = vunpack.c.l.b16 %v81
  %v737 = vunpack.c.h.b16 %v81
  %v738 = vunpack.c.l.b16 %v82
  %v739 = vunpack.c.h.b16 %v82
  %v740 = vunpack.c.l.b16 %v83
  %v741 = vunpack.c.h.b16 %v83
  %v742 = vunpack.c.l.b16 %v84
  %v743 = vunpack.c.h.b16 %v84
  %v744 = vunpack.c.l.b16 %v85
  %v745 = vunpack.c.h.b16 %v85
  %v746 = vunpack.c.l.b16 %v86
  %v747 = vunpack.c.h.b16 %v86
  %v748 = vunpack.c.l.b16 %v87
  %v749 = vunpack.c.h.b16 %v87
  %v750 = vunpack.c.l.b16 %v88
  %v751 = vunpack.c.h.b16 %v88
  %v752 = vunpack.c.l.b16 %v89
  %v753 = vunpack.c.h.b16 %v89
  %v754 = vunpack.c.l.b16 %v90
  %v755 = vunpack.c.h.b16 %v90
  %v756 = vunpack.c.l.b16 %v91
  %v757 = vunpack.c.h.b16 %v91
  %v758 = vunpack.c.l.b16 %v92
  %v759 = vunpack.c.h.b16 %v92
  %v760 = vunpack.c.l.b16 %v93
  %v761 = vunpack.c.h.b16 %v93
  %v762 = vunpack.c.l.b16 %v94
  %v763 = vunpack.c.h.b16 %v94
  %v764 = vunpack.c.l.b16 %v95
  %v765 = vunpack.c.h.b16 %v95
  %v766 = vunpack.c.l.b16 %v96
  %v767 = vunpack.c.h.b16 %v96
  %v768 = vunpack.c.l.b16 %v97
  %v769 = vunpack.c.h.b16 %v97
  %v770 = vunpack.c.l.b16 %v98
  %v771 = vunpack.c.h.b16 %v98
  %v772 = vunpack.c.l.b16 %v99
  %v773 = vunpack.c.h.b16 %v99
  %v774 = vunpack.c.l.b16 %v100
  %v775 = vunpack.c.h.b16 %v100
  %v776 = vunpack.c.l.b16 %v101
  %v777 = vunpack.c.h.b16 %v101
  %v778 = vunpack.c.l.b16 %v102
  %v779 = vunpack.c.h.b16 %v102
  %v780 = vunpack.c.l.b16 %v103
  %v781 = vunpack.c.h.b16 %v103
  %v782 = vunpack.c.l.b16 %v104
  %v783 = vunpack.c.h.b16 %v104
  %v784 = vunpack.c.l.b16 %v105
  %v785 = vunpack.c.h.b16 %v105
  %v786 = vunpack.c.l.b16 %v106
  %v787 = vunpack.c.h.b16 %v106
  %v788 = vunpack.c.l.b16 %v107
  %v789 = vunpack.c.h.b16 %v107
  %v790 = vunpack.c.l.b16 %v108
  %v791 = vunpack.c.h.b16 %v108
  %v792 = vunpack.c.l.b16 %v109
  %v793 = vunpack.c.h.b16 %v109
  %v794 = vunpack.c.l.b16 %v110
  %v795 = vunpack.c.h.b16 %v110
  %v796 = vunpack.c.l.b16 %v111
  %v797 = vunpack.c.h.b16 %v111
  %v798 = vunpack.c.l.b16 %v112
  %v799 = vunpack.c.h.b16 %v112
  %v800 = vunpack.c.l.b16 %v113
  %v801 = vunpack.c.h.b16 %v113
  %v802 = vunpack.c.l.b16 %v114
  %v803 = vunpack.c.h.b16 %v114
  %v804 = vunpack.c.l.b16 %v115
  %v805 = vunpack.c.h.b16 %v115
  %v806 = vunpack.c.l.b16 %v116
  %v807 = vunpack.c.h.b16 %v116
  %v808 = vunpack.c.l.b16 %v117
  %v809 = vunpack.c.h.b16 %v117
  %v810 = vunpack.c.l.b16 %v118
  %v811 = vunpack.c.h.b16 %v118
  %v812 = vunpack.c.l.b16 %v119
  %v813 = vunpack.c.h.b16 %v119
  %v814 = vunpack.c.l.b16 %v120
  %v815 = vunpack.c.h.b16 %v120
  %v816 = vunpack.c.l.b16 %v121
  %v817 = vunpack.c.h.b16 %v121
  %v818 = vunpack.c.l.b16 %v122
  %v819 = vunpack.c.h.b16 %v122
  %v820 = vunpack.c.l.b16 %v123
  %v821 = vunpack.c.h.b16 %v123
  %v822 = vunpack.c.l.b16 %v124
  %v823 = vunpack.c.h.b16 %v124
  %v824 = vunpack.c.l.b16 %v125
  %v825 = vunpack.c.h.b16 %v125
  %v826 = vunpack.c.l.b16 %v126
  %v827 = vunpack.c.h.b16 %v126
  %v828 = vunpack.c.l.b16 %v127
  %v829 = vunpack.c.h.b16 %v127
  %v830 = vunpack.c.l.b16 %v128
  %v831 = vunpack.c.h.b16 %v128
  %v832 = vunpack.c.l.b16 %v129
  %v833 = vunpack.c.h.b16 %v129
  %v834 = vunpack.c.l.b16 %v130
  %v835 = vunpack.c.h.b16 %v130
  %v836 = vunpack.c.l.b16 %v131
  %v837 = vunpack.c.h.b16 %v131
  %v838 = vunpack.c.l.b16 %v132
  %v839 = vunpack.c.h.b16 %v132
  %v840 = vunpack.c.l.b16 %v133
  %v841 = vunpack.c.h.b16 %v133
  %v842 = vunpack.c.l.b16 %v134
  %v843 = vunpack.c.h.b16 %v134
  %v844 = vunpack.c.l.b16 %v135
  %v845 = vunpack.c.h.b16 %v135
  %v846 = vunpack.c.l.b16 %v136
  %v847 = vunpack.c.h.b16 %v136
  %v848 = vunpack.c.l.b16 %v137
  %v849 = vunpack.c.h.b16 %v137
  %v850 = vunpack.c.l.b16 %v138
  %v851 = vunpack.c.h.b16 %v138
  %v852 = vunpack.c.l.b16 %v139
  %v853 = vunpack.c.h.b16 %v139
  %v854 = vunpack.c.l.b16 %v140
  %v855 = vunpack.c.h.b16 %v140
  %v856 = vunpack.c.l.b16 %v141
  %v857 = vunpack.c.h.b16 %v141
  %v858 = vunpack.c.l.b16 %v142
  %v859 = vunpack.c.h.b16 %v142
  %v860 = vunpack.c.l.b16 %v143
  %v861 = vunpack.c.h.b16 %v143
  %v862 = vunpack.c.l.b16 %v144
  %v863 = vunpack.c.h.b16 %v144
  %v864 = vunpack.c.l.b16 %v145
  %v865 = vunpack.c.h.b16 %v145
  %v866 = vunpack.c.l.b16 %v146
  %v867 = vunpack.c.h.b16 %v146
  %v868 = vunpack.c.l.b16 %v147
  %v869 = vunpack.c.h.b16 %v147
  %v870 = vunpack.c.l.b16 %v148
  %v871 = vunpack.c.h.b16 %v148
  %v872 = vunpack.c.l.b16 %v149
  %v873 = vunpack.c.h.b16 %v149
  %v874 = vunpack.c.l.b16 %v150
  %v875 = vunpack.c.h.b16 %v150
  %v876 = vunpack.c.l.b16 %v151
  %v877 = vunpack.c.h.b16 %v151
  %v878 = vunpack.c.l.b16 %v152
  %v879 = vunpack.c.h.b16 %v152
  %v880 = vunpack.c.l.b16 %v153
  %v881 = vunpack.c.h.b16 %v153
  %v882 = vunpack.c.l.b16 %v154
  %v883 = vunpack.c.h.b16 %v154
  %v884 = vunpack.c.l.b16 %v155
  %v885 = vunpack.c.h.b16 %v155
  %v886 = vunpack.c.l.b16 %v156
  %v887 = vunpack.c.h.b16 %v156
  %v888 = vunpack.c.l.b16 %v157
  %v889 = vunpack.c.h.b16 %v157
  %v890 = vpack.c.b16 %v620, %v602
  %v891 = vpack.c.b16 %v621, %v603
  %v892 = vpack.c.b16 %v622, %v604
  %v893 = vpack.c.b16 %v623, %v605
  %v894 = vpack.c.b16 %v624, %v606
  %v895 = vpack.c.b16 %v625, %v607
  %v896 = vpack.c.b16 %v626, %v608
  %v897 = vpack.c.b16 %v627, %v609
  %v898 = vpack.c.b16 %v628, %v610
  %v899 = vpack.c.b16 %v629, %v611
  %v900 = vpack.c.b16 %v630, %v612
  %v901 = vpack.c.b16 %v631, %v613
  %v902 = vpack.c.b16 %v632, %v614
  %v903 = vpack.c.b16 %v633, %v615
  %v904 = vpack.c.b16 %v634, %v616
  %v905 = vpack.c.b16 %v635, %v617
  %v906 = vpack.c.b16 %v636, %v618
  %v907 = vpack.c.b16 %v637, %v619
  %v908 = vpack.c.b16 %v656, %v638
  %v909 = vpack.c.b16 %v657, %v639
  %v910 = vpack.c.b16 %v658, %v640
  %v911 = vpack.c.b16 %v659, %v641
  %v912 = vpack.c.b16 %v660, %v642
  %v913 = vpack.c.b16 %v661, %v643
  %v914 = vpack.c.b16 %v662, %v644
  %v915 = vpack.c.b16 %v663, %v645
  %v916 = vpack.c.b16 %v664, %v646
  %v917 = vpack.c.b16 %v665, %v647
  %v918 = vpack.c.b16 %v666, %v648
  %v919 = vpack.c.b16 %v667, %v649
  %v920 = vpack.c.b16 %v668, %v650
  %v921 = vpack.c.b16 %v669, %v651
  %v922 = vpack.c.b16 %v670, %v652
  %v923 = vpack.c.b16 %v671, %v653
  %v924 = vpack.c.b16 %v672, %v654
  %v925 = vpack.c.b16 %v673, %v655
  %v926 = vpack.c.b16 %v692, %v674
  %v927 = vpack.c.b16 %v693, %v675
  %v928 = vpack.c.b16 %v694, %v676
  %v929 = vpack.c.b16 %v695, %v677
  %v930 = vpack.c.b16 %v696, %v678
  %v931 = vpack.c.b16 %v697, %v679
  %v932 = vpack.c.b16 %v698, %v680
  %v933 = vpack.c.b16 %v699, %v681
  %v934 = vpack.c.b16 %v700, %v682
  %v935 = vpack.c.b16 %v701, %v683
  %v936 = vpack.c.b16 %v702, %v684
  %v937 = vpack.c.b16 %v703, %v685
  %v938 = vpack.c.b16 %v704, %v686
  %v939 = vpack.c.b16 %v705, %v687
  %v940 = vpack.c.b16 %v706, %v688
  %v941 = vpack.c.b16 %v707, %v689
  %v942 = vpack.c.b16 %v708, %v690
  %v943 = vpack.c.b16 %v709, %v691
  %v944 = vpack.c.b16 %v728, %v710
  %v945 = vpack.c.b16 %v729, %v711
  %v946 = vpack.c.b16 %v730, %v712
  %v947 = vpack.c.b16 %v731, %v713
  %v948 = vpack.c.b16 %v732, %v714
  %v949 = vpack.c.b16 %v733, %v715
  %v950 = vpack.c.b16 %v734, %v716
  %v951 = vpack.c.b16 %v735, %v717
  %v952 = vpack.c.b16 %v736, %v718
  %v953 = vpack.c.b16 %v737, %v719
  %v954 = vpack.c.b16 %v738, %v720
  %v955 = vpack.c.b16 %v739, %v721
  %v956 = vpack.c.b16 %v740, %v722
  %v957 = vpack.c.b16 %v741, %v723
  %v958 = vpack.c.b16 %v742, %v724
  %v959 = vpack.c.b16 %v743, %v725
  %v960 = vpack.c.b16 %v744, %v726
  %v961 = vpack.c.b16 %v745, %v727
  %v962 = vpack.c.b16 %v764, %v746
  %v963 = vpack.c.b16 %v765, %v747
  %v964 = vpack.c.b16 %v766, %v748
  %v965 = vpack.c.b16 %v767, %v749
  %v966 = vpack.c.b16 %v768, %v750
  %v967 = vpack.c.b16 %v769, %v751
  %v968 = vpack.c.b16 %v770, %v752
  %v969 = vpack.c.b16 %v771, %v753
  %v970 = vpack.c.b16 %v772, %v754
  %v971 = vpack.c.b16 %v773, %v755
  %v972 = vpack.c.b16 %v774, %v756
  %v973 = vpack.c.b16 %v775, %v757
  %v974 = vpack.c.b16 %v776, %v758
  %v975 = vpack.c.b16 %v777, %v759
  %v976 = vpack.c.b16 %v778, %v760
  %v977 = vpack.c.b16 %v779, %v761
  %v978 = vpack.c.b16 %v780, %v762
  %v979 = vpack.c.b16 %v781, %v763
  %v980 = vpack.c.b16 %v800, %v782
  %v981 = vpack.c.b16 %v801, %v783
  %v982 = vpack.c.b16 %v802, %v784
  %v983 = vpack.c.b16 %v803, %v785
  %v984 = vpack.c.b16 %v804, %v786
  %v985 = vpack.c.b16 %v805, %v787
  %v986 = vpack.c.b16 %v806, %v788
  %v987 = vpack.c.b16 %v807, %v789
  %v988 = vpack.c.b16 %v808, %v790
  %v989 = vpack.c.b16 %v809, %v791
  %v990 = vpack.c.b16 %v810, %v792
  %v991 = vpack.c.b16 %v811, %v793
  %v992 = vpack.c.b16 %v812, %v794
  %v993 = vpack.c.b16 %v813, %v795
  %v994 = vpack.c.b16 %v814, %v796
  %v995 = vpack.c.b16 %v815, %v797
  %v996 = vpack.c.b16 %v816, %v798
  %v997 = vpack.c.b16 %v817, %v799
  %v998 = vpack.c.b16 %v836, %v818
  %v999 = vpack.c.b16 %v837, %v819
  %v1000 = vpack.c.b16 %v838, %v820
  %v1001 = vpack.c.b16 %v839, %v821
  %v1002 = vpack.c.b16 %v840, %v822
  %v1003 = vpack.c.b16 %v841, %v823
  %v1004 = vpack.c.b16 %v842, %v824
  %v1005 = vpack.c.b16 %v843, %v825
  %v1006 = vpack.c.b16 %v844, %v826
  %v1007 = vpack.c.b16 %v845, %v827
  %v1008 = vpack.c.b16 %v846, %v828
  %v1009 = vpack.c.b16 %v847, %v829
  %v1010 = vpack.c.b16 %v848, %v830
  %v1011 = vpack.c.b16 %v849, %v831
  %v1012 = vpack.c.b16 %v850, %v832
  %v1013 = vpack.c.b16 %v851, %v833
  %v1014 = vpack.c.b16 %v852, %v834
  %v1015 = vpack.c.b16 %v853, %v835
  %v1016 = vpack.c.b16 %v872, %v854
  %v1017 = vpack.c.b16 %v873, %v855
  %v1018 = vpack.c.b16 %v874, %v856
  %v1019 = vpack.c.b16 %v875, %v857
  %v1020 = vpack.c.b16 %v876, %v858
  %v1021 = vpack.c.b16 %v877, %v859
  %v1022 = vpack.c.b16 %v878, %v860
  %v1023 = vpack.c.b16 %v879, %v861
  %v1024 = vpack.c.b16 %v880, %v862
  %v1025 = vpack.c.b16 %v881, %v863
  %v1026 = vpack.c.b16 %v882, %v864
  %v1027 = vpack.c.b16 %v883, %v865
  %v1028 = vpack.c.b16 %v884, %v866
  %v1029 = vpack.c.b16 %v885, %v867
  %v1030 = vpack.c.b16 %v886, %v868
  %v1031 = vpack.c.b16 %v887, %v869
  %v1032 = vpack.c.b16 %v888, %v870
  %v1033 = vpack.c.b16 %v889, %v871
  %v1466 = vunpack.c.l.b16 %v158
  %v1467 = vunpack.c.h.b16 %v158
  %v1468 = vunpack.c.l.b16 %v159
  %v1469 = vunpack.c.h.b16 %v159
  %v1470 = vunpack.c.l.b16 %v160
  %v1471 = vunpack.c.h.b16 %v160
  %v1472 = vunpack.c.l.b16 %v161
  %v1473 = vunpack.c.h.b16 %v161
  %v1474 = vunpack.c.l.b16 %v162
  %v1475 = vunpack.c.h.b16 %v162
  %v1476 = vunpack.c.l.b16 %v163
  %v1477 = vunpack.c.h.b16 %v163
  %v1478 = vunpack.c.l.b16 %v164
  %v1479 = vunpack.c.h.b16 %v164
  %v1480 = vunpack.c.l.b16 %v165
  %v1481 = vunpack.c.h.b16 %v165
  %v1482 = vunpack.c.l.b16 %v166
  %v1483 = vunpack.c.h.b16 %v166
  %v1484 = vunpack.c.l.b16 %v167
  %v1485 = vunpack.c.h.b16 %v167
  %v1486 = vunpack.c.l.b16 %v168
  %v1487 = vunpack.c.h.b16 %v168
  %v1488 = vunpack.c.l.b16 %v169
  %v1489 = vunpack.c.h.b16 %v169
  %v1490 = vunpack.c.l.b16 %v170
  %v1491 = vunpack.c.h.b16 %v170
  %v1492 = vunpack.c.l.b16 %v171
  %v1493 = vunpack.c.h.b16 %v171
  %v1494 = vunpack.c.l.b16 %v172
  %v1495 = vunpack.c.h.b16 %v172
  %v1496 = vunpack.c.l.b16 %v173
  %v1497 = vunpack.c.h.b16 %v173
  %v1498 = vunpack.c.l.b16 %v174
  %v1499 = vunpack.c.h.b16 %v174
  %v1500 = vunpack.c.l.b16 %v175
  %v1501 = vunpack.c.h.b16 %v175
  %v1502 = vunpack.c.l.b16 %v176
  %v1503 = vunpack.c.h.b16 %v176
  %v1504 = vunpack.c.l.b16 %v177
  %v1505 = vunpack.c.h.b16 %v177
  %v1506 = vunpack.c.l.b16 %v178
  %v1507 = vunpack.c.h.b16 %v178
  %v1508 = vunpack.c.l.b16 %v179
  %v1509 = vunpack.c.h.b16 %v179
  %v1510 = vunpack.c.l.b16 %v180
  %v1511 = vunpack.c.h.b16 %v180
  %v1512 = vunpack.c.l.b16 %v181
  %v1513 = vunpack.c.h.b16 %v181
  %v1514 = vunpack.c.l.b16 %v182
  %v1515 = vunpack.c.h.b16 %v182
  %v1516 = vunpack.c.l.b16 %v183
  %v1517 = vunpack.c.h.b16 %v183
  %v1518 = vunpack.c.l.b16 %v184
  %v1519 = vunpack.c.h.b16 %v184
  %v1520 = vunpack.c.l.b16 %v185
  %v1521 = vunpack.c.h.b16 %v185
  %v1522 = vunpack.c.l.b16 %v186
  %v1523 = vunpack.c.h.b16 %v186
  %v1524 = vunpack.c.l.b16 %v187
  %v1525 = vunpack.c.h.b16 %v187
  %v1526 = vunpack.c.l.b16 %v188
  %v1527 = vunpack.c.h.b16 %v188
  %v1528 = vunpack.c.l.b16 %v189
  %v1529 = vunpack.c.h.b16 %v189
  %v1530 = vunpack.c.l.b16 %v190
  %v1531 = vunpack.c.h.b16 %v190
  %v1532 = vunpack.c.l.b16 %v191
  %v1533 = vunpack.c.h.b16 %v191
  %v1534 = vunpack.c.l.b16 %v192
  %v1535 = vunpack.c.h.b16 %v192
  %v1536 = vunpack.c.l.b16 %v193
  %v1537 = vunpack.c.h.b16 %v193
  %v1538 = vunpack.c.l.b16 %v194
  %v1539 = vunpack.c.h.b16 %v194
  %v1540 = vunpack.c.l.b16 %v195
  %v1541 = vunpack.c.h.b16 %v195
  %v1542 = vunpack.c.l.b16 %v196
  %v1543 = vunpack.c.h.b16 %v196
  %v1544 = vunpack.c.l.b16 %v197
  %v1545 = vunpack.c.h.b16 %v197
  %v1546 = vunpack.c.l.b16 %v198
  %v1547 = vunpack.c.h.b16 %v198
  %v1548 = vunpack.c.l.b16 %v199
  %v1549 = vunpack.c.h.b16 %v199
  %v1550 = vunpack.c.l.b16 %v200
  %v1551 = vunpack.c.h.b16 %v200
  %v1552 = vunpack.c.l.b16 %v201
  %v1553 = vunpack.c.h.b16 %v201
  %v1554 = vunpack.c.l.b16 %v202
  %v1555 = vunpack.c.h.b16 %v202
  %v1556 = vunpack.c.l.b16 %v203
  %v1557 = vunpack.c.h.b16 %v203
  %v1558 = vunpack.c.l.b16 %v204
  %v1559 = vunpack.c.h.b16 %v204
  %v1560 = vunpack.c.l.b16 %v205
  %v1561 = vunpack.c.h.b16 %v205
  %v1562 = vunpack.c.l.b16 %v206
  %v1563 = vunpack.c.h.b16 %v206
  %v1564 = vunpack.c.l.b16 %v207
  %v1565 = vunpack.c.h.b16 %v207
  %v1566 = vunpack.c.l.b16 %v208
  %v1567 = vunpack.c.h.b16 %v208
  %v1568 = vunpack.c.l.b16 %v209
  %v1569 = vunpack.c.h.b16 %v209
  %v1570 = vunpack.c.l.b16 %v210
  %v1571 = vunpack.c.h.b16 %v210
  %v1572 = vunpack.c.l.b16 %v211
  %v1573 = vunpack.c.h.b16 %v211
  %v1574 = vunpack.c.l.b16 %v212
  %v1575 = vunpack.c.h.b16 %v212
  %v1576 = vunpack.c.l.b16 %v213
  %v1577 = vunpack.c.h.b16 %v213
  %v1578 = vunpack.c.l.b16 %v214
  %v1579 = vunpack.c.h.b16 %v214
  %v1580 = vunpack.c.l.b16 %v215
  %v1581 = vunpack.c.h.b16 %v215
  %v1582 = vunpack.c.l.b16 %v216
  %v1583 = vunpack.c.h.b16 %v216
  %v1584 = vunpack.c.l.b16 %v217
  %v1585 = vunpack.c.h.b16 %v217
  %v1586 = vunpack.c.l.b16 %v218
  %v1587 = vunpack.c.h.b16 %v218
  %v1588 = vunpack.c.l.b16 %v219
  %v1589 = vunpack.c.h.b16 %v219
  %v1590 = vunpack.c.l.b16 %v220
  %v1591 = vunpack.c.h.b16 %v220
  %v1592 = vunpack.c.l.b16 %v221
  %v1593 = vunpack.c.h.b16 %v221
  %v1594 = vunpack.c.l.b16 %v222
  %v1595 = vunpack.c.h.b16 %v222
  %v1596 = vunpack.c.l.b16 %v223
  %v1597 = vunpack.c.h.b16 %v223
  %v1598 = vunpack.c.l.b16 %v224
  %v1599 = vunpack.c.h.b16 %v224
  %v1600 = vunpack.c.l.b16 %v225
  %v1601 = vunpack.c.h.b16 %v225
  %v1602 = vunpack.c.l.b16 %v226
  %v1603 = vunpack.c.h.b16 %v226
  %v1604 = vunpack.c.l.b16 %v227
  %v1605 = vunpack.c.h.b16 %v227
  %v1606 = vunpack.c.l.b16 %v228
  %v1607 = vunpack.c.h.b16 %v228
  %v1608 = vunpack.c.l.b16 %v229
  %v1609 = vunpack.c.h.b16 %v229
  %v1610 = vunpack.c.l.b16 %v230
  %v1611 = vunpack.c.h.b16 %v230
  %v1612 = vunpack.c.l.b16 %v231
  %v1613 = vunpack.c.h.b16 %v231
  %v1614 = vunpack.c.l.b16 %v232
  %v1615 = vunpack.c.h.b16 %v232
  %v1616 = vunpack.c.l.b16 %v233
  %v1617 = vunpack.c.h.b16 %v233
  %v1618 = vunpack.c.l.b16 %v234
  %v1619 = vunpack.c.h.b16 %v234
  %v1620 = vunpack.c.l.b16 %v235
  %v1621 = vunpack.c.h.b16 %v235
  %v1622 = vunpack.c.l.b16 %v236
  %v1623 = vunpack.c.h.b16 %v236
  %v1624 = vunpack.c.l.b16 %v237
  %v1625 = vunpack.c.h.b16 %v237
  %v1626 = vunpack.c.l.b16 %v238
  %v1627 = vunpack.c.h.b16 %v238
  %v1628 = vunpack.c.l.b16 %v239
  %v1629 = vunpack.c.h.b16 %v239
  %v1630 = vunpack.c.l.b16 %v240
  %v1631 = vunpack.c.h.b16 %v240
  %v1632 = vunpack.c.l.b16 %v241
  %v1633 = vunpack.c.h.b16 %v241
  %v1634 = vunpack.c.l.b16 %v242
  %v1635 = vunpack.c.h.b16 %v242
  %v1636 = vunpack.c.l.b16 %v243
  %v1637 = vunpack.c.h.b16 %v243
  %v1638 = vunpack.c.l.b16 %v244
  %v1639 = vunpack.c.h.b16 %v244
  %v1640 = vunpack.c.l.b16 %v245
  %v1641 = vunpack.c.h.b16 %v245
  %v1642 = vunpack.c.l.b16 %v246
  %v1643 = vunpack.c.h.b16 %v246
  %v1644 = vunpack.c.l.b16 %v247
  %v1645 = vunpack.c.h.b16 %v247
  %v1646 = vunpack.c.l.b16 %v248
  %v1647 = vunpack.c.h.b16 %v248
  %v1648 = vunpack.c.l.b16 %v249
  %v1649 = vunpack.c.h.b16 %v249
  %v1650 = vunpack.c.l.b16 %v250
  %v1651 = vunpack.c.h.b16 %v250
  %v1652 = vunpack.c.l.b16 %v251
  %v1653 = vunpack.c.h.b16 %v251
  %v1654 = vunpack.c.l.b16 %v252
  %v1655 = vunpack.c.h.b16 %v252
  %v1656 = vunpack.c.l.b16 %v253
  %v1657 = vunpack.c.h.b16 %v253
  %v1658 = vunpack.c.l.b16 %v254
  %v1659 = vunpack.c.h.b16 %v254
  %v1660 = vunpack.c.l.b16 %v255
  %v1661 = vunpack.c.h.b16 %v255
  %v1662 = vunpack.c.l.b16 %v256
  %v1663 = vunpack.c.h.b16 %v256
  %v1664 = vunpack.c.l.b16 %v257
  %v1665 = vunpack.c.h.b16 %v257
  %v1666 = vunpack.c.l.b16 %v258
  %v1667 = vunpack.c.h.b16 %v258
  %v1668 = vunpack.c.l.b16 %v259
  %v1669 = vunpack.c.h.b16 %v259
  %v1670 = vunpack.c.l.b16 %v260
  %v1671 = vunpack.c.h.b16 %v260
  %v1672 = vunpack.c.l.b16 %v261
  %v1673 = vunpack.c.h.b16 %v261
  %v1674 = vunpack.c.l.b16 %v262
  %v1675 = vunpack.c.h.b16 %v262
  %v1676 = vunpack.c.l.b16 %v263
  %v1677 = vunpack.c.h.b16 %v263
  %v1678 = vunpack.c.l.b16 %v264
  %v1679 = vunpack.c.h.b16 %v264
  %v1680 = vunpack.c.l.b16 %v265
  %v1681 = vunpack.c.h.b16 %v265
  %v1682 = vunpack.c.l.b16 %v266
  %v1683 = vunpack.c.h.b16 %v266
  %v1684 = vunpack.c.l.b16 %v267
  %v1685 = vunpack.c.h.b16 %v267
  %v1686 = vunpack.c.l.b16 %v268
  %v1687 = vunpack.c.h.b16 %v268
  %v1688 = vunpack.c.l.b16 %v269
  %v1689 = vunpack.c.h.b16 %v269
  %v1690 = vunpack.c.l.b16 %v270
  %v1691 = vunpack.c.h.b16 %v270
  %v1692 = vunpack.c.l.b16 %v271
  %v1693 = vunpack.c.h.b16 %v271
  %v1694 = vunpack.c.l.b16 %v272
  %v1695 = vunpack.c.h.b16 %v272
  %v1696 = vunpack.c.l.b16 %v273
  %v1697 = vunpack.c.h.b16 %v273
  %v1698 = vunpack.c.l.b16 %v274
  %v1699 = vunpack.c.h.b16 %v274
  %v1700 = vunpack.c.l.b16 %v275
  %v1701 = vunpack.c.h.b16 %v275
  %v1702 = vunpack.c.l.b16 %v276
  %v1703 = vunpack.c.h.b16 %v276
  %v1704 = vunpack.c.l.b16 %v277
  %v1705 = vunpack.c.h.b16 %v277
  %v1706 = vunpack.c.l.b16 %v278
  %v1707 = vunpack.c.h.b16 %v278
  %v1708 = vunpack.c.l.b16 %v279
  %v1709 = vunpack.c.h.b16 %v279
  %v1710 = vunpack.c.l.b16 %v280
  %v1711 = vunpack.c.h.b16 %v280
  %v1712 = vunpack.c.l.b16 %v281
  %v1713 = vunpack.c.h.b16 %v281
  %v1714 = vunpack.c.l.b16 %v282
  %v1715 = vunpack.c.h.b16 %v282
  %v1716 = vunpack.c.l.b16 %v283
  %v1717 = vunpack.c.h.b16 %v283
  %v1718 = vunpack.c.l.b16 %v284
  %v1719 = vunpack.c.h.b16 %v284
  %v1720 = vunpack.c.l.b16 %v285
  %v1721 = vunpack.c.h.b16 %v285
  %v1722 = vunpack.c.l.b16 %v286
  %v1723 = vunpack.c.h.b16 %v286
  %v1724 = vunpack.c.l.b16 %v287
  %v1725 = vunpack.c.h.b16 %v287
  %v1726 = vunpack.c.l.b16 %v288
  %v1727 = vunpack.c.h.b16 %v288
  %v1728 = vunpack.c.l.b16 %v289
  %v1729 = vunpack.c.h.b16 %v289
  %v1730 = vunpack.c.l.b16 %v290
  %v1731 = vunpack.c.h.b16 %v290
  %v1732 = vunpack.c.l.b16 %v291
  %v1733 = vunpack.c.h.b16 %v291
  %v1734 = vunpack.c.l.b16 %v292
  %v1735 = vunpack.c.h.b16 %v292
  %v1736 = vunpack.c.l.b16 %v293
  %v1737 = vunpack.c.h.b16 %v293
  %v1738 = vunpack.c.l.b16 %v294
  %v1739 = vunpack.c.h.b16 %v294
  %v1740 = vunpack.c.l.b16 %v295
  %v1741 = vunpack.c.h.b16 %v295
  %v1742 = vunpack.c.l.b16 %v296
  %v1743 = vunpack.c.h.b16 %v296
  %v1744 = vunpack.c.l.b16 %v297
  %v1745 = vunpack.c.h.b16 %v297
  %v1746 = vunpack.c.l.b16 %v298
  %v1747 = vunpack.c.h.b16 %v298
  %v1748 = vunpack.c.l.b16 %v299
  %v1749 = vunpack.c.h.b16 %v299
  %v1750 = vunpack.c.l.b16 %v300
  %v1751 = vunpack.c.h.b16 %v300
  %v1752 = vunpack.c.l.b16 %v301
  %v1753 = vunpack.c.h.b16 %v301
  %v1754 = vunpack.c.l.b16 %v302
  %v1755 = vunpack.c.h.b16 %v302
  %v1756 = vunpack.c.l.b16 %v303
  %v1757 = vunpack.c.h.b16 %v303
  %v1758 = vunpack.c.l.b16 %v304
  %v1759 = vunpack.c.h.b16 %v304
  %v1760 = vunpack.c.l.b16 %v305
  %v1761 = vunpack.c.h.b16 %v305
  %v1762 = vunpack.c.l.b16 %v306
  %v1763 = vunpack.c.h.b16 %v306
  %v1764 = vunpack.c.l.b16 %v307
  %v1765 = vunpack.c.h.b16 %v307
  %v1766 = vunpack.c.l.b16 %v308
  %v1767 = vunpack.c.h.b16 %v308
  %v1768 = vunpack.c.l.b16 %v309
  %v1769 = vunpack.c.h.b16 %v309
  %v1770 = vunpack.c.l.b16 %v310
  %v1771 = vunpack.c.h.b16 %v310
  %v1772 = vunpack.c.l.b16 %v311
  %v1773 = vunpack.c.h.b16 %v311
  %v1774 = vunpack.c.l.b16 %v312
  %v1775 = vunpack.c.h.b16 %v312
  %v1776 = vunpack.c.l.b16 %v313
  %v1777 = vunpack.c.h.b16 %v313
  %v1778 = vunpack.c.l.b16 %v314
  %v1779 = vunpack.c.h.b16 %v314
  %v1780 = vunpack.c.l.b16 %v315
  %v1781 = vunpack.c.h.b16 %v315
  %v1782 = vunpack.c.l.b16 %v316
  %v1783 = vunpack.c.h.b16 %v316
  %v1784 = vunpack.c.l.b16 %v317
  %v1785 = vunpack.c.h.b16 %v317
  %v1786 = vunpack.c.l.b16 %v318
  %v1787 = vunpack.c.h.b16 %v318
  %v1788 = vunpack.c.l.b16 %v319
  %v1789 = vunpack.c.h.b16 %v319
  %v1790 = vunpack.c.l.b16 %v320
  %v1791 = vunpack.c.h.b16 %v320
  %v1792 = vunpack.c.l.b16 %v321
  %v1793 = vunpack.c.h.b16 %v321
  %v1794 = vunpack.c.l.b16 %v322
  %v1795 = vunpack.c.h.b16 %v322
  %v1796 = vunpack.c.l.b16 %v323
  %v1797 = vunpack.c.h.b16 %v323
  %v1798 = vunpack.c.l.b16 %v324
  %v1799 = vunpack.c.h.b16 %v324
  %v1800 = vunpack.c.l.b16 %v325
  %v1801 = vunpack.c.h.b16 %v325
  %v1802 = vunpack.c.l.b16 %v326
  %v1803 = vunpack.c.h.b16 %v326
  %v1804 = vunpack.c.l.b16 %v327
  %v1805 = vunpack.c.h.b16 %v327
  %v1806 = vunpack.c.l.b16 %v328
  %v1807 = vunpack.c.h.b16 %v328
  %v1808 = vunpack.c.l.b16 %v329
  %v1809 = vunpack.c.h.b16 %v329
  %v1810 = vunpack.c.l.b16 %v330
  %v1811 = vunpack.c.h.b16 %v330
  %v1812 = vunpack.c.l.b16 %v331
  %v1813 = vunpack.c.h.b16 %v331
  %v1814 = vunpack.c.l.b16 %v332
  %v1815 = vunpack.c.h.b16 %v332
  %v1816 = vunpack.c.l.b16 %v333
  %v1817 = vunpack.c.h.b16 %v333
  %v1818 = vunpack.c.l.b16 %v334
  %v1819 = vunpack.c.h.b16 %v334
  %v1820 = vunpack.c.l.b16 %v335
  %v1821 = vunpack.c.h.b16 %v335
  %v1822 = vunpack.c.l.b16 %v336
  %v1823 = vunpack.c.h.b16 %v336
  %v1824 = vunpack.c.l.b16 %v337
  %v1825 = vunpack.c.h.b16 %v337
  %v1826 = vunpack.c.l.b16 %v338
  %v1827 = vunpack.c.h.b16 %v338
  %v1828 = vunpack.c.l.b16 %v339
  %v1829 = vunpack.c.h.b16 %v339
  %v1830 = vunpack.c.l.b16 %v340
  %v1831 = vunpack.c.h.b16 %v340
  %v1832 = vunpack.c.l.b16 %v341
  %v1833 = vunpack.c.h.b16 %v341
  %v1834 = vunpack.c.l.b16 %v342
  %v1835 = vunpack.c.h.b16 %v342
  %v1836 = vunpack.c.l.b16 %v343
  %v1837 = vunpack.c.h.b16 %v343
  %v1838 = vunpack.c.l.b16 %v344
  %v1839 = vunpack.c.h.b16 %v344
  %v1840 = vunpack.c.l.b16 %v345
  %v1841 = vunpack.c.h.b16 %v345
  %v1842 = vunpack.c.l.b16 %v346
  %v1843 = vunpack.c.h.b16 %v346
  %v1844 = vunpack.c.l.b16 %v347
  %v1845 = vunpack.c.h.b16 %v347
  %v1846 = vunpack.c.l.b16 %v348
  %v1847 = vunpack.c.h.b16 %v348
  %v1848 = vunpack.c.l.b16 %v349
  %v1849 = vunpack.c.h.b16 %v349
  %v1850 = vunpack.c.l.b16 %v350
  %v1851 = vunpack.c.h.b16 %v350
  %v1852 = vunpack.c.l.b16 %v351
  %v1853 = vunpack.c.h.b16 %v351
  %v1854 = vunpack.c.l.b16 %v352
  %v1855 = vunpack.c.h.b16 %v352
  %v1856 = vunpack.c.l.b16 %v353
  %v1857 = vunpack.c.h.b16 %v353
  %v1858 = vunpack.c.l.b16 %v354
  %v1859 = vunpack.c.h.b16 %v354
  %v1860 = vunpack.c.l.b16 %v355
  %v1861 = vunpack.c.h.b16 %v355
  %v1862 = vunpack.c.l.b16 %v356
  %v1863 = vunpack.c.h.b16 %v356
  %v1864 = vunpack.c.l.b16 %v357
  %v1865 = vunpack.c.h.b16 %v357
  %v1866 = vunpack.c.l.b16 %v358
  %v1867 = vunpack.c.h.b16 %v358
  %v1868 = vunpack.c.l.b16 %v359
  %v1869 = vunpack.c.h.b16 %v359
  %v1870 = vunpack.c.l.b16 %v360
  %v1871 = vunpack.c.h.b16 %v360
  %v1872 = vunpack.c.l.b16 %v361
  %v1873 = vunpack.c.h.b16 %v361
  %v1874 = vunpack.c.l.b16 %v362
  %v1875 = vunpack.c.h.b16 %v362
  %v1876 = vunpack.c.l.b16 %v363
  %v1877 = vunpack.c.h.b16 %v363
  %v1878 = vunpack.c.l.b16 %v364
  %v1879 = vunpack.c.h.b16 %v364
  %v1880 = vunpack.c.l.b16 %v365
  %v1881 = vunpack.c.h.b16 %v365
  %v1882 = vunpack.c.l.b16 %v366
  %v1883 = vunpack.c.h.b16 %v366
  %v1884 = vunpack.c.l.b16 %v367
  %v1885 = vunpack.c.h.b16 %v367
  %v1886 = vunpack.c.l.b16 %v368
  %v1887 = vunpack.c.h.b16 %v368
  %v1888 = vunpack.c.l.b16 %v369
  %v1889 = vunpack.c.h.b16 %v369
  %v1890 = vunpack.c.l.b16 %v370
  %v1891 = vunpack.c.h.b16 %v370
  %v1892 = vunpack.c.l.b16 %v371
  %v1893 = vunpack.c.h.b16 %v371
  %v1894 = vunpack.c.l.b16 %v372
  %v1895 = vunpack.c.h.b16 %v372
  %v1896 = vunpack.c.l.b16 %v373
  %v1897 = vunpack.c.h.b16 %v373
  %v1898 = vunpack.c.l.b16 %v374
  %v1899 = vunpack.c.h.b16 %v374
  %v1900 = vunpack.c.l.b16 %v375
  %v1901 = vunpack.c.h.b16 %v375
  %v1902 = vunpack.c.l.b16 %v376
  %v1903 = vunpack.c.h.b16 %v376
  %v1904 = vunpack.c.l.b16 %v377
  %v1905 = vunpack.c.h.b16 %v377
  %v1906 = vunpack.c.l.b16 %v378
  %v1907 = vunpack.c.h.b16 %v378
  %v1908 = vunpack.c.l.b16 %v379
  %v1909 = vunpack.c.h.b16 %v379
  %v1910 = vunpack.c.l.b16 %v380
  %v1911 = vunpack.c.h.b16 %v380
  %v1912 = vunpack.c.l.b16 %v381
  %v1913 = vunpack.c.h.b16 %v381
  %v1914 = vunpack.c.l.b16 %v382
  %v1915 = vunpack.c.h.b16 %v382
  %v1916 = vunpack.c.l.b16 %v383
  %v1917 = vunpack.c.h.b16 %v383
  %v1918 = vunpack.c.l.b16 %v384
  %v1919 = vunpack.c.h.b16 %v384
  %v1920 = vunpack.c.l.b16 %v385
  %v1921 = vunpack.c.h.b16 %v385
  %v1922 = vunpack.c.l.b16 %v386
  %v1923 = vunpack.c.h.b16 %v386
  %v1924 = vunpack.c.l.b16 %v387
  %v1925 = vunpack.c.h.b16 %v387
  %v1926 = vunpack.c.l.b16 %v388
  %v1927 = vunpack.c.h.b16 %v388
  %v1928 = vunpack.c.l.b16 %v389
  %v1929 = vunpack.c.h.b16 %v389
  %v1930 = vunpack.c.l.b16 %v390
  %v1931 = vunpack.c.h.b16 %v390
  %v1932 = vunpack.c.l.b16 %v391
  %v1933 = vunpack.c.h.b16 %v391
  %v1934 = vunpack.c.l.b16 %v392
  %v1935 = vunpack.c.h.b16 %v392
  %v1936 = vunpack.c.l.b16 %v393
  %v1937 = vunpack.c.h.b16 %v393
  %v1938 = vunpack.c.l.b16 %v394
  %v1939 = vunpack.c.h.b16 %v394
  %v1940 = vunpack.c.l.b16 %v395
  %v1941 = vunpack.c.h.b16 %v395
  %v1942 = vunpack.c.l.b16 %v396
  %v1943 = vunpack.c.h.b16 %v396
  %v1944 = vunpack.c.l.b16 %v397
  %v1945 = vunpack.c.h.b16 %v397
  %v1946 = vunpack.c.l.b16 %v398
  %v1947 = vunpack.c.h.b16 %v398
  %v1948 = vunpack.c.l.b16 %v399
  %v1949 = vunpack.c.h.b16 %v399
  %v1950 = vunpack.c.l.b16 %v400
  %v1951 = vunpack.c.h.b16 %v400
  %v1952 = vunpack.c.l.b16 %v401
  %v1953 = vunpack.c.h.b16 %v401
  %v1954 = vunpack.c.l.b16 %v402
  %v1955 = vunpack.c.h.b16 %v402
  %v1956 = vunpack.c.l.b16 %v403
  %v1957 = vunpack.c.h.b16 %v403
  %v1958 = vunpack.c.l.b16 %v404
  %v1959 = vunpack.c.h.b16 %v404
  %v1960 = vunpack.c.l.b16 %v405
  %v1961 = vunpack.c.h.b16 %v405
  %v1962 = vunpack.c.l.b16 %v406
  %v1963 = vunpack.c.h.b16 %v406
  %v1964 = vunpack.c.l.b16 %v407
  %v1965 = vunpack.c.h.b16 %v407
  %v1966 = vunpack.c.l.b16 %v408
  %v1967 = vunpack.c.h.b16 %v408
  %v1968 = vunpack.c.l.b16 %v409
  %v1969 = vunpack.c.h.b16 %v409
  %v1970 = vunpack.c.l.b16 %v410
  %v1971 = vunpack.c.h.b16 %v410
  %v1972 = vunpack.c.l.b16 %v411
  %v1973 = vunpack.c.h.b16 %v411
  %v1974 = vunpack.c.l.b16 %v412
  %v1975 = vunpack.c.h.b16 %v412
  %v1976 = vunpack.c.l.b16 %v413
  %v1977 = vunpack.c.h.b16 %v413
  %v1978 = vunpack.c.l.b16 %v414
  %v1979 = vunpack.c.h.b16 %v414
  %v1980 = vunpack.c.l.b16 %v415
  %v1981 = vunpack.c.h.b16 %v415
  %v1982 = vunpack.c.l.b16 %v416
  %v1983 = vunpack.c.h.b16 %v416
  %v1984 = vunpack.c.l.b16 %v417
  %v1985 = vunpack.c.h.b16 %v417
  %v1986 = vunpack.c.l.b16 %v418
  %v1987 = vunpack.c.h.b16 %v418
  %v1988 = vunpack.c.l.b16 %v419
  %v1989 = vunpack.c.h.b16 %v419
  %v1990 = vunpack.c.l.b16 %v420
  %v1991 = vunpack.c.h.b16 %v420
  %v1992 = vunpack.c.l.b16 %v421
  %v1993 = vunpack.c.h.b16 %v421
  %v1994 = vunpack.c.l.b16 %v422
  %v1995 = vunpack.c.h.b16 %v422
  %v1996 = vunpack.c.l.b16 %v423
  %v1997 = vunpack.c.h.b16 %v423
  %v1998 = vunpack.c.l.b16 %v424
  %v1999 = vunpack.c.h.b16 %v424
  %v2000 = vunpack.c.l.b16 %v425
  %v2001 = vunpack.c.h.b16 %v425
  %v2002 = vunpack.c.l.b16 %v426
  %v2003 = vunpack.c.h.b16 %v426
  %v2004 = vunpack.c.l.b16 %v427
  %v2005 = vunpack.c.h.b16 %v427
  %v2006 = vunpack.c.l.b16 %v428
  %v2007 = vunpack.c.h.b16 %v428
  %v2008 = vunpack.c.l.b16 %v429
  %v2009 = vunpack.c.h.b16 %v429
  %v2010 = vunpack.c.l.b16 %v430
  %v2011 = vunpack.c.h.b16 %v430
  %v2012 = vunpack.c.l.b16 %v431
  %v2013 = vunpack.c.h.b16 %v431
  %v2014 = vunpack.c.l.b16 %v432
  %v2015 = vunpack.c.h.b16 %v432
  %v2016 = vunpack.c.l.b16 %v433
  %v2017 = vunpack.c.h.b16 %v433
  %v2018 = vunpack.c.l.b16 %v434
  %v2019 = vunpack.c.h.b16 %v434
  %v2020 = vunpack.c.l.b16 %v435
  %v2021 = vunpack.c.h.b16 %v435
  %v2022 = vunpack.c.l.b16 %v436
  %v2023 = vunpack.c.h.b16 %v436
  %v2024 = vunpack.c.l.b16 %v437
  %v2025 = vunpack.c.h.b16 %v437
  %v2026 = vunpack.c.l.b16 %v438
  %v2027 = vunpack.c.h.b16 %v438
  %v2028 = vunpack.c.l.b16 %v439
  %v2029 = vunpack.c.h.b16 %v439
  %v2030 = vunpack.c.l.b16 %v440
  %v2031 = vunpack.c.h.b16 %v440
  %v2032 = vunpack.c.l.b16 %v441
  %v2033 = vunpack.c.h.b16 %v441
  %v2034 = vunpack.c.l.b16 %v442
  %v2035 = vunpack.c.h.b16 %v442
  %v2036 = vunpack.c.l.b16 %v443
  %v2037 = vunpack.c.h.b16 %v443
  %v2038 = vunpack.c.l.b16 %v444
  %v2039 = vunpack.c.h.b16 %v444
  %v2040 = vunpack.c.l.b16 %v445
  %v2041 = vunpack.c.h.b16 %v445
  %v2042 = vpack.c.b16 %v1468, %v1466
  %v2043 = vpack.c.b16 %v1469, %v1467
  %v2044 = vpack.c.b16 %v1472, %v1470
  %v2045 = vpack.c.b16 %v1473, %v1471
  %v2046 = vpack.c.b16 %v1476, %v1474
  %v2047 = vpack.c.b16 %v1477, %v1475
  %v2048 = vpack.c.b16 %v1480, %v1478
  %v2049 = vpack.c.b16 %v1481, %v1479
  %v2050 = vpack.c.b16 %v1484, %v1482
  %v2051 = vpack.c.b16 %v1485, %v1483
  %v2052 = vpack.c.b16 %v1488, %v1486
  %v2053 = vpack.c.b16 %v1489, %v1487
  %v2054 = vpack.c.b16 %v1492, %v1490
  %v2055 = vpack.c.b16 %v1493, %v1491
  %v2056 = vpack.c.b16 %v1496, %v1494
  %v2057 = vpack.c.b16 %v1497, %v1495
  %v2058 = vpack.c.b16 %v1500, %v1498
  %v2059 = vpack.c.b16 %v1501, %v1499
  %v2060 = vpack.c.b16 %v1504, %v1502
  %v2061 = vpack.c.b16 %v1505, %v1503
  %v2062 = vpack.c.b16 %v1508, %v1506
  %v2063 = vpack.c.b16 %v1509, %v1507
  %v2064 = vpack.c.b16 %v1512, %v1510
  %v2065 = vpack.c.b16 %v1513, %v1511
  %v2066 = vpack.c.b16 %v1516, %v1514
  %v2067 = vpack.c.b16 %v1517, %v1515
  %v2068 = vpack.c.b16 %v1520, %v1518
  %v2069 = vpack.c.b16 %v1521, %v1519
  %v2070 = vpack.c.b16 %v1524, %v1522
  %v2071 = vpack.c.b16 %v1525, %v1523
  %v2072 = vpack.c.b16 %v1528, %v1526
  %v2073 = vpack.c.b16 %v1529, %v1527
  %v2074 = vpack.c.b16 %v1532, %v1530
  %v2075 = vpack.c.b16 %v1533, %v1531
  %v2076 = vpack.c.b16 %v1536, %v1534
  %v2077 = vpack.c.b16 %v1537, %v1535
  %v2078 = vpack.c.b16 %v1540, %v1538
  %v2079 = vpack.c.b16 %v1541, %v1539
  %v2080 = vpack.c.b16 %v1544, %v1542
  %v2081 = vpack.c.b16 %v1545, %v1543
  %v2082 = vpack.c.b16 %v1548, %v1546
  %v2083 = vpack.c.b16 %v1549, %v1547
  %v2084 = vpack.c.b16 %v1552, %v1550
  %v2085 = vpack.c.b16 %v1553, %v1551
  %v2086 = vpack.c.b16 %v1556, %v1554
  %v2087 = vpack.c.b16 %v1557, %v1555
  %v2088 = vpack.c.b16 %v1560, %v1558
  %v2089 = vpack.c.b16 %v1561, %v1559
  %v2090 = vpack.c.b16 %v1564, %v1562
  %v2091 = vpack.c.b16 %v1565, %v1563
  %v2092 = vpack.c.b16 %v1568, %v1566
  %v2093 = vpack.c.b16 %v1569, %v1567
  %v2094 = vpack.c.b16 %v1572, %v1570
  %v2095 = vpack.c.b16 %v1573, %v1571
  %v2096 = vpack.c.b16 %v1576, %v1574
  %v2097 = vpack.c.b16 %v1577, %v1575
  %v2098 = vpack.c.b16 %v1580, %v1578
  %v2099 = vpack.c.b16 %v1581, %v1579
  %v2100 = vpack.c.b16 %v1584, %v1582
  %v2101 = vpack.c.b16 %v1585, %v1583
  %v2102 = vpack.c.b16 %v1588, %v1586
  %v2103 = vpack.c.b16 %v1589, %v1587
  %v2104 = vpack.c.b16 %v1592, %v1590
  %v2105 = vpack.c.b16 %v1593, %v1591
  %v2106 = vpack.c.b16 %v1596, %v1594
  %v2107 = vpack.c.b16 %v1597, %v1595
  %v2108 = vpack.c.b16 %v1600, %v1598
  %v2109 = vpack.c.b16 %v1601, %v1599
  %v2110 = vpack.c.b16 %v1604, %v1602
  %v2111 = vpack.c.b16 %v1605, %v1603
  %v2112 = vpack.c.b16 %v1608, %v1606
  %v2113 = vpack.c.b16 %v1609, %v1607
  %v2114 = vpack.c.b16 %v1612, %v1610
  %v2115 = vpack.c.b16 %v1613, %v1611
  %v2116 = vpack.c.b16 %v1616, %v1614
  %v2117 = vpack.c.b16 %v1617, %v1615
  %v2118 = vpack.c.b16 %v1620, %v1618
  %v2119 = vpack.c.b16 %v1621, %v1619
  %v2120 = vpack.c.b16 %v1624, %v1622
  %v2121 = vpack.c.b16 %v1625, %v1623
  %v2122 = vpack.c.b16 %v1628, %v1626
  %v2123 = vpack.c.b16 %v1629, %v1627
  %v2124 = vpack.c.b16 %v1632, %v1630
  %v2125 = vpack.c.b16 %v1633, %v1631
  %v2126 = vpack.c.b16 %v1636, %v1634
  %v2127 = vpack.c.b16 %v1637, %v1635
  %v2128 = vpack.c.b16 %v1640, %v1638
  %v2129 = vpack.c.b16 %v1641, %v1639
  %v2130 = vpack.c.b16 %v1644, %v1642
  %v2131 = vpack.c.b16 %v1645, %v1643
  %v2132 = vpack.c.b16 %v1648, %v1646
  %v2133 = vpack.c.b16 %v1649, %v1647
  %v2134 = vpack.c.b16 %v1652, %v1650
  %v2135 = vpack.c.b16 %v1653, %v1651
  %v2136 = vpack.c.b16 %v1656, %v1654
  %v2137 = vpack.c.b16 %v1657, %v1655
  %v2138 = vpack.c.b16 %v1660, %v1658
  %v2139 = vpack.c.b16 %v1661, %v1659
  %v2140 = vpack.c.b16 %v1664, %v1662
  %v2141 = vpack.c.b16 %v1665, %v1663
  %v2142 = vpack.c.b16 %v1668, %v1666
  %v2143 = vpack.c.b16 %v1669, %v1667
  %v2144 = vpack.c.b16 %v1672, %v1670
  %v2145 = vpack.c.b16 %v1673, %v1671
  %v2146 = vpack.c.b16 %v1676, %v1674
  %v2147 = vpack.c.b16 %v1677, %v1675
  %v2148 = vpack.c.b16 %v1680, %v1678
  %v2149 = vpack.c.b16 %v1681, %v1679
  %v2150 = vpack.c.b16 %v1684, %v1682
  %v2151 = vpack.c.b16 %v1685, %v1683
  %v2152 = vpack.c.b16 %v1688, %v1686
  %v2153 = vpack.c.b16 %v1689, %v1687
  %v2154 = vpack.c.b16 %v1692, %v1690
  %v2155 = vpack.c.b16 %v1693, %v1691
  %v2156 = vpack.c.b16 %v1696, %v1694
  %v2157 = vpack.c.b16 %v1697, %v1695
  %v2158 = vpack.c.b16 %v1700, %v1698
  %v2159 = vpack.c.b16 %v1701, %v1699
  %v2160 = vpack.c.b16 %v1704, %v1702
  %v2161 = vpack.c.b16 %v1705, %v1703
  %v2162 = vpack.c.b16 %v1708, %v1706
  %v2163 = vpack.c.b16 %v1709, %v1707
  %v2164 = vpack.c.b16 %v1712, %v1710
  %v2165 = vpack.c.b16 %v1713, %v1711
  %v2166 = vpack.c.b16 %v1716, %v1714
  %v2167 = vpack.c.b16 %v1717, %v1715
  %v2168 = vpack.c.b16 %v1720, %v1718
  %v2169 = vpack.c.b16 %v1721, %v1719
  %v2170 = vpack.c.b16 %v1724, %v1722
  %v2171 = vpack.c.b16 %v1725, %v1723
  %v2172 = vpack.c.b16 %v1728, %v1726
  %v2173 = vpack.c.b16 %v1729, %v1727
  %v2174 = vpack.c.b16 %v1732, %v1730
  %v2175 = vpack.c.b16 %v1733, %v1731
  %v2176 = vpack.c.b16 %v1736, %v1734
  %v2177 = vpack.c.b16 %v1737, %v1735
  %v2178 = vpack.c.b16 %v1740, %v1738
  %v2179 = vpack.c.b16 %v1741, %v1739
  %v2180 = vpack.c.b16 %v1744, %v1742
  %v2181 = vpack.c.b16 %v1745, %v1743
  %v2182 = vpack.c.b16 %v1748, %v1746
  %v2183 = vpack.c.b16 %v1749, %v1747
  %v2184 = vpack.c.b16 %v1752, %v1750
  %v2185 = vpack.c.b16 %v1753, %v1751
  %v2186 = vpack.c.b16 %v1756, %v1754
  %v2187 = vpack.c.b16 %v1757, %v1755
  %v2188 = vpack.c.b16 %v1760, %v1758
  %v2189 = vpack.c.b16 %v1761, %v1759
  %v2190 = vpack.c.b16 %v1764, %v1762
  %v2191 = vpack.c.b16 %v1765, %v1763
  %v2192 = vpack.c.b16 %v1768, %v1766
  %v2193 = vpack.c.b16 %v1769, %v1767
  %v2194 = vpack.c.b16 %v1772, %v1770
  %v2195 = vpack.c.b16 %v1773, %v1771
  %v2196 = vpack.c.b16 %v1776, %v1774
  %v2197 = vpack.c.b16 %v1777, %v1775
  %v2198 = vpack.c.b16 %v1780, %v1778
  %v2199 = vpack.c.b16 %v1781, %v1779
  %v2200 = vpack.c.b16 %v1784, %v1782
  %v2201 = vpack.c.b16 %v1785, %v1783
  %v2202 = vpack.c.b16 %v1788, %v1786
  %v2203 = vpack.c.b16 %v1789, %v1787
  %v2204 = vpack.c.b16 %v1792, %v1790
  %v2205 = vpack.c.b16 %v1793, %v1791
  %v2206 = vpack.c.b16 %v1796, %v1794
  %v2207 = vpack.c.b16 %v1797, %v1795
  %v2208 = vpack.c.b16 %v1800, %v1798
  %v2209 = vpack.c.b16 %v1801, %v1799
  %v2210 = vpack.c.b16 %v1804, %v1802
  %v2211 = vpack.c.b16 %v1805, %v1803
  %v2212 = vpack.c.b16 %v1808, %v1806
  %v2213 = vpack.c.b16 %v1809, %v1807
  %v2214 = vpack.c.b16 %v1812, %v1810
  %v2215 = vpack.c.b16 %v1813, %v1811
  %v2216 = vpack.c.b16 %v1816, %v1814
  %v2217 = vpack.c.b16 %v1817, %v1815
  %v2218 = vpack.c.b16 %v1820, %v1818
  %v2219 = vpack.c.b16 %v1821, %v1819
  %v2220 = vpack.c.b16 %v1824, %v1822
  %v2221 = vpack.c.b16 %v1825, %v1823
  %v2222 = vpack.c.b16 %v1828, %v1826
  %v2223 = vpack.c.b16 %v1829, %v1827
  %v2224 = vpack.c.b16 %v1832, %v1830
  %v2225 = vpack.c.b16 %v1833, %v1831
  %v2226 = vpack.c.b16 %v1836, %v1834
  %v2227 = vpack.c.b16 %v1837, %v1835
  %v2228 = vpack.c.b16 %v1840, %v1838
  %v2229 = vpack.c.b16 %v1841, %v1839
  %v2230 = vpack.c.b16 %v1844, %v1842
  %v2231 = vpack.c.b16 %v1845, %v1843
  %v2232 = vpack.c.b16 %v1848, %v1846
  %v2233 = vpack.c.b16 %v1849, %v1847
  %v2234 = vpack.c.b16 %v1852, %v1850
  %v2235 = vpack.c.b16 %v1853, %v1851
  %v2236 = vpack.c.b16 %v1856, %v1854
  %v2237 = vpack.c.b16 %v1857, %v1855
  %v2238 = vpack.c.b16 %v1860, %v1858
  %v2239 = vpack.c.b16 %v1861, %v1859
  %v2240 = vpack.c.b16 %v1864, %v1862
  %v2241 = vpack.c.b16 %v1865, %v1863
  %v2242 = vpack.c.b16 %v1868, %v1866
  %v2243 = vpack.c.b16 %v1869, %v1867
  %v2244 = vpack.c.b16 %v1872, %v1870
  %v2245 = vpack.c.b16 %v1873, %v1871
  %v2246 = vpack.c.b16 %v1876, %v1874
  %v2247 = vpack.c.b16 %v1877, %v1875
  %v2248 = vpack.c.b16 %v1880, %v1878
  %v2249 = vpack.c.b16 %v1881, %v1879
  %v2250 = vpack.c.b16 %v1884, %v1882
  %v2251 = vpack.c.b16 %v1885, %v1883
  %v2252 = vpack.c.b16 %v1888, %v1886
  %v2253 = vpack.c.b16 %v1889, %v1887
  %v2254 = vpack.c.b16 %v1892, %v1890
  %v2255 = vpack.c.b16 %v1893, %v1891
  %v2256 = vpack.c.b16 %v1896, %v1894
  %v2257 = vpack.c.b16 %v1897, %v1895
  %v2258 = vpack.c.b16 %v1900, %v1898
  %v2259 = vpack.c.b16 %v1901, %v1899
  %v2260 = vpack.c.b16 %v1904, %v1902
  %v2261 = vpack.c.b16 %v1905, %v1903
  %v2262 = vpack.c.b16 %v1908, %v1906
  %v2263 = vpack.c.b16 %v1909, %v1907
  %v2264 = vpack.c.b16 %v1912, %v1910
  %v2265 = vpack.c.b16 %v1913, %v1911
  %v2266 = vpack.c.b16 %v1916, %v1914
  %v2267 = vpack.c.b16 %v1917, %v1915
  %v2268 = vpack.c.b16 %v1920, %v1918
  %v2269 = vpack.c.b16 %v1921, %v1919
  %v2270 = vpack.c.b16 %v1924, %v1922
  %v2271 = vpack.c.b16 %v1925, %v1923
  %v2272 = vpack.c.b16 %v1928, %v1926
  %v2273 = vpack.c.b16 %v1929, %v1927
  %v2274 = vpack.c.b16 %v1932, %v1930
  %v2275 = vpack.c.b16 %v1933, %v1931
  %v2276 = vpack.c.b16 %v1936, %v1934
  %v2277 = vpack.c.b16 %v1937, %v1935
  %v2278 = vpack.c.b16 %v1940, %v1938
  %v2279 = vpack.c.b16 %v1941, %v1939
  %v2280 = vpack.c.b16 %v1944, %v1942
  %v2281 = vpack.c.b16 %v1945, %v1943
  %v2282 = vpack.c.b16 %v1948, %v1946
  %v2283 = vpack.c.b16 %v1949, %v1947
  %v2284 = vpack.c.b16 %v1952, %v1950
  %v2285 = vpack.c.b16 %v1953, %v1951
  %v2286 = vpack.c.b16 %v1956, %v1954
  %v2287 = vpack.c.b16 %v1957, %v1955
  %v2288 = vpack.c.b16 %v1960, %v1958
  %v2289 = vpack.c.b16 %v1961, %v1959
  %v2290 = vpack.c.b16 %v1964, %v1962
  %v2291 = vpack.c.b16 %v1965, %v1963
  %v2292 = vpack.c.b16 %v1968, %v1966
  %v2293 = vpack.c.b16 %v1969, %v1967
  %v2294 = vpack.c.b16 %v1972, %v1970
  %v2295 = vpack.c.b16 %v1973, %v1971
  %v2296 = vpack.c.b16 %v1976, %v1974
  %v2297 = vpack.c.b16 %v1977, %v1975
  %v2298 = vpack.c.b16 %v1980, %v1978
  %v2299 = vpack.c.b16 %v1981, %v1979
  %v2300 = vpack.c.b16 %v1984, %v1982
  %v2301 = vpack.c.b16 %v1985, %v1983
  %v2302 = vpack.c.b16 %v1988, %v1986
  %v2303 = vpack.c.b16 %v1989, %v1987
  %v2304 = vpack.c.b16 %v1992, %v1990
  %v2305 = vpack.c.b16 %v1993, %v1991
  %v2306 = vpack.c.b16 %v1996, %v1994
  %v2307 = vpack.c.b16 %v1997, %v1995
  %v2308 = vpack.c.b16 %v2000, %v1998
  %v2309 = vpack.c.b16 %v2001, %v1999
  %v2310 = vpack.c.b16 %v2004, %v2002
  %v2311 = vpack.c.b16 %v2005, %v2003
  %v2312 = vpack.c.b16 %v2008, %v2006
  %v2313 = vpack.c.b16 %v2009, %v2007
  %v2314 = vpack.c.b16 %v2012, %v2010
  %v2315 = vpack.c.b16 %v2013, %v2011
  %v2316 = vpack.c.b16 %v2016, %v2014
  %v2317 = vpack.c.b16 %v2017, %v2015
  %v2318 = vpack.c.b16 %v2020, %v2018
  %v2319 = vpack.c.b16 %v2021, %v2019
  %v2320 = vpack.c.b16 %v2024, %v2022
  %v2321 = vpack.c.b16 %v2025, %v2023
  %v2322 = vpack.c.b16 %v2028, %v2026
  %v2323 = vpack.c.b16 %v2029, %v2027
  %v2324 = vpack.c.b16 %v2032, %v2030
  %v2325 = vpack.c.b16 %v2033, %v2031
  %v2326 = vpack.c.b16 %v2036, %v2034
  %v2327 = vpack.c.b16 %v2037, %v2035
  %v2328 = vpack.c.b16 %v2040, %v2038
  %v2329 = vpack.c.b16 %v2041, %v2039
  %2618 = vmatprep.subr.bf16.mxu0 %v2043
  %2619 = vmatpush1.bf16.msra.mxu0 %v2042
  %2620 = vmatprep.subr.bf16.mxu0 %v2045
  %2621 = vmatpush1.bf16.msra.mxu0 %v2044
  %2622 = vmatprep.subr.bf16.mxu0 %v2047
  %2623 = vmatpush1.bf16.msra.mxu0 %v2046
  %2624 = vmatprep.subr.bf16.mxu0 %v2049
  %2625 = vmatpush1.bf16.msra.mxu0 %v2048
  %2626 = vmatprep.subr.bf16.mxu0 %v2051
  %2627 = vmatpush1.bf16.msra.mxu0 %v2050
  %2628 = vmatprep.subr.bf16.mxu0 %v2053
  %2629 = vmatpush1.bf16.msra.mxu0 %v2052
  %2630 = vmatprep.subr.bf16.mxu0 %v2055
  %2631 = vmatpush1.bf16.msra.mxu0 %v2054
  %2632 = vmatprep.subr.bf16.mxu0 %v2057
  %2633 = vmatpush1.bf16.msra.mxu0 %v2056
  %2634 = vmatprep.subr.bf16.mxu0 %v2059
  %2635 = vmatpush1.bf16.msra.mxu0 %v2058
  %2636 = vmatprep.subr.bf16.mxu0 %v2061
  %2637 = vmatpush1.bf16.msra.mxu0 %v2060
  %2638 = vmatprep.subr.bf16.mxu0 %v2063
  %2639 = vmatpush1.bf16.msra.mxu0 %v2062
  %2640 = vmatprep.subr.bf16.mxu0 %v2065
  %2641 = vmatpush1.bf16.msra.mxu0 %v2064
  %2642 = vmatprep.subr.bf16.mxu0 %v2067
  %2643 = vmatpush1.bf16.msra.mxu0 %v2066
  %2644 = vmatprep.subr.bf16.mxu0 %v2069
  %2645 = vmatpush1.bf16.msra.mxu0 %v2068
  %2646 = vmatprep.subr.bf16.mxu0 %v2071
  %2647 = vmatpush1.bf16.msra.mxu0 %v2070
  %2648 = vmatprep.subr.bf16.mxu0 %v2073
  %2649 = vmatpush1.bf16.msra.mxu0 %v2072
  %2650 = vmatprep.mubr.bf16.mxu0 %v891
  %2651 = vmatmul.mubr.bf16.gmra.mrb[0].mxu0 %v890
  %v2652 = vpop.f32.mrb[0].mxu0
  %v2653 = vadd.f32 %v451, %v2652
  %v2654 = vpop.f32.mrb[0].mxu0
  %v2655 = vadd.f32 %v455, %v2654
  %v2656 = vpop.f32.mrb[0].mxu0
  %v2657 = vadd.f32 %v451, %v2656
  %v2658 = vpop.f32.mrb[0].mxu0
  %v2659 = vadd.f32 %v455, %v2658
  %2660 = vmatprep.mubr.bf16.mxu0 %v909
  %2661 = vmatmul.mubr.bf16.gmra.mrb[0].mxu0 %v908
  %v2662 = vpop.f32.mrb[0].mxu0
  %v2663 = vadd.f32 %v451, %v2662
  %v2664 = vpop.f32.mrb[0].mxu0
  %v2665 = vadd.f32 %v455, %v2664
  %v2666 = vpop.f32.mrb[0].mxu0
  %v2667 = vadd.f32 %v451, %v2666
  %v2668 = vpop.f32.mrb[0].mxu0
  %v2669 = vadd.f32 %v455, %v2668
  %2670 = vmatprep.mubr.bf16.mxu0 %v927
  %2671 = vmatmul.mubr.bf16.gmra.mrb[0].mxu0 %v926
  %v2672 = vpop.f32.mrb[0].mxu0
  %v2673 = vadd.f32 %v451, %v2672
  %v2674 = vpop.f32.mrb[0].mxu0
  %v2675 = vadd.f32 %v455, %v2674
  %v2676 = vpop.f32.mrb[0].mxu0
  %v2677 = vadd.f32 %v451, %v2676
  %v2678 = vpop.f32.mrb[0].mxu0
  %v2679 = vadd.f32 %v455, %v2678
  %2680 = vmatprep.mubr.bf16.mxu0 %v945
  %2681 = vmatmul.mubr.bf16.gmra.mrb[0].mxu0 %v944
  %v2682 = vpop.f32.mrb[0].mxu0
  %v2683 = vadd.f32 %v451, %v2682
  %v2684 = vpop.f32.mrb[0].mxu0
  %v2685 = vadd.f32 %v455, %v2684
  %v2686 = vpop.f32.mrb[0].mxu0
  %v2687 = vadd.f32 %v451, %v2686
  %v2688 = vpop.f32.mrb[0].mxu0
  %v2689 = vadd.f32 %v455, %v2688
  %2690 = vmatprep.mubr.bf16.mxu0 %v963
  %2691 = vmatmul.mubr.bf16.gmra.mrb[0].mxu0 %v962
  %v2692 = vpop.f32.mrb[0].mxu0
  %v2693 = vadd.f32 %v451, %v2692
  %v2694 = vpop.f32.mrb[0].mxu0
  %v2695 = vadd.f32 %v455, %v2694
  %v2696 = vpop.f32.mrb[0].mxu0
  %v2697 = vadd.f32 %v451, %v2696
  %v2698 = vpop.f32.mrb[0].mxu0
  %v2699 = vadd.f32 %v455, %v2698
  %2700 = vmatprep.mubr.bf16.mxu0 %v981
  %2701 = vmatmul.mubr.bf16.gmra.mrb[0].mxu0 %v980
  %v2702 = vpop.f32.mrb[0].mxu0
  %v2703 = vadd.f32 %v451, %v2702
  %v2704 = vpop.f32.mrb[0].mxu0
  %v2705 = vadd.f32 %v455, %v2704
  %v2706 = vpop.f32.mrb[0].mxu0
  %v2707 = vadd.f32 %v451, %v2706
  %v2708 = vpop.f32.mrb[0].mxu0
  %v2709 = vadd.f32 %v455, %v2708
  %2710 = vmatprep.mubr.bf16.mxu0 %v999
  %2711 = vmatmul.mubr.bf16.gmra.mrb[0].mxu0 %v998
  %v2712 = vpop.f32.mrb[0].mxu0
  %v2713 = vadd.f32 %v451, %v2712
  %v2714 = vpop.f32.mrb[0].mxu0
  %v2715 = vadd.f32 %v455, %v2714
  %v2716 = vpop.f32.mrb[0].mxu0
  %v2717 = vadd.f32 %v451, %v2716
  %v2718 = vpop.f32.mrb[0].mxu0
  %v2719 = vadd.f32 %v455, %v2718
  %2720 = vmatprep.mubr.bf16.mxu0 %v1017
  %2721 = vmatmul.mubr.bf16.gmra.mrb[0].mxu0 %v1016
  %v2722 = vpop.f32.mrb[0].mxu0
  %v2723 = vadd.f32 %v451, %v2722
  %v2724 = vpop.f32.mrb[0].mxu0
  %v2725 = vadd.f32 %v455, %v2724
  %v2726 = vpop.f32.mrb[0].mxu0
  %v2727 = vadd.f32 %v451, %v2726
  %v2728 = vpop.f32.mrb[0].mxu0
  %v2729 = vadd.f32 %v455, %v2728
  %2730 = vdwg.mxu0
  %2731 = vmatprep.subr.bf16.mxu0 %v2075
  %2732 = vmatpush1.bf16.msra.mxu0 %v2074
  %2733 = vmatprep.subr.bf16.mxu0 %v2077
  %2734 = vmatpush1.bf16.msra.mxu0 %v2076
  %2735 = vmatprep.subr.bf16.mxu0 %v2079
  %2736 = vmatpush1.bf16.msra.mxu0 %v2078
  %2737 = vmatprep.subr.bf16.mxu0 %v2081
  %2738 = vmatpush1.bf16.msra.mxu0 %v2080
  %2739 = vmatprep.subr.bf16.mxu0 %v2083
  %2740 = vmatpush1.bf16.msra.mxu0 %v2082
  %2741 = vmatprep.subr.bf16.mxu0 %v2085
  %2742 = vmatpush1.bf16.msra.mxu0 %v2084
  %2743 = vmatprep.subr.bf16.mxu0 %v2087
  %2744 = vmatpush1.bf16.msra.mxu0 %v2086
  %2745 = vmatprep.subr.bf16.mxu0 %v2089
  %2746 = vmatpush1.bf16.msra.mxu0 %v2088
  %2747 = vmatprep.subr.bf16.mxu0 %v2091
  %2748 = vmatpush1.bf16.msra.mxu0 %v2090
  %2749 = vmatprep.subr.bf16.mxu0 %v2093
  %2750 = vmatpush1.bf16.msra.mxu0 %v2092
  %2751 = vmatprep.subr.bf16.mxu0 %v2095
  %2752 = vmatpush1.bf16.msra.mxu0 %v2094
  %2753 = vmatprep.subr.bf16.mxu0 %v2097
  %2754 = vmatpush1.bf16.msra.mxu0 %v2096
  %2755 = vmatprep.subr.bf16.mxu0 %v2099
  %2756 = vmatpush1.bf16.msra.mxu0 %v2098
  %2757 = vmatprep.subr.bf16.mxu0 %v2101
  %2758 = vmatpush1.bf16.msra.mxu0 %v2100
  %2759 = vmatprep.subr.bf16.mxu0 %v2103
  %2760 = vmatpush1.bf16.msra.mxu0 %v2102
  %2761 = vmatprep.subr.bf16.mxu0 %v2105
  %2762 = vmatpush1.bf16.msra.mxu0 %v2104
  %2763 = vmatprep.mubr.bf16.mxu0 %v893
  %2764 = vmatmul.mubr.bf16.gmra.mrb[0].mxu0 %v892
  %v2765 = vpop.f32.mrb[0].mxu0
  %v2766 = vadd.f32 %v2653, %v2765
  %v2767 = vpop.f32.mrb[0].mxu0
  %v2768 = vadd.f32 %v2655, %v2767
  %v2769 = vpop.f32.mrb[0].mxu0
  %v2770 = vadd.f32 %v2657, %v2769
  %v2771 = vpop.f32.mrb[0].mxu0
  %v2772 = vadd.f32 %v2659, %v2771
  %2773 = vmatprep.mubr.bf16.mxu0 %v911
  %2774 = vmatmul.mubr.bf16.gmra.mrb[0].mxu0 %v910
  %v2775 = vpop.f32.mrb[0].mxu0
  %v2776 = vadd.f32 %v2663, %v2775
  %v2777 = vpop.f32.mrb[0].mxu0
  %v2778 = vadd.f32 %v2665, %v2777
  %v2779 = vpop.f32.mrb[0].mxu0
  %v2780 = vadd.f32 %v2667, %v2779
  %v2781 = vpop.f32.mrb[0].mxu0
  %v2782 = vadd.f32 %v2669, %v2781
  %2783 = vmatprep.mubr.bf16.mxu0 %v929
  %2784 = vmatmul.mubr.bf16.gmra.mrb[0].mxu0 %v928
  %v2785 = vpop.f32.mrb[0].mxu0
  %v2786 = vadd.f32 %v2673, %v2785
  %v2787 = vpop.f32.mrb[0].mxu0
  %v2788 = vadd.f32 %v2675, %v2787
  %v2789 = vpop.f32.mrb[0].mxu0
  %v2790 = vadd.f32 %v2677, %v2789
  %v2791 = vpop.f32.mrb[0].mxu0
  %v2792 = vadd.f32 %v2679, %v2791
  %2793 = vmatprep.mubr.bf16.mxu0 %v947
  %2794 = vmatmul.mubr.bf16.gmra.mrb[0].mxu0 %v946
  %v2795 = vpop.f32.mrb[0].mxu0
  %v2796 = vadd.f32 %v2683, %v2795
  %v2797 = vpop.f32.mrb[0].mxu0
  %v2798 = vadd.f32 %v2685, %v2797
  %v2799 = vpop.f32.mrb[0].mxu0
  %v2800 = vadd.f32 %v2687, %v2799
  %v2801 = vpop.f32.mrb[0].mxu0
  %v2802 = vadd.f32 %v2689, %v2801
  %2803 = vmatprep.mubr.bf16.mxu0 %v965
  %2804 = vmatmul.mubr.bf16.gmra.mrb[0].mxu0 %v964
  %v2805 = vpop.f32.mrb[0].mxu0
  %v2806 = vadd.f32 %v2693, %v2805
  %v2807 = vpop.f32.mrb[0].mxu0
  %v2808 = vadd.f32 %v2695, %v2807
  %v2809 = vpop.f32.mrb[0].mxu0
  %v2810 = vadd.f32 %v2697, %v2809
  %v2811 = vpop.f32.mrb[0].mxu0
  %v2812 = vadd.f32 %v2699, %v2811
  %2813 = vmatprep.mubr.bf16.mxu0 %v983
  %2814 = vmatmul.mubr.bf16.gmra.mrb[0].mxu0 %v982
  %v2815 = vpop.f32.mrb[0].mxu0
  %v2816 = vadd.f32 %v2703, %v2815
  %v2817 = vpop.f32.mrb[0].mxu0
  %v2818 = vadd.f32 %v2705, %v2817
  %v2819 = vpop.f32.mrb[0].mxu0
  %v2820 = vadd.f32 %v2707, %v2819
  %v2821 = vpop.f32.mrb[0].mxu0
  %v2822 = vadd.f32 %v2709, %v2821
  %2823 = vmatprep.mubr.bf16.mxu0 %v1001
  %2824 = vmatmul.mubr.bf16.gmra.mrb[0].mxu0 %v1000
  %v2825 = vpop.f32.mrb[0].mxu0
  %v2826 = vadd.f32 %v2713, %v2825
  %v2827 = vpop.f32.mrb[0].mxu0
  %v2828 = vadd.f32 %v2715, %v2827
  %v2829 = vpop.f32.mrb[0].mxu0
  %v2830 = vadd.f32 %v2717, %v2829
  %v2831 = vpop.f32.mrb[0].mxu0
  %v2832 = vadd.f32 %v2719, %v2831
  %2833 = vmatprep.mubr.bf16.mxu0 %v1019
  %2834 = vmatmul.mubr.bf16.gmra.mrb[0].mxu0 %v1018
  %v2835 = vpop.f32.mrb[0].mxu0
  %v2836 = vadd.f32 %v2723, %v2835
  %v2837 = vpop.f32.mrb[0].mxu0
  %v2838 = vadd.f32 %v2725, %v2837
  %v2839 = vpop.f32.mrb[0].mxu0
  %v2840 = vadd.f32 %v2727, %v2839
  %v2841 = vpop.f32.mrb[0].mxu0
  %v2842 = vadd.f32 %v2729, %v2841
  %2843 = vdwg.mxu0
  %2844 = vmatprep.subr.bf16.mxu0 %v2107
  %2845 = vmatpush1.bf16.msra.mxu0 %v2106
  %2846 = vmatprep.subr.bf16.mxu0 %v2109
  %2847 = vmatpush1.bf16.msra.mxu0 %v2108
  %2848 = vmatprep.subr.bf16.mxu0 %v2111
  %2849 = vmatpush1.bf16.msra.mxu0 %v2110
  %2850 = vmatprep.subr.bf16.mxu0 %v2113
  %2851 = vmatpush1.bf16.msra.mxu0 %v2112
  %2852 = vmatprep.subr.bf16.mxu0 %v2115
  %2853 = vmatpush1.bf16.msra.mxu0 %v2114
  %2854 = vmatprep.subr.bf16.mxu0 %v2117
  %2855 = vmatpush1.bf16.msra.mxu0 %v2116
  %2856 = vmatprep.subr.bf16.mxu0 %v2119
  %2857 = vmatpush1.bf16.msra.mxu0 %v2118
  %2858 = vmatprep.subr.bf16.mxu0 %v2121
  %2859 = vmatpush1.bf16.msra.mxu0 %v2120
  %2860 = vmatprep.subr.bf16.mxu0 %v2123
  %2861 = vmatpush1.bf16.msra.mxu0 %v2122
  %2862 = vmatprep.subr.bf16.mxu0 %v2125
  %2863 = vmatpush1.bf16.msra.mxu0 %v2124
  %2864 = vmatprep.subr.bf16.mxu0 %v2127
  %2865 = vmatpush1.bf16.msra.mxu0 %v2126
  %2866 = vmatprep.subr.bf16.mxu0 %v2129
  %2867 = vmatpush1.bf16.msra.mxu0 %v2128
  %2868 = vmatprep.subr.bf16.mxu0 %v2131
  %2869 = vmatpush1.bf16.msra.mxu0 %v2130
  %2870 = vmatprep.subr.bf16.mxu0 %v2133
  %2871 = vmatpush1.bf16.msra.mxu0 %v2132
  %2872 = vmatprep.subr.bf16.mxu0 %v2135
  %2873 = vmatpush1.bf16.msra.mxu0 %v2134
  %2874 = vmatprep.subr.bf16.mxu0 %v2137
  %2875 = vmatpush1.bf16.msra.mxu0 %v2136
  %2876 = vmatprep.mubr.bf16.mxu0 %v895
  %2877 = vmatmul.mubr.bf16.gmra.mrb[0].mxu0 %v894
  %v2878 = vpop.f32.mrb[0].mxu0
  %v2879 = vadd.f32 %v2766, %v2878
  %v2880 = vpop.f32.mrb[0].mxu0
  %v2881 = vadd.f32 %v2768, %v2880
  %v2882 = vpop.f32.mrb[0].mxu0
  %v2883 = vadd.f32 %v2770, %v2882
  %v2884 = vpop.f32.mrb[0].mxu0
  %v2885 = vadd.f32 %v2772, %v2884
  %2886 = vmatprep.mubr.bf16.mxu0 %v913
  %2887 = vmatmul.mubr.bf16.gmra.mrb[0].mxu0 %v912
  %v2888 = vpop.f32.mrb[0].mxu0
  %v2889 = vadd.f32 %v2776, %v2888
  %v2890 = vpop.f32.mrb[0].mxu0
  %v2891 = vadd.f32 %v2778, %v2890
  %v2892 = vpop.f32.mrb[0].mxu0
  %v2893 = vadd.f32 %v2780, %v2892
  %v2894 = vpop.f32.mrb[0].mxu0
  %v2895 = vadd.f32 %v2782, %v2894
  %2896 = vmatprep.mubr.bf16.mxu0 %v931
  %2897 = vmatmul.mubr.bf16.gmra.mrb[0].mxu0 %v930
  %v2898 = vpop.f32.mrb[0].mxu0
  %v2899 = vadd.f32 %v2786, %v2898
  %v2900 = vpop.f32.mrb[0].mxu0
  %v2901 = vadd.f32 %v2788, %v2900
  %v2902 = vpop.f32.mrb[0].mxu0
  %v2903 = vadd.f32 %v2790, %v2902
  %v2904 = vpop.f32.mrb[0].mxu0
  %v2905 = vadd.f32 %v2792, %v2904
  %2906 = vmatprep.mubr.bf16.mxu0 %v949
  %2907 = vmatmul.mubr.bf16.gmra.mrb[0].mxu0 %v948
  %v2908 = vpop.f32.mrb[0].mxu0
  %v2909 = vadd.f32 %v2796, %v2908
  %v2910 = vpop.f32.mrb[0].mxu0
  %v2911 = vadd.f32 %v2798, %v2910
  %v2912 = vpop.f32.mrb[0].mxu0
  %v2913 = vadd.f32 %v2800, %v2912
  %v2914 = vpop.f32.mrb[0].mxu0
  %v2915 = vadd.f32 %v2802, %v2914
  %2916 = vmatprep.mubr.bf16.mxu0 %v967
  %2917 = vmatmul.mubr.bf16.gmra.mrb[0].mxu0 %v966
  %v2918 = vpop.f32.mrb[0].mxu0
  %v2919 = vadd.f32 %v2806, %v2918
  %v2920 = vpop.f32.mrb[0].mxu0
  %v2921 = vadd.f32 %v2808, %v2920
  %v2922 = vpop.f32.mrb[0].mxu0
  %v2923 = vadd.f32 %v2810, %v2922
  %v2924 = vpop.f32.mrb[0].mxu0
  %v2925 = vadd.f32 %v2812, %v2924
  %2926 = vmatprep.mubr.bf16.mxu0 %v985
  %2927 = vmatmul.mubr.bf16.gmra.mrb[0].mxu0 %v984
  %v2928 = vpop.f32.mrb[0].mxu0
  %v2929 = vadd.f32 %v2816, %v2928
  %v2930 = vpop.f32.mrb[0].mxu0
  %v2931 = vadd.f32 %v2818, %v2930
  %v2932 = vpop.f32.mrb[0].mxu0
  %v2933 = vadd.f32 %v2820, %v2932
  %v2934 = vpop.f32.mrb[0].mxu0
  %v2935 = vadd.f32 %v2822, %v2934
  %2936 = vmatprep.mubr.bf16.mxu0 %v1003
  %2937 = vmatmul.mubr.bf16.gmra.mrb[0].mxu0 %v1002
  %v2938 = vpop.f32.mrb[0].mxu0
  %v2939 = vadd.f32 %v2826, %v2938
  %v2940 = vpop.f32.mrb[0].mxu0
  %v2941 = vadd.f32 %v2828, %v2940
  %v2942 = vpop.f32.mrb[0].mxu0
  %v2943 = vadd.f32 %v2830, %v2942
  %v2944 = vpop.f32.mrb[0].mxu0
  %v2945 = vadd.f32 %v2832, %v2944
  %2946 = vmatprep.mubr.bf16.mxu0 %v1021
  %2947 = vmatmul.mubr.bf16.gmra.mrb[0].mxu0 %v1020
  %v2948 = vpop.f32.mrb[0].mxu0
  %v2949 = vadd.f32 %v2836, %v2948
  %v2950 = vpop.f32.mrb[0].mxu0
  %v2951 = vadd.f32 %v2838, %v2950
  %v2952 = vpop.f32.mrb[0].mxu0
  %v2953 = vadd.f32 %v2840, %v2952
  %v2954 = vpop.f32.mrb[0].mxu0
  %v2955 = vadd.f32 %v2842, %v2954
  %2956 = vdwg.mxu0
  %2957 = vmatprep.subr.bf16.mxu0 %v2139
  %2958 = vmatpush1.bf16.msra.mxu0 %v2138
  %2959 = vmatprep.subr.bf16.mxu0 %v2141
  %2960 = vmatpush1.bf16.msra.mxu0 %v2140
  %2961 = vmatprep.subr.bf16.mxu0 %v2143
  %2962 = vmatpush1.bf16.msra.mxu0 %v2142
  %2963 = vmatprep.subr.bf16.mxu0 %v2145
  %2964 = vmatpush1.bf16.msra.mxu0 %v2144
  %2965 = vmatprep.subr.bf16.mxu0 %v2147
  %2966 = vmatpush1.bf16.msra.mxu0 %v2146
  %2967 = vmatprep.subr.bf16.mxu0 %v2149
  %2968 = vmatpush1.bf16.msra.mxu0 %v2148
  %2969 = vmatprep.subr.bf16.mxu0 %v2151
  %2970 = vmatpush1.bf16.msra.mxu0 %v2150
  %2971 = vmatprep.subr.bf16.mxu0 %v2153
  %2972 = vmatpush1.bf16.msra.mxu0 %v2152
  %2973 = vmatprep.subr.bf16.mxu0 %v2155
  %2974 = vmatpush1.bf16.msra.mxu0 %v2154
  %2975 = vmatprep.subr.bf16.mxu0 %v2157
  %2976 = vmatpush1.bf16.msra.mxu0 %v2156
  %2977 = vmatprep.subr.bf16.mxu0 %v2159
  %2978 = vmatpush1.bf16.msra.mxu0 %v2158
  %2979 = vmatprep.subr.bf16.mxu0 %v2161
  %2980 = vmatpush1.bf16.msra.mxu0 %v2160
  %2981 = vmatprep.subr.bf16.mxu0 %v2163
  %2982 = vmatpush1.bf16.msra.mxu0 %v2162
  %2983 = vmatprep.subr.bf16.mxu0 %v2165
  %2984 = vmatpush1.bf16.msra.mxu0 %v2164
  %2985 = vmatprep.subr.bf16.mxu0 %v2167
  %2986 = vmatpush1.bf16.msra.mxu0 %v2166
  %2987 = vmatprep.subr.bf16.mxu0 %v2169
  %2988 = vmatpush1.bf16.msra.mxu0 %v2168
  %2989 = vmatprep.mubr.bf16.mxu0 %v897
  %2990 = vmatmul.mubr.bf16.gmra.mrb[0].mxu0 %v896
  %v2991 = vpop.f32.mrb[0].mxu0
  %v2992 = vadd.f32 %v2879, %v2991
  %v2993 = vpop.f32.mrb[0].mxu0
  %v2994 = vadd.f32 %v2881, %v2993
  %v2995 = vpop.f32.mrb[0].mxu0
  %v2996 = vadd.f32 %v2883, %v2995
  %v2997 = vpop.f32.mrb[0].mxu0
  %v2998 = vadd.f32 %v2885, %v2997
  %2999 = vmatprep.mubr.bf16.mxu0 %v915
  %3000 = vmatmul.mubr.bf16.gmra.mrb[0].mxu0 %v914
  %v3001 = vpop.f32.mrb[0].mxu0
  %v3002 = vadd.f32 %v2889, %v3001
  %v3003 = vpop.f32.mrb[0].mxu0
  %v3004 = vadd.f32 %v2891, %v3003
  %v3005 = vpop.f32.mrb[0].mxu0
  %v3006 = vadd.f32 %v2893, %v3005
  %v3007 = vpop.f32.mrb[0].mxu0
  %v3008 = vadd.f32 %v2895, %v3007
  %3009 = vmatprep.mubr.bf16.mxu0 %v933
  %3010 = vmatmul.mubr.bf16.gmra.mrb[0].mxu0 %v932
  %v3011 = vpop.f32.mrb[0].mxu0
  %v3012 = vadd.f32 %v2899, %v3011
  %v3013 = vpop.f32.mrb[0].mxu0
  %v3014 = vadd.f32 %v2901, %v3013
  %v3015 = vpop.f32.mrb[0].mxu0
  %v3016 = vadd.f32 %v2903, %v3015
  %v3017 = vpop.f32.mrb[0].mxu0
  %v3018 = vadd.f32 %v2905, %v3017
  %3019 = vmatprep.mubr.bf16.mxu0 %v951
  %3020 = vmatmul.mubr.bf16.gmra.mrb[0].mxu0 %v950
  %v3021 = vpop.f32.mrb[0].mxu0
  %v3022 = vadd.f32 %v2909, %v3021
  %v3023 = vpop.f32.mrb[0].mxu0
  %v3024 = vadd.f32 %v2911, %v3023
  %v3025 = vpop.f32.mrb[0].mxu0
  %v3026 = vadd.f32 %v2913, %v3025
  %v3027 = vpop.f32.mrb[0].mxu0
  %v3028 = vadd.f32 %v2915, %v3027
  %3029 = vmatprep.mubr.bf16.mxu0 %v969
  %3030 = vmatmul.mubr.bf16.gmra.mrb[0].mxu0 %v968
  %v3031 = vpop.f32.mrb[0].mxu0
  %v3032 = vadd.f32 %v2919, %v3031
  %v3033 = vpop.f32.mrb[0].mxu0
  %v3034 = vadd.f32 %v2921, %v3033
  %v3035 = vpop.f32.mrb[0].mxu0
  %v3036 = vadd.f32 %v2923, %v3035
  %v3037 = vpop.f32.mrb[0].mxu0
  %v3038 = vadd.f32 %v2925, %v3037
  %3039 = vmatprep.mubr.bf16.mxu0 %v987
  %3040 = vmatmul.mubr.bf16.gmra.mrb[0].mxu0 %v986
  %v3041 = vpop.f32.mrb[0].mxu0
  %v3042 = vadd.f32 %v2929, %v3041
  %v3043 = vpop.f32.mrb[0].mxu0
  %v3044 = vadd.f32 %v2931, %v3043
  %v3045 = vpop.f32.mrb[0].mxu0
  %v3046 = vadd.f32 %v2933, %v3045
  %v3047 = vpop.f32.mrb[0].mxu0
  %v3048 = vadd.f32 %v2935, %v3047
  %3049 = vmatprep.mubr.bf16.mxu0 %v1005
  %3050 = vmatmul.mubr.bf16.gmra.mrb[0].mxu0 %v1004
  %v3051 = vpop.f32.mrb[0].mxu0
  %v3052 = vadd.f32 %v2939, %v3051
  %v3053 = vpop.f32.mrb[0].mxu0
  %v3054 = vadd.f32 %v2941, %v3053
  %v3055 = vpop.f32.mrb[0].mxu0
  %v3056 = vadd.f32 %v2943, %v3055
  %v3057 = vpop.f32.mrb[0].mxu0
  %v3058 = vadd.f32 %v2945, %v3057
  %3059 = vmatprep.mubr.bf16.mxu0 %v1023
  %3060 = vmatmul.mubr.bf16.gmra.mrb[0].mxu0 %v1022
  %v3061 = vpop.f32.mrb[0].mxu0
  %v3062 = vadd.f32 %v2949, %v3061
  %v3063 = vpop.f32.mrb[0].mxu0
  %v3064 = vadd.f32 %v2951, %v3063
  %v3065 = vpop.f32.mrb[0].mxu0
  %v3066 = vadd.f32 %v2953, %v3065
  %v3067 = vpop.f32.mrb[0].mxu0
  %v3068 = vadd.f32 %v2955, %v3067
  %3069 = vdwg.mxu0
  %3070 = vmatprep.subr.bf16.mxu0 %v2171
  %3071 = vmatpush1.bf16.msra.mxu0 %v2170
  %3072 = vmatprep.subr.bf16.mxu0 %v2173
  %3073 = vmatpush1.bf16.msra.mxu0 %v2172
  %3074 = vmatprep.subr.bf16.mxu0 %v2175
  %3075 = vmatpush1.bf16.msra.mxu0 %v2174
  %3076 = vmatprep.subr.bf16.mxu0 %v2177
  %3077 = vmatpush1.bf16.msra.mxu0 %v2176
  %3078 = vmatprep.subr.bf16.mxu0 %v2179
  %3079 = vmatpush1.bf16.msra.mxu0 %v2178
  %3080 = vmatprep.subr.bf16.mxu0 %v2181
  %3081 = vmatpush1.bf16.msra.mxu0 %v2180
  %3082 = vmatprep.subr.bf16.mxu0 %v2183
  %3083 = vmatpush1.bf16.msra.mxu0 %v2182
  %3084 = vmatprep.subr.bf16.mxu0 %v2185
  %3085 = vmatpush1.bf16.msra.mxu0 %v2184
  %3086 = vmatprep.subr.bf16.mxu0 %v2187
  %3087 = vmatpush1.bf16.msra.mxu0 %v2186
  %3088 = vmatprep.subr.bf16.mxu0 %v2189
  %3089 = vmatpush1.bf16.msra.mxu0 %v2188
  %3090 = vmatprep.subr.bf16.mxu0 %v2191
  %3091 = vmatpush1.bf16.msra.mxu0 %v2190
  %3092 = vmatprep.subr.bf16.mxu0 %v2193
  %3093 = vmatpush1.bf16.msra.mxu0 %v2192
  %3094 = vmatprep.subr.bf16.mxu0 %v2195
  %3095 = vmatpush1.bf16.msra.mxu0 %v2194
  %3096 = vmatprep.subr.bf16.mxu0 %v2197
  %3097 = vmatpush1.bf16.msra.mxu0 %v2196
  %3098 = vmatprep.subr.bf16.mxu0 %v2199
  %3099 = vmatpush1.bf16.msra.mxu0 %v2198
  %3100 = vmatprep.subr.bf16.mxu0 %v2201
  %3101 = vmatpush1.bf16.msra.mxu0 %v2200
  %3102 = vmatprep.mubr.bf16.mxu0 %v899
  %3103 = vmatmul.mubr.bf16.gmra.mrb[0].mxu0 %v898
  %v3104 = vpop.f32.mrb[0].mxu0
  %v3105 = vadd.f32 %v2992, %v3104
  %v3106 = vpop.f32.mrb[0].mxu0
  %v3107 = vadd.f32 %v2994, %v3106
  %v3108 = vpop.f32.mrb[0].mxu0
  %v3109 = vadd.f32 %v2996, %v3108
  %v3110 = vpop.f32.mrb[0].mxu0
  %v3111 = vadd.f32 %v2998, %v3110
  %3112 = vmatprep.mubr.bf16.mxu0 %v917
  %3113 = vmatmul.mubr.bf16.gmra.mrb[0].mxu0 %v916
  %v3114 = vpop.f32.mrb[0].mxu0
  %v3115 = vadd.f32 %v3002, %v3114
  %v3116 = vpop.f32.mrb[0].mxu0
  %v3117 = vadd.f32 %v3004, %v3116
  %v3118 = vpop.f32.mrb[0].mxu0
  %v3119 = vadd.f32 %v3006, %v3118
  %v3120 = vpop.f32.mrb[0].mxu0
  %v3121 = vadd.f32 %v3008, %v3120
  %3122 = vmatprep.mubr.bf16.mxu0 %v935
  %3123 = vmatmul.mubr.bf16.gmra.mrb[0].mxu0 %v934
  %v3124 = vpop.f32.mrb[0].mxu0
  %v3125 = vadd.f32 %v3012, %v3124
  %v3126 = vpop.f32.mrb[0].mxu0
  %v3127 = vadd.f32 %v3014, %v3126
  %v3128 = vpop.f32.mrb[0].mxu0
  %v3129 = vadd.f32 %v3016, %v3128
  %v3130 = vpop.f32.mrb[0].mxu0
  %v3131 = vadd.f32 %v3018, %v3130
  %3132 = vmatprep.mubr.bf16.mxu0 %v953
  %3133 = vmatmul.mubr.bf16.gmra.mrb[0].mxu0 %v952
  %v3134 = vpop.f32.mrb[0].mxu0
  %v3135 = vadd.f32 %v3022, %v3134
  %v3136 = vpop.f32.mrb[0].mxu0
  %v3137 = vadd.f32 %v3024, %v3136
  %v3138 = vpop.f32.mrb[0].mxu0
  %v3139 = vadd.f32 %v3026, %v3138
  %v3140 = vpop.f32.mrb[0].mxu0
  %v3141 = vadd.f32 %v3028, %v3140
  %3142 = vmatprep.mubr.bf16.mxu0 %v971
  %3143 = vmatmul.mubr.bf16.gmra.mrb[0].mxu0 %v970
  %v3144 = vpop.f32.mrb[0].mxu0
  %v3145 = vadd.f32 %v3032, %v3144
  %v3146 = vpop.f32.mrb[0].mxu0
  %v3147 = vadd.f32 %v3034, %v3146
  %v3148 = vpop.f32.mrb[0].mxu0
  %v3149 = vadd.f32 %v3036, %v3148
  %v3150 = vpop.f32.mrb[0].mxu0
  %v3151 = vadd.f32 %v3038, %v3150
  %3152 = vmatprep.mubr.bf16.mxu0 %v989
  %3153 = vmatmul.mubr.bf16.gmra.mrb[0].mxu0 %v988
  %v3154 = vpop.f32.mrb[0].mxu0
  %v3155 = vadd.f32 %v3042, %v3154
  %v3156 = vpop.f32.mrb[0].mxu0
  %v3157 = vadd.f32 %v3044, %v3156
  %v3158 = vpop.f32.mrb[0].mxu0
  %v3159 = vadd.f32 %v3046, %v3158
  %v3160 = vpop.f32.mrb[0].mxu0
  %v3161 = vadd.f32 %v3048, %v3160
  %3162 = vmatprep.mubr.bf16.mxu0 %v1007
  %3163 = vmatmul.mubr.bf16.gmra.mrb[0].mxu0 %v1006
  %v3164 = vpop.f32.mrb[0].mxu0
  %v3165 = vadd.f32 %v3052, %v3164
  %v3166 = vpop.f32.mrb[0].mxu0
  %v3167 = vadd.f32 %v3054, %v3166
  %v3168 = vpop.f32.mrb[0].mxu0
  %v3169 = vadd.f32 %v3056, %v3168
  %v3170 = vpop.f32.mrb[0].mxu0
  %v3171 = vadd.f32 %v3058, %v3170
  %3172 = vmatprep.mubr.bf16.mxu0 %v1025
  %3173 = vmatmul.mubr.bf16.gmra.mrb[0].mxu0 %v1024
  %v3174 = vpop.f32.mrb[0].mxu0
  %v3175 = vadd.f32 %v3062, %v3174
  %v3176 = vpop.f32.mrb[0].mxu0
  %v3177 = vadd.f32 %v3064, %v3176
  %v3178 = vpop.f32.mrb[0].mxu0
  %v3179 = vadd.f32 %v3066, %v3178
  %v3180 = vpop.f32.mrb[0].mxu0
  %v3181 = vadd.f32 %v3068, %v3180
  %3182 = vdwg.mxu0
  %3183 = vmatprep.subr.bf16.mxu0 %v2203
  %3184 = vmatpush1.bf16.msra.mxu0 %v2202
  %3185 = vmatprep.subr.bf16.mxu0 %v2205
  %3186 = vmatpush1.bf16.msra.mxu0 %v2204
  %3187 = vmatprep.subr.bf16.mxu0 %v2207
  %3188 = vmatpush1.bf16.msra.mxu0 %v2206
  %3189 = vmatprep.subr.bf16.mxu0 %v2209
  %3190 = vmatpush1.bf16.msra.mxu0 %v2208
  %3191 = vmatprep.subr.bf16.mxu0 %v2211
  %3192 = vmatpush1.bf16.msra.mxu0 %v2210
  %3193 = vmatprep.subr.bf16.mxu0 %v2213
  %3194 = vmatpush1.bf16.msra.mxu0 %v2212
  %3195 = vmatprep.subr.bf16.mxu0 %v2215
  %3196 = vmatpush1.bf16.msra.mxu0 %v2214
  %3197 = vmatprep.subr.bf16.mxu0 %v2217
  %3198 = vmatpush1.bf16.msra.mxu0 %v2216
  %3199 = vmatprep.subr.bf16.mxu0 %v2219
  %3200 = vmatpush1.bf16.msra.mxu0 %v2218
  %3201 = vmatprep.subr.bf16.mxu0 %v2221
  %3202 = vmatpush1.bf16.msra.mxu0 %v2220
  %3203 = vmatprep.subr.bf16.mxu0 %v2223
  %3204 = vmatpush1.bf16.msra.mxu0 %v2222
  %3205 = vmatprep.subr.bf16.mxu0 %v2225
  %3206 = vmatpush1.bf16.msra.mxu0 %v2224
  %3207 = vmatprep.subr.bf16.mxu0 %v2227
  %3208 = vmatpush1.bf16.msra.mxu0 %v2226
  %3209 = vmatprep.subr.bf16.mxu0 %v2229
  %3210 = vmatpush1.bf16.msra.mxu0 %v2228
  %3211 = vmatprep.subr.bf16.mxu0 %v2231
  %3212 = vmatpush1.bf16.msra.mxu0 %v2230
  %3213 = vmatprep.subr.bf16.mxu0 %v2233
  %3214 = vmatpush1.bf16.msra.mxu0 %v2232
  %3215 = vmatprep.mubr.bf16.mxu0 %v901
  %3216 = vmatmul.mubr.bf16.gmra.mrb[0].mxu0 %v900
  %v3217 = vpop.f32.mrb[0].mxu0
  %v3218 = vadd.f32 %v3105, %v3217
  %v3219 = vpop.f32.mrb[0].mxu0
  %v3220 = vadd.f32 %v3107, %v3219
  %v3221 = vpop.f32.mrb[0].mxu0
  %v3222 = vadd.f32 %v3109, %v3221
  %v3223 = vpop.f32.mrb[0].mxu0
  %v3224 = vadd.f32 %v3111, %v3223
  %3225 = vmatprep.mubr.bf16.mxu0 %v919
  %3226 = vmatmul.mubr.bf16.gmra.mrb[0].mxu0 %v918
  %v3227 = vpop.f32.mrb[0].mxu0
  %v3228 = vadd.f32 %v3115, %v3227
  %v3229 = vpop.f32.mrb[0].mxu0
  %v3230 = vadd.f32 %v3117, %v3229
  %v3231 = vpop.f32.mrb[0].mxu0
  %v3232 = vadd.f32 %v3119, %v3231
  %v3233 = vpop.f32.mrb[0].mxu0
  %v3234 = vadd.f32 %v3121, %v3233
  %3235 = vmatprep.mubr.bf16.mxu0 %v937
  %3236 = vmatmul.mubr.bf16.gmra.mrb[0].mxu0 %v936
  %v3237 = vpop.f32.mrb[0].mxu0
  %v3238 = vadd.f32 %v3125, %v3237
  %v3239 = vpop.f32.mrb[0].mxu0
  %v3240 = vadd.f32 %v3127, %v3239
  %v3241 = vpop.f32.mrb[0].mxu0
  %v3242 = vadd.f32 %v3129, %v3241
  %v3243 = vpop.f32.mrb[0].mxu0
  %v3244 = vadd.f32 %v3131, %v3243
  %3245 = vmatprep.mubr.bf16.mxu0 %v955
  %3246 = vmatmul.mubr.bf16.gmra.mrb[0].mxu0 %v954
  %v3247 = vpop.f32.mrb[0].mxu0
  %v3248 = vadd.f32 %v3135, %v3247
  %v3249 = vpop.f32.mrb[0].mxu0
  %v3250 = vadd.f32 %v3137, %v3249
  %v3251 = vpop.f32.mrb[0].mxu0
  %v3252 = vadd.f32 %v3139, %v3251
  %v3253 = vpop.f32.mrb[0].mxu0
  %v3254 = vadd.f32 %v3141, %v3253
  %3255 = vmatprep.mubr.bf16.mxu0 %v973
  %3256 = vmatmul.mubr.bf16.gmra.mrb[0].mxu0 %v972
  %v3257 = vpop.f32.mrb[0].mxu0
  %v3258 = vadd.f32 %v3145, %v3257
  %v3259 = vpop.f32.mrb[0].mxu0
  %v3260 = vadd.f32 %v3147, %v3259
  %v3261 = vpop.f32.mrb[0].mxu0
  %v3262 = vadd.f32 %v3149, %v3261
  %v3263 = vpop.f32.mrb[0].mxu0
  %v3264 = vadd.f32 %v3151, %v3263
  %3265 = vmatprep.mubr.bf16.mxu0 %v991
  %3266 = vmatmul.mubr.bf16.gmra.mrb[0].mxu0 %v990
  %v3267 = vpop.f32.mrb[0].mxu0
  %v3268 = vadd.f32 %v3155, %v3267
  %v3269 = vpop.f32.mrb[0].mxu0
  %v3270 = vadd.f32 %v3157, %v3269
  %v3271 = vpop.f32.mrb[0].mxu0
  %v3272 = vadd.f32 %v3159, %v3271
  %v3273 = vpop.f32.mrb[0].mxu0
  %v3274 = vadd.f32 %v3161, %v3273
  %3275 = vmatprep.mubr.bf16.mxu0 %v1009
  %3276 = vmatmul.mubr.bf16.gmra.mrb[0].mxu0 %v1008
  %v3277 = vpop.f32.mrb[0].mxu0
  %v3278 = vadd.f32 %v3165, %v3277
  %v3279 = vpop.f32.mrb[0].mxu0
  %v3280 = vadd.f32 %v3167, %v3279
  %v3281 = vpop.f32.mrb[0].mxu0
  %v3282 = vadd.f32 %v3169, %v3281
  %v3283 = vpop.f32.mrb[0].mxu0
  %v3284 = vadd.f32 %v3171, %v3283
  %3285 = vmatprep.mubr.bf16.mxu0 %v1027
  %3286 = vmatmul.mubr.bf16.gmra.mrb[0].mxu0 %v1026
  %v3287 = vpop.f32.mrb[0].mxu0
  %v3288 = vadd.f32 %v3175, %v3287
  %v3289 = vpop.f32.mrb[0].mxu0
  %v3290 = vadd.f32 %v3177, %v3289
  %v3291 = vpop.f32.mrb[0].mxu0
  %v3292 = vadd.f32 %v3179, %v3291
  %v3293 = vpop.f32.mrb[0].mxu0
  %v3294 = vadd.f32 %v3181, %v3293
  %3295 = vdwg.mxu0
  %3296 = vmatprep.subr.bf16.mxu0 %v2235
  %3297 = vmatpush1.bf16.msra.mxu0 %v2234
  %3298 = vmatprep.subr.bf16.mxu0 %v2237
  %3299 = vmatpush1.bf16.msra.mxu0 %v2236
  %3300 = vmatprep.subr.bf16.mxu0 %v2239
  %3301 = vmatpush1.bf16.msra.mxu0 %v2238
  %3302 = vmatprep.subr.bf16.mxu0 %v2241
  %3303 = vmatpush1.bf16.msra.mxu0 %v2240
  %3304 = vmatprep.subr.bf16.mxu0 %v2243
  %3305 = vmatpush1.bf16.msra.mxu0 %v2242
  %3306 = vmatprep.subr.bf16.mxu0 %v2245
  %3307 = vmatpush1.bf16.msra.mxu0 %v2244
  %3308 = vmatprep.subr.bf16.mxu0 %v2247
  %3309 = vmatpush1.bf16.msra.mxu0 %v2246
  %3310 = vmatprep.subr.bf16.mxu0 %v2249
  %3311 = vmatpush1.bf16.msra.mxu0 %v2248
  %3312 = vmatprep.subr.bf16.mxu0 %v2251
  %3313 = vmatpush1.bf16.msra.mxu0 %v2250
  %3314 = vmatprep.subr.bf16.mxu0 %v2253
  %3315 = vmatpush1.bf16.msra.mxu0 %v2252
  %3316 = vmatprep.subr.bf16.mxu0 %v2255
  %3317 = vmatpush1.bf16.msra.mxu0 %v2254
  %3318 = vmatprep.subr.bf16.mxu0 %v2257
  %3319 = vmatpush1.bf16.msra.mxu0 %v2256
  %3320 = vmatprep.subr.bf16.mxu0 %v2259
  %3321 = vmatpush1.bf16.msra.mxu0 %v2258
  %3322 = vmatprep.subr.bf16.mxu0 %v2261
  %3323 = vmatpush1.bf16.msra.mxu0 %v2260
  %3324 = vmatprep.subr.bf16.mxu0 %v2263
  %3325 = vmatpush1.bf16.msra.mxu0 %v2262
  %3326 = vmatprep.subr.bf16.mxu0 %v2265
  %3327 = vmatpush1.bf16.msra.mxu0 %v2264
  %3328 = vmatprep.mubr.bf16.mxu0 %v903
  %3329 = vmatmul.mubr.bf16.gmra.mrb[0].mxu0 %v902
  %v3330 = vpop.f32.mrb[0].mxu0
  %v3331 = vadd.f32 %v3218, %v3330
  %v3332 = vpop.f32.mrb[0].mxu0
  %v3333 = vadd.f32 %v3220, %v3332
  %v3334 = vpop.f32.mrb[0].mxu0
  %v3335 = vadd.f32 %v3222, %v3334
  %v3336 = vpop.f32.mrb[0].mxu0
  %v3337 = vadd.f32 %v3224, %v3336
  %3338 = vmatprep.mubr.bf16.mxu0 %v921
  %3339 = vmatmul.mubr.bf16.gmra.mrb[0].mxu0 %v920
  %v3340 = vpop.f32.mrb[0].mxu0
  %v3341 = vadd.f32 %v3228, %v3340
  %v3342 = vpop.f32.mrb[0].mxu0
  %v3343 = vadd.f32 %v3230, %v3342
  %v3344 = vpop.f32.mrb[0].mxu0
  %v3345 = vadd.f32 %v3232, %v3344
  %v3346 = vpop.f32.mrb[0].mxu0
  %v3347 = vadd.f32 %v3234, %v3346
  %3348 = vmatprep.mubr.bf16.mxu0 %v939
  %3349 = vmatmul.mubr.bf16.gmra.mrb[0].mxu0 %v938
  %v3350 = vpop.f32.mrb[0].mxu0
  %v3351 = vadd.f32 %v3238, %v3350
  %v3352 = vpop.f32.mrb[0].mxu0
  %v3353 = vadd.f32 %v3240, %v3352
  %v3354 = vpop.f32.mrb[0].mxu0
  %v3355 = vadd.f32 %v3242, %v3354
  %v3356 = vpop.f32.mrb[0].mxu0
  %v3357 = vadd.f32 %v3244, %v3356
  %3358 = vmatprep.mubr.bf16.mxu0 %v957
  %3359 = vmatmul.mubr.bf16.gmra.mrb[0].mxu0 %v956
  %v3360 = vpop.f32.mrb[0].mxu0
  %v3361 = vadd.f32 %v3248, %v3360
  %v3362 = vpop.f32.mrb[0].mxu0
  %v3363 = vadd.f32 %v3250, %v3362
  %v3364 = vpop.f32.mrb[0].mxu0
  %v3365 = vadd.f32 %v3252, %v3364
  %v3366 = vpop.f32.mrb[0].mxu0
  %v3367 = vadd.f32 %v3254, %v3366
  %3368 = vmatprep.mubr.bf16.mxu0 %v975
  %3369 = vmatmul.mubr.bf16.gmra.mrb[0].mxu0 %v974
  %v3370 = vpop.f32.mrb[0].mxu0
  %v3371 = vadd.f32 %v3258, %v3370
  %v3372 = vpop.f32.mrb[0].mxu0
  %v3373 = vadd.f32 %v3260, %v3372
  %v3374 = vpop.f32.mrb[0].mxu0
  %v3375 = vadd.f32 %v3262, %v3374
  %v3376 = vpop.f32.mrb[0].mxu0
  %v3377 = vadd.f32 %v3264, %v3376
  %3378 = vmatprep.mubr.bf16.mxu0 %v993
  %3379 = vmatmul.mubr.bf16.gmra.mrb[0].mxu0 %v992
  %v3380 = vpop.f32.mrb[0].mxu0
  %v3381 = vadd.f32 %v3268, %v3380
  %v3382 = vpop.f32.mrb[0].mxu0
  %v3383 = vadd.f32 %v3270, %v3382
  %v3384 = vpop.f32.mrb[0].mxu0
  %v3385 = vadd.f32 %v3272, %v3384
  %v3386 = vpop.f32.mrb[0].mxu0
  %v3387 = vadd.f32 %v3274, %v3386
  %3388 = vmatprep.mubr.bf16.mxu0 %v1011
  %3389 = vmatmul.mubr.bf16.gmra.mrb[0].mxu0 %v1010
  %v3390 = vpop.f32.mrb[0].mxu0
  %v3391 = vadd.f32 %v3278, %v3390
  %v3392 = vpop.f32.mrb[0].mxu0
  %v3393 = vadd.f32 %v3280, %v3392
  %v3394 = vpop.f32.mrb[0].mxu0
  %v3395 = vadd.f32 %v3282, %v3394
  %v3396 = vpop.f32.mrb[0].mxu0
  %v3397 = vadd.f32 %v3284, %v3396
  %3398 = vmatprep.mubr.bf16.mxu0 %v1029
  %3399 = vmatmul.mubr.bf16.gmra.mrb[0].mxu0 %v1028
  %v3400 = vpop.f32.mrb[0].mxu0
  %v3401 = vadd.f32 %v3288, %v3400
  %v3402 = vpop.f32.mrb[0].mxu0
  %v3403 = vadd.f32 %v3290, %v3402
  %v3404 = vpop.f32.mrb[0].mxu0
  %v3405 = vadd.f32 %v3292, %v3404
  %v3406 = vpop.f32.mrb[0].mxu0
  %v3407 = vadd.f32 %v3294, %v3406
  %3408 = vdwg.mxu0
  %3409 = vmatprep.subr.bf16.mxu0 %v2267
  %3410 = vmatpush1.bf16.msra.mxu0 %v2266
  %3411 = vmatprep.subr.bf16.mxu0 %v2269
  %3412 = vmatpush1.bf16.msra.mxu0 %v2268
  %3413 = vmatprep.subr.bf16.mxu0 %v2271
  %3414 = vmatpush1.bf16.msra.mxu0 %v2270
  %3415 = vmatprep.subr.bf16.mxu0 %v2273
  %3416 = vmatpush1.bf16.msra.mxu0 %v2272
  %3417 = vmatprep.subr.bf16.mxu0 %v2275
  %3418 = vmatpush1.bf16.msra.mxu0 %v2274
  %3419 = vmatprep.subr.bf16.mxu0 %v2277
  %3420 = vmatpush1.bf16.msra.mxu0 %v2276
  %3421 = vmatprep.subr.bf16.mxu0 %v2279
  %3422 = vmatpush1.bf16.msra.mxu0 %v2278
  %3423 = vmatprep.subr.bf16.mxu0 %v2281
  %3424 = vmatpush1.bf16.msra.mxu0 %v2280
  %3425 = vmatprep.subr.bf16.mxu0 %v2283
  %3426 = vmatpush1.bf16.msra.mxu0 %v2282
  %3427 = vmatprep.subr.bf16.mxu0 %v2285
  %3428 = vmatpush1.bf16.msra.mxu0 %v2284
  %3429 = vmatprep.subr.bf16.mxu0 %v2287
  %3430 = vmatpush1.bf16.msra.mxu0 %v2286
  %3431 = vmatprep.subr.bf16.mxu0 %v2289
  %3432 = vmatpush1.bf16.msra.mxu0 %v2288
  %3433 = vmatprep.subr.bf16.mxu0 %v2291
  %3434 = vmatpush1.bf16.msra.mxu0 %v2290
  %3435 = vmatprep.subr.bf16.mxu0 %v2293
  %3436 = vmatpush1.bf16.msra.mxu0 %v2292
  %3437 = vmatprep.subr.bf16.mxu0 %v2295
  %3438 = vmatpush1.bf16.msra.mxu0 %v2294
  %3439 = vmatprep.subr.bf16.mxu0 %v2297
  %3440 = vmatpush1.bf16.msra.mxu0 %v2296
  %3441 = vmatprep.mubr.bf16.mxu0 %v905
  %3442 = vmatmul.mubr.bf16.gmra.mrb[0].mxu0 %v904
  %v3443 = vpop.f32.mrb[0].mxu0
  %v3444 = vadd.f32 %v3331, %v3443
  %v3445 = vpop.f32.mrb[0].mxu0
  %v3446 = vadd.f32 %v3333, %v3445
  %v3447 = vpop.f32.mrb[0].mxu0
  %v3448 = vadd.f32 %v3335, %v3447
  %v3449 = vpop.f32.mrb[0].mxu0
  %v3450 = vadd.f32 %v3337, %v3449
  %3451 = vmatprep.mubr.bf16.mxu0 %v923
  %3452 = vmatmul.mubr.bf16.gmra.mrb[0].mxu0 %v922
  %v3453 = vpop.f32.mrb[0].mxu0
  %v3454 = vadd.f32 %v3341, %v3453
  %v3455 = vpop.f32.mrb[0].mxu0
  %v3456 = vadd.f32 %v3343, %v3455
  %v3457 = vpop.f32.mrb[0].mxu0
  %v3458 = vadd.f32 %v3345, %v3457
  %v3459 = vpop.f32.mrb[0].mxu0
  %v3460 = vadd.f32 %v3347, %v3459
  %3461 = vmatprep.mubr.bf16.mxu0 %v941
  %3462 = vmatmul.mubr.bf16.gmra.mrb[0].mxu0 %v940
  %v3463 = vpop.f32.mrb[0].mxu0
  %v3464 = vadd.f32 %v3351, %v3463
  %v3465 = vpop.f32.mrb[0].mxu0
  %v3466 = vadd.f32 %v3353, %v3465
  %v3467 = vpop.f32.mrb[0].mxu0
  %v3468 = vadd.f32 %v3355, %v3467
  %v3469 = vpop.f32.mrb[0].mxu0
  %v3470 = vadd.f32 %v3357, %v3469
  %3471 = vmatprep.mubr.bf16.mxu0 %v959
  %3472 = vmatmul.mubr.bf16.gmra.mrb[0].mxu0 %v958
  %v3473 = vpop.f32.mrb[0].mxu0
  %v3474 = vadd.f32 %v3361, %v3473
  %v3475 = vpop.f32.mrb[0].mxu0
  %v3476 = vadd.f32 %v3363, %v3475
  %v3477 = vpop.f32.mrb[0].mxu0
  %v3478 = vadd.f32 %v3365, %v3477
  %v3479 = vpop.f32.mrb[0].mxu0
  %v3480 = vadd.f32 %v3367, %v3479
  %3481 = vmatprep.mubr.bf16.mxu0 %v977
  %3482 = vmatmul.mubr.bf16.gmra.mrb[0].mxu0 %v976
  %v3483 = vpop.f32.mrb[0].mxu0
  %v3484 = vadd.f32 %v3371, %v3483
  %v3485 = vpop.f32.mrb[0].mxu0
  %v3486 = vadd.f32 %v3373, %v3485
  %v3487 = vpop.f32.mrb[0].mxu0
  %v3488 = vadd.f32 %v3375, %v3487
  %v3489 = vpop.f32.mrb[0].mxu0
  %v3490 = vadd.f32 %v3377, %v3489
  %3491 = vmatprep.mubr.bf16.mxu0 %v995
  %3492 = vmatmul.mubr.bf16.gmra.mrb[0].mxu0 %v994
  %v3493 = vpop.f32.mrb[0].mxu0
  %v3494 = vadd.f32 %v3381, %v3493
  %v3495 = vpop.f32.mrb[0].mxu0
  %v3496 = vadd.f32 %v3383, %v3495
  %v3497 = vpop.f32.mrb[0].mxu0
  %v3498 = vadd.f32 %v3385, %v3497
  %v3499 = vpop.f32.mrb[0].mxu0
  %v3500 = vadd.f32 %v3387, %v3499
  %3501 = vmatprep.mubr.bf16.mxu0 %v1013
  %3502 = vmatmul.mubr.bf16.gmra.mrb[0].mxu0 %v1012
  %v3503 = vpop.f32.mrb[0].mxu0
  %v3504 = vadd.f32 %v3391, %v3503
  %v3505 = vpop.f32.mrb[0].mxu0
  %v3506 = vadd.f32 %v3393, %v3505
  %v3507 = vpop.f32.mrb[0].mxu0
  %v3508 = vadd.f32 %v3395, %v3507
  %v3509 = vpop.f32.mrb[0].mxu0
  %v3510 = vadd.f32 %v3397, %v3509
  %3511 = vmatprep.mubr.bf16.mxu0 %v1031
  %3512 = vmatmul.mubr.bf16.gmra.mrb[0].mxu0 %v1030
  %v3513 = vpop.f32.mrb[0].mxu0
  %v3514 = vadd.f32 %v3401, %v3513
  %v3515 = vpop.f32.mrb[0].mxu0
  %v3516 = vadd.f32 %v3403, %v3515
  %v3517 = vpop.f32.mrb[0].mxu0
  %v3518 = vadd.f32 %v3405, %v3517
  %v3519 = vpop.f32.mrb[0].mxu0
  %v3520 = vadd.f32 %v3407, %v3519
  %3521 = vdwg.mxu0
  %3522 = vmatprep.subr.bf16.mxu0 %v2299
  %3523 = vmatpush1.bf16.msra.mxu0 %v2298
  %3524 = vmatprep.subr.bf16.mxu0 %v2301
  %3525 = vmatpush1.bf16.msra.mxu0 %v2300
  %3526 = vmatprep.subr.bf16.mxu0 %v2303
  %3527 = vmatpush1.bf16.msra.mxu0 %v2302
  %3528 = vmatprep.subr.bf16.mxu0 %v2305
  %3529 = vmatpush1.bf16.msra.mxu0 %v2304
  %3530 = vmatprep.subr.bf16.mxu0 %v2307
  %3531 = vmatpush1.bf16.msra.mxu0 %v2306
  %3532 = vmatprep.subr.bf16.mxu0 %v2309
  %3533 = vmatpush1.bf16.msra.mxu0 %v2308
  %3534 = vmatprep.subr.bf16.mxu0 %v2311
  %3535 = vmatpush1.bf16.msra.mxu0 %v2310
  %3536 = vmatprep.subr.bf16.mxu0 %v2313
  %3537 = vmatpush1.bf16.msra.mxu0 %v2312
  %3538 = vmatprep.subr.bf16.mxu0 %v2315
  %3539 = vmatpush1.bf16.msra.mxu0 %v2314
  %3540 = vmatprep.subr.bf16.mxu0 %v2317
  %3541 = vmatpush1.bf16.msra.mxu0 %v2316
  %3542 = vmatprep.subr.bf16.mxu0 %v2319
  %3543 = vmatpush1.bf16.msra.mxu0 %v2318
  %3544 = vmatprep.subr.bf16.mxu0 %v2321
  %3545 = vmatpush1.bf16.msra.mxu0 %v2320
  %3546 = vmatprep.subr.bf16.mxu0 %v2323
  %3547 = vmatpush1.bf16.msra.mxu0 %v2322
  %3548 = vmatprep.subr.bf16.mxu0 %v2325
  %3549 = vmatpush1.bf16.msra.mxu0 %v2324
  %3550 = vmatprep.subr.bf16.mxu0 %v2327
  %3551 = vmatpush1.bf16.msra.mxu0 %v2326
  %3552 = vmatprep.subr.bf16.mxu0 %v2329
  %3553 = vmatpush1.bf16.msra.mxu0 %v2328
  %3554 = vmatprep.mubr.bf16.mxu0 %v907
  %3555 = vmatmul.mubr.bf16.gmra.mrb[0].mxu0 %v906
  %v3556 = vpop.f32.mrb[0].mxu0
  %v3557 = vadd.f32 %v3444, %v3556
  %v3558 = vpop.f32.mrb[0].mxu0
  %v3559 = vadd.f32 %v3446, %v3558
  %v3560 = vpop.f32.mrb[0].mxu0
  %v3561 = vadd.f32 %v3448, %v3560
  %v3562 = vpop.f32.mrb[0].mxu0
  %v3563 = vadd.f32 %v3450, %v3562
  %3564 = vmatprep.mubr.bf16.mxu0 %v925
  %3565 = vmatmul.mubr.bf16.gmra.mrb[0].mxu0 %v924
  %v3566 = vpop.f32.mrb[0].mxu0
  %v3567 = vadd.f32 %v3454, %v3566
  %v3568 = vpop.f32.mrb[0].mxu0
  %v3569 = vadd.f32 %v3456, %v3568
  %v3570 = vpop.f32.mrb[0].mxu0
  %v3571 = vadd.f32 %v3458, %v3570
  %v3572 = vpop.f32.mrb[0].mxu0
  %v3573 = vadd.f32 %v3460, %v3572
  %3574 = vmatprep.mubr.bf16.mxu0 %v943
  %3575 = vmatmul.mubr.bf16.gmra.mrb[0].mxu0 %v942
  %v3576 = vpop.f32.mrb[0].mxu0
  %v3577 = vadd.f32 %v3464, %v3576
  %v3578 = vpop.f32.mrb[0].mxu0
  %v3579 = vadd.f32 %v3466, %v3578
  %v3580 = vpop.f32.mrb[0].mxu0
  %v3581 = vadd.f32 %v3468, %v3580
  %v3582 = vpop.f32.mrb[0].mxu0
  %v3583 = vadd.f32 %v3470, %v3582
  %3584 = vmatprep.mubr.bf16.mxu0 %v961
  %3585 = vmatmul.mubr.bf16.gmra.mrb[0].mxu0 %v960
  %v3586 = vpop.f32.mrb[0].mxu0
  %v3587 = vadd.f32 %v3474, %v3586
  %v3588 = vpop.f32.mrb[0].mxu0
  %v3589 = vadd.f32 %v3476, %v3588
  %v3590 = vpop.f32.mrb[0].mxu0
  %v3591 = vadd.f32 %v3478, %v3590
  %v3592 = vpop.f32.mrb[0].mxu0
  %v3593 = vadd.f32 %v3480, %v3592
  %3594 = vmatprep.mubr.bf16.mxu0 %v979
  %3595 = vmatmul.mubr.bf16.gmra.mrb[0].mxu0 %v978
  %v3596 = vpop.f32.mrb[0].mxu0
  %v3597 = vadd.f32 %v3484, %v3596
  %v3598 = vpop.f32.mrb[0].mxu0
  %v3599 = vadd.f32 %v3486, %v3598
  %v3600 = vpop.f32.mrb[0].mxu0
  %v3601 = vadd.f32 %v3488, %v3600
  %v3602 = vpop.f32.mrb[0].mxu0
  %v3603 = vadd.f32 %v3490, %v3602
  %3604 = vmatprep.mubr.bf16.mxu0 %v997
  %3605 = vmatmul.mubr.bf16.gmra.mrb[0].mxu0 %v996
  %v3606 = vpop.f32.mrb[0].mxu0
  %v3607 = vadd.f32 %v3494, %v3606
  %v3608 = vpop.f32.mrb[0].mxu0
  %v3609 = vadd.f32 %v3496, %v3608
  %v3610 = vpop.f32.mrb[0].mxu0
  %v3611 = vadd.f32 %v3498, %v3610
  %v3612 = vpop.f32.mrb[0].mxu0
  %v3613 = vadd.f32 %v3500, %v3612
  %3614 = vmatprep.mubr.bf16.mxu0 %v1015
  %3615 = vmatmul.mubr.bf16.gmra.mrb[0].mxu0 %v1014
  %v3616 = vpop.f32.mrb[0].mxu0
  %v3617 = vadd.f32 %v3504, %v3616
  %v3618 = vpop.f32.mrb[0].mxu0
  %v3619 = vadd.f32 %v3506, %v3618
  %v3620 = vpop.f32.mrb[0].mxu0
  %v3621 = vadd.f32 %v3508, %v3620
  %v3622 = vpop.f32.mrb[0].mxu0
  %v3623 = vadd.f32 %v3510, %v3622
  %3624 = vmatprep.mubr.bf16.mxu0 %v1033
  %3625 = vmatmul.mubr.bf16.gmra.mrb[0].mxu0 %v1032
  %v3626 = vpop.f32.mrb[0].mxu0
  %v3627 = vadd.f32 %v3514, %v3626
  %v3628 = vpop.f32.mrb[0].mxu0
  %v3629 = vadd.f32 %v3516, %v3628
  %v3630 = vpop.f32.mrb[0].mxu0
  %v3631 = vadd.f32 %v3518, %v3630
  %v3632 = vpop.f32.mrb[0].mxu0
  %v3633 = vadd.f32 %v3520, %v3632
  %3634 = vdwg.mxu0
  %v3635 = vmax.f32 %v3557, 0.0
  %v3636 = vmax.f32 %v3559, 0.0
  %v3637 = vmax.f32 %v3561, 0.0
  %v3638 = vmax.f32 %v3563, 0.0
  %v3639 = vmax.f32 %v3567, 0.0
  %v3640 = vmax.f32 %v3569, 0.0
  %v3641 = vmax.f32 %v3571, 0.0
  %v3642 = vmax.f32 %v3573, 0.0
  %v3643 = vmax.f32 %v3577, 0.0
  %v3644 = vmax.f32 %v3579, 0.0
  %v3645 = vmax.f32 %v3581, 0.0
  %v3646 = vmax.f32 %v3583, 0.0
  %v3647 = vmax.f32 %v3587, 0.0
  %v3648 = vmax.f32 %v3589, 0.0
  %v3649 = vmax.f32 %v3591, 0.0
  %v3650 = vmax.f32 %v3593, 0.0
  %v3651 = vmax.f32 %v3597, 0.0
  %v3652 = vmax.f32 %v3599, 0.0
  %v3653 = vmax.f32 %v3601, 0.0
  %v3654 = vmax.f32 %v3603, 0.0
  %v3655 = vmax.f32 %v3607, 0.0
  %v3656 = vmax.f32 %v3609, 0.0
  %v3657 = vmax.f32 %v3611, 0.0
  %v3658 = vmax.f32 %v3613, 0.0
  %v3659 = vmax.f32 %v3617, 0.0
  %v3660 = vmax.f32 %v3619, 0.0
  %v3661 = vmax.f32 %v3621, 0.0
  %v3662 = vmax.f32 %v3623, 0.0
  %v3663 = vmax.f32 %v3627, 0.0
  %v3664 = vmax.f32 %v3629, 0.0
  %v3665 = vmax.f32 %v3631, 0.0
  %v3666 = vmax.f32 %v3633, 0.0
  %v3667 = vpack.c.bf16 %v3637, %v3635
  %v3668 = vpack.c.bf16 %v3638, %v3636
  %v3669 = vpack.c.bf16 %v3641, %v3639
  %v3670 = vpack.c.bf16 %v3642, %v3640
  %v3671 = vpack.c.bf16 %v3645, %v3643
  %v3672 = vpack.c.bf16 %v3646, %v3644
  %v3673 = vpack.c.bf16 %v3649, %v3647
  %v3674 = vpack.c.bf16 %v3650, %v3648
  %v3675 = vpack.c.bf16 %v3653, %v3651
  %v3676 = vpack.c.bf16 %v3654, %v3652
  %v3677 = vpack.c.bf16 %v3657, %v3655
  %v3678 = vpack.c.bf16 %v3658, %v3656
  %v3679 = vpack.c.bf16 %v3661, %v3659
  %v3680 = vpack.c.bf16 %v3662, %v3660
  %v3681 = vpack.c.bf16 %v3665, %v3663
  %v3682 = vpack.c.bf16 %v3666, %v3664
  %v3699 = vunpack.c.l.b16 %v3667
  %v3700 = vunpack.c.l.b16 %v3668
  %v3701 = vunpack.c.h.b16 %v3667
  %v3702 = vunpack.c.h.b16 %v3668
  %v3703 = vunpack.c.l.b16 %v3669
  %v3704 = vunpack.c.l.b16 %v3670
  %v3705 = vunpack.c.h.b16 %v3669
  %v3706 = vunpack.c.h.b16 %v3670
  %v3707 = vunpack.c.l.b16 %v3671
  %v3708 = vunpack.c.l.b16 %v3672
  %v3709 = vunpack.c.h.b16 %v3671
  %v3710 = vunpack.c.h.b16 %v3672
  %v3711 = vunpack.c.l.b16 %v3673
  %v3712 = vunpack.c.l.b16 %v3674
  %v3713 = vunpack.c.h.b16 %v3673
  %v3714 = vunpack.c.h.b16 %v3674
  %v3715 = vunpack.c.l.b16 %v3675
  %v3716 = vunpack.c.l.b16 %v3676
  %v3717 = vunpack.c.h.b16 %v3675
  %v3718 = vunpack.c.h.b16 %v3676
  %v3719 = vunpack.c.l.b16 %v3677
  %v3720 = vunpack.c.l.b16 %v3678
  %v3721 = vunpack.c.h.b16 %v3677
  %v3722 = vunpack.c.h.b16 %v3678
  %v3723 = vunpack.c.l.b16 %v3679
  %v3724 = vunpack.c.l.b16 %v3680
  %v3725 = vunpack.c.h.b16 %v3679
  %v3726 = vunpack.c.h.b16 %v3680
  %v3727 = vunpack.c.l.b16 %v3681
  %v3728 = vunpack.c.l.b16 %v3682
  %v3729 = vunpack.c.h.b16 %v3681
  %v3730 = vunpack.c.h.b16 %v3682
  %v3731 = vpack.c.b16 %v3700, %v3699
  %v3732 = vpack.c.b16 %v3702, %v3701
  %v3733 = vpack.c.b16 %v3704, %v3703
  %v3734 = vpack.c.b16 %v3706, %v3705
  %v3735 = vpack.c.b16 %v3708, %v3707
  %v3736 = vpack.c.b16 %v3710, %v3709
  %v3737 = vpack.c.b16 %v3712, %v3711
  %v3738 = vpack.c.b16 %v3714, %v3713
  %v3739 = vpack.c.b16 %v3716, %v3715
  %v3740 = vpack.c.b16 %v3718, %v3717
  %v3741 = vpack.c.b16 %v3720, %v3719
  %v3742 = vpack.c.b16 %v3722, %v3721
  %v3743 = vpack.c.b16 %v3724, %v3723
  %v3744 = vpack.c.b16 %v3726, %v3725
  %v3745 = vpack.c.b16 %v3728, %v3727
  %v3746 = vpack.c.b16 %v3730, %v3729
  %3763 = vst [vmem:[%s3] sm:$0xff] %v3731
  %3764 = vst [vmem:[%s3 + $0x8] sm:$0xff] %v3732
  %3765 = vst [vmem:[%s3 + $0x10] sm:$0xff] %v3733
  %3766 = vst [vmem:[%s3 + $0x18] sm:$0xff] %v3734
  %3767 = vst [vmem:[%s3 + $0x20] sm:$0xff] %v3735
  %3768 = vst [vmem:[%s3 + $0x28] sm:$0xff] %v3736
  %3769 = vst [vmem:[%s3 + $0x30] sm:$0xff] %v3737
  %3770 = vst [vmem:[%s3 + $0x38] sm:$0xff] %v3738
  %3771 = vst [vmem:[%s3 + $0x40] sm:$0xff] %v3739
  %3772 = vst [vmem:[%s3 + $0x48] sm:$0xff] %v3740
  %3773 = vst [vmem:[%s3 + $0x50] sm:$0xff] %v3741
  %3774 = vst [vmem:[%s3 + $0x58] sm:$0xff] %v3742
  %3775 = vst [vmem:[%s3 + $0x60] sm:$0xff] %v3743
  %3776 = vst [vmem:[%s3 + $0x68] sm:$0xff] %v3744
  %3777 = vst [vmem:[%s3 + $0x70] sm:$0xff] %v3745
  %3778 = vst [vmem:[%s3 + $0x78] sm:$0xff] %v3746
  // Predicated region
  $region14: #{pix_forward.6} parent=0 // pred_check
    _
  $region15: #{pix_forward.6} parent=0 // pred_check_branch
    %3780 = sbr.rel (0) target = $region17
  $region16: #{pix_forward.6} parent=0 // pred_region
    _
  $region17: #{pix_forward.6} parent=0 // pred_fallthru
    _
  // Predicated region
  $region18: #{pix_forward.6} parent=0 // pred_check
    _
  $region19: #{pix_forward.6} parent=0 // pred_check_branch
    %3782 = sbr.rel (0) target = $region21
  $region20: #{pix_forward.6} parent=0 // pred_region
    _
  $region21: #{pix_forward.6} parent=0 // pred_fallthru
    _

// kernel: pix_forward.7
$region0: #{pix_forward.7}
  #allocation0 [shape = 'u32[]', space=smem, size = 0x4, offset = 0x4, fixed_abs, tag = 'smem constant byte address 0x4 - core index']
  #allocation1 [shape = 'u32[144,128]{1,0:T(1,128)}', space=vmem, size = 0x12000, scoped, tag = 'internal scratch']
  %s0 = inlined_call_operand.vmem [shape: bf16[128,512], index: 0, kind: input, shape index: {}]
  %s1 = inlined_call_operand.vmem [shape: bf16[512,64], index: 1, kind: input, shape index: {}]
  %s2 = inlined_call_operand.vmem [shape: f32[1,64], index: 2, kind: input, shape index: {}]
  %s3 = inlined_call_operand.vmem [shape: bf16[128,64], index: 3, kind: output, shape index: {}]
  %s4 = sld [smem:[#allocation0]]
  $region22: #{pix_forward.7} parent=0
    _
  %s6 = ssub.s32 1, %s4
  %s7 = scalar_select 0, %s6, %s4
  // Predicated region
  $region2: #{pix_forward.7} parent=0 // pred_check
    _
  $region3: #{pix_forward.7} parent=0 // pred_check_branch
    %9 = sbr.rel (0) target = $region5
  $region4: #{pix_forward.7} parent=0 // pred_region
    _
  $region5: #{pix_forward.7} parent=0 // pred_fallthru
    _
  // Predicated region
  $region6: #{pix_forward.7} parent=0 // pred_check
    _
  $region7: #{pix_forward.7} parent=0 // pred_check_branch
    %11 = sbr.rel (0) target = $region9
  $region8: #{pix_forward.7} parent=0 // pred_region
    _
  $region9: #{pix_forward.7} parent=0 // pred_fallthru
    _
  // Predicated region
  $region10: #{pix_forward.7} parent=0 // pred_check
    _
  $region11: #{pix_forward.7} parent=0 // pred_check_branch
    %13 = sbr.rel (0) target = $region13
  $region12: #{pix_forward.7} parent=0 // pred_region
    _
  $region13: #{pix_forward.7} parent=0 // pred_fallthru
    _
  %v15 = vld [vmem:[%s0] sm:$0xff]
  %v16 = vld [vmem:[%s0 + $0x8] sm:$0xff]
  %v17 = vld [vmem:[%s0 + $0x10] sm:$0xff]
  %v18 = vld [vmem:[%s0 + $0x18] sm:$0xff]
  %v19 = vld [vmem:[%s0 + $0x20] sm:$0xff]
  %v20 = vld [vmem:[%s0 + $0x28] sm:$0xff]
  %v21 = vld [vmem:[%s0 + $0x30] sm:$0xff]
  %v22 = vld [vmem:[%s0 + $0x38] sm:$0xff]
  %v23 = vld [vmem:[%s0 + $0x40] sm:$0xff]
  %v24 = vld [vmem:[%s0 + $0x48] sm:$0xff]
  %v25 = vld [vmem:[%s0 + $0x50] sm:$0xff]
  %v26 = vld [vmem:[%s0 + $0x58] sm:$0xff]
  %v27 = vld [vmem:[%s0 + $0x60] sm:$0xff]
  %v28 = vld [vmem:[%s0 + $0x68] sm:$0xff]
  %v29 = vld [vmem:[%s0 + $0x70] sm:$0xff]
  %v30 = vld [vmem:[%s0 + $0x78] sm:$0xff]
  %v31 = vld [vmem:[%s0 + $0x80] sm:$0xff]
  %v32 = vld [vmem:[%s0 + $0x88] sm:$0xff]
  %v33 = vld [vmem:[%s0 + $0x90] sm:$0xff]
  %v34 = vld [vmem:[%s0 + $0x98] sm:$0xff]
  %v35 = vld [vmem:[%s0 + $0xa0] sm:$0xff]
  %v36 = vld [vmem:[%s0 + $0xa8] sm:$0xff]
  %v37 = vld [vmem:[%s0 + $0xb0] sm:$0xff]
  %v38 = vld [vmem:[%s0 + $0xb8] sm:$0xff]
  %v39 = vld [vmem:[%s0 + $0xc0] sm:$0xff]
  %v40 = vld [vmem:[%s0 + $0xc8] sm:$0xff]
  %v41 = vld [vmem:[%s0 + $0xd0] sm:$0xff]
  %v42 = vld [vmem:[%s0 + $0xd8] sm:$0xff]
  %v43 = vld [vmem:[%s0 + $0xe0] sm:$0xff]
  %v44 = vld [vmem:[%s0 + $0xe8] sm:$0xff]
  %v45 = vld [vmem:[%s0 + $0xf0] sm:$0xff]
  %v46 = vld [vmem:[%s0 + $0xf8] sm:$0xff]
  %v47 = vld [vmem:[%s1] sm:$0xf]
  %v48 = vld [vmem:[%s1 + $0x4] sm:$0xf]
  %v49 = vld [vmem:[%s1 + $0x8] sm:$0xf]
  %v50 = vld [vmem:[%s1 + $0xc] sm:$0xf]
  %v51 = vld [vmem:[%s1 + $0x10] sm:$0xf]
  %v52 = vld [vmem:[%s1 + $0x14] sm:$0xf]
  %v53 = vld [vmem:[%s1 + $0x18] sm:$0xf]
  %v54 = vld [vmem:[%s1 + $0x1c] sm:$0xf]
  %v55 = vld [vmem:[%s1 + $0x20] sm:$0xf]
  %v56 = vld [vmem:[%s1 + $0x24] sm:$0xf]
  %v57 = vld [vmem:[%s1 + $0x28] sm:$0xf]
  %v58 = vld [vmem:[%s1 + $0x2c] sm:$0xf]
  %v59 = vld [vmem:[%s1 + $0x30] sm:$0xf]
  %v60 = vld [vmem:[%s1 + $0x34] sm:$0xf]
  %v61 = vld [vmem:[%s1 + $0x38] sm:$0xf]
  %v62 = vld [vmem:[%s1 + $0x3c] sm:$0xf]
  %v63 = vld [vmem:[%s1 + $0x40] sm:$0xf]
  %v64 = vld [vmem:[%s1 + $0x44] sm:$0xf]
  %v65 = vld [vmem:[%s1 + $0x48] sm:$0xf]
  %v66 = vld [vmem:[%s1 + $0x4c] sm:$0xf]
  %v67 = vld [vmem:[%s1 + $0x50] sm:$0xf]
  %v68 = vld [vmem:[%s1 + $0x54] sm:$0xf]
  %v69 = vld [vmem:[%s1 + $0x58] sm:$0xf]
  %v70 = vld [vmem:[%s1 + $0x5c] sm:$0xf]
  %v71 = vld [vmem:[%s1 + $0x60] sm:$0xf]
  %v72 = vld [vmem:[%s1 + $0x64] sm:$0xf]
  %v73 = vld [vmem:[%s1 + $0x68] sm:$0xf]
  %v74 = vld [vmem:[%s1 + $0x6c] sm:$0xf]
  %v75 = vld [vmem:[%s1 + $0x70] sm:$0xf]
  %v76 = vld [vmem:[%s1 + $0x74] sm:$0xf]
  %v77 = vld [vmem:[%s1 + $0x78] sm:$0xf]
  %v78 = vld [vmem:[%s1 + $0x7c] sm:$0xf]
  %v79 = vld [vmem:[%s1 + $0x80] sm:$0xf]
  %v80 = vld [vmem:[%s1 + $0x84] sm:$0xf]
  %v81 = vld [vmem:[%s1 + $0x88] sm:$0xf]
  %v82 = vld [vmem:[%s1 + $0x8c] sm:$0xf]
  %v83 = vld [vmem:[%s1 + $0x90] sm:$0xf]
  %v84 = vld [vmem:[%s1 + $0x94] sm:$0xf]
  %v85 = vld [vmem:[%s1 + $0x98] sm:$0xf]
  %v86 = vld [vmem:[%s1 + $0x9c] sm:$0xf]
  %v87 = vld [vmem:[%s1 + $0xa0] sm:$0xf]
  %v88 = vld [vmem:[%s1 + $0xa4] sm:$0xf]
  %v89 = vld [vmem:[%s1 + $0xa8] sm:$0xf]
  %v90 = vld [vmem:[%s1 + $0xac] sm:$0xf]
  %v91 = vld [vmem:[%s1 + $0xb0] sm:$0xf]
  %v92 = vld [vmem:[%s1 + $0xb4] sm:$0xf]
  %v93 = vld [vmem:[%s1 + $0xb8] sm:$0xf]
  %v94 = vld [vmem:[%s1 + $0xbc] sm:$0xf]
  %v95 = vld [vmem:[%s1 + $0xc0] sm:$0xf]
  %v96 = vld [vmem:[%s1 + $0xc4] sm:$0xf]
  %v97 = vld [vmem:[%s1 + $0xc8] sm:$0xf]
  %v98 = vld [vmem:[%s1 + $0xcc] sm:$0xf]
  %v99 = vld [vmem:[%s1 + $0xd0] sm:$0xf]
  %v100 = vld [vmem:[%s1 + $0xd4] sm:$0xf]
  %v101 = vld [vmem:[%s1 + $0xd8] sm:$0xf]
  %v102 = vld [vmem:[%s1 + $0xdc] sm:$0xf]
  %v103 = vld [vmem:[%s1 + $0xe0] sm:$0xf]
  %v104 = vld [vmem:[%s1 + $0xe4] sm:$0xf]
  %v105 = vld [vmem:[%s1 + $0xe8] sm:$0xf]
  %v106 = vld [vmem:[%s1 + $0xec] sm:$0xf]
  %v107 = vld [vmem:[%s1 + $0xf0] sm:$0xf]
  %v108 = vld [vmem:[%s1 + $0xf4] sm:$0xf]
  %v109 = vld [vmem:[%s1 + $0xf8] sm:$0xf]
  %v110 = vld [vmem:[%s1 + $0xfc] sm:$0xf]
  %v111 = vld [vmem:[%s2] sm:$0x1]
  %v113 = vlaneseq
  %v114 = vshrl.u32 %v113, 7
  %v115 = vsub.s32 0, %v114
  %v116 = vrot.slane %v111, %v115
  %v150 = vunpack.c.l.b16 %v15
  %v151 = vunpack.c.h.b16 %v15
  %v152 = vunpack.c.l.b16 %v16
  %v153 = vunpack.c.h.b16 %v16
  %v154 = vunpack.c.l.b16 %v17
  %v155 = vunpack.c.h.b16 %v17
  %v156 = vunpack.c.l.b16 %v18
  %v157 = vunpack.c.h.b16 %v18
  %v158 = vunpack.c.l.b16 %v19
  %v159 = vunpack.c.h.b16 %v19
  %v160 = vunpack.c.l.b16 %v20
  %v161 = vunpack.c.h.b16 %v20
  %v162 = vunpack.c.l.b16 %v21
  %v163 = vunpack.c.h.b16 %v21
  %v164 = vunpack.c.l.b16 %v22
  %v165 = vunpack.c.h.b16 %v22
  %v166 = vunpack.c.l.b16 %v23
  %v167 = vunpack.c.h.b16 %v23
  %v168 = vunpack.c.l.b16 %v24
  %v169 = vunpack.c.h.b16 %v24
  %v170 = vunpack.c.l.b16 %v25
  %v171 = vunpack.c.h.b16 %v25
  %v172 = vunpack.c.l.b16 %v26
  %v173 = vunpack.c.h.b16 %v26
  %v174 = vunpack.c.l.b16 %v27
  %v175 = vunpack.c.h.b16 %v27
  %v176 = vunpack.c.l.b16 %v28
  %v177 = vunpack.c.h.b16 %v28
  %v178 = vunpack.c.l.b16 %v29
  %v179 = vunpack.c.h.b16 %v29
  %v180 = vunpack.c.l.b16 %v30
  %v181 = vunpack.c.h.b16 %v30
  %v182 = vunpack.c.l.b16 %v31
  %v183 = vunpack.c.h.b16 %v31
  %v184 = vunpack.c.l.b16 %v32
  %v185 = vunpack.c.h.b16 %v32
  %v186 = vunpack.c.l.b16 %v33
  %v187 = vunpack.c.h.b16 %v33
  %v188 = vunpack.c.l.b16 %v34
  %v189 = vunpack.c.h.b16 %v34
  %v190 = vunpack.c.l.b16 %v35
  %v191 = vunpack.c.h.b16 %v35
  %v192 = vunpack.c.l.b16 %v36
  %v193 = vunpack.c.h.b16 %v36
  %v194 = vunpack.c.l.b16 %v37
  %v195 = vunpack.c.h.b16 %v37
  %v196 = vunpack.c.l.b16 %v38
  %v197 = vunpack.c.h.b16 %v38
  %v198 = vunpack.c.l.b16 %v39
  %v199 = vunpack.c.h.b16 %v39
  %v200 = vunpack.c.l.b16 %v40
  %v201 = vunpack.c.h.b16 %v40
  %v202 = vunpack.c.l.b16 %v41
  %v203 = vunpack.c.h.b16 %v41
  %v204 = vunpack.c.l.b16 %v42
  %v205 = vunpack.c.h.b16 %v42
  %v206 = vunpack.c.l.b16 %v43
  %v207 = vunpack.c.h.b16 %v43
  %v208 = vunpack.c.l.b16 %v44
  %v209 = vunpack.c.h.b16 %v44
  %v210 = vunpack.c.l.b16 %v45
  %v211 = vunpack.c.h.b16 %v45
  %v212 = vunpack.c.l.b16 %v46
  %v213 = vunpack.c.h.b16 %v46
  %v214 = vpack.c.b16 %v154, %v150
  %v215 = vpack.c.b16 %v155, %v151
  %v216 = vpack.c.b16 %v156, %v152
  %v217 = vpack.c.b16 %v157, %v153
  %v218 = vpack.c.b16 %v162, %v158
  %v219 = vpack.c.b16 %v163, %v159
  %v220 = vpack.c.b16 %v164, %v160
  %v221 = vpack.c.b16 %v165, %v161
  %v222 = vpack.c.b16 %v170, %v166
  %v223 = vpack.c.b16 %v171, %v167
  %v224 = vpack.c.b16 %v172, %v168
  %v225 = vpack.c.b16 %v173, %v169
  %v226 = vpack.c.b16 %v178, %v174
  %v227 = vpack.c.b16 %v179, %v175
  %v228 = vpack.c.b16 %v180, %v176
  %v229 = vpack.c.b16 %v181, %v177
  %v230 = vpack.c.b16 %v186, %v182
  %v231 = vpack.c.b16 %v187, %v183
  %v232 = vpack.c.b16 %v188, %v184
  %v233 = vpack.c.b16 %v189, %v185
  %v234 = vpack.c.b16 %v194, %v190
  %v235 = vpack.c.b16 %v195, %v191
  %v236 = vpack.c.b16 %v196, %v192
  %v237 = vpack.c.b16 %v197, %v193
  %v238 = vpack.c.b16 %v202, %v198
  %v239 = vpack.c.b16 %v203, %v199
  %v240 = vpack.c.b16 %v204, %v200
  %v241 = vpack.c.b16 %v205, %v201
  %v242 = vpack.c.b16 %v210, %v206
  %v243 = vpack.c.b16 %v211, %v207
  %v244 = vpack.c.b16 %v212, %v208
  %v245 = vpack.c.b16 %v213, %v209
  %v342 = vunpack.c.l.b16 %v47
  %v343 = vunpack.c.l.b16 %v48
  %v344 = vunpack.c.l.b16 %v49
  %v345 = vunpack.c.l.b16 %v50
  %v346 = vunpack.c.l.b16 %v51
  %v347 = vunpack.c.l.b16 %v52
  %v348 = vunpack.c.l.b16 %v53
  %v349 = vunpack.c.l.b16 %v54
  %v350 = vunpack.c.l.b16 %v55
  %v351 = vunpack.c.l.b16 %v56
  %v352 = vunpack.c.l.b16 %v57
  %v353 = vunpack.c.l.b16 %v58
  %v354 = vunpack.c.l.b16 %v59
  %v355 = vunpack.c.l.b16 %v60
  %v356 = vunpack.c.l.b16 %v61
  %v357 = vunpack.c.l.b16 %v62
  %v358 = vunpack.c.l.b16 %v63
  %v359 = vunpack.c.l.b16 %v64
  %v360 = vunpack.c.l.b16 %v65
  %v361 = vunpack.c.l.b16 %v66
  %v362 = vunpack.c.l.b16 %v67
  %v363 = vunpack.c.l.b16 %v68
  %v364 = vunpack.c.l.b16 %v69
  %v365 = vunpack.c.l.b16 %v70
  %v366 = vunpack.c.l.b16 %v71
  %v367 = vunpack.c.l.b16 %v72
  %v368 = vunpack.c.l.b16 %v73
  %v369 = vunpack.c.l.b16 %v74
  %v370 = vunpack.c.l.b16 %v75
  %v371 = vunpack.c.l.b16 %v76
  %v372 = vunpack.c.l.b16 %v77
  %v373 = vunpack.c.l.b16 %v78
  %v374 = vunpack.c.l.b16 %v79
  %v375 = vunpack.c.l.b16 %v80
  %v376 = vunpack.c.l.b16 %v81
  %v377 = vunpack.c.l.b16 %v82
  %v378 = vunpack.c.l.b16 %v83
  %v379 = vunpack.c.l.b16 %v84
  %v380 = vunpack.c.l.b16 %v85
  %v381 = vunpack.c.l.b16 %v86
  %v382 = vunpack.c.l.b16 %v87
  %v383 = vunpack.c.l.b16 %v88
  %v384 = vunpack.c.l.b16 %v89
  %v385 = vunpack.c.l.b16 %v90
  %v386 = vunpack.c.l.b16 %v91
  %v387 = vunpack.c.l.b16 %v92
  %v388 = vunpack.c.l.b16 %v93
  %v389 = vunpack.c.l.b16 %v94
  %v390 = vunpack.c.l.b16 %v95
  %v391 = vunpack.c.l.b16 %v96
  %v392 = vunpack.c.l.b16 %v97
  %v393 = vunpack.c.l.b16 %v98
  %v394 = vunpack.c.l.b16 %v99
  %v395 = vunpack.c.l.b16 %v100
  %v396 = vunpack.c.l.b16 %v101
  %v397 = vunpack.c.l.b16 %v102
  %v398 = vunpack.c.l.b16 %v103
  %v399 = vunpack.c.l.b16 %v104
  %v400 = vunpack.c.l.b16 %v105
  %v401 = vunpack.c.l.b16 %v106
  %v402 = vunpack.c.l.b16 %v107
  %v403 = vunpack.c.l.b16 %v108
  %v404 = vunpack.c.l.b16 %v109
  %v405 = vunpack.c.l.b16 %v110
  %v406 = vpack.c.b16 %v343, %v342
  %v407 = vpack.c.b16 %v345, %v344
  %v408 = vpack.c.b16 %v347, %v346
  %v409 = vpack.c.b16 %v349, %v348
  %v410 = vpack.c.b16 %v351, %v350
  %v411 = vpack.c.b16 %v353, %v352
  %v412 = vpack.c.b16 %v355, %v354
  %v413 = vpack.c.b16 %v357, %v356
  %v414 = vpack.c.b16 %v359, %v358
  %v415 = vpack.c.b16 %v361, %v360
  %v416 = vpack.c.b16 %v363, %v362
  %v417 = vpack.c.b16 %v365, %v364
  %v418 = vpack.c.b16 %v367, %v366
  %v419 = vpack.c.b16 %v369, %v368
  %v420 = vpack.c.b16 %v371, %v370
  %v421 = vpack.c.b16 %v373, %v372
  %v422 = vpack.c.b16 %v375, %v374
  %v423 = vpack.c.b16 %v377, %v376
  %v424 = vpack.c.b16 %v379, %v378
  %v425 = vpack.c.b16 %v381, %v380
  %v426 = vpack.c.b16 %v383, %v382
  %v427 = vpack.c.b16 %v385, %v384
  %v428 = vpack.c.b16 %v387, %v386
  %v429 = vpack.c.b16 %v389, %v388
  %v430 = vpack.c.b16 %v391, %v390
  %v431 = vpack.c.b16 %v393, %v392
  %v432 = vpack.c.b16 %v395, %v394
  %v433 = vpack.c.b16 %v397, %v396
  %v434 = vpack.c.b16 %v399, %v398
  %v435 = vpack.c.b16 %v401, %v400
  %v436 = vpack.c.b16 %v403, %v402
  %v437 = vpack.c.b16 %v405, %v404
  %470 = vmatprep.subr.bf16.mxu0 0
  %471 = vmatpush1.bf16.msra.mxu0 %v406
  %472 = vmatprep.subr.bf16.mxu0 0
  %473 = vmatpush1.bf16.msra.mxu0 %v407
  %474 = vmatprep.subr.bf16.mxu0 0
  %475 = vmatpush1.bf16.msra.mxu0 %v408
  %476 = vmatprep.subr.bf16.mxu0 0
  %477 = vmatpush1.bf16.msra.mxu0 %v409
  %478 = vmatprep.subr.bf16.mxu0 0
  %479 = vmatpush1.bf16.msra.mxu0 %v410
  %480 = vmatprep.subr.bf16.mxu0 0
  %481 = vmatpush1.bf16.msra.mxu0 %v411
  %482 = vmatprep.subr.bf16.mxu0 0
  %483 = vmatpush1.bf16.msra.mxu0 %v412
  %484 = vmatprep.subr.bf16.mxu0 0
  %485 = vmatpush1.bf16.msra.mxu0 %v413
  %486 = vmatprep.subr.bf16.mxu0 0
  %487 = vmatpush1.bf16.msra.mxu0 %v414
  %488 = vmatprep.subr.bf16.mxu0 0
  %489 = vmatpush1.bf16.msra.mxu0 %v415
  %490 = vmatprep.subr.bf16.mxu0 0
  %491 = vmatpush1.bf16.msra.mxu0 %v416
  %492 = vmatprep.subr.bf16.mxu0 0
  %493 = vmatpush1.bf16.msra.mxu0 %v417
  %494 = vmatprep.subr.bf16.mxu0 0
  %495 = vmatpush1.bf16.msra.mxu0 %v418
  %496 = vmatprep.subr.bf16.mxu0 0
  %497 = vmatpush1.bf16.msra.mxu0 %v419
  %498 = vmatprep.subr.bf16.mxu0 0
  %499 = vmatpush1.bf16.msra.mxu0 %v420
  %500 = vmatprep.subr.bf16.mxu0 0
  %501 = vmatpush1.bf16.msra.mxu0 %v421
  %502 = vmatprep.mubr.bf16.mxu0 %v215
  %503 = vmatmul.mubr.bf16.gmra.mrb[0].mxu0 %v214
  %v504 = vpop.f32.mrb[0].mxu0
  %v505 = vadd.f32 %v116, %v504
  %v506 = vpop.f32.mrb[0].mxu0
  %v507 = vpop.f32.mrb[0].mxu0
  %v508 = vadd.f32 %v116, %v507
  %v509 = vpop.f32.mrb[0].mxu0
  %510 = vmatprep.mubr.bf16.mxu0 %v219
  %511 = vmatmul.mubr.bf16.gmra.mrb[0].mxu0 %v218
  %v512 = vpop.f32.mrb[0].mxu0
  %v513 = vadd.f32 %v116, %v512
  %v514 = vpop.f32.mrb[0].mxu0
  %v515 = vpop.f32.mrb[0].mxu0
  %v516 = vadd.f32 %v116, %v515
  %v517 = vpop.f32.mrb[0].mxu0
  %518 = vmatprep.mubr.bf16.mxu0 %v223
  %519 = vmatmul.mubr.bf16.gmra.mrb[0].mxu0 %v222
  %v520 = vpop.f32.mrb[0].mxu0
  %v521 = vadd.f32 %v116, %v520
  %v522 = vpop.f32.mrb[0].mxu0
  %v523 = vpop.f32.mrb[0].mxu0
  %v524 = vadd.f32 %v116, %v523
  %v525 = vpop.f32.mrb[0].mxu0
  %526 = vmatprep.mubr.bf16.mxu0 %v227
  %527 = vmatmul.mubr.bf16.gmra.mrb[0].mxu0 %v226
  %v528 = vpop.f32.mrb[0].mxu0
  %v529 = vadd.f32 %v116, %v528
  %v530 = vpop.f32.mrb[0].mxu0
  %v531 = vpop.f32.mrb[0].mxu0
  %v532 = vadd.f32 %v116, %v531
  %v533 = vpop.f32.mrb[0].mxu0
  %534 = vmatprep.mubr.bf16.mxu0 %v231
  %535 = vmatmul.mubr.bf16.gmra.mrb[0].mxu0 %v230
  %v536 = vpop.f32.mrb[0].mxu0
  %v537 = vadd.f32 %v116, %v536
  %v538 = vpop.f32.mrb[0].mxu0
  %v539 = vpop.f32.mrb[0].mxu0
  %v540 = vadd.f32 %v116, %v539
  %v541 = vpop.f32.mrb[0].mxu0
  %542 = vmatprep.mubr.bf16.mxu0 %v235
  %543 = vmatmul.mubr.bf16.gmra.mrb[0].mxu0 %v234
  %v544 = vpop.f32.mrb[0].mxu0
  %v545 = vadd.f32 %v116, %v544
  %v546 = vpop.f32.mrb[0].mxu0
  %v547 = vpop.f32.mrb[0].mxu0
  %v548 = vadd.f32 %v116, %v547
  %v549 = vpop.f32.mrb[0].mxu0
  %550 = vmatprep.mubr.bf16.mxu0 %v239
  %551 = vmatmul.mubr.bf16.gmra.mrb[0].mxu0 %v238
  %v552 = vpop.f32.mrb[0].mxu0
  %v553 = vadd.f32 %v116, %v552
  %v554 = vpop.f32.mrb[0].mxu0
  %v555 = vpop.f32.mrb[0].mxu0
  %v556 = vadd.f32 %v116, %v555
  %v557 = vpop.f32.mrb[0].mxu0
  %558 = vmatprep.mubr.bf16.mxu0 %v243
  %559 = vmatmul.mubr.bf16.gmra.mrb[0].mxu0 %v242
  %v560 = vpop.f32.mrb[0].mxu0
  %v561 = vadd.f32 %v116, %v560
  %v562 = vpop.f32.mrb[0].mxu0
  %v563 = vpop.f32.mrb[0].mxu0
  %v564 = vadd.f32 %v116, %v563
  %v565 = vpop.f32.mrb[0].mxu0
  %566 = vdwg.mxu0
  %567 = vmatprep.subr.bf16.mxu0 0
  %568 = vmatpush1.bf16.msra.mxu0 %v422
  %569 = vmatprep.subr.bf16.mxu0 0
  %570 = vmatpush1.bf16.msra.mxu0 %v423
  %571 = vmatprep.subr.bf16.mxu0 0
  %572 = vmatpush1.bf16.msra.mxu0 %v424
  %573 = vmatprep.subr.bf16.mxu0 0
  %574 = vmatpush1.bf16.msra.mxu0 %v425
  %575 = vmatprep.subr.bf16.mxu0 0
  %576 = vmatpush1.bf16.msra.mxu0 %v426
  %577 = vmatprep.subr.bf16.mxu0 0
  %578 = vmatpush1.bf16.msra.mxu0 %v427
  %579 = vmatprep.subr.bf16.mxu0 0
  %580 = vmatpush1.bf16.msra.mxu0 %v428
  %581 = vmatprep.subr.bf16.mxu0 0
  %582 = vmatpush1.bf16.msra.mxu0 %v429
  %583 = vmatprep.subr.bf16.mxu0 0
  %584 = vmatpush1.bf16.msra.mxu0 %v430
  %585 = vmatprep.subr.bf16.mxu0 0
  %586 = vmatpush1.bf16.msra.mxu0 %v431
  %587 = vmatprep.subr.bf16.mxu0 0
  %588 = vmatpush1.bf16.msra.mxu0 %v432
  %589 = vmatprep.subr.bf16.mxu0 0
  %590 = vmatpush1.bf16.msra.mxu0 %v433
  %591 = vmatprep.subr.bf16.mxu0 0
  %592 = vmatpush1.bf16.msra.mxu0 %v434
  %593 = vmatprep.subr.bf16.mxu0 0
  %594 = vmatpush1.bf16.msra.mxu0 %v435
  %595 = vmatprep.subr.bf16.mxu0 0
  %596 = vmatpush1.bf16.msra.mxu0 %v436
  %597 = vmatprep.subr.bf16.mxu0 0
  %598 = vmatpush1.bf16.msra.mxu0 %v437
  %599 = vmatprep.mubr.bf16.mxu0 %v217
  %600 = vmatmul.mubr.bf16.gmra.mrb[0].mxu0 %v216
  %v601 = vpop.f32.mrb[0].mxu0
  %v602 = vadd.f32 %v505, %v601
  %v603 = vpop.f32.mrb[0].mxu0
  %v604 = vpop.f32.mrb[0].mxu0
  %v605 = vadd.f32 %v508, %v604
  %v606 = vpop.f32.mrb[0].mxu0
  %607 = vmatprep.mubr.bf16.mxu0 %v221
  %608 = vmatmul.mubr.bf16.gmra.mrb[0].mxu0 %v220
  %v609 = vpop.f32.mrb[0].mxu0
  %v610 = vadd.f32 %v513, %v609
  %v611 = vpop.f32.mrb[0].mxu0
  %v612 = vpop.f32.mrb[0].mxu0
  %v613 = vadd.f32 %v516, %v612
  %v614 = vpop.f32.mrb[0].mxu0
  %615 = vmatprep.mubr.bf16.mxu0 %v225
  %616 = vmatmul.mubr.bf16.gmra.mrb[0].mxu0 %v224
  %v617 = vpop.f32.mrb[0].mxu0
  %v618 = vadd.f32 %v521, %v617
  %v619 = vpop.f32.mrb[0].mxu0
  %v620 = vpop.f32.mrb[0].mxu0
  %v621 = vadd.f32 %v524, %v620
  %v622 = vpop.f32.mrb[0].mxu0
  %623 = vmatprep.mubr.bf16.mxu0 %v229
  %624 = vmatmul.mubr.bf16.gmra.mrb[0].mxu0 %v228
  %v625 = vpop.f32.mrb[0].mxu0
  %v626 = vadd.f32 %v529, %v625
  %v627 = vpop.f32.mrb[0].mxu0
  %v628 = vpop.f32.mrb[0].mxu0
  %v629 = vadd.f32 %v532, %v628
  %v630 = vpop.f32.mrb[0].mxu0
  %631 = vmatprep.mubr.bf16.mxu0 %v233
  %632 = vmatmul.mubr.bf16.gmra.mrb[0].mxu0 %v232
  %v633 = vpop.f32.mrb[0].mxu0
  %v634 = vadd.f32 %v537, %v633
  %v635 = vpop.f32.mrb[0].mxu0
  %v636 = vpop.f32.mrb[0].mxu0
  %v637 = vadd.f32 %v540, %v636
  %v638 = vpop.f32.mrb[0].mxu0
  %639 = vmatprep.mubr.bf16.mxu0 %v237
  %640 = vmatmul.mubr.bf16.gmra.mrb[0].mxu0 %v236
  %v641 = vpop.f32.mrb[0].mxu0
  %v642 = vadd.f32 %v545, %v641
  %v643 = vpop.f32.mrb[0].mxu0
  %v644 = vpop.f32.mrb[0].mxu0
  %v645 = vadd.f32 %v548, %v644
  %v646 = vpop.f32.mrb[0].mxu0
  %647 = vmatprep.mubr.bf16.mxu0 %v241
  %648 = vmatmul.mubr.bf16.gmra.mrb[0].mxu0 %v240
  %v649 = vpop.f32.mrb[0].mxu0
  %v650 = vadd.f32 %v553, %v649
  %v651 = vpop.f32.mrb[0].mxu0
  %v652 = vpop.f32.mrb[0].mxu0
  %v653 = vadd.f32 %v556, %v652
  %v654 = vpop.f32.mrb[0].mxu0
  %655 = vmatprep.mubr.bf16.mxu0 %v245
  %656 = vmatmul.mubr.bf16.gmra.mrb[0].mxu0 %v244
  %v657 = vpop.f32.mrb[0].mxu0
  %v658 = vadd.f32 %v561, %v657
  %v659 = vpop.f32.mrb[0].mxu0
  %v660 = vpop.f32.mrb[0].mxu0
  %v661 = vadd.f32 %v564, %v660
  %v662 = vpop.f32.mrb[0].mxu0
  %663 = vdwg.mxu0
  %vm664 = vcmp.ge.f32.partialorder %v602, 0.0
  %vm665 = vcmp.ge.f32.partialorder %v605, 0.0
  %vm666 = vcmp.ge.f32.partialorder %v610, 0.0
  %vm667 = vcmp.ge.f32.partialorder %v613, 0.0
  %vm668 = vcmp.ge.f32.partialorder %v618, 0.0
  %vm669 = vcmp.ge.f32.partialorder %v621, 0.0
  %vm670 = vcmp.ge.f32.partialorder %v626, 0.0
  %vm671 = vcmp.ge.f32.partialorder %v629, 0.0
  %vm672 = vcmp.ge.f32.partialorder %v634, 0.0
  %vm673 = vcmp.ge.f32.partialorder %v637, 0.0
  %vm674 = vcmp.ge.f32.partialorder %v642, 0.0
  %vm675 = vcmp.ge.f32.partialorder %v645, 0.0
  %vm676 = vcmp.ge.f32.partialorder %v650, 0.0
  %vm677 = vcmp.ge.f32.partialorder %v653, 0.0
  %vm678 = vcmp.ge.f32.partialorder %v658, 0.0
  %vm679 = vcmp.ge.f32.partialorder %v661, 0.0
  %v680 = vmul.f32 %v602, 0.1
  %v681 = vmul.f32 %v605, 0.1
  %v682 = vmul.f32 %v610, 0.1
  %v683 = vmul.f32 %v613, 0.1
  %v684 = vmul.f32 %v618, 0.1
  %v685 = vmul.f32 %v621, 0.1
  %v686 = vmul.f32 %v626, 0.1
  %v687 = vmul.f32 %v629, 0.1
  %v688 = vmul.f32 %v634, 0.1
  %v689 = vmul.f32 %v637, 0.1
  %v690 = vmul.f32 %v642, 0.1
  %v691 = vmul.f32 %v645, 0.1
  %v692 = vmul.f32 %v650, 0.1
  %v693 = vmul.f32 %v653, 0.1
  %v694 = vmul.f32 %v658, 0.1
  %v695 = vmul.f32 %v661, 0.1
  %v696 = vsel %vm664, %v602, %v680
  %v697 = vsel %vm665, %v605, %v681
  %v698 = vsel %vm666, %v610, %v682
  %v699 = vsel %vm667, %v613, %v683
  %v700 = vsel %vm668, %v618, %v684
  %v701 = vsel %vm669, %v621, %v685
  %v702 = vsel %vm670, %v626, %v686
  %v703 = vsel %vm671, %v629, %v687
  %v704 = vsel %vm672, %v634, %v688
  %v705 = vsel %vm673, %v637, %v689
  %v706 = vsel %vm674, %v642, %v690
  %v707 = vsel %vm675, %v645, %v691
  %v708 = vsel %vm676, %v650, %v692
  %v709 = vsel %vm677, %v653, %v693
  %v710 = vsel %vm678, %v658, %v694
  %v711 = vsel %vm679, %v661, %v695
  %v712 = vpack.c.bf16 %v697, %v696
  %v713 = vpack.c.bf16 %v699, %v698
  %v714 = vpack.c.bf16 %v701, %v700
  %v715 = vpack.c.bf16 %v703, %v702
  %v716 = vpack.c.bf16 %v705, %v704
  %v717 = vpack.c.bf16 %v707, %v706
  %v718 = vpack.c.bf16 %v709, %v708
  %v719 = vpack.c.bf16 %v711, %v710
  %v728 = vunpack.c.l.b16 %v712
  %v729 = vunpack.c.h.b16 %v712
  %v730 = vunpack.c.l.b16 %v713
  %v731 = vunpack.c.h.b16 %v713
  %v732 = vunpack.c.l.b16 %v714
  %v733 = vunpack.c.h.b16 %v714
  %v734 = vunpack.c.l.b16 %v715
  %v735 = vunpack.c.h.b16 %v715
  %v736 = vunpack.c.l.b16 %v716
  %v737 = vunpack.c.h.b16 %v716
  %v738 = vunpack.c.l.b16 %v717
  %v739 = vunpack.c.h.b16 %v717
  %v740 = vunpack.c.l.b16 %v718
  %v741 = vunpack.c.h.b16 %v718
  %v742 = vunpack.c.l.b16 %v719
  %v743 = vunpack.c.h.b16 %v719
  %v744 = vpack.c.b16 %v728, %v728
  %v745 = vpack.c.b16 %v729, %v729
  %v746 = vpack.c.b16 %v730, %v730
  %v747 = vpack.c.b16 %v731, %v731
  %v748 = vpack.c.b16 %v732, %v732
  %v749 = vpack.c.b16 %v733, %v733
  %v750 = vpack.c.b16 %v734, %v734
  %v751 = vpack.c.b16 %v735, %v735
  %v752 = vpack.c.b16 %v736, %v736
  %v753 = vpack.c.b16 %v737, %v737
  %v754 = vpack.c.b16 %v738, %v738
  %v755 = vpack.c.b16 %v739, %v739
  %v756 = vpack.c.b16 %v740, %v740
  %v757 = vpack.c.b16 %v741, %v741
  %v758 = vpack.c.b16 %v742, %v742
  %v759 = vpack.c.b16 %v743, %v743
  %vm776 = vcmask 519168
  %777 = vst.msk [vmem:[%s3] sm:$0xf] %vm776, %v744
  %778 = vst.msk [vmem:[%s3 + $0x4] sm:$0xf] %vm776, %v745
  %779 = vst.msk [vmem:[%s3 + $0x8] sm:$0xf] %vm776, %v746
  %780 = vst.msk [vmem:[%s3 + $0xc] sm:$0xf] %vm776, %v747
  %781 = vst.msk [vmem:[%s3 + $0x10] sm:$0xf] %vm776, %v748
  %782 = vst.msk [vmem:[%s3 + $0x14] sm:$0xf] %vm776, %v749
  %783 = vst.msk [vmem:[%s3 + $0x18] sm:$0xf] %vm776, %v750
  %784 = vst.msk [vmem:[%s3 + $0x1c] sm:$0xf] %vm776, %v751
  %785 = vst.msk [vmem:[%s3 + $0x20] sm:$0xf] %vm776, %v752
  %786 = vst.msk [vmem:[%s3 + $0x24] sm:$0xf] %vm776, %v753
  %787 = vst.msk [vmem:[%s3 + $0x28] sm:$0xf] %vm776, %v754
  %788 = vst.msk [vmem:[%s3 + $0x2c] sm:$0xf] %vm776, %v755
  %789 = vst.msk [vmem:[%s3 + $0x30] sm:$0xf] %vm776, %v756
  %790 = vst.msk [vmem:[%s3 + $0x34] sm:$0xf] %vm776, %v757
  %791 = vst.msk [vmem:[%s3 + $0x38] sm:$0xf] %vm776, %v758
  %792 = vst.msk [vmem:[%s3 + $0x3c] sm:$0xf] %vm776, %v759
  // Predicated region
  $region14: #{pix_forward.7} parent=0 // pred_check
    _
  $region15: #{pix_forward.7} parent=0 // pred_check_branch
    %794 = sbr.rel (0) target = $region17
  $region16: #{pix_forward.7} parent=0 // pred_region
    _
  $region17: #{pix_forward.7} parent=0 // pred_fallthru
    _
  // Predicated region
  $region18: #{pix_forward.7} parent=0 // pred_check
    _
  $region19: #{pix_forward.7} parent=0 // pred_check_branch
    %796 = sbr.rel (0) target = $region21
  $region20: #{pix_forward.7} parent=0 // pred_region
    _
  $region21: #{pix_forward.7} parent=0 // pred_fallthru
    _

</llo_original>
